<compile_context>
chip_gen: v6e
topology: v6e:2x2x1
jax: 0.10.0
libtpu: 0.0.40
codegen_flags: <defaults>
</compile_context>

<pallas_src>
import jax
import jax.numpy as jnp
from jax.experimental import pallas as pl
from jax.experimental.pallas import tpu as pltpu

VOCAB = 10
DIM = 512
TB_MAX = 2048             # max batch-tile rows (multiple of 8 and 128)
TB_QUANTUM = 256          # adaptive-tile granularity (multiple of 8)
SMALL_BATCH_CUTOFF = 256  # below this, a plain XLA gather beats kernel launch


def _embed_kernel(labels_ref, table_ref, out_ref):
    # labels_ref: (TB, 1)  int32   in VMEM
    # table_ref : (V, D)   float32 in VMEM (resident across grid steps)
    # out_ref   : (TB, D)  float32 in VMEM (partial final block clipped on
    #                                       HBM writeback by Pallas)
    tb = out_ref.shape[0]
    v = table_ref.shape[0]
    ids = jax.lax.broadcasted_iota(jnp.int32, (tb, v), 1)        # (TB, V)
    onehot = (ids == labels_ref[...]).astype(table_ref.dtype)    # (TB, V)
    out_ref[...] = jnp.dot(
        onehot, table_ref[...], preferred_element_type=jnp.float32
    )


def _pick_tile(b):
    """Largest tile <= TB_MAX that is a multiple of TB_QUANTUM and <= b."""
    return min(TB_MAX, (b // TB_QUANTUM) * TB_QUANTUM)


def label2vec(labels, table):
    """Embedding lookup: returns table[labels], shape labels.shape + (DIM,)."""
    orig_shape = labels.shape
    flat = labels.reshape(-1).astype(jnp.int32)   # (B,)
    b = flat.shape[0]

    # Small-batch fast path: kernel launch overhead dominates, let XLA gather.
    if b < SMALL_BATCH_CUTOFF:
        out = jnp.take(table, flat, axis=0)
        return out.reshape(orig_shape + (DIM,))

    tb = _pick_tile(b)
    num_tiles = pl.cdiv(b, tb)

    # Only the (tiny) label vector is padded to full tiles; the output keeps
    # its exact size, so no post-kernel slice / extra pass over the output.
    b_pad = num_tiles * tb
    if b_pad != b:
        flat = jnp.pad(flat, (0, b_pad - b))
    flat2d = flat.reshape(b_pad, 1)               # (B_pad, 1)

    cost = pl.CostEstimate(
        flops=2 * b * VOCAB * DIM,
        transcendentals=0,
        bytes_accessed=b * 4 + b * DIM * 4 + VOCAB * DIM * 4,
    )

    out = pl.pallas_call(
        _embed_kernel,
        out_shape=jax.ShapeDtypeStruct((b, DIM), table.dtype),
        grid=(num_tiles,),
        in_specs=[
            # labels: one (tb, 1) tile per grid step
            pl.BlockSpec((tb, 1), lambda i: (i, 0)),
            # table: constant index -> DMA'd once, resident across steps
            pl.BlockSpec((VOCAB, DIM), lambda i: (0, 0)),
        ],
        out_specs=pl.BlockSpec((tb, DIM), lambda i: (i, 0)),
        compiler_params=pltpu.CompilerParams(
            dimension_semantics=("parallel",),
            vmem_limit_bytes=32 * 1024 * 1024,
        ),
        cost_estimate=cost,
    )(flat2d, table)

    return out.reshape(orig_shape + (DIM,))


if __name__ == "__main__":
    key = jax.random.PRNGKey(0)
    k_tab, k_small, k_big = jax.random.split(key, 3)

    # Deterministic parameter init: nn.Embedding default is N(0, 1).
    table = jax.random.normal(k_tab, (VOCAB, DIM), dtype=jnp.float32)

    # Small batch consistent with the module's forward (fast path).
    labels_small = jax.random.randint(k_small, (8,), 0, VOCAB, dtype=jnp.int32)
    out_small = jax.block_until_ready(label2vec(labels_small, table))
    ref_small = jnp.take(table, labels_small, axis=0)
    assert out_small.shape == (8, DIM), out_small.shape
    assert jnp.allclose(out_small, ref_small, atol=1e-5), "small-batch mismatch"

    # Larger, non-tile-multiple batch to exercise the gridded Pallas kernel
    # (multi-tile pipeline + resident table + clipped partial final block).
    labels_big = jax.random.randint(k_big, (3000,), 0, VOCAB, dtype=jnp.int32)
    out_big = jax.block_until_ready(label2vec(labels_big, table))
    ref_big = jnp.take(table, labels_big, axis=0)
    assert out_big.shape == (3000, DIM), out_big.shape
    assert jnp.allclose(out_big, ref_big, atol=1e-5), "kernel mismatch vs gather"

    print("KERNEL_OK")
</pallas_src>

<mosaic_0001>
module attributes {stable_mosaic.version = 11 : i64} {
  func.func @_embed_kernel(%arg0: i32, %arg1: memref<2048x1xi32, #tpu.memory_space<vmem>>, %arg2: memref<10x512xf32, #tpu.memory_space<vmem>>, %arg3: memref<2048x512xf32, #tpu.memory_space<vmem>>) attributes {dimension_semantics = [#tpu.dimension_semantics<parallel>], iteration_bounds = array<i64: 2>, scalar_prefetch = 0 : i64, scratch_operands = 0 : i64, tpu.core_type = #tpu.core_type<tc>, window_params = [{transform_indices = @transform_0, window_bounds = array<i64: 2048, 1>}, {pipeline_mode = #tpu.pipeline_mode<synchronous>, transform_indices = @transform_1, window_bounds = array<i64: 10, 512>}, {transform_indices = @transform_2, window_bounds = array<i64: 2048, 512>}]} {
    %0 = tpu.iota {dimensions = array<i32: 1>} : vector<2048x10xi32>
    %c0 = arith.constant 0 : index
    %c0_0 = arith.constant 0 : index
    %1 = vector.load %arg1[%c0, %c0_0] : memref<2048x1xi32, #tpu.memory_space<vmem>>, vector<2048x1xi32>
    %2 = vector.broadcast %1 : vector<2048x1xi32> to vector<2048x10xi32>
    %3 = arith.cmpi eq, %0, %2 : vector<2048x10xi32>
    %4 = arith.extui %3 : vector<2048x10xi1> to vector<2048x10xi32>
    %5 = arith.sitofp %4 : vector<2048x10xi32> to vector<2048x10xf32>
    %c0_1 = arith.constant 0 : index
    %c0_2 = arith.constant 0 : index
    %6 = vector.load %arg2[%c0_1, %c0_2] : memref<10x512xf32, #tpu.memory_space<vmem>>, vector<10x512xf32>
    %cst = arith.constant dense<0.000000e+00> : vector<2048x512xf32>
    %7 = tpu.matmul %5, %6, %cst {dimension_numbers = #tpu.dot_dimension_numbers<[1], [0], [0], [1], [0, 0, 1, 1], [], []>} : vector<2048x10xf32>, vector<10x512xf32>, vector<2048x512xf32> -> vector<2048x512xf32>
    %c0_3 = arith.constant 0 : index
    %c0_4 = arith.constant 0 : index
    %8 = vector.load %arg3[%c0_3, %c0_4] : memref<2048x512xf32, #tpu.memory_space<vmem>>, vector<2048x512xf32>
    tpu.vector_store %arg3[%c0_3, %c0_4], %7 {strides = array<i32>} : memref<2048x512xf32, #tpu.memory_space<vmem>>, vector<2048x512xf32>,
    return
  }
  func.func @transform_0(%arg0: i32) -> (i32, i32) {
    %c0_i32 = arith.constant 0 : i32
    %c0_i32_0 = arith.constant 0 : i32
    return %arg0, %c0_i32 : i32, i32
  }
  func.func @transform_1(%arg0: i32) -> (i32, i32) {
    %c0_i32 = arith.constant 0 : i32
    %c0_i32_0 = arith.constant 0 : i32
    %c0_i32_1 = arith.constant 0 : i32
    return %c0_i32, %c0_i32_0 : i32, i32
  }
  func.func @transform_2(%arg0: i32) -> (i32, i32) {
    %c0_i32 = arith.constant 0 : i32
    %c0_i32_0 = arith.constant 0 : i32
    return %arg0, %c0_i32 : i32, i32
  }
}

</mosaic_0001>

<llo_original>
// kernel: tpu_custom_call.1
$region0: #{tpu_custom_call.1}
  #allocation0 [shape = 'u32[]', space=smem, size = 0x4, offset = 0x4, fixed_abs, tag = 'smem constant byte address 0x4 - core index']
  #allocation1 [shape = 'u32[144,128]{1,0:T(1,128)}', space=vmem, size = 0x12000, scoped, tag = 'internal scratch']
  %s0 = inlined_call_operand.vmem [shape: s32[4096,1], index: 0, kind: input, shape index: {}]
  %s1 = inlined_call_operand.hbm [shape: f32[10,512], index: 1, kind: input, shape index: {}]
  %s2 = inlined_call_operand.hbm [shape: f32[3000,512], index: 2, kind: output, shape index: {}]
  %s3 = sld [smem:[#allocation0]]
  $region45: #{tpu_custom_call.1} parent=0
    _
  %s5 = ssub.s32 1, %s3
  %s6 = scalar_select 0, %s5, %s3
  $region1: #{tpu_custom_call.1} parent=0
    #allocation2 [shape = 'u8[32768]{0}', space=vmem, size = 0x8000, scoped, tag = 'input window, operand 1, single buffered']
    #allocation3 [shape = 's32[2]{0}', space=sflag, size = 0x8, scoped, tag = 'scoped memory for tpu_custom_call.1']
    #allocation4 [shape = 's32[2]{0}', space=sflag, size = 0x8, scoped, tag = 'scoped memory for tpu_custom_call.1']
    #allocation5 [shape = 'u8[8388608]{0}', space=vmem, size = 0x800000, scoped, tag = 'output window, operand 0']
    %7 = vsyncpa [#allocation3], 0
    %8 = vsyncpa [#allocation4], 0
    %s9 = scalar_lea.sflag [#allocation4], 1
    %10 = vsyncpa %s9, 0
    loop: start=0, step=1, limit=4
    $region2: #{tpu_custom_call.1} parent=1 // loop_pre_header
      _
    $region3: #{tpu_custom_call.1} parent=1 // loop_header
      %s12 = sphi 0, %s16
      %p13 = scmp.ge.s32.totalorder %s12, 4
      %s22 = sphi 0, %s24
      %s25 = sphi 0, %s22
      %s26 = sphi 0, %s25
      %s42 = sphi 0, %s26
      %s46 = sphi 0, %s46
      %s48 = sphi 0, %s46
      %s49 = sphi 0, %s48
      %s63 = sphi 0, %s49
      %s69 = sphi 0, %s71
      %s72 = sphi 0, %s69
      %s73 = sphi 0, %s72
      %s89 = sphi 0, %s73
    $region4: #{tpu_custom_call.1} parent=1 // loop_header_branch
      %15 = sbr.rel (%p13) target = $region8
    $region5: #{tpu_custom_call.1} parent=1 // loop_body
      %s17 = ssub.s32 %s12, 1
      %s18 = ssub.s32 %s12, 2
      %s19 = sadd.s32 %s12, 1
      %s20 = ssub.s32 %s12, %s19
      %p21 = scmp.eq.s32.totalorder %s20, 0
      %s23 = sadd.s32 %s22, 1
      %s24 = scalar_select %p21, %s22, %s23
      %p27 = pneg %p21
      %p28 = scmp.eq.s32.totalorder %s12, 1
      %p29 = por %p27, %p28
      %p30 = scmp.ne.s32.totalorder %s22, %s25
      %p31 = scmp.eq.s32.totalorder %s12, 0
      %p32 = por %p30, %p31
      %p33 = scmp.ne.s32.totalorder %s22, %s25
      %p34 = scmp.eq.s32.totalorder %s17, 1
      %p35 = por %p33, %p34
      %p36 = scmp.ne.s32.totalorder %s25, %s26
      %p37 = scmp.eq.s32.totalorder %s17, 0
      %p38 = por %p36, %p37
      %p39 = scmp.ne.s32.totalorder %s25, %s26
      %p40 = scmp.eq.s32.totalorder %s18, 1
      %p41 = por %p39, %p40
      %p43 = scmp.ne.s32.totalorder %s26, %s42
      %p44 = scmp.eq.s32.totalorder %s18, 0
      %p45 = por %p43, %p44
      %s47 = sadd.s32 %s46, 1
      %p50 = scmp.eq.s32.totalorder %s12, 1
      %p51 = scmp.ne.s32.totalorder %s46, %s48
      %p52 = scmp.eq.s32.totalorder %s12, 0
      %p53 = por %p51, %p52
      %p54 = scmp.ne.s32.totalorder %s46, %s48
      %p55 = scmp.eq.s32.totalorder %s17, 1
      %p56 = por %p54, %p55
      %p57 = scmp.ne.s32.totalorder %s48, %s49
      %p58 = scmp.eq.s32.totalorder %s17, 0
      %p59 = por %p57, %p58
      %p60 = scmp.ne.s32.totalorder %s48, %s49
      %p61 = scmp.eq.s32.totalorder %s18, 1
      %p62 = por %p60, %p61
      %p64 = scmp.ne.s32.totalorder %s49, %s63
      %p65 = scmp.eq.s32.totalorder %s18, 0
      %p66 = por %p64, %p65
      %s67 = ssub.s32 %s12, %s19
      %p68 = scmp.eq.s32.totalorder %s67, 0
      %s70 = sadd.s32 %s69, 1
      %s71 = scalar_select %p68, %s69, %s70
      %p74 = pneg %p68
      %p75 = scmp.eq.s32.totalorder %s12, 1
      %p76 = por %p74, %p75
      %p77 = scmp.ne.s32.totalorder %s69, %s72
      %p78 = scmp.eq.s32.totalorder %s12, 0
      %p79 = por %p77, %p78
      %p80 = scmp.ne.s32.totalorder %s69, %s72
      %p81 = scmp.eq.s32.totalorder %s17, 1
      %p82 = por %p80, %p81
      %p83 = scmp.ne.s32.totalorder %s72, %s73
      %p84 = scmp.eq.s32.totalorder %s17, 0
      %p85 = por %p83, %p84
      %p86 = scmp.ne.s32.totalorder %s72, %s73
      %p87 = scmp.eq.s32.totalorder %s18, 1
      %p88 = por %p86, %p87
      %p90 = scmp.ne.s32.totalorder %s73, %s89
      %p91 = scmp.eq.s32.totalorder %s18, 0
      %p92 = por %p90, %p91
      %p93 = scmp.le.s32.totalorder 1, %s12
      %p94 = scmp.lt.s32.totalorder %s12, 3
      %p95 = pnand %p93, %p94
      %p96 = pneg %p95
      // Predicated region
      $region9: #{tpu_custom_call.1} parent=5 // pred_check
        _
      $region10: #{tpu_custom_call.1} parent=5 // pred_check_branch
        %98 = sbr.rel (%p95) target = $region12
      $region11: #{tpu_custom_call.1} parent=5 // pred_region
        %s99 = ssub.s32 %s12, 1
        // Predicated region
        $region13: #{tpu_custom_call.1} parent=11 // pred_check
          %p100 = pneg %p59
        $region14: #{tpu_custom_call.1} parent=11 // pred_check_branch
          %102 = sbr.rel (%p100) target = $region16
        $region15: #{tpu_custom_call.1} parent=11 // pred_region
          %s104 = ssub.s32 1024, 1024
          %105 = vsyncadd [#allocation3], %s104
          %s106 = sshll.u32 [#allocation2], 4
          %s107 = int_to_ptr.vmem [resolvable:$true] %s106
          %112 = dma.hbm_to_vmem [thread:$0]  %s1, 1024, %s107, [#allocation3], 512, 512, 32
        $region16: #{tpu_custom_call.1} parent=11 // pred_fallthru
          _
      $region12: #{tpu_custom_call.1} parent=5 // pred_fallthru
        _
      %p113 = scmp.lt.s32.totalorder %s12, 2
      // Predicated region
      $region17: #{tpu_custom_call.1} parent=5 // pred_check
        %p114 = pneg %p113
      $region18: #{tpu_custom_call.1} parent=5 // pred_check_branch
        %116 = sbr.rel (%p114) target = $region20
      $region19: #{tpu_custom_call.1} parent=5 // pred_region
        // Predicated region
        $region21: #{tpu_custom_call.1} parent=19 // pred_check
          %p117 = pneg %p32
        $region22: #{tpu_custom_call.1} parent=19 // pred_check_branch
          %119 = sbr.rel (%p117) target = $region24
        $region23: #{tpu_custom_call.1} parent=19 // pred_region
          %s120 = smul.u32 256, %s12
          %p121 = scmp.lt.s32.totalorder %s120, 511
          %s122 = scalar_select %p121, %s120, 511
          %s123 = smul.addr %s122, 8
          %s124 = scalar_lea.vmem %s0, %s123
          %s125 = smul.u32 256, %s12
        $region24: #{tpu_custom_call.1} parent=19 // pred_fallthru
          _
      $region20: #{tpu_custom_call.1} parent=5 // pred_fallthru
        _
      %p126 = scmp.le.s32.totalorder 1, %s12
      %p127 = scmp.lt.s32.totalorder %s12, 3
      %p128 = pnand %p126, %p127
      %p129 = pneg %p128
      // Predicated region
      $region25: #{tpu_custom_call.1} parent=5 // pred_check
        _
      $region26: #{tpu_custom_call.1} parent=5 // pred_check_branch
        %131 = sbr.rel (%p128) target = $region28
      $region27: #{tpu_custom_call.1} parent=5 // pred_region
        %s132 = ssub.s32 %s12, 1
        // Predicated region
        $region29: #{tpu_custom_call.1} parent=27 // pred_check
          %p133 = pneg %p59
        $region30: #{tpu_custom_call.1} parent=27 // pred_check_branch
          %135 = sbr.rel (%p133) target = $region32
        $region31: #{tpu_custom_call.1} parent=27 // pred_region
          %136 = dma.done [#allocation3], 1024
        $region32: #{tpu_custom_call.1} parent=27 // pred_fallthru
          _
        %s137 = smul.u32 256, %s17
        %p138 = scmp.lt.s32.totalorder %s137, 511
        %s139 = scalar_select %p138, %s137, 511
        %s140 = smul.addr %s139, 8
        %s141 = scalar_lea.vmem %s0, %s140
        %p142 = pneg %p38
        %p143 = pneg %p35
        %p144 = pneg %p59
        %p145 = pneg %p56
        %p146 = pneg %p85
        %p147 = pneg %p82
        %s148 = sand.u32 %s72, 1
        %s149 = scalar_lea.sflag [#allocation4], %s148
        %s150 = sand.u32 %s72, 1
        %s151 = smul.addr %s150, 8192
        %s152 = scalar_lea.vmem [#allocation5], %s151
        %s153 = smul.u32 256, %s17
        %p154 = scmp.lt.s32.totalorder %s153, 511
        %s155 = scalar_select %p154, %s153, 511
        %s156 = smul.addr %s155, 8
        %s157 = scalar_lea.vmem %s0, %s156
        %s158 = smul.u32 256, %s17
        %s159 = smul.u32 256, %s17
        %s160 = ssub.s32 375, %s159
        %p161 = scmp.lt.s32.totalorder %s160, 256
        %s162 = scalar_select %p161, %s160, 256
        %s163 = smul.u32 128, %s162
        %s164 = smul.u32 %s163, 4
        %v165 = vlaneseq
        %v166 = vand.u32 %v165, 127
        %v167 = vld [vmem:[%s157] sm:$0xff]
        %v168 = vld [vmem:[%s157 + $0x8] sm:$0xff]
        %v169 = vld [vmem:[%s157 + $0x10] sm:$0xff]
        %v170 = vld [vmem:[%s157 + $0x18] sm:$0xff]
        %v171 = vld [vmem:[%s157 + $0x20] sm:$0xff]
        %v172 = vld [vmem:[%s157 + $0x28] sm:$0xff]
        %v173 = vld [vmem:[%s157 + $0x30] sm:$0xff]
        %v174 = vld [vmem:[%s157 + $0x38] sm:$0xff]
        %v175 = vld [vmem:[%s157 + $0x40] sm:$0xff]
        %v176 = vld [vmem:[%s157 + $0x48] sm:$0xff]
        %v177 = vld [vmem:[%s157 + $0x50] sm:$0xff]
        %v178 = vld [vmem:[%s157 + $0x58] sm:$0xff]
        %v179 = vld [vmem:[%s157 + $0x60] sm:$0xff]
        %v180 = vld [vmem:[%s157 + $0x68] sm:$0xff]
        %v181 = vld [vmem:[%s157 + $0x70] sm:$0xff]
        %v182 = vld [vmem:[%s157 + $0x78] sm:$0xff]
        %v183 = vld [vmem:[%s157 + $0x80] sm:$0xff]
        %v184 = vld [vmem:[%s157 + $0x88] sm:$0xff]
        %v185 = vld [vmem:[%s157 + $0x90] sm:$0xff]
        %v186 = vld [vmem:[%s157 + $0x98] sm:$0xff]
        %v187 = vld [vmem:[%s157 + $0xa0] sm:$0xff]
        %v188 = vld [vmem:[%s157 + $0xa8] sm:$0xff]
        %v189 = vld [vmem:[%s157 + $0xb0] sm:$0xff]
        %v190 = vld [vmem:[%s157 + $0xb8] sm:$0xff]
        %v191 = vld [vmem:[%s157 + $0xc0] sm:$0xff]
        %v192 = vld [vmem:[%s157 + $0xc8] sm:$0xff]
        %v193 = vld [vmem:[%s157 + $0xd0] sm:$0xff]
        %v194 = vld [vmem:[%s157 + $0xd8] sm:$0xff]
        %v195 = vld [vmem:[%s157 + $0xe0] sm:$0xff]
        %v196 = vld [vmem:[%s157 + $0xe8] sm:$0xff]
        %v197 = vld [vmem:[%s157 + $0xf0] sm:$0xff]
        %v198 = vld [vmem:[%s157 + $0xf8] sm:$0xff]
        %v199 = vld [vmem:[%s157 + $0x100] sm:$0xff]
        %v200 = vld [vmem:[%s157 + $0x108] sm:$0xff]
        %v201 = vld [vmem:[%s157 + $0x110] sm:$0xff]
        %v202 = vld [vmem:[%s157 + $0x118] sm:$0xff]
        %v203 = vld [vmem:[%s157 + $0x120] sm:$0xff]
        %v204 = vld [vmem:[%s157 + $0x128] sm:$0xff]
        %v205 = vld [vmem:[%s157 + $0x130] sm:$0xff]
        %v206 = vld [vmem:[%s157 + $0x138] sm:$0xff]
        %v207 = vld [vmem:[%s157 + $0x140] sm:$0xff]
        %v208 = vld [vmem:[%s157 + $0x148] sm:$0xff]
        %v209 = vld [vmem:[%s157 + $0x150] sm:$0xff]
        %v210 = vld [vmem:[%s157 + $0x158] sm:$0xff]
        %v211 = vld [vmem:[%s157 + $0x160] sm:$0xff]
        %v212 = vld [vmem:[%s157 + $0x168] sm:$0xff]
        %v213 = vld [vmem:[%s157 + $0x170] sm:$0xff]
        %v214 = vld [vmem:[%s157 + $0x178] sm:$0xff]
        %v215 = vld [vmem:[%s157 + $0x180] sm:$0xff]
        %v216 = vld [vmem:[%s157 + $0x188] sm:$0xff]
        %v217 = vld [vmem:[%s157 + $0x190] sm:$0xff]
        %v218 = vld [vmem:[%s157 + $0x198] sm:$0xff]
        %v219 = vld [vmem:[%s157 + $0x1a0] sm:$0xff]
        %v220 = vld [vmem:[%s157 + $0x1a8] sm:$0xff]
        %v221 = vld [vmem:[%s157 + $0x1b0] sm:$0xff]
        %v222 = vld [vmem:[%s157 + $0x1b8] sm:$0xff]
        %v223 = vld [vmem:[%s157 + $0x1c0] sm:$0xff]
        %v224 = vld [vmem:[%s157 + $0x1c8] sm:$0xff]
        %v225 = vld [vmem:[%s157 + $0x1d0] sm:$0xff]
        %v226 = vld [vmem:[%s157 + $0x1d8] sm:$0xff]
        %v227 = vld [vmem:[%s157 + $0x1e0] sm:$0xff]
        %v228 = vld [vmem:[%s157 + $0x1e8] sm:$0xff]
        %v229 = vld [vmem:[%s157 + $0x1f0] sm:$0xff]
        %v230 = vld [vmem:[%s157 + $0x1f8] sm:$0xff]
        %v231 = vld [vmem:[%s157 + $0x200] sm:$0xff]
        %v232 = vld [vmem:[%s157 + $0x208] sm:$0xff]
        %v233 = vld [vmem:[%s157 + $0x210] sm:$0xff]
        %v234 = vld [vmem:[%s157 + $0x218] sm:$0xff]
        %v235 = vld [vmem:[%s157 + $0x220] sm:$0xff]
        %v236 = vld [vmem:[%s157 + $0x228] sm:$0xff]
        %v237 = vld [vmem:[%s157 + $0x230] sm:$0xff]
        %v238 = vld [vmem:[%s157 + $0x238] sm:$0xff]
        %v239 = vld [vmem:[%s157 + $0x240] sm:$0xff]
        %v240 = vld [vmem:[%s157 + $0x248] sm:$0xff]
        %v241 = vld [vmem:[%s157 + $0x250] sm:$0xff]
        %v242 = vld [vmem:[%s157 + $0x258] sm:$0xff]
        %v243 = vld [vmem:[%s157 + $0x260] sm:$0xff]
        %v244 = vld [vmem:[%s157 + $0x268] sm:$0xff]
        %v245 = vld [vmem:[%s157 + $0x270] sm:$0xff]
        %v246 = vld [vmem:[%s157 + $0x278] sm:$0xff]
        %v247 = vld [vmem:[%s157 + $0x280] sm:$0xff]
        %v248 = vld [vmem:[%s157 + $0x288] sm:$0xff]
        %v249 = vld [vmem:[%s157 + $0x290] sm:$0xff]
        %v250 = vld [vmem:[%s157 + $0x298] sm:$0xff]
        %v251 = vld [vmem:[%s157 + $0x2a0] sm:$0xff]
        %v252 = vld [vmem:[%s157 + $0x2a8] sm:$0xff]
        %v253 = vld [vmem:[%s157 + $0x2b0] sm:$0xff]
        %v254 = vld [vmem:[%s157 + $0x2b8] sm:$0xff]
        %v255 = vld [vmem:[%s157 + $0x2c0] sm:$0xff]
        %v256 = vld [vmem:[%s157 + $0x2c8] sm:$0xff]
        %v257 = vld [vmem:[%s157 + $0x2d0] sm:$0xff]
        %v258 = vld [vmem:[%s157 + $0x2d8] sm:$0xff]
        %v259 = vld [vmem:[%s157 + $0x2e0] sm:$0xff]
        %v260 = vld [vmem:[%s157 + $0x2e8] sm:$0xff]
        %v261 = vld [vmem:[%s157 + $0x2f0] sm:$0xff]
        %v262 = vld [vmem:[%s157 + $0x2f8] sm:$0xff]
        %v263 = vld [vmem:[%s157 + $0x300] sm:$0xff]
        %v264 = vld [vmem:[%s157 + $0x308] sm:$0xff]
        %v265 = vld [vmem:[%s157 + $0x310] sm:$0xff]
        %v266 = vld [vmem:[%s157 + $0x318] sm:$0xff]
        %v267 = vld [vmem:[%s157 + $0x320] sm:$0xff]
        %v268 = vld [vmem:[%s157 + $0x328] sm:$0xff]
        %v269 = vld [vmem:[%s157 + $0x330] sm:$0xff]
        %v270 = vld [vmem:[%s157 + $0x338] sm:$0xff]
        %v271 = vld [vmem:[%s157 + $0x340] sm:$0xff]
        %v272 = vld [vmem:[%s157 + $0x348] sm:$0xff]
        %v273 = vld [vmem:[%s157 + $0x350] sm:$0xff]
        %v274 = vld [vmem:[%s157 + $0x358] sm:$0xff]
        %v275 = vld [vmem:[%s157 + $0x360] sm:$0xff]
        %v276 = vld [vmem:[%s157 + $0x368] sm:$0xff]
        %v277 = vld [vmem:[%s157 + $0x370] sm:$0xff]
        %v278 = vld [vmem:[%s157 + $0x378] sm:$0xff]
        %v279 = vld [vmem:[%s157 + $0x380] sm:$0xff]
        %v280 = vld [vmem:[%s157 + $0x388] sm:$0xff]
        %v281 = vld [vmem:[%s157 + $0x390] sm:$0xff]
        %v282 = vld [vmem:[%s157 + $0x398] sm:$0xff]
        %v283 = vld [vmem:[%s157 + $0x3a0] sm:$0xff]
        %v284 = vld [vmem:[%s157 + $0x3a8] sm:$0xff]
        %v285 = vld [vmem:[%s157 + $0x3b0] sm:$0xff]
        %v286 = vld [vmem:[%s157 + $0x3b8] sm:$0xff]
        %v287 = vld [vmem:[%s157 + $0x3c0] sm:$0xff]
        %v288 = vld [vmem:[%s157 + $0x3c8] sm:$0xff]
        %v289 = vld [vmem:[%s157 + $0x3d0] sm:$0xff]
        %v290 = vld [vmem:[%s157 + $0x3d8] sm:$0xff]
        %v291 = vld [vmem:[%s157 + $0x3e0] sm:$0xff]
        %v292 = vld [vmem:[%s157 + $0x3e8] sm:$0xff]
        %v293 = vld [vmem:[%s157 + $0x3f0] sm:$0xff]
        %v294 = vld [vmem:[%s157 + $0x3f8] sm:$0xff]
        %v295 = vld [vmem:[%s157 + $0x400] sm:$0xff]
        %v296 = vld [vmem:[%s157 + $0x408] sm:$0xff]
        %v297 = vld [vmem:[%s157 + $0x410] sm:$0xff]
        %v298 = vld [vmem:[%s157 + $0x418] sm:$0xff]
        %v299 = vld [vmem:[%s157 + $0x420] sm:$0xff]
        %v300 = vld [vmem:[%s157 + $0x428] sm:$0xff]
        %v301 = vld [vmem:[%s157 + $0x430] sm:$0xff]
        %v302 = vld [vmem:[%s157 + $0x438] sm:$0xff]
        %v303 = vld [vmem:[%s157 + $0x440] sm:$0xff]
        %v304 = vld [vmem:[%s157 + $0x448] sm:$0xff]
        %v305 = vld [vmem:[%s157 + $0x450] sm:$0xff]
        %v306 = vld [vmem:[%s157 + $0x458] sm:$0xff]
        %v307 = vld [vmem:[%s157 + $0x460] sm:$0xff]
        %v308 = vld [vmem:[%s157 + $0x468] sm:$0xff]
        %v309 = vld [vmem:[%s157 + $0x470] sm:$0xff]
        %v310 = vld [vmem:[%s157 + $0x478] sm:$0xff]
        %v311 = vld [vmem:[%s157 + $0x480] sm:$0xff]
        %v312 = vld [vmem:[%s157 + $0x488] sm:$0xff]
        %v313 = vld [vmem:[%s157 + $0x490] sm:$0xff]
        %v314 = vld [vmem:[%s157 + $0x498] sm:$0xff]
        %v315 = vld [vmem:[%s157 + $0x4a0] sm:$0xff]
        %v316 = vld [vmem:[%s157 + $0x4a8] sm:$0xff]
        %v317 = vld [vmem:[%s157 + $0x4b0] sm:$0xff]
        %v318 = vld [vmem:[%s157 + $0x4b8] sm:$0xff]
        %v319 = vld [vmem:[%s157 + $0x4c0] sm:$0xff]
        %v320 = vld [vmem:[%s157 + $0x4c8] sm:$0xff]
        %v321 = vld [vmem:[%s157 + $0x4d0] sm:$0xff]
        %v322 = vld [vmem:[%s157 + $0x4d8] sm:$0xff]
        %v323 = vld [vmem:[%s157 + $0x4e0] sm:$0xff]
        %v324 = vld [vmem:[%s157 + $0x4e8] sm:$0xff]
        %v325 = vld [vmem:[%s157 + $0x4f0] sm:$0xff]
        %v326 = vld [vmem:[%s157 + $0x4f8] sm:$0xff]
        %v327 = vld [vmem:[%s157 + $0x500] sm:$0xff]
        %v328 = vld [vmem:[%s157 + $0x508] sm:$0xff]
        %v329 = vld [vmem:[%s157 + $0x510] sm:$0xff]
        %v330 = vld [vmem:[%s157 + $0x518] sm:$0xff]
        %v331 = vld [vmem:[%s157 + $0x520] sm:$0xff]
        %v332 = vld [vmem:[%s157 + $0x528] sm:$0xff]
        %v333 = vld [vmem:[%s157 + $0x530] sm:$0xff]
        %v334 = vld [vmem:[%s157 + $0x538] sm:$0xff]
        %v335 = vld [vmem:[%s157 + $0x540] sm:$0xff]
        %v336 = vld [vmem:[%s157 + $0x548] sm:$0xff]
        %v337 = vld [vmem:[%s157 + $0x550] sm:$0xff]
        %v338 = vld [vmem:[%s157 + $0x558] sm:$0xff]
        %v339 = vld [vmem:[%s157 + $0x560] sm:$0xff]
        %v340 = vld [vmem:[%s157 + $0x568] sm:$0xff]
        %v341 = vld [vmem:[%s157 + $0x570] sm:$0xff]
        %v342 = vld [vmem:[%s157 + $0x578] sm:$0xff]
        %v343 = vld [vmem:[%s157 + $0x580] sm:$0xff]
        %v344 = vld [vmem:[%s157 + $0x588] sm:$0xff]
        %v345 = vld [vmem:[%s157 + $0x590] sm:$0xff]
        %v346 = vld [vmem:[%s157 + $0x598] sm:$0xff]
        %v347 = vld [vmem:[%s157 + $0x5a0] sm:$0xff]
        %v348 = vld [vmem:[%s157 + $0x5a8] sm:$0xff]
        %v349 = vld [vmem:[%s157 + $0x5b0] sm:$0xff]
        %v350 = vld [vmem:[%s157 + $0x5b8] sm:$0xff]
        %v351 = vld [vmem:[%s157 + $0x5c0] sm:$0xff]
        %v352 = vld [vmem:[%s157 + $0x5c8] sm:$0xff]
        %v353 = vld [vmem:[%s157 + $0x5d0] sm:$0xff]
        %v354 = vld [vmem:[%s157 + $0x5d8] sm:$0xff]
        %v355 = vld [vmem:[%s157 + $0x5e0] sm:$0xff]
        %v356 = vld [vmem:[%s157 + $0x5e8] sm:$0xff]
        %v357 = vld [vmem:[%s157 + $0x5f0] sm:$0xff]
        %v358 = vld [vmem:[%s157 + $0x5f8] sm:$0xff]
        %v359 = vld [vmem:[%s157 + $0x600] sm:$0xff]
        %v360 = vld [vmem:[%s157 + $0x608] sm:$0xff]
        %v361 = vld [vmem:[%s157 + $0x610] sm:$0xff]
        %v362 = vld [vmem:[%s157 + $0x618] sm:$0xff]
        %v363 = vld [vmem:[%s157 + $0x620] sm:$0xff]
        %v364 = vld [vmem:[%s157 + $0x628] sm:$0xff]
        %v365 = vld [vmem:[%s157 + $0x630] sm:$0xff]
        %v366 = vld [vmem:[%s157 + $0x638] sm:$0xff]
        %v367 = vld [vmem:[%s157 + $0x640] sm:$0xff]
        %v368 = vld [vmem:[%s157 + $0x648] sm:$0xff]
        %v369 = vld [vmem:[%s157 + $0x650] sm:$0xff]
        %v370 = vld [vmem:[%s157 + $0x658] sm:$0xff]
        %v371 = vld [vmem:[%s157 + $0x660] sm:$0xff]
        %v372 = vld [vmem:[%s157 + $0x668] sm:$0xff]
        %v373 = vld [vmem:[%s157 + $0x670] sm:$0xff]
        %v374 = vld [vmem:[%s157 + $0x678] sm:$0xff]
        %v375 = vld [vmem:[%s157 + $0x680] sm:$0xff]
        %v376 = vld [vmem:[%s157 + $0x688] sm:$0xff]
        %v377 = vld [vmem:[%s157 + $0x690] sm:$0xff]
        %v378 = vld [vmem:[%s157 + $0x698] sm:$0xff]
        %v379 = vld [vmem:[%s157 + $0x6a0] sm:$0xff]
        %v380 = vld [vmem:[%s157 + $0x6a8] sm:$0xff]
        %v381 = vld [vmem:[%s157 + $0x6b0] sm:$0xff]
        %v382 = vld [vmem:[%s157 + $0x6b8] sm:$0xff]
        %v383 = vld [vmem:[%s157 + $0x6c0] sm:$0xff]
        %v384 = vld [vmem:[%s157 + $0x6c8] sm:$0xff]
        %v385 = vld [vmem:[%s157 + $0x6d0] sm:$0xff]
        %v386 = vld [vmem:[%s157 + $0x6d8] sm:$0xff]
        %v387 = vld [vmem:[%s157 + $0x6e0] sm:$0xff]
        %v388 = vld [vmem:[%s157 + $0x6e8] sm:$0xff]
        %v389 = vld [vmem:[%s157 + $0x6f0] sm:$0xff]
        %v390 = vld [vmem:[%s157 + $0x6f8] sm:$0xff]
        %v391 = vld [vmem:[%s157 + $0x700] sm:$0xff]
        %v392 = vld [vmem:[%s157 + $0x708] sm:$0xff]
        %v393 = vld [vmem:[%s157 + $0x710] sm:$0xff]
        %v394 = vld [vmem:[%s157 + $0x718] sm:$0xff]
        %v395 = vld [vmem:[%s157 + $0x720] sm:$0xff]
        %v396 = vld [vmem:[%s157 + $0x728] sm:$0xff]
        %v397 = vld [vmem:[%s157 + $0x730] sm:$0xff]
        %v398 = vld [vmem:[%s157 + $0x738] sm:$0xff]
        %v399 = vld [vmem:[%s157 + $0x740] sm:$0xff]
        %v400 = vld [vmem:[%s157 + $0x748] sm:$0xff]
        %v401 = vld [vmem:[%s157 + $0x750] sm:$0xff]
        %v402 = vld [vmem:[%s157 + $0x758] sm:$0xff]
        %v403 = vld [vmem:[%s157 + $0x760] sm:$0xff]
        %v404 = vld [vmem:[%s157 + $0x768] sm:$0xff]
        %v405 = vld [vmem:[%s157 + $0x770] sm:$0xff]
        %v406 = vld [vmem:[%s157 + $0x778] sm:$0xff]
        %v407 = vld [vmem:[%s157 + $0x780] sm:$0xff]
        %v408 = vld [vmem:[%s157 + $0x788] sm:$0xff]
        %v409 = vld [vmem:[%s157 + $0x790] sm:$0xff]
        %v410 = vld [vmem:[%s157 + $0x798] sm:$0xff]
        %v411 = vld [vmem:[%s157 + $0x7a0] sm:$0xff]
        %v412 = vld [vmem:[%s157 + $0x7a8] sm:$0xff]
        %v413 = vld [vmem:[%s157 + $0x7b0] sm:$0xff]
        %v414 = vld [vmem:[%s157 + $0x7b8] sm:$0xff]
        %v415 = vld [vmem:[%s157 + $0x7c0] sm:$0xff]
        %v416 = vld [vmem:[%s157 + $0x7c8] sm:$0xff]
        %v417 = vld [vmem:[%s157 + $0x7d0] sm:$0xff]
        %v418 = vld [vmem:[%s157 + $0x7d8] sm:$0xff]
        %v419 = vld [vmem:[%s157 + $0x7e0] sm:$0xff]
        %v420 = vld [vmem:[%s157 + $0x7e8] sm:$0xff]
        %v421 = vld [vmem:[%s157 + $0x7f0] sm:$0xff]
        %v422 = vld [vmem:[%s157 + $0x7f8] sm:$0xff]
        %423 = vset.pattern.permute.xlu0 0
        %424 = vperm.xlu0 %423, %v167
        %v425 = vpop.permute.xlu0 %424
        %426 = vset.pattern.permute.xlu0 0
        %427 = vperm.xlu0 %426, %v168
        %v428 = vpop.permute.xlu0 %427
        %429 = vset.pattern.permute.xlu0 0
        %430 = vperm.xlu0 %429, %v169
        %v431 = vpop.permute.xlu0 %430
        %432 = vset.pattern.permute.xlu0 0
        %433 = vperm.xlu0 %432, %v170
        %v434 = vpop.permute.xlu0 %433
        %435 = vset.pattern.permute.xlu0 0
        %436 = vperm.xlu0 %435, %v171
        %v437 = vpop.permute.xlu0 %436
        %438 = vset.pattern.permute.xlu0 0
        %439 = vperm.xlu0 %438, %v172
        %v440 = vpop.permute.xlu0 %439
        %441 = vset.pattern.permute.xlu0 0
        %442 = vperm.xlu0 %441, %v173
        %v443 = vpop.permute.xlu0 %442
        %444 = vset.pattern.permute.xlu0 0
        %445 = vperm.xlu0 %444, %v174
        %v446 = vpop.permute.xlu0 %445
        %447 = vset.pattern.permute.xlu0 0
        %448 = vperm.xlu0 %447, %v175
        %v449 = vpop.permute.xlu0 %448
        %450 = vset.pattern.permute.xlu0 0
        %451 = vperm.xlu0 %450, %v176
        %v452 = vpop.permute.xlu0 %451
        %453 = vset.pattern.permute.xlu0 0
        %454 = vperm.xlu0 %453, %v177
        %v455 = vpop.permute.xlu0 %454
        %456 = vset.pattern.permute.xlu0 0
        %457 = vperm.xlu0 %456, %v178
        %v458 = vpop.permute.xlu0 %457
        %459 = vset.pattern.permute.xlu0 0
        %460 = vperm.xlu0 %459, %v179
        %v461 = vpop.permute.xlu0 %460
        %462 = vset.pattern.permute.xlu0 0
        %463 = vperm.xlu0 %462, %v180
        %v464 = vpop.permute.xlu0 %463
        %465 = vset.pattern.permute.xlu0 0
        %466 = vperm.xlu0 %465, %v181
        %v467 = vpop.permute.xlu0 %466
        %468 = vset.pattern.permute.xlu0 0
        %469 = vperm.xlu0 %468, %v182
        %v470 = vpop.permute.xlu0 %469
        %471 = vset.pattern.permute.xlu0 0
        %472 = vperm.xlu0 %471, %v183
        %v473 = vpop.permute.xlu0 %472
        %474 = vset.pattern.permute.xlu0 0
        %475 = vperm.xlu0 %474, %v184
        %v476 = vpop.permute.xlu0 %475
        %477 = vset.pattern.permute.xlu0 0
        %478 = vperm.xlu0 %477, %v185
        %v479 = vpop.permute.xlu0 %478
        %480 = vset.pattern.permute.xlu0 0
        %481 = vperm.xlu0 %480, %v186
        %v482 = vpop.permute.xlu0 %481
        %483 = vset.pattern.permute.xlu0 0
        %484 = vperm.xlu0 %483, %v187
        %v485 = vpop.permute.xlu0 %484
        %486 = vset.pattern.permute.xlu0 0
        %487 = vperm.xlu0 %486, %v188
        %v488 = vpop.permute.xlu0 %487
        %489 = vset.pattern.permute.xlu0 0
        %490 = vperm.xlu0 %489, %v189
        %v491 = vpop.permute.xlu0 %490
        %492 = vset.pattern.permute.xlu0 0
        %493 = vperm.xlu0 %492, %v190
        %v494 = vpop.permute.xlu0 %493
        %495 = vset.pattern.permute.xlu0 0
        %496 = vperm.xlu0 %495, %v191
        %v497 = vpop.permute.xlu0 %496
        %498 = vset.pattern.permute.xlu0 0
        %499 = vperm.xlu0 %498, %v192
        %v500 = vpop.permute.xlu0 %499
        %501 = vset.pattern.permute.xlu0 0
        %502 = vperm.xlu0 %501, %v193
        %v503 = vpop.permute.xlu0 %502
        %504 = vset.pattern.permute.xlu0 0
        %505 = vperm.xlu0 %504, %v194
        %v506 = vpop.permute.xlu0 %505
        %507 = vset.pattern.permute.xlu0 0
        %508 = vperm.xlu0 %507, %v195
        %v509 = vpop.permute.xlu0 %508
        %510 = vset.pattern.permute.xlu0 0
        %511 = vperm.xlu0 %510, %v196
        %v512 = vpop.permute.xlu0 %511
        %513 = vset.pattern.permute.xlu0 0
        %514 = vperm.xlu0 %513, %v197
        %v515 = vpop.permute.xlu0 %514
        %516 = vset.pattern.permute.xlu0 0
        %517 = vperm.xlu0 %516, %v198
        %v518 = vpop.permute.xlu0 %517
        %519 = vset.pattern.permute.xlu0 0
        %520 = vperm.xlu0 %519, %v199
        %v521 = vpop.permute.xlu0 %520
        %522 = vset.pattern.permute.xlu0 0
        %523 = vperm.xlu0 %522, %v200
        %v524 = vpop.permute.xlu0 %523
        %525 = vset.pattern.permute.xlu0 0
        %526 = vperm.xlu0 %525, %v201
        %v527 = vpop.permute.xlu0 %526
        %528 = vset.pattern.permute.xlu0 0
        %529 = vperm.xlu0 %528, %v202
        %v530 = vpop.permute.xlu0 %529
        %531 = vset.pattern.permute.xlu0 0
        %532 = vperm.xlu0 %531, %v203
        %v533 = vpop.permute.xlu0 %532
        %534 = vset.pattern.permute.xlu0 0
        %535 = vperm.xlu0 %534, %v204
        %v536 = vpop.permute.xlu0 %535
        %537 = vset.pattern.permute.xlu0 0
        %538 = vperm.xlu0 %537, %v205
        %v539 = vpop.permute.xlu0 %538
        %540 = vset.pattern.permute.xlu0 0
        %541 = vperm.xlu0 %540, %v206
        %v542 = vpop.permute.xlu0 %541
        %543 = vset.pattern.permute.xlu0 0
        %544 = vperm.xlu0 %543, %v207
        %v545 = vpop.permute.xlu0 %544
        %546 = vset.pattern.permute.xlu0 0
        %547 = vperm.xlu0 %546, %v208
        %v548 = vpop.permute.xlu0 %547
        %549 = vset.pattern.permute.xlu0 0
        %550 = vperm.xlu0 %549, %v209
        %v551 = vpop.permute.xlu0 %550
        %552 = vset.pattern.permute.xlu0 0
        %553 = vperm.xlu0 %552, %v210
        %v554 = vpop.permute.xlu0 %553
        %555 = vset.pattern.permute.xlu0 0
        %556 = vperm.xlu0 %555, %v211
        %v557 = vpop.permute.xlu0 %556
        %558 = vset.pattern.permute.xlu0 0
        %559 = vperm.xlu0 %558, %v212
        %v560 = vpop.permute.xlu0 %559
        %561 = vset.pattern.permute.xlu0 0
        %562 = vperm.xlu0 %561, %v213
        %v563 = vpop.permute.xlu0 %562
        %564 = vset.pattern.permute.xlu0 0
        %565 = vperm.xlu0 %564, %v214
        %v566 = vpop.permute.xlu0 %565
        %567 = vset.pattern.permute.xlu0 0
        %568 = vperm.xlu0 %567, %v215
        %v569 = vpop.permute.xlu0 %568
        %570 = vset.pattern.permute.xlu0 0
        %571 = vperm.xlu0 %570, %v216
        %v572 = vpop.permute.xlu0 %571
        %573 = vset.pattern.permute.xlu0 0
        %574 = vperm.xlu0 %573, %v217
        %v575 = vpop.permute.xlu0 %574
        %576 = vset.pattern.permute.xlu0 0
        %577 = vperm.xlu0 %576, %v218
        %v578 = vpop.permute.xlu0 %577
        %579 = vset.pattern.permute.xlu0 0
        %580 = vperm.xlu0 %579, %v219
        %v581 = vpop.permute.xlu0 %580
        %582 = vset.pattern.permute.xlu0 0
        %583 = vperm.xlu0 %582, %v220
        %v584 = vpop.permute.xlu0 %583
        %585 = vset.pattern.permute.xlu0 0
        %586 = vperm.xlu0 %585, %v221
        %v587 = vpop.permute.xlu0 %586
        %588 = vset.pattern.permute.xlu0 0
        %589 = vperm.xlu0 %588, %v222
        %v590 = vpop.permute.xlu0 %589
        %591 = vset.pattern.permute.xlu0 0
        %592 = vperm.xlu0 %591, %v223
        %v593 = vpop.permute.xlu0 %592
        %594 = vset.pattern.permute.xlu0 0
        %595 = vperm.xlu0 %594, %v224
        %v596 = vpop.permute.xlu0 %595
        %597 = vset.pattern.permute.xlu0 0
        %598 = vperm.xlu0 %597, %v225
        %v599 = vpop.permute.xlu0 %598
        %600 = vset.pattern.permute.xlu0 0
        %601 = vperm.xlu0 %600, %v226
        %v602 = vpop.permute.xlu0 %601
        %603 = vset.pattern.permute.xlu0 0
        %604 = vperm.xlu0 %603, %v227
        %v605 = vpop.permute.xlu0 %604
        %606 = vset.pattern.permute.xlu0 0
        %607 = vperm.xlu0 %606, %v228
        %v608 = vpop.permute.xlu0 %607
        %609 = vset.pattern.permute.xlu0 0
        %610 = vperm.xlu0 %609, %v229
        %v611 = vpop.permute.xlu0 %610
        %612 = vset.pattern.permute.xlu0 0
        %613 = vperm.xlu0 %612, %v230
        %v614 = vpop.permute.xlu0 %613
        %615 = vset.pattern.permute.xlu0 0
        %616 = vperm.xlu0 %615, %v231
        %v617 = vpop.permute.xlu0 %616
        %618 = vset.pattern.permute.xlu0 0
        %619 = vperm.xlu0 %618, %v232
        %v620 = vpop.permute.xlu0 %619
        %621 = vset.pattern.permute.xlu0 0
        %622 = vperm.xlu0 %621, %v233
        %v623 = vpop.permute.xlu0 %622
        %624 = vset.pattern.permute.xlu0 0
        %625 = vperm.xlu0 %624, %v234
        %v626 = vpop.permute.xlu0 %625
        %627 = vset.pattern.permute.xlu0 0
        %628 = vperm.xlu0 %627, %v235
        %v629 = vpop.permute.xlu0 %628
        %630 = vset.pattern.permute.xlu0 0
        %631 = vperm.xlu0 %630, %v236
        %v632 = vpop.permute.xlu0 %631
        %633 = vset.pattern.permute.xlu0 0
        %634 = vperm.xlu0 %633, %v237
        %v635 = vpop.permute.xlu0 %634
        %636 = vset.pattern.permute.xlu0 0
        %637 = vperm.xlu0 %636, %v238
        %v638 = vpop.permute.xlu0 %637
        %639 = vset.pattern.permute.xlu0 0
        %640 = vperm.xlu0 %639, %v239
        %v641 = vpop.permute.xlu0 %640
        %642 = vset.pattern.permute.xlu0 0
        %643 = vperm.xlu0 %642, %v240
        %v644 = vpop.permute.xlu0 %643
        %645 = vset.pattern.permute.xlu0 0
        %646 = vperm.xlu0 %645, %v241
        %v647 = vpop.permute.xlu0 %646
        %648 = vset.pattern.permute.xlu0 0
        %649 = vperm.xlu0 %648, %v242
        %v650 = vpop.permute.xlu0 %649
        %651 = vset.pattern.permute.xlu0 0
        %652 = vperm.xlu0 %651, %v243
        %v653 = vpop.permute.xlu0 %652
        %654 = vset.pattern.permute.xlu0 0
        %655 = vperm.xlu0 %654, %v244
        %v656 = vpop.permute.xlu0 %655
        %657 = vset.pattern.permute.xlu0 0
        %658 = vperm.xlu0 %657, %v245
        %v659 = vpop.permute.xlu0 %658
        %660 = vset.pattern.permute.xlu0 0
        %661 = vperm.xlu0 %660, %v246
        %v662 = vpop.permute.xlu0 %661
        %663 = vset.pattern.permute.xlu0 0
        %664 = vperm.xlu0 %663, %v247
        %v665 = vpop.permute.xlu0 %664
        %666 = vset.pattern.permute.xlu0 0
        %667 = vperm.xlu0 %666, %v248
        %v668 = vpop.permute.xlu0 %667
        %669 = vset.pattern.permute.xlu0 0
        %670 = vperm.xlu0 %669, %v249
        %v671 = vpop.permute.xlu0 %670
        %672 = vset.pattern.permute.xlu0 0
        %673 = vperm.xlu0 %672, %v250
        %v674 = vpop.permute.xlu0 %673
        %675 = vset.pattern.permute.xlu0 0
        %676 = vperm.xlu0 %675, %v251
        %v677 = vpop.permute.xlu0 %676
        %678 = vset.pattern.permute.xlu0 0
        %679 = vperm.xlu0 %678, %v252
        %v680 = vpop.permute.xlu0 %679
        %681 = vset.pattern.permute.xlu0 0
        %682 = vperm.xlu0 %681, %v253
        %v683 = vpop.permute.xlu0 %682
        %684 = vset.pattern.permute.xlu0 0
        %685 = vperm.xlu0 %684, %v254
        %v686 = vpop.permute.xlu0 %685
        %687 = vset.pattern.permute.xlu0 0
        %688 = vperm.xlu0 %687, %v255
        %v689 = vpop.permute.xlu0 %688
        %690 = vset.pattern.permute.xlu0 0
        %691 = vperm.xlu0 %690, %v256
        %v692 = vpop.permute.xlu0 %691
        %693 = vset.pattern.permute.xlu0 0
        %694 = vperm.xlu0 %693, %v257
        %v695 = vpop.permute.xlu0 %694
        %696 = vset.pattern.permute.xlu0 0
        %697 = vperm.xlu0 %696, %v258
        %v698 = vpop.permute.xlu0 %697
        %699 = vset.pattern.permute.xlu0 0
        %700 = vperm.xlu0 %699, %v259
        %v701 = vpop.permute.xlu0 %700
        %702 = vset.pattern.permute.xlu0 0
        %703 = vperm.xlu0 %702, %v260
        %v704 = vpop.permute.xlu0 %703
        %705 = vset.pattern.permute.xlu0 0
        %706 = vperm.xlu0 %705, %v261
        %v707 = vpop.permute.xlu0 %706
        %708 = vset.pattern.permute.xlu0 0
        %709 = vperm.xlu0 %708, %v262
        %v710 = vpop.permute.xlu0 %709
        %711 = vset.pattern.permute.xlu0 0
        %712 = vperm.xlu0 %711, %v263
        %v713 = vpop.permute.xlu0 %712
        %714 = vset.pattern.permute.xlu0 0
        %715 = vperm.xlu0 %714, %v264
        %v716 = vpop.permute.xlu0 %715
        %717 = vset.pattern.permute.xlu0 0
        %718 = vperm.xlu0 %717, %v265
        %v719 = vpop.permute.xlu0 %718
        %720 = vset.pattern.permute.xlu0 0
        %721 = vperm.xlu0 %720, %v266
        %v722 = vpop.permute.xlu0 %721
        %723 = vset.pattern.permute.xlu0 0
        %724 = vperm.xlu0 %723, %v267
        %v725 = vpop.permute.xlu0 %724
        %726 = vset.pattern.permute.xlu0 0
        %727 = vperm.xlu0 %726, %v268
        %v728 = vpop.permute.xlu0 %727
        %729 = vset.pattern.permute.xlu0 0
        %730 = vperm.xlu0 %729, %v269
        %v731 = vpop.permute.xlu0 %730
        %732 = vset.pattern.permute.xlu0 0
        %733 = vperm.xlu0 %732, %v270
        %v734 = vpop.permute.xlu0 %733
        %735 = vset.pattern.permute.xlu0 0
        %736 = vperm.xlu0 %735, %v271
        %v737 = vpop.permute.xlu0 %736
        %738 = vset.pattern.permute.xlu0 0
        %739 = vperm.xlu0 %738, %v272
        %v740 = vpop.permute.xlu0 %739
        %741 = vset.pattern.permute.xlu0 0
        %742 = vperm.xlu0 %741, %v273
        %v743 = vpop.permute.xlu0 %742
        %744 = vset.pattern.permute.xlu0 0
        %745 = vperm.xlu0 %744, %v274
        %v746 = vpop.permute.xlu0 %745
        %747 = vset.pattern.permute.xlu0 0
        %748 = vperm.xlu0 %747, %v275
        %v749 = vpop.permute.xlu0 %748
        %750 = vset.pattern.permute.xlu0 0
        %751 = vperm.xlu0 %750, %v276
        %v752 = vpop.permute.xlu0 %751
        %753 = vset.pattern.permute.xlu0 0
        %754 = vperm.xlu0 %753, %v277
        %v755 = vpop.permute.xlu0 %754
        %756 = vset.pattern.permute.xlu0 0
        %757 = vperm.xlu0 %756, %v278
        %v758 = vpop.permute.xlu0 %757
        %759 = vset.pattern.permute.xlu0 0
        %760 = vperm.xlu0 %759, %v279
        %v761 = vpop.permute.xlu0 %760
        %762 = vset.pattern.permute.xlu0 0
        %763 = vperm.xlu0 %762, %v280
        %v764 = vpop.permute.xlu0 %763
        %765 = vset.pattern.permute.xlu0 0
        %766 = vperm.xlu0 %765, %v281
        %v767 = vpop.permute.xlu0 %766
        %768 = vset.pattern.permute.xlu0 0
        %769 = vperm.xlu0 %768, %v282
        %v770 = vpop.permute.xlu0 %769
        %771 = vset.pattern.permute.xlu0 0
        %772 = vperm.xlu0 %771, %v283
        %v773 = vpop.permute.xlu0 %772
        %774 = vset.pattern.permute.xlu0 0
        %775 = vperm.xlu0 %774, %v284
        %v776 = vpop.permute.xlu0 %775
        %777 = vset.pattern.permute.xlu0 0
        %778 = vperm.xlu0 %777, %v285
        %v779 = vpop.permute.xlu0 %778
        %780 = vset.pattern.permute.xlu0 0
        %781 = vperm.xlu0 %780, %v286
        %v782 = vpop.permute.xlu0 %781
        %783 = vset.pattern.permute.xlu0 0
        %784 = vperm.xlu0 %783, %v287
        %v785 = vpop.permute.xlu0 %784
        %786 = vset.pattern.permute.xlu0 0
        %787 = vperm.xlu0 %786, %v288
        %v788 = vpop.permute.xlu0 %787
        %789 = vset.pattern.permute.xlu0 0
        %790 = vperm.xlu0 %789, %v289
        %v791 = vpop.permute.xlu0 %790
        %792 = vset.pattern.permute.xlu0 0
        %793 = vperm.xlu0 %792, %v290
        %v794 = vpop.permute.xlu0 %793
        %795 = vset.pattern.permute.xlu0 0
        %796 = vperm.xlu0 %795, %v291
        %v797 = vpop.permute.xlu0 %796
        %798 = vset.pattern.permute.xlu0 0
        %799 = vperm.xlu0 %798, %v292
        %v800 = vpop.permute.xlu0 %799
        %801 = vset.pattern.permute.xlu0 0
        %802 = vperm.xlu0 %801, %v293
        %v803 = vpop.permute.xlu0 %802
        %804 = vset.pattern.permute.xlu0 0
        %805 = vperm.xlu0 %804, %v294
        %v806 = vpop.permute.xlu0 %805
        %807 = vset.pattern.permute.xlu0 0
        %808 = vperm.xlu0 %807, %v295
        %v809 = vpop.permute.xlu0 %808
        %810 = vset.pattern.permute.xlu0 0
        %811 = vperm.xlu0 %810, %v296
        %v812 = vpop.permute.xlu0 %811
        %813 = vset.pattern.permute.xlu0 0
        %814 = vperm.xlu0 %813, %v297
        %v815 = vpop.permute.xlu0 %814
        %816 = vset.pattern.permute.xlu0 0
        %817 = vperm.xlu0 %816, %v298
        %v818 = vpop.permute.xlu0 %817
        %819 = vset.pattern.permute.xlu0 0
        %820 = vperm.xlu0 %819, %v299
        %v821 = vpop.permute.xlu0 %820
        %822 = vset.pattern.permute.xlu0 0
        %823 = vperm.xlu0 %822, %v300
        %v824 = vpop.permute.xlu0 %823
        %825 = vset.pattern.permute.xlu0 0
        %826 = vperm.xlu0 %825, %v301
        %v827 = vpop.permute.xlu0 %826
        %828 = vset.pattern.permute.xlu0 0
        %829 = vperm.xlu0 %828, %v302
        %v830 = vpop.permute.xlu0 %829
        %831 = vset.pattern.permute.xlu0 0
        %832 = vperm.xlu0 %831, %v303
        %v833 = vpop.permute.xlu0 %832
        %834 = vset.pattern.permute.xlu0 0
        %835 = vperm.xlu0 %834, %v304
        %v836 = vpop.permute.xlu0 %835
        %837 = vset.pattern.permute.xlu0 0
        %838 = vperm.xlu0 %837, %v305
        %v839 = vpop.permute.xlu0 %838
        %840 = vset.pattern.permute.xlu0 0
        %841 = vperm.xlu0 %840, %v306
        %v842 = vpop.permute.xlu0 %841
        %843 = vset.pattern.permute.xlu0 0
        %844 = vperm.xlu0 %843, %v307
        %v845 = vpop.permute.xlu0 %844
        %846 = vset.pattern.permute.xlu0 0
        %847 = vperm.xlu0 %846, %v308
        %v848 = vpop.permute.xlu0 %847
        %849 = vset.pattern.permute.xlu0 0
        %850 = vperm.xlu0 %849, %v309
        %v851 = vpop.permute.xlu0 %850
        %852 = vset.pattern.permute.xlu0 0
        %853 = vperm.xlu0 %852, %v310
        %v854 = vpop.permute.xlu0 %853
        %855 = vset.pattern.permute.xlu0 0
        %856 = vperm.xlu0 %855, %v311
        %v857 = vpop.permute.xlu0 %856
        %858 = vset.pattern.permute.xlu0 0
        %859 = vperm.xlu0 %858, %v312
        %v860 = vpop.permute.xlu0 %859
        %861 = vset.pattern.permute.xlu0 0
        %862 = vperm.xlu0 %861, %v313
        %v863 = vpop.permute.xlu0 %862
        %864 = vset.pattern.permute.xlu0 0
        %865 = vperm.xlu0 %864, %v314
        %v866 = vpop.permute.xlu0 %865
        %867 = vset.pattern.permute.xlu0 0
        %868 = vperm.xlu0 %867, %v315
        %v869 = vpop.permute.xlu0 %868
        %870 = vset.pattern.permute.xlu0 0
        %871 = vperm.xlu0 %870, %v316
        %v872 = vpop.permute.xlu0 %871
        %873 = vset.pattern.permute.xlu0 0
        %874 = vperm.xlu0 %873, %v317
        %v875 = vpop.permute.xlu0 %874
        %876 = vset.pattern.permute.xlu0 0
        %877 = vperm.xlu0 %876, %v318
        %v878 = vpop.permute.xlu0 %877
        %879 = vset.pattern.permute.xlu0 0
        %880 = vperm.xlu0 %879, %v319
        %v881 = vpop.permute.xlu0 %880
        %882 = vset.pattern.permute.xlu0 0
        %883 = vperm.xlu0 %882, %v320
        %v884 = vpop.permute.xlu0 %883
        %885 = vset.pattern.permute.xlu0 0
        %886 = vperm.xlu0 %885, %v321
        %v887 = vpop.permute.xlu0 %886
        %888 = vset.pattern.permute.xlu0 0
        %889 = vperm.xlu0 %888, %v322
        %v890 = vpop.permute.xlu0 %889
        %891 = vset.pattern.permute.xlu0 0
        %892 = vperm.xlu0 %891, %v323
        %v893 = vpop.permute.xlu0 %892
        %894 = vset.pattern.permute.xlu0 0
        %895 = vperm.xlu0 %894, %v324
        %v896 = vpop.permute.xlu0 %895
        %897 = vset.pattern.permute.xlu0 0
        %898 = vperm.xlu0 %897, %v325
        %v899 = vpop.permute.xlu0 %898
        %900 = vset.pattern.permute.xlu0 0
        %901 = vperm.xlu0 %900, %v326
        %v902 = vpop.permute.xlu0 %901
        %903 = vset.pattern.permute.xlu0 0
        %904 = vperm.xlu0 %903, %v327
        %v905 = vpop.permute.xlu0 %904
        %906 = vset.pattern.permute.xlu0 0
        %907 = vperm.xlu0 %906, %v328
        %v908 = vpop.permute.xlu0 %907
        %909 = vset.pattern.permute.xlu0 0
        %910 = vperm.xlu0 %909, %v329
        %v911 = vpop.permute.xlu0 %910
        %912 = vset.pattern.permute.xlu0 0
        %913 = vperm.xlu0 %912, %v330
        %v914 = vpop.permute.xlu0 %913
        %915 = vset.pattern.permute.xlu0 0
        %916 = vperm.xlu0 %915, %v331
        %v917 = vpop.permute.xlu0 %916
        %918 = vset.pattern.permute.xlu0 0
        %919 = vperm.xlu0 %918, %v332
        %v920 = vpop.permute.xlu0 %919
        %921 = vset.pattern.permute.xlu0 0
        %922 = vperm.xlu0 %921, %v333
        %v923 = vpop.permute.xlu0 %922
        %924 = vset.pattern.permute.xlu0 0
        %925 = vperm.xlu0 %924, %v334
        %v926 = vpop.permute.xlu0 %925
        %927 = vset.pattern.permute.xlu0 0
        %928 = vperm.xlu0 %927, %v335
        %v929 = vpop.permute.xlu0 %928
        %930 = vset.pattern.permute.xlu0 0
        %931 = vperm.xlu0 %930, %v336
        %v932 = vpop.permute.xlu0 %931
        %933 = vset.pattern.permute.xlu0 0
        %934 = vperm.xlu0 %933, %v337
        %v935 = vpop.permute.xlu0 %934
        %936 = vset.pattern.permute.xlu0 0
        %937 = vperm.xlu0 %936, %v338
        %v938 = vpop.permute.xlu0 %937
        %939 = vset.pattern.permute.xlu0 0
        %940 = vperm.xlu0 %939, %v339
        %v941 = vpop.permute.xlu0 %940
        %942 = vset.pattern.permute.xlu0 0
        %943 = vperm.xlu0 %942, %v340
        %v944 = vpop.permute.xlu0 %943
        %945 = vset.pattern.permute.xlu0 0
        %946 = vperm.xlu0 %945, %v341
        %v947 = vpop.permute.xlu0 %946
        %948 = vset.pattern.permute.xlu0 0
        %949 = vperm.xlu0 %948, %v342
        %v950 = vpop.permute.xlu0 %949
        %951 = vset.pattern.permute.xlu0 0
        %952 = vperm.xlu0 %951, %v343
        %v953 = vpop.permute.xlu0 %952
        %954 = vset.pattern.permute.xlu0 0
        %955 = vperm.xlu0 %954, %v344
        %v956 = vpop.permute.xlu0 %955
        %957 = vset.pattern.permute.xlu0 0
        %958 = vperm.xlu0 %957, %v345
        %v959 = vpop.permute.xlu0 %958
        %960 = vset.pattern.permute.xlu0 0
        %961 = vperm.xlu0 %960, %v346
        %v962 = vpop.permute.xlu0 %961
        %963 = vset.pattern.permute.xlu0 0
        %964 = vperm.xlu0 %963, %v347
        %v965 = vpop.permute.xlu0 %964
        %966 = vset.pattern.permute.xlu0 0
        %967 = vperm.xlu0 %966, %v348
        %v968 = vpop.permute.xlu0 %967
        %969 = vset.pattern.permute.xlu0 0
        %970 = vperm.xlu0 %969, %v349
        %v971 = vpop.permute.xlu0 %970
        %972 = vset.pattern.permute.xlu0 0
        %973 = vperm.xlu0 %972, %v350
        %v974 = vpop.permute.xlu0 %973
        %975 = vset.pattern.permute.xlu0 0
        %976 = vperm.xlu0 %975, %v351
        %v977 = vpop.permute.xlu0 %976
        %978 = vset.pattern.permute.xlu0 0
        %979 = vperm.xlu0 %978, %v352
        %v980 = vpop.permute.xlu0 %979
        %981 = vset.pattern.permute.xlu0 0
        %982 = vperm.xlu0 %981, %v353
        %v983 = vpop.permute.xlu0 %982
        %984 = vset.pattern.permute.xlu0 0
        %985 = vperm.xlu0 %984, %v354
        %v986 = vpop.permute.xlu0 %985
        %987 = vset.pattern.permute.xlu0 0
        %988 = vperm.xlu0 %987, %v355
        %v989 = vpop.permute.xlu0 %988
        %990 = vset.pattern.permute.xlu0 0
        %991 = vperm.xlu0 %990, %v356
        %v992 = vpop.permute.xlu0 %991
        %993 = vset.pattern.permute.xlu0 0
        %994 = vperm.xlu0 %993, %v357
        %v995 = vpop.permute.xlu0 %994
        %996 = vset.pattern.permute.xlu0 0
        %997 = vperm.xlu0 %996, %v358
        %v998 = vpop.permute.xlu0 %997
        %999 = vset.pattern.permute.xlu0 0
        %1000 = vperm.xlu0 %999, %v359
        %v1001 = vpop.permute.xlu0 %1000
        %1002 = vset.pattern.permute.xlu0 0
        %1003 = vperm.xlu0 %1002, %v360
        %v1004 = vpop.permute.xlu0 %1003
        %1005 = vset.pattern.permute.xlu0 0
        %1006 = vperm.xlu0 %1005, %v361
        %v1007 = vpop.permute.xlu0 %1006
        %1008 = vset.pattern.permute.xlu0 0
        %1009 = vperm.xlu0 %1008, %v362
        %v1010 = vpop.permute.xlu0 %1009
        %1011 = vset.pattern.permute.xlu0 0
        %1012 = vperm.xlu0 %1011, %v363
        %v1013 = vpop.permute.xlu0 %1012
        %1014 = vset.pattern.permute.xlu0 0
        %1015 = vperm.xlu0 %1014, %v364
        %v1016 = vpop.permute.xlu0 %1015
        %1017 = vset.pattern.permute.xlu0 0
        %1018 = vperm.xlu0 %1017, %v365
        %v1019 = vpop.permute.xlu0 %1018
        %1020 = vset.pattern.permute.xlu0 0
        %1021 = vperm.xlu0 %1020, %v366
        %v1022 = vpop.permute.xlu0 %1021
        %1023 = vset.pattern.permute.xlu0 0
        %1024 = vperm.xlu0 %1023, %v367
        %v1025 = vpop.permute.xlu0 %1024
        %1026 = vset.pattern.permute.xlu0 0
        %1027 = vperm.xlu0 %1026, %v368
        %v1028 = vpop.permute.xlu0 %1027
        %1029 = vset.pattern.permute.xlu0 0
        %1030 = vperm.xlu0 %1029, %v369
        %v1031 = vpop.permute.xlu0 %1030
        %1032 = vset.pattern.permute.xlu0 0
        %1033 = vperm.xlu0 %1032, %v370
        %v1034 = vpop.permute.xlu0 %1033
        %1035 = vset.pattern.permute.xlu0 0
        %1036 = vperm.xlu0 %1035, %v371
        %v1037 = vpop.permute.xlu0 %1036
        %1038 = vset.pattern.permute.xlu0 0
        %1039 = vperm.xlu0 %1038, %v372
        %v1040 = vpop.permute.xlu0 %1039
        %1041 = vset.pattern.permute.xlu0 0
        %1042 = vperm.xlu0 %1041, %v373
        %v1043 = vpop.permute.xlu0 %1042
        %1044 = vset.pattern.permute.xlu0 0
        %1045 = vperm.xlu0 %1044, %v374
        %v1046 = vpop.permute.xlu0 %1045
        %1047 = vset.pattern.permute.xlu0 0
        %1048 = vperm.xlu0 %1047, %v375
        %v1049 = vpop.permute.xlu0 %1048
        %1050 = vset.pattern.permute.xlu0 0
        %1051 = vperm.xlu0 %1050, %v376
        %v1052 = vpop.permute.xlu0 %1051
        %1053 = vset.pattern.permute.xlu0 0
        %1054 = vperm.xlu0 %1053, %v377
        %v1055 = vpop.permute.xlu0 %1054
        %1056 = vset.pattern.permute.xlu0 0
        %1057 = vperm.xlu0 %1056, %v378
        %v1058 = vpop.permute.xlu0 %1057
        %1059 = vset.pattern.permute.xlu0 0
        %1060 = vperm.xlu0 %1059, %v379
        %v1061 = vpop.permute.xlu0 %1060
        %1062 = vset.pattern.permute.xlu0 0
        %1063 = vperm.xlu0 %1062, %v380
        %v1064 = vpop.permute.xlu0 %1063
        %1065 = vset.pattern.permute.xlu0 0
        %1066 = vperm.xlu0 %1065, %v381
        %v1067 = vpop.permute.xlu0 %1066
        %1068 = vset.pattern.permute.xlu0 0
        %1069 = vperm.xlu0 %1068, %v382
        %v1070 = vpop.permute.xlu0 %1069
        %1071 = vset.pattern.permute.xlu0 0
        %1072 = vperm.xlu0 %1071, %v383
        %v1073 = vpop.permute.xlu0 %1072
        %1074 = vset.pattern.permute.xlu0 0
        %1075 = vperm.xlu0 %1074, %v384
        %v1076 = vpop.permute.xlu0 %1075
        %1077 = vset.pattern.permute.xlu0 0
        %1078 = vperm.xlu0 %1077, %v385
        %v1079 = vpop.permute.xlu0 %1078
        %1080 = vset.pattern.permute.xlu0 0
        %1081 = vperm.xlu0 %1080, %v386
        %v1082 = vpop.permute.xlu0 %1081
        %1083 = vset.pattern.permute.xlu0 0
        %1084 = vperm.xlu0 %1083, %v387
        %v1085 = vpop.permute.xlu0 %1084
        %1086 = vset.pattern.permute.xlu0 0
        %1087 = vperm.xlu0 %1086, %v388
        %v1088 = vpop.permute.xlu0 %1087
        %1089 = vset.pattern.permute.xlu0 0
        %1090 = vperm.xlu0 %1089, %v389
        %v1091 = vpop.permute.xlu0 %1090
        %1092 = vset.pattern.permute.xlu0 0
        %1093 = vperm.xlu0 %1092, %v390
        %v1094 = vpop.permute.xlu0 %1093
        %1095 = vset.pattern.permute.xlu0 0
        %1096 = vperm.xlu0 %1095, %v391
        %v1097 = vpop.permute.xlu0 %1096
        %1098 = vset.pattern.permute.xlu0 0
        %1099 = vperm.xlu0 %1098, %v392
        %v1100 = vpop.permute.xlu0 %1099
        %1101 = vset.pattern.permute.xlu0 0
        %1102 = vperm.xlu0 %1101, %v393
        %v1103 = vpop.permute.xlu0 %1102
        %1104 = vset.pattern.permute.xlu0 0
        %1105 = vperm.xlu0 %1104, %v394
        %v1106 = vpop.permute.xlu0 %1105
        %1107 = vset.pattern.permute.xlu0 0
        %1108 = vperm.xlu0 %1107, %v395
        %v1109 = vpop.permute.xlu0 %1108
        %1110 = vset.pattern.permute.xlu0 0
        %1111 = vperm.xlu0 %1110, %v396
        %v1112 = vpop.permute.xlu0 %1111
        %1113 = vset.pattern.permute.xlu0 0
        %1114 = vperm.xlu0 %1113, %v397
        %v1115 = vpop.permute.xlu0 %1114
        %1116 = vset.pattern.permute.xlu0 0
        %1117 = vperm.xlu0 %1116, %v398
        %v1118 = vpop.permute.xlu0 %1117
        %1119 = vset.pattern.permute.xlu0 0
        %1120 = vperm.xlu0 %1119, %v399
        %v1121 = vpop.permute.xlu0 %1120
        %1122 = vset.pattern.permute.xlu0 0
        %1123 = vperm.xlu0 %1122, %v400
        %v1124 = vpop.permute.xlu0 %1123
        %1125 = vset.pattern.permute.xlu0 0
        %1126 = vperm.xlu0 %1125, %v401
        %v1127 = vpop.permute.xlu0 %1126
        %1128 = vset.pattern.permute.xlu0 0
        %1129 = vperm.xlu0 %1128, %v402
        %v1130 = vpop.permute.xlu0 %1129
        %1131 = vset.pattern.permute.xlu0 0
        %1132 = vperm.xlu0 %1131, %v403
        %v1133 = vpop.permute.xlu0 %1132
        %1134 = vset.pattern.permute.xlu0 0
        %1135 = vperm.xlu0 %1134, %v404
        %v1136 = vpop.permute.xlu0 %1135
        %1137 = vset.pattern.permute.xlu0 0
        %1138 = vperm.xlu0 %1137, %v405
        %v1139 = vpop.permute.xlu0 %1138
        %1140 = vset.pattern.permute.xlu0 0
        %1141 = vperm.xlu0 %1140, %v406
        %v1142 = vpop.permute.xlu0 %1141
        %1143 = vset.pattern.permute.xlu0 0
        %1144 = vperm.xlu0 %1143, %v407
        %v1145 = vpop.permute.xlu0 %1144
        %1146 = vset.pattern.permute.xlu0 0
        %1147 = vperm.xlu0 %1146, %v408
        %v1148 = vpop.permute.xlu0 %1147
        %1149 = vset.pattern.permute.xlu0 0
        %1150 = vperm.xlu0 %1149, %v409
        %v1151 = vpop.permute.xlu0 %1150
        %1152 = vset.pattern.permute.xlu0 0
        %1153 = vperm.xlu0 %1152, %v410
        %v1154 = vpop.permute.xlu0 %1153
        %1155 = vset.pattern.permute.xlu0 0
        %1156 = vperm.xlu0 %1155, %v411
        %v1157 = vpop.permute.xlu0 %1156
        %1158 = vset.pattern.permute.xlu0 0
        %1159 = vperm.xlu0 %1158, %v412
        %v1160 = vpop.permute.xlu0 %1159
        %1161 = vset.pattern.permute.xlu0 0
        %1162 = vperm.xlu0 %1161, %v413
        %v1163 = vpop.permute.xlu0 %1162
        %1164 = vset.pattern.permute.xlu0 0
        %1165 = vperm.xlu0 %1164, %v414
        %v1166 = vpop.permute.xlu0 %1165
        %1167 = vset.pattern.permute.xlu0 0
        %1168 = vperm.xlu0 %1167, %v415
        %v1169 = vpop.permute.xlu0 %1168
        %1170 = vset.pattern.permute.xlu0 0
        %1171 = vperm.xlu0 %1170, %v416
        %v1172 = vpop.permute.xlu0 %1171
        %1173 = vset.pattern.permute.xlu0 0
        %1174 = vperm.xlu0 %1173, %v417
        %v1175 = vpop.permute.xlu0 %1174
        %1176 = vset.pattern.permute.xlu0 0
        %1177 = vperm.xlu0 %1176, %v418
        %v1178 = vpop.permute.xlu0 %1177
        %1179 = vset.pattern.permute.xlu0 0
        %1180 = vperm.xlu0 %1179, %v419
        %v1181 = vpop.permute.xlu0 %1180
        %1182 = vset.pattern.permute.xlu0 0
        %1183 = vperm.xlu0 %1182, %v420
        %v1184 = vpop.permute.xlu0 %1183
        %1185 = vset.pattern.permute.xlu0 0
        %1186 = vperm.xlu0 %1185, %v421
        %v1187 = vpop.permute.xlu0 %1186
        %1188 = vset.pattern.permute.xlu0 0
        %1189 = vperm.xlu0 %1188, %v422
        %v1190 = vpop.permute.xlu0 %1189
        %vm1191 = vcmp.eq.s32.totalorder %v166, %v425
        %vm1192 = vcmp.eq.s32.totalorder %v166, %v428
        %vm1193 = vcmp.eq.s32.totalorder %v166, %v431
        %vm1194 = vcmp.eq.s32.totalorder %v166, %v434
        %vm1195 = vcmp.eq.s32.totalorder %v166, %v437
        %vm1196 = vcmp.eq.s32.totalorder %v166, %v440
        %vm1197 = vcmp.eq.s32.totalorder %v166, %v443
        %vm1198 = vcmp.eq.s32.totalorder %v166, %v446
        %vm1199 = vcmp.eq.s32.totalorder %v166, %v449
        %vm1200 = vcmp.eq.s32.totalorder %v166, %v452
        %vm1201 = vcmp.eq.s32.totalorder %v166, %v455
        %vm1202 = vcmp.eq.s32.totalorder %v166, %v458
        %vm1203 = vcmp.eq.s32.totalorder %v166, %v461
        %vm1204 = vcmp.eq.s32.totalorder %v166, %v464
        %vm1205 = vcmp.eq.s32.totalorder %v166, %v467
        %vm1206 = vcmp.eq.s32.totalorder %v166, %v470
        %vm1207 = vcmp.eq.s32.totalorder %v166, %v473
        %vm1208 = vcmp.eq.s32.totalorder %v166, %v476
        %vm1209 = vcmp.eq.s32.totalorder %v166, %v479
        %vm1210 = vcmp.eq.s32.totalorder %v166, %v482
        %vm1211 = vcmp.eq.s32.totalorder %v166, %v485
        %vm1212 = vcmp.eq.s32.totalorder %v166, %v488
        %vm1213 = vcmp.eq.s32.totalorder %v166, %v491
        %vm1214 = vcmp.eq.s32.totalorder %v166, %v494
        %vm1215 = vcmp.eq.s32.totalorder %v166, %v497
        %vm1216 = vcmp.eq.s32.totalorder %v166, %v500
        %vm1217 = vcmp.eq.s32.totalorder %v166, %v503
        %vm1218 = vcmp.eq.s32.totalorder %v166, %v506
        %vm1219 = vcmp.eq.s32.totalorder %v166, %v509
        %vm1220 = vcmp.eq.s32.totalorder %v166, %v512
        %vm1221 = vcmp.eq.s32.totalorder %v166, %v515
        %vm1222 = vcmp.eq.s32.totalorder %v166, %v518
        %vm1223 = vcmp.eq.s32.totalorder %v166, %v521
        %vm1224 = vcmp.eq.s32.totalorder %v166, %v524
        %vm1225 = vcmp.eq.s32.totalorder %v166, %v527
        %vm1226 = vcmp.eq.s32.totalorder %v166, %v530
        %vm1227 = vcmp.eq.s32.totalorder %v166, %v533
        %vm1228 = vcmp.eq.s32.totalorder %v166, %v536
        %vm1229 = vcmp.eq.s32.totalorder %v166, %v539
        %vm1230 = vcmp.eq.s32.totalorder %v166, %v542
        %vm1231 = vcmp.eq.s32.totalorder %v166, %v545
        %vm1232 = vcmp.eq.s32.totalorder %v166, %v548
        %vm1233 = vcmp.eq.s32.totalorder %v166, %v551
        %vm1234 = vcmp.eq.s32.totalorder %v166, %v554
        %vm1235 = vcmp.eq.s32.totalorder %v166, %v557
        %vm1236 = vcmp.eq.s32.totalorder %v166, %v560
        %vm1237 = vcmp.eq.s32.totalorder %v166, %v563
        %vm1238 = vcmp.eq.s32.totalorder %v166, %v566
        %vm1239 = vcmp.eq.s32.totalorder %v166, %v569
        %vm1240 = vcmp.eq.s32.totalorder %v166, %v572
        %vm1241 = vcmp.eq.s32.totalorder %v166, %v575
        %vm1242 = vcmp.eq.s32.totalorder %v166, %v578
        %vm1243 = vcmp.eq.s32.totalorder %v166, %v581
        %vm1244 = vcmp.eq.s32.totalorder %v166, %v584
        %vm1245 = vcmp.eq.s32.totalorder %v166, %v587
        %vm1246 = vcmp.eq.s32.totalorder %v166, %v590
        %vm1247 = vcmp.eq.s32.totalorder %v166, %v593
        %vm1248 = vcmp.eq.s32.totalorder %v166, %v596
        %vm1249 = vcmp.eq.s32.totalorder %v166, %v599
        %vm1250 = vcmp.eq.s32.totalorder %v166, %v602
        %vm1251 = vcmp.eq.s32.totalorder %v166, %v605
        %vm1252 = vcmp.eq.s32.totalorder %v166, %v608
        %vm1253 = vcmp.eq.s32.totalorder %v166, %v611
        %vm1254 = vcmp.eq.s32.totalorder %v166, %v614
        %vm1255 = vcmp.eq.s32.totalorder %v166, %v617
        %vm1256 = vcmp.eq.s32.totalorder %v166, %v620
        %vm1257 = vcmp.eq.s32.totalorder %v166, %v623
        %vm1258 = vcmp.eq.s32.totalorder %v166, %v626
        %vm1259 = vcmp.eq.s32.totalorder %v166, %v629
        %vm1260 = vcmp.eq.s32.totalorder %v166, %v632
        %vm1261 = vcmp.eq.s32.totalorder %v166, %v635
        %vm1262 = vcmp.eq.s32.totalorder %v166, %v638
        %vm1263 = vcmp.eq.s32.totalorder %v166, %v641
        %vm1264 = vcmp.eq.s32.totalorder %v166, %v644
        %vm1265 = vcmp.eq.s32.totalorder %v166, %v647
        %vm1266 = vcmp.eq.s32.totalorder %v166, %v650
        %vm1267 = vcmp.eq.s32.totalorder %v166, %v653
        %vm1268 = vcmp.eq.s32.totalorder %v166, %v656
        %vm1269 = vcmp.eq.s32.totalorder %v166, %v659
        %vm1270 = vcmp.eq.s32.totalorder %v166, %v662
        %vm1271 = vcmp.eq.s32.totalorder %v166, %v665
        %vm1272 = vcmp.eq.s32.totalorder %v166, %v668
        %vm1273 = vcmp.eq.s32.totalorder %v166, %v671
        %vm1274 = vcmp.eq.s32.totalorder %v166, %v674
        %vm1275 = vcmp.eq.s32.totalorder %v166, %v677
        %vm1276 = vcmp.eq.s32.totalorder %v166, %v680
        %vm1277 = vcmp.eq.s32.totalorder %v166, %v683
        %vm1278 = vcmp.eq.s32.totalorder %v166, %v686
        %vm1279 = vcmp.eq.s32.totalorder %v166, %v689
        %vm1280 = vcmp.eq.s32.totalorder %v166, %v692
        %vm1281 = vcmp.eq.s32.totalorder %v166, %v695
        %vm1282 = vcmp.eq.s32.totalorder %v166, %v698
        %vm1283 = vcmp.eq.s32.totalorder %v166, %v701
        %vm1284 = vcmp.eq.s32.totalorder %v166, %v704
        %vm1285 = vcmp.eq.s32.totalorder %v166, %v707
        %vm1286 = vcmp.eq.s32.totalorder %v166, %v710
        %vm1287 = vcmp.eq.s32.totalorder %v166, %v713
        %vm1288 = vcmp.eq.s32.totalorder %v166, %v716
        %vm1289 = vcmp.eq.s32.totalorder %v166, %v719
        %vm1290 = vcmp.eq.s32.totalorder %v166, %v722
        %vm1291 = vcmp.eq.s32.totalorder %v166, %v725
        %vm1292 = vcmp.eq.s32.totalorder %v166, %v728
        %vm1293 = vcmp.eq.s32.totalorder %v166, %v731
        %vm1294 = vcmp.eq.s32.totalorder %v166, %v734
        %vm1295 = vcmp.eq.s32.totalorder %v166, %v737
        %vm1296 = vcmp.eq.s32.totalorder %v166, %v740
        %vm1297 = vcmp.eq.s32.totalorder %v166, %v743
        %vm1298 = vcmp.eq.s32.totalorder %v166, %v746
        %vm1299 = vcmp.eq.s32.totalorder %v166, %v749
        %vm1300 = vcmp.eq.s32.totalorder %v166, %v752
        %vm1301 = vcmp.eq.s32.totalorder %v166, %v755
        %vm1302 = vcmp.eq.s32.totalorder %v166, %v758
        %vm1303 = vcmp.eq.s32.totalorder %v166, %v761
        %vm1304 = vcmp.eq.s32.totalorder %v166, %v764
        %vm1305 = vcmp.eq.s32.totalorder %v166, %v767
        %vm1306 = vcmp.eq.s32.totalorder %v166, %v770
        %vm1307 = vcmp.eq.s32.totalorder %v166, %v773
        %vm1308 = vcmp.eq.s32.totalorder %v166, %v776
        %vm1309 = vcmp.eq.s32.totalorder %v166, %v779
        %vm1310 = vcmp.eq.s32.totalorder %v166, %v782
        %vm1311 = vcmp.eq.s32.totalorder %v166, %v785
        %vm1312 = vcmp.eq.s32.totalorder %v166, %v788
        %vm1313 = vcmp.eq.s32.totalorder %v166, %v791
        %vm1314 = vcmp.eq.s32.totalorder %v166, %v794
        %vm1315 = vcmp.eq.s32.totalorder %v166, %v797
        %vm1316 = vcmp.eq.s32.totalorder %v166, %v800
        %vm1317 = vcmp.eq.s32.totalorder %v166, %v803
        %vm1318 = vcmp.eq.s32.totalorder %v166, %v806
        %vm1319 = vcmp.eq.s32.totalorder %v166, %v809
        %vm1320 = vcmp.eq.s32.totalorder %v166, %v812
        %vm1321 = vcmp.eq.s32.totalorder %v166, %v815
        %vm1322 = vcmp.eq.s32.totalorder %v166, %v818
        %vm1323 = vcmp.eq.s32.totalorder %v166, %v821
        %vm1324 = vcmp.eq.s32.totalorder %v166, %v824
        %vm1325 = vcmp.eq.s32.totalorder %v166, %v827
        %vm1326 = vcmp.eq.s32.totalorder %v166, %v830
        %vm1327 = vcmp.eq.s32.totalorder %v166, %v833
        %vm1328 = vcmp.eq.s32.totalorder %v166, %v836
        %vm1329 = vcmp.eq.s32.totalorder %v166, %v839
        %vm1330 = vcmp.eq.s32.totalorder %v166, %v842
        %vm1331 = vcmp.eq.s32.totalorder %v166, %v845
        %vm1332 = vcmp.eq.s32.totalorder %v166, %v848
        %vm1333 = vcmp.eq.s32.totalorder %v166, %v851
        %vm1334 = vcmp.eq.s32.totalorder %v166, %v854
        %vm1335 = vcmp.eq.s32.totalorder %v166, %v857
        %vm1336 = vcmp.eq.s32.totalorder %v166, %v860
        %vm1337 = vcmp.eq.s32.totalorder %v166, %v863
        %vm1338 = vcmp.eq.s32.totalorder %v166, %v866
        %vm1339 = vcmp.eq.s32.totalorder %v166, %v869
        %vm1340 = vcmp.eq.s32.totalorder %v166, %v872
        %vm1341 = vcmp.eq.s32.totalorder %v166, %v875
        %vm1342 = vcmp.eq.s32.totalorder %v166, %v878
        %vm1343 = vcmp.eq.s32.totalorder %v166, %v881
        %vm1344 = vcmp.eq.s32.totalorder %v166, %v884
        %vm1345 = vcmp.eq.s32.totalorder %v166, %v887
        %vm1346 = vcmp.eq.s32.totalorder %v166, %v890
        %vm1347 = vcmp.eq.s32.totalorder %v166, %v893
        %vm1348 = vcmp.eq.s32.totalorder %v166, %v896
        %vm1349 = vcmp.eq.s32.totalorder %v166, %v899
        %vm1350 = vcmp.eq.s32.totalorder %v166, %v902
        %vm1351 = vcmp.eq.s32.totalorder %v166, %v905
        %vm1352 = vcmp.eq.s32.totalorder %v166, %v908
        %vm1353 = vcmp.eq.s32.totalorder %v166, %v911
        %vm1354 = vcmp.eq.s32.totalorder %v166, %v914
        %vm1355 = vcmp.eq.s32.totalorder %v166, %v917
        %vm1356 = vcmp.eq.s32.totalorder %v166, %v920
        %vm1357 = vcmp.eq.s32.totalorder %v166, %v923
        %vm1358 = vcmp.eq.s32.totalorder %v166, %v926
        %vm1359 = vcmp.eq.s32.totalorder %v166, %v929
        %vm1360 = vcmp.eq.s32.totalorder %v166, %v932
        %vm1361 = vcmp.eq.s32.totalorder %v166, %v935
        %vm1362 = vcmp.eq.s32.totalorder %v166, %v938
        %vm1363 = vcmp.eq.s32.totalorder %v166, %v941
        %vm1364 = vcmp.eq.s32.totalorder %v166, %v944
        %vm1365 = vcmp.eq.s32.totalorder %v166, %v947
        %vm1366 = vcmp.eq.s32.totalorder %v166, %v950
        %vm1367 = vcmp.eq.s32.totalorder %v166, %v953
        %vm1368 = vcmp.eq.s32.totalorder %v166, %v956
        %vm1369 = vcmp.eq.s32.totalorder %v166, %v959
        %vm1370 = vcmp.eq.s32.totalorder %v166, %v962
        %vm1371 = vcmp.eq.s32.totalorder %v166, %v965
        %vm1372 = vcmp.eq.s32.totalorder %v166, %v968
        %vm1373 = vcmp.eq.s32.totalorder %v166, %v971
        %vm1374 = vcmp.eq.s32.totalorder %v166, %v974
        %vm1375 = vcmp.eq.s32.totalorder %v166, %v977
        %vm1376 = vcmp.eq.s32.totalorder %v166, %v980
        %vm1377 = vcmp.eq.s32.totalorder %v166, %v983
        %vm1378 = vcmp.eq.s32.totalorder %v166, %v986
        %vm1379 = vcmp.eq.s32.totalorder %v166, %v989
        %vm1380 = vcmp.eq.s32.totalorder %v166, %v992
        %vm1381 = vcmp.eq.s32.totalorder %v166, %v995
        %vm1382 = vcmp.eq.s32.totalorder %v166, %v998
        %vm1383 = vcmp.eq.s32.totalorder %v166, %v1001
        %vm1384 = vcmp.eq.s32.totalorder %v166, %v1004
        %vm1385 = vcmp.eq.s32.totalorder %v166, %v1007
        %vm1386 = vcmp.eq.s32.totalorder %v166, %v1010
        %vm1387 = vcmp.eq.s32.totalorder %v166, %v1013
        %vm1388 = vcmp.eq.s32.totalorder %v166, %v1016
        %vm1389 = vcmp.eq.s32.totalorder %v166, %v1019
        %vm1390 = vcmp.eq.s32.totalorder %v166, %v1022
        %vm1391 = vcmp.eq.s32.totalorder %v166, %v1025
        %vm1392 = vcmp.eq.s32.totalorder %v166, %v1028
        %vm1393 = vcmp.eq.s32.totalorder %v166, %v1031
        %vm1394 = vcmp.eq.s32.totalorder %v166, %v1034
        %vm1395 = vcmp.eq.s32.totalorder %v166, %v1037
        %vm1396 = vcmp.eq.s32.totalorder %v166, %v1040
        %vm1397 = vcmp.eq.s32.totalorder %v166, %v1043
        %vm1398 = vcmp.eq.s32.totalorder %v166, %v1046
        %vm1399 = vcmp.eq.s32.totalorder %v166, %v1049
        %vm1400 = vcmp.eq.s32.totalorder %v166, %v1052
        %vm1401 = vcmp.eq.s32.totalorder %v166, %v1055
        %vm1402 = vcmp.eq.s32.totalorder %v166, %v1058
        %vm1403 = vcmp.eq.s32.totalorder %v166, %v1061
        %vm1404 = vcmp.eq.s32.totalorder %v166, %v1064
        %vm1405 = vcmp.eq.s32.totalorder %v166, %v1067
        %vm1406 = vcmp.eq.s32.totalorder %v166, %v1070
        %vm1407 = vcmp.eq.s32.totalorder %v166, %v1073
        %vm1408 = vcmp.eq.s32.totalorder %v166, %v1076
        %vm1409 = vcmp.eq.s32.totalorder %v166, %v1079
        %vm1410 = vcmp.eq.s32.totalorder %v166, %v1082
        %vm1411 = vcmp.eq.s32.totalorder %v166, %v1085
        %vm1412 = vcmp.eq.s32.totalorder %v166, %v1088
        %vm1413 = vcmp.eq.s32.totalorder %v166, %v1091
        %vm1414 = vcmp.eq.s32.totalorder %v166, %v1094
        %vm1415 = vcmp.eq.s32.totalorder %v166, %v1097
        %vm1416 = vcmp.eq.s32.totalorder %v166, %v1100
        %vm1417 = vcmp.eq.s32.totalorder %v166, %v1103
        %vm1418 = vcmp.eq.s32.totalorder %v166, %v1106
        %vm1419 = vcmp.eq.s32.totalorder %v166, %v1109
        %vm1420 = vcmp.eq.s32.totalorder %v166, %v1112
        %vm1421 = vcmp.eq.s32.totalorder %v166, %v1115
        %vm1422 = vcmp.eq.s32.totalorder %v166, %v1118
        %vm1423 = vcmp.eq.s32.totalorder %v166, %v1121
        %vm1424 = vcmp.eq.s32.totalorder %v166, %v1124
        %vm1425 = vcmp.eq.s32.totalorder %v166, %v1127
        %vm1426 = vcmp.eq.s32.totalorder %v166, %v1130
        %vm1427 = vcmp.eq.s32.totalorder %v166, %v1133
        %vm1428 = vcmp.eq.s32.totalorder %v166, %v1136
        %vm1429 = vcmp.eq.s32.totalorder %v166, %v1139
        %vm1430 = vcmp.eq.s32.totalorder %v166, %v1142
        %vm1431 = vcmp.eq.s32.totalorder %v166, %v1145
        %vm1432 = vcmp.eq.s32.totalorder %v166, %v1148
        %vm1433 = vcmp.eq.s32.totalorder %v166, %v1151
        %vm1434 = vcmp.eq.s32.totalorder %v166, %v1154
        %vm1435 = vcmp.eq.s32.totalorder %v166, %v1157
        %vm1436 = vcmp.eq.s32.totalorder %v166, %v1160
        %vm1437 = vcmp.eq.s32.totalorder %v166, %v1163
        %vm1438 = vcmp.eq.s32.totalorder %v166, %v1166
        %vm1439 = vcmp.eq.s32.totalorder %v166, %v1169
        %vm1440 = vcmp.eq.s32.totalorder %v166, %v1172
        %vm1441 = vcmp.eq.s32.totalorder %v166, %v1175
        %vm1442 = vcmp.eq.s32.totalorder %v166, %v1178
        %vm1443 = vcmp.eq.s32.totalorder %v166, %v1181
        %vm1444 = vcmp.eq.s32.totalorder %v166, %v1184
        %vm1445 = vcmp.eq.s32.totalorder %v166, %v1187
        %vm1446 = vcmp.eq.s32.totalorder %v166, %v1190
        %v1447 = vsel %vm1191, 1, 0
        %v1448 = vsel %vm1192, 1, 0
        %v1449 = vsel %vm1193, 1, 0
        %v1450 = vsel %vm1194, 1, 0
        %v1451 = vsel %vm1195, 1, 0
        %v1452 = vsel %vm1196, 1, 0
        %v1453 = vsel %vm1197, 1, 0
        %v1454 = vsel %vm1198, 1, 0
        %v1455 = vsel %vm1199, 1, 0
        %v1456 = vsel %vm1200, 1, 0
        %v1457 = vsel %vm1201, 1, 0
        %v1458 = vsel %vm1202, 1, 0
        %v1459 = vsel %vm1203, 1, 0
        %v1460 = vsel %vm1204, 1, 0
        %v1461 = vsel %vm1205, 1, 0
        %v1462 = vsel %vm1206, 1, 0
        %v1463 = vsel %vm1207, 1, 0
        %v1464 = vsel %vm1208, 1, 0
        %v1465 = vsel %vm1209, 1, 0
        %v1466 = vsel %vm1210, 1, 0
        %v1467 = vsel %vm1211, 1, 0
        %v1468 = vsel %vm1212, 1, 0
        %v1469 = vsel %vm1213, 1, 0
        %v1470 = vsel %vm1214, 1, 0
        %v1471 = vsel %vm1215, 1, 0
        %v1472 = vsel %vm1216, 1, 0
        %v1473 = vsel %vm1217, 1, 0
        %v1474 = vsel %vm1218, 1, 0
        %v1475 = vsel %vm1219, 1, 0
        %v1476 = vsel %vm1220, 1, 0
        %v1477 = vsel %vm1221, 1, 0
        %v1478 = vsel %vm1222, 1, 0
        %v1479 = vsel %vm1223, 1, 0
        %v1480 = vsel %vm1224, 1, 0
        %v1481 = vsel %vm1225, 1, 0
        %v1482 = vsel %vm1226, 1, 0
        %v1483 = vsel %vm1227, 1, 0
        %v1484 = vsel %vm1228, 1, 0
        %v1485 = vsel %vm1229, 1, 0
        %v1486 = vsel %vm1230, 1, 0
        %v1487 = vsel %vm1231, 1, 0
        %v1488 = vsel %vm1232, 1, 0
        %v1489 = vsel %vm1233, 1, 0
        %v1490 = vsel %vm1234, 1, 0
        %v1491 = vsel %vm1235, 1, 0
        %v1492 = vsel %vm1236, 1, 0
        %v1493 = vsel %vm1237, 1, 0
        %v1494 = vsel %vm1238, 1, 0
        %v1495 = vsel %vm1239, 1, 0
        %v1496 = vsel %vm1240, 1, 0
        %v1497 = vsel %vm1241, 1, 0
        %v1498 = vsel %vm1242, 1, 0
        %v1499 = vsel %vm1243, 1, 0
        %v1500 = vsel %vm1244, 1, 0
        %v1501 = vsel %vm1245, 1, 0
        %v1502 = vsel %vm1246, 1, 0
        %v1503 = vsel %vm1247, 1, 0
        %v1504 = vsel %vm1248, 1, 0
        %v1505 = vsel %vm1249, 1, 0
        %v1506 = vsel %vm1250, 1, 0
        %v1507 = vsel %vm1251, 1, 0
        %v1508 = vsel %vm1252, 1, 0
        %v1509 = vsel %vm1253, 1, 0
        %v1510 = vsel %vm1254, 1, 0
        %v1511 = vsel %vm1255, 1, 0
        %v1512 = vsel %vm1256, 1, 0
        %v1513 = vsel %vm1257, 1, 0
        %v1514 = vsel %vm1258, 1, 0
        %v1515 = vsel %vm1259, 1, 0
        %v1516 = vsel %vm1260, 1, 0
        %v1517 = vsel %vm1261, 1, 0
        %v1518 = vsel %vm1262, 1, 0
        %v1519 = vsel %vm1263, 1, 0
        %v1520 = vsel %vm1264, 1, 0
        %v1521 = vsel %vm1265, 1, 0
        %v1522 = vsel %vm1266, 1, 0
        %v1523 = vsel %vm1267, 1, 0
        %v1524 = vsel %vm1268, 1, 0
        %v1525 = vsel %vm1269, 1, 0
        %v1526 = vsel %vm1270, 1, 0
        %v1527 = vsel %vm1271, 1, 0
        %v1528 = vsel %vm1272, 1, 0
        %v1529 = vsel %vm1273, 1, 0
        %v1530 = vsel %vm1274, 1, 0
        %v1531 = vsel %vm1275, 1, 0
        %v1532 = vsel %vm1276, 1, 0
        %v1533 = vsel %vm1277, 1, 0
        %v1534 = vsel %vm1278, 1, 0
        %v1535 = vsel %vm1279, 1, 0
        %v1536 = vsel %vm1280, 1, 0
        %v1537 = vsel %vm1281, 1, 0
        %v1538 = vsel %vm1282, 1, 0
        %v1539 = vsel %vm1283, 1, 0
        %v1540 = vsel %vm1284, 1, 0
        %v1541 = vsel %vm1285, 1, 0
        %v1542 = vsel %vm1286, 1, 0
        %v1543 = vsel %vm1287, 1, 0
        %v1544 = vsel %vm1288, 1, 0
        %v1545 = vsel %vm1289, 1, 0
        %v1546 = vsel %vm1290, 1, 0
        %v1547 = vsel %vm1291, 1, 0
        %v1548 = vsel %vm1292, 1, 0
        %v1549 = vsel %vm1293, 1, 0
        %v1550 = vsel %vm1294, 1, 0
        %v1551 = vsel %vm1295, 1, 0
        %v1552 = vsel %vm1296, 1, 0
        %v1553 = vsel %vm1297, 1, 0
        %v1554 = vsel %vm1298, 1, 0
        %v1555 = vsel %vm1299, 1, 0
        %v1556 = vsel %vm1300, 1, 0
        %v1557 = vsel %vm1301, 1, 0
        %v1558 = vsel %vm1302, 1, 0
        %v1559 = vsel %vm1303, 1, 0
        %v1560 = vsel %vm1304, 1, 0
        %v1561 = vsel %vm1305, 1, 0
        %v1562 = vsel %vm1306, 1, 0
        %v1563 = vsel %vm1307, 1, 0
        %v1564 = vsel %vm1308, 1, 0
        %v1565 = vsel %vm1309, 1, 0
        %v1566 = vsel %vm1310, 1, 0
        %v1567 = vsel %vm1311, 1, 0
        %v1568 = vsel %vm1312, 1, 0
        %v1569 = vsel %vm1313, 1, 0
        %v1570 = vsel %vm1314, 1, 0
        %v1571 = vsel %vm1315, 1, 0
        %v1572 = vsel %vm1316, 1, 0
        %v1573 = vsel %vm1317, 1, 0
        %v1574 = vsel %vm1318, 1, 0
        %v1575 = vsel %vm1319, 1, 0
        %v1576 = vsel %vm1320, 1, 0
        %v1577 = vsel %vm1321, 1, 0
        %v1578 = vsel %vm1322, 1, 0
        %v1579 = vsel %vm1323, 1, 0
        %v1580 = vsel %vm1324, 1, 0
        %v1581 = vsel %vm1325, 1, 0
        %v1582 = vsel %vm1326, 1, 0
        %v1583 = vsel %vm1327, 1, 0
        %v1584 = vsel %vm1328, 1, 0
        %v1585 = vsel %vm1329, 1, 0
        %v1586 = vsel %vm1330, 1, 0
        %v1587 = vsel %vm1331, 1, 0
        %v1588 = vsel %vm1332, 1, 0
        %v1589 = vsel %vm1333, 1, 0
        %v1590 = vsel %vm1334, 1, 0
        %v1591 = vsel %vm1335, 1, 0
        %v1592 = vsel %vm1336, 1, 0
        %v1593 = vsel %vm1337, 1, 0
        %v1594 = vsel %vm1338, 1, 0
        %v1595 = vsel %vm1339, 1, 0
        %v1596 = vsel %vm1340, 1, 0
        %v1597 = vsel %vm1341, 1, 0
        %v1598 = vsel %vm1342, 1, 0
        %v1599 = vsel %vm1343, 1, 0
        %v1600 = vsel %vm1344, 1, 0
        %v1601 = vsel %vm1345, 1, 0
        %v1602 = vsel %vm1346, 1, 0
        %v1603 = vsel %vm1347, 1, 0
        %v1604 = vsel %vm1348, 1, 0
        %v1605 = vsel %vm1349, 1, 0
        %v1606 = vsel %vm1350, 1, 0
        %v1607 = vsel %vm1351, 1, 0
        %v1608 = vsel %vm1352, 1, 0
        %v1609 = vsel %vm1353, 1, 0
        %v1610 = vsel %vm1354, 1, 0
        %v1611 = vsel %vm1355, 1, 0
        %v1612 = vsel %vm1356, 1, 0
        %v1613 = vsel %vm1357, 1, 0
        %v1614 = vsel %vm1358, 1, 0
        %v1615 = vsel %vm1359, 1, 0
        %v1616 = vsel %vm1360, 1, 0
        %v1617 = vsel %vm1361, 1, 0
        %v1618 = vsel %vm1362, 1, 0
        %v1619 = vsel %vm1363, 1, 0
        %v1620 = vsel %vm1364, 1, 0
        %v1621 = vsel %vm1365, 1, 0
        %v1622 = vsel %vm1366, 1, 0
        %v1623 = vsel %vm1367, 1, 0
        %v1624 = vsel %vm1368, 1, 0
        %v1625 = vsel %vm1369, 1, 0
        %v1626 = vsel %vm1370, 1, 0
        %v1627 = vsel %vm1371, 1, 0
        %v1628 = vsel %vm1372, 1, 0
        %v1629 = vsel %vm1373, 1, 0
        %v1630 = vsel %vm1374, 1, 0
        %v1631 = vsel %vm1375, 1, 0
        %v1632 = vsel %vm1376, 1, 0
        %v1633 = vsel %vm1377, 1, 0
        %v1634 = vsel %vm1378, 1, 0
        %v1635 = vsel %vm1379, 1, 0
        %v1636 = vsel %vm1380, 1, 0
        %v1637 = vsel %vm1381, 1, 0
        %v1638 = vsel %vm1382, 1, 0
        %v1639 = vsel %vm1383, 1, 0
        %v1640 = vsel %vm1384, 1, 0
        %v1641 = vsel %vm1385, 1, 0
        %v1642 = vsel %vm1386, 1, 0
        %v1643 = vsel %vm1387, 1, 0
        %v1644 = vsel %vm1388, 1, 0
        %v1645 = vsel %vm1389, 1, 0
        %v1646 = vsel %vm1390, 1, 0
        %v1647 = vsel %vm1391, 1, 0
        %v1648 = vsel %vm1392, 1, 0
        %v1649 = vsel %vm1393, 1, 0
        %v1650 = vsel %vm1394, 1, 0
        %v1651 = vsel %vm1395, 1, 0
        %v1652 = vsel %vm1396, 1, 0
        %v1653 = vsel %vm1397, 1, 0
        %v1654 = vsel %vm1398, 1, 0
        %v1655 = vsel %vm1399, 1, 0
        %v1656 = vsel %vm1400, 1, 0
        %v1657 = vsel %vm1401, 1, 0
        %v1658 = vsel %vm1402, 1, 0
        %v1659 = vsel %vm1403, 1, 0
        %v1660 = vsel %vm1404, 1, 0
        %v1661 = vsel %vm1405, 1, 0
        %v1662 = vsel %vm1406, 1, 0
        %v1663 = vsel %vm1407, 1, 0
        %v1664 = vsel %vm1408, 1, 0
        %v1665 = vsel %vm1409, 1, 0
        %v1666 = vsel %vm1410, 1, 0
        %v1667 = vsel %vm1411, 1, 0
        %v1668 = vsel %vm1412, 1, 0
        %v1669 = vsel %vm1413, 1, 0
        %v1670 = vsel %vm1414, 1, 0
        %v1671 = vsel %vm1415, 1, 0
        %v1672 = vsel %vm1416, 1, 0
        %v1673 = vsel %vm1417, 1, 0
        %v1674 = vsel %vm1418, 1, 0
        %v1675 = vsel %vm1419, 1, 0
        %v1676 = vsel %vm1420, 1, 0
        %v1677 = vsel %vm1421, 1, 0
        %v1678 = vsel %vm1422, 1, 0
        %v1679 = vsel %vm1423, 1, 0
        %v1680 = vsel %vm1424, 1, 0
        %v1681 = vsel %vm1425, 1, 0
        %v1682 = vsel %vm1426, 1, 0
        %v1683 = vsel %vm1427, 1, 0
        %v1684 = vsel %vm1428, 1, 0
        %v1685 = vsel %vm1429, 1, 0
        %v1686 = vsel %vm1430, 1, 0
        %v1687 = vsel %vm1431, 1, 0
        %v1688 = vsel %vm1432, 1, 0
        %v1689 = vsel %vm1433, 1, 0
        %v1690 = vsel %vm1434, 1, 0
        %v1691 = vsel %vm1435, 1, 0
        %v1692 = vsel %vm1436, 1, 0
        %v1693 = vsel %vm1437, 1, 0
        %v1694 = vsel %vm1438, 1, 0
        %v1695 = vsel %vm1439, 1, 0
        %v1696 = vsel %vm1440, 1, 0
        %v1697 = vsel %vm1441, 1, 0
        %v1698 = vsel %vm1442, 1, 0
        %v1699 = vsel %vm1443, 1, 0
        %v1700 = vsel %vm1444, 1, 0
        %v1701 = vsel %vm1445, 1, 0
        %v1702 = vsel %vm1446, 1, 0
        %v1703 = vcvt.s32.f32 %v1447
        %v1704 = vcvt.s32.f32 %v1448
        %v1705 = vcvt.s32.f32 %v1449
        %v1706 = vcvt.s32.f32 %v1450
        %v1707 = vcvt.s32.f32 %v1451
        %v1708 = vcvt.s32.f32 %v1452
        %v1709 = vcvt.s32.f32 %v1453
        %v1710 = vcvt.s32.f32 %v1454
        %v1711 = vcvt.s32.f32 %v1455
        %v1712 = vcvt.s32.f32 %v1456
        %v1713 = vcvt.s32.f32 %v1457
        %v1714 = vcvt.s32.f32 %v1458
        %v1715 = vcvt.s32.f32 %v1459
        %v1716 = vcvt.s32.f32 %v1460
        %v1717 = vcvt.s32.f32 %v1461
        %v1718 = vcvt.s32.f32 %v1462
        %v1719 = vcvt.s32.f32 %v1463
        %v1720 = vcvt.s32.f32 %v1464
        %v1721 = vcvt.s32.f32 %v1465
        %v1722 = vcvt.s32.f32 %v1466
        %v1723 = vcvt.s32.f32 %v1467
        %v1724 = vcvt.s32.f32 %v1468
        %v1725 = vcvt.s32.f32 %v1469
        %v1726 = vcvt.s32.f32 %v1470
        %v1727 = vcvt.s32.f32 %v1471
        %v1728 = vcvt.s32.f32 %v1472
        %v1729 = vcvt.s32.f32 %v1473
        %v1730 = vcvt.s32.f32 %v1474
        %v1731 = vcvt.s32.f32 %v1475
        %v1732 = vcvt.s32.f32 %v1476
        %v1733 = vcvt.s32.f32 %v1477
        %v1734 = vcvt.s32.f32 %v1478
        %v1735 = vcvt.s32.f32 %v1479
        %v1736 = vcvt.s32.f32 %v1480
        %v1737 = vcvt.s32.f32 %v1481
        %v1738 = vcvt.s32.f32 %v1482
        %v1739 = vcvt.s32.f32 %v1483
        %v1740 = vcvt.s32.f32 %v1484
        %v1741 = vcvt.s32.f32 %v1485
        %v1742 = vcvt.s32.f32 %v1486
        %v1743 = vcvt.s32.f32 %v1487
        %v1744 = vcvt.s32.f32 %v1488
        %v1745 = vcvt.s32.f32 %v1489
        %v1746 = vcvt.s32.f32 %v1490
        %v1747 = vcvt.s32.f32 %v1491
        %v1748 = vcvt.s32.f32 %v1492
        %v1749 = vcvt.s32.f32 %v1493
        %v1750 = vcvt.s32.f32 %v1494
        %v1751 = vcvt.s32.f32 %v1495
        %v1752 = vcvt.s32.f32 %v1496
        %v1753 = vcvt.s32.f32 %v1497
        %v1754 = vcvt.s32.f32 %v1498
        %v1755 = vcvt.s32.f32 %v1499
        %v1756 = vcvt.s32.f32 %v1500
        %v1757 = vcvt.s32.f32 %v1501
        %v1758 = vcvt.s32.f32 %v1502
        %v1759 = vcvt.s32.f32 %v1503
        %v1760 = vcvt.s32.f32 %v1504
        %v1761 = vcvt.s32.f32 %v1505
        %v1762 = vcvt.s32.f32 %v1506
        %v1763 = vcvt.s32.f32 %v1507
        %v1764 = vcvt.s32.f32 %v1508
        %v1765 = vcvt.s32.f32 %v1509
        %v1766 = vcvt.s32.f32 %v1510
        %v1767 = vcvt.s32.f32 %v1511
        %v1768 = vcvt.s32.f32 %v1512
        %v1769 = vcvt.s32.f32 %v1513
        %v1770 = vcvt.s32.f32 %v1514
        %v1771 = vcvt.s32.f32 %v1515
        %v1772 = vcvt.s32.f32 %v1516
        %v1773 = vcvt.s32.f32 %v1517
        %v1774 = vcvt.s32.f32 %v1518
        %v1775 = vcvt.s32.f32 %v1519
        %v1776 = vcvt.s32.f32 %v1520
        %v1777 = vcvt.s32.f32 %v1521
        %v1778 = vcvt.s32.f32 %v1522
        %v1779 = vcvt.s32.f32 %v1523
        %v1780 = vcvt.s32.f32 %v1524
        %v1781 = vcvt.s32.f32 %v1525
        %v1782 = vcvt.s32.f32 %v1526
        %v1783 = vcvt.s32.f32 %v1527
        %v1784 = vcvt.s32.f32 %v1528
        %v1785 = vcvt.s32.f32 %v1529
        %v1786 = vcvt.s32.f32 %v1530
        %v1787 = vcvt.s32.f32 %v1531
        %v1788 = vcvt.s32.f32 %v1532
        %v1789 = vcvt.s32.f32 %v1533
        %v1790 = vcvt.s32.f32 %v1534
        %v1791 = vcvt.s32.f32 %v1535
        %v1792 = vcvt.s32.f32 %v1536
        %v1793 = vcvt.s32.f32 %v1537
        %v1794 = vcvt.s32.f32 %v1538
        %v1795 = vcvt.s32.f32 %v1539
        %v1796 = vcvt.s32.f32 %v1540
        %v1797 = vcvt.s32.f32 %v1541
        %v1798 = vcvt.s32.f32 %v1542
        %v1799 = vcvt.s32.f32 %v1543
        %v1800 = vcvt.s32.f32 %v1544
        %v1801 = vcvt.s32.f32 %v1545
        %v1802 = vcvt.s32.f32 %v1546
        %v1803 = vcvt.s32.f32 %v1547
        %v1804 = vcvt.s32.f32 %v1548
        %v1805 = vcvt.s32.f32 %v1549
        %v1806 = vcvt.s32.f32 %v1550
        %v1807 = vcvt.s32.f32 %v1551
        %v1808 = vcvt.s32.f32 %v1552
        %v1809 = vcvt.s32.f32 %v1553
        %v1810 = vcvt.s32.f32 %v1554
        %v1811 = vcvt.s32.f32 %v1555
        %v1812 = vcvt.s32.f32 %v1556
        %v1813 = vcvt.s32.f32 %v1557
        %v1814 = vcvt.s32.f32 %v1558
        %v1815 = vcvt.s32.f32 %v1559
        %v1816 = vcvt.s32.f32 %v1560
        %v1817 = vcvt.s32.f32 %v1561
        %v1818 = vcvt.s32.f32 %v1562
        %v1819 = vcvt.s32.f32 %v1563
        %v1820 = vcvt.s32.f32 %v1564
        %v1821 = vcvt.s32.f32 %v1565
        %v1822 = vcvt.s32.f32 %v1566
        %v1823 = vcvt.s32.f32 %v1567
        %v1824 = vcvt.s32.f32 %v1568
        %v1825 = vcvt.s32.f32 %v1569
        %v1826 = vcvt.s32.f32 %v1570
        %v1827 = vcvt.s32.f32 %v1571
        %v1828 = vcvt.s32.f32 %v1572
        %v1829 = vcvt.s32.f32 %v1573
        %v1830 = vcvt.s32.f32 %v1574
        %v1831 = vcvt.s32.f32 %v1575
        %v1832 = vcvt.s32.f32 %v1576
        %v1833 = vcvt.s32.f32 %v1577
        %v1834 = vcvt.s32.f32 %v1578
        %v1835 = vcvt.s32.f32 %v1579
        %v1836 = vcvt.s32.f32 %v1580
        %v1837 = vcvt.s32.f32 %v1581
        %v1838 = vcvt.s32.f32 %v1582
        %v1839 = vcvt.s32.f32 %v1583
        %v1840 = vcvt.s32.f32 %v1584
        %v1841 = vcvt.s32.f32 %v1585
        %v1842 = vcvt.s32.f32 %v1586
        %v1843 = vcvt.s32.f32 %v1587
        %v1844 = vcvt.s32.f32 %v1588
        %v1845 = vcvt.s32.f32 %v1589
        %v1846 = vcvt.s32.f32 %v1590
        %v1847 = vcvt.s32.f32 %v1591
        %v1848 = vcvt.s32.f32 %v1592
        %v1849 = vcvt.s32.f32 %v1593
        %v1850 = vcvt.s32.f32 %v1594
        %v1851 = vcvt.s32.f32 %v1595
        %v1852 = vcvt.s32.f32 %v1596
        %v1853 = vcvt.s32.f32 %v1597
        %v1854 = vcvt.s32.f32 %v1598
        %v1855 = vcvt.s32.f32 %v1599
        %v1856 = vcvt.s32.f32 %v1600
        %v1857 = vcvt.s32.f32 %v1601
        %v1858 = vcvt.s32.f32 %v1602
        %v1859 = vcvt.s32.f32 %v1603
        %v1860 = vcvt.s32.f32 %v1604
        %v1861 = vcvt.s32.f32 %v1605
        %v1862 = vcvt.s32.f32 %v1606
        %v1863 = vcvt.s32.f32 %v1607
        %v1864 = vcvt.s32.f32 %v1608
        %v1865 = vcvt.s32.f32 %v1609
        %v1866 = vcvt.s32.f32 %v1610
        %v1867 = vcvt.s32.f32 %v1611
        %v1868 = vcvt.s32.f32 %v1612
        %v1869 = vcvt.s32.f32 %v1613
        %v1870 = vcvt.s32.f32 %v1614
        %v1871 = vcvt.s32.f32 %v1615
        %v1872 = vcvt.s32.f32 %v1616
        %v1873 = vcvt.s32.f32 %v1617
        %v1874 = vcvt.s32.f32 %v1618
        %v1875 = vcvt.s32.f32 %v1619
        %v1876 = vcvt.s32.f32 %v1620
        %v1877 = vcvt.s32.f32 %v1621
        %v1878 = vcvt.s32.f32 %v1622
        %v1879 = vcvt.s32.f32 %v1623
        %v1880 = vcvt.s32.f32 %v1624
        %v1881 = vcvt.s32.f32 %v1625
        %v1882 = vcvt.s32.f32 %v1626
        %v1883 = vcvt.s32.f32 %v1627
        %v1884 = vcvt.s32.f32 %v1628
        %v1885 = vcvt.s32.f32 %v1629
        %v1886 = vcvt.s32.f32 %v1630
        %v1887 = vcvt.s32.f32 %v1631
        %v1888 = vcvt.s32.f32 %v1632
        %v1889 = vcvt.s32.f32 %v1633
        %v1890 = vcvt.s32.f32 %v1634
        %v1891 = vcvt.s32.f32 %v1635
        %v1892 = vcvt.s32.f32 %v1636
        %v1893 = vcvt.s32.f32 %v1637
        %v1894 = vcvt.s32.f32 %v1638
        %v1895 = vcvt.s32.f32 %v1639
        %v1896 = vcvt.s32.f32 %v1640
        %v1897 = vcvt.s32.f32 %v1641
        %v1898 = vcvt.s32.f32 %v1642
        %v1899 = vcvt.s32.f32 %v1643
        %v1900 = vcvt.s32.f32 %v1644
        %v1901 = vcvt.s32.f32 %v1645
        %v1902 = vcvt.s32.f32 %v1646
        %v1903 = vcvt.s32.f32 %v1647
        %v1904 = vcvt.s32.f32 %v1648
        %v1905 = vcvt.s32.f32 %v1649
        %v1906 = vcvt.s32.f32 %v1650
        %v1907 = vcvt.s32.f32 %v1651
        %v1908 = vcvt.s32.f32 %v1652
        %v1909 = vcvt.s32.f32 %v1653
        %v1910 = vcvt.s32.f32 %v1654
        %v1911 = vcvt.s32.f32 %v1655
        %v1912 = vcvt.s32.f32 %v1656
        %v1913 = vcvt.s32.f32 %v1657
        %v1914 = vcvt.s32.f32 %v1658
        %v1915 = vcvt.s32.f32 %v1659
        %v1916 = vcvt.s32.f32 %v1660
        %v1917 = vcvt.s32.f32 %v1661
        %v1918 = vcvt.s32.f32 %v1662
        %v1919 = vcvt.s32.f32 %v1663
        %v1920 = vcvt.s32.f32 %v1664
        %v1921 = vcvt.s32.f32 %v1665
        %v1922 = vcvt.s32.f32 %v1666
        %v1923 = vcvt.s32.f32 %v1667
        %v1924 = vcvt.s32.f32 %v1668
        %v1925 = vcvt.s32.f32 %v1669
        %v1926 = vcvt.s32.f32 %v1670
        %v1927 = vcvt.s32.f32 %v1671
        %v1928 = vcvt.s32.f32 %v1672
        %v1929 = vcvt.s32.f32 %v1673
        %v1930 = vcvt.s32.f32 %v1674
        %v1931 = vcvt.s32.f32 %v1675
        %v1932 = vcvt.s32.f32 %v1676
        %v1933 = vcvt.s32.f32 %v1677
        %v1934 = vcvt.s32.f32 %v1678
        %v1935 = vcvt.s32.f32 %v1679
        %v1936 = vcvt.s32.f32 %v1680
        %v1937 = vcvt.s32.f32 %v1681
        %v1938 = vcvt.s32.f32 %v1682
        %v1939 = vcvt.s32.f32 %v1683
        %v1940 = vcvt.s32.f32 %v1684
        %v1941 = vcvt.s32.f32 %v1685
        %v1942 = vcvt.s32.f32 %v1686
        %v1943 = vcvt.s32.f32 %v1687
        %v1944 = vcvt.s32.f32 %v1688
        %v1945 = vcvt.s32.f32 %v1689
        %v1946 = vcvt.s32.f32 %v1690
        %v1947 = vcvt.s32.f32 %v1691
        %v1948 = vcvt.s32.f32 %v1692
        %v1949 = vcvt.s32.f32 %v1693
        %v1950 = vcvt.s32.f32 %v1694
        %v1951 = vcvt.s32.f32 %v1695
        %v1952 = vcvt.s32.f32 %v1696
        %v1953 = vcvt.s32.f32 %v1697
        %v1954 = vcvt.s32.f32 %v1698
        %v1955 = vcvt.s32.f32 %v1699
        %v1956 = vcvt.s32.f32 %v1700
        %v1957 = vcvt.s32.f32 %v1701
        %v1958 = vcvt.s32.f32 %v1702
        %v1959 = vld [vmem:[#allocation2] sm:$0xff]
        %v1960 = vld [vmem:[#allocation2 + $0x8] sm:$0xff]
        %v1961 = vld [vmem:[#allocation2 + $0x10] sm:$0xff]
        %v1962 = vld [vmem:[#allocation2 + $0x18] sm:$0xff]
        %v1963 = vld [vmem:[#allocation2 + $0x20] sm:$0x3]
        %v1964 = vld [vmem:[#allocation2 + $0x28] sm:$0x3]
        %v1965 = vld [vmem:[#allocation2 + $0x30] sm:$0x3]
        %v1966 = vld [vmem:[#allocation2 + $0x38] sm:$0x3]
        %vm1967 = vcmask 80896
        %v1969 = vsel %vm1967, %v1703, 0
        %v1972 = vsel %vm1967, %v1704, 0
        %v1975 = vsel %vm1967, %v1705, 0
        %v1978 = vsel %vm1967, %v1706, 0
        %v1981 = vsel %vm1967, %v1707, 0
        %v1984 = vsel %vm1967, %v1708, 0
        %v1987 = vsel %vm1967, %v1709, 0
        %v1990 = vsel %vm1967, %v1710, 0
        %v1993 = vsel %vm1967, %v1711, 0
        %v1996 = vsel %vm1967, %v1712, 0
        %v1999 = vsel %vm1967, %v1713, 0
        %v2002 = vsel %vm1967, %v1714, 0
        %v2005 = vsel %vm1967, %v1715, 0
        %v2008 = vsel %vm1967, %v1716, 0
        %v2011 = vsel %vm1967, %v1717, 0
        %v2014 = vsel %vm1967, %v1718, 0
        %v2017 = vsel %vm1967, %v1719, 0
        %v2020 = vsel %vm1967, %v1720, 0
        %v2023 = vsel %vm1967, %v1721, 0
        %v2026 = vsel %vm1967, %v1722, 0
        %v2029 = vsel %vm1967, %v1723, 0
        %v2032 = vsel %vm1967, %v1724, 0
        %v2035 = vsel %vm1967, %v1725, 0
        %v2038 = vsel %vm1967, %v1726, 0
        %v2041 = vsel %vm1967, %v1727, 0
        %v2044 = vsel %vm1967, %v1728, 0
        %v2047 = vsel %vm1967, %v1729, 0
        %v2050 = vsel %vm1967, %v1730, 0
        %v2053 = vsel %vm1967, %v1731, 0
        %v2056 = vsel %vm1967, %v1732, 0
        %v2059 = vsel %vm1967, %v1733, 0
        %v2062 = vsel %vm1967, %v1734, 0
        %v2065 = vsel %vm1967, %v1735, 0
        %v2068 = vsel %vm1967, %v1736, 0
        %v2071 = vsel %vm1967, %v1737, 0
        %v2074 = vsel %vm1967, %v1738, 0
        %v2077 = vsel %vm1967, %v1739, 0
        %v2080 = vsel %vm1967, %v1740, 0
        %v2083 = vsel %vm1967, %v1741, 0
        %v2086 = vsel %vm1967, %v1742, 0
        %v2089 = vsel %vm1967, %v1743, 0
        %v2092 = vsel %vm1967, %v1744, 0
        %v2095 = vsel %vm1967, %v1745, 0
        %v2098 = vsel %vm1967, %v1746, 0
        %v2101 = vsel %vm1967, %v1747, 0
        %v2104 = vsel %vm1967, %v1748, 0
        %v2107 = vsel %vm1967, %v1749, 0
        %v2110 = vsel %vm1967, %v1750, 0
        %v2113 = vsel %vm1967, %v1751, 0
        %v2116 = vsel %vm1967, %v1752, 0
        %v2119 = vsel %vm1967, %v1753, 0
        %v2122 = vsel %vm1967, %v1754, 0
        %v2125 = vsel %vm1967, %v1755, 0
        %v2128 = vsel %vm1967, %v1756, 0
        %v2131 = vsel %vm1967, %v1757, 0
        %v2134 = vsel %vm1967, %v1758, 0
        %v2137 = vsel %vm1967, %v1759, 0
        %v2140 = vsel %vm1967, %v1760, 0
        %v2143 = vsel %vm1967, %v1761, 0
        %v2146 = vsel %vm1967, %v1762, 0
        %v2149 = vsel %vm1967, %v1763, 0
        %v2152 = vsel %vm1967, %v1764, 0
        %v2155 = vsel %vm1967, %v1765, 0
        %v2158 = vsel %vm1967, %v1766, 0
        %v2161 = vsel %vm1967, %v1767, 0
        %v2164 = vsel %vm1967, %v1768, 0
        %v2167 = vsel %vm1967, %v1769, 0
        %v2170 = vsel %vm1967, %v1770, 0
        %v2173 = vsel %vm1967, %v1771, 0
        %v2176 = vsel %vm1967, %v1772, 0
        %v2179 = vsel %vm1967, %v1773, 0
        %v2182 = vsel %vm1967, %v1774, 0
        %v2185 = vsel %vm1967, %v1775, 0
        %v2188 = vsel %vm1967, %v1776, 0
        %v2191 = vsel %vm1967, %v1777, 0
        %v2194 = vsel %vm1967, %v1778, 0
        %v2197 = vsel %vm1967, %v1779, 0
        %v2200 = vsel %vm1967, %v1780, 0
        %v2203 = vsel %vm1967, %v1781, 0
        %v2206 = vsel %vm1967, %v1782, 0
        %v2209 = vsel %vm1967, %v1783, 0
        %v2212 = vsel %vm1967, %v1784, 0
        %v2215 = vsel %vm1967, %v1785, 0
        %v2218 = vsel %vm1967, %v1786, 0
        %v2221 = vsel %vm1967, %v1787, 0
        %v2224 = vsel %vm1967, %v1788, 0
        %v2227 = vsel %vm1967, %v1789, 0
        %v2230 = vsel %vm1967, %v1790, 0
        %v2233 = vsel %vm1967, %v1791, 0
        %v2236 = vsel %vm1967, %v1792, 0
        %v2239 = vsel %vm1967, %v1793, 0
        %v2242 = vsel %vm1967, %v1794, 0
        %v2245 = vsel %vm1967, %v1795, 0
        %v2248 = vsel %vm1967, %v1796, 0
        %v2251 = vsel %vm1967, %v1797, 0
        %v2254 = vsel %vm1967, %v1798, 0
        %v2257 = vsel %vm1967, %v1799, 0
        %v2260 = vsel %vm1967, %v1800, 0
        %v2263 = vsel %vm1967, %v1801, 0
        %v2266 = vsel %vm1967, %v1802, 0
        %v2269 = vsel %vm1967, %v1803, 0
        %v2272 = vsel %vm1967, %v1804, 0
        %v2275 = vsel %vm1967, %v1805, 0
        %v2278 = vsel %vm1967, %v1806, 0
        %v2281 = vsel %vm1967, %v1807, 0
        %v2284 = vsel %vm1967, %v1808, 0
        %v2287 = vsel %vm1967, %v1809, 0
        %v2290 = vsel %vm1967, %v1810, 0
        %v2293 = vsel %vm1967, %v1811, 0
        %v2296 = vsel %vm1967, %v1812, 0
        %v2299 = vsel %vm1967, %v1813, 0
        %v2302 = vsel %vm1967, %v1814, 0
        %v2305 = vsel %vm1967, %v1815, 0
        %v2308 = vsel %vm1967, %v1816, 0
        %v2311 = vsel %vm1967, %v1817, 0
        %v2314 = vsel %vm1967, %v1818, 0
        %v2317 = vsel %vm1967, %v1819, 0
        %v2320 = vsel %vm1967, %v1820, 0
        %v2323 = vsel %vm1967, %v1821, 0
        %v2326 = vsel %vm1967, %v1822, 0
        %v2329 = vsel %vm1967, %v1823, 0
        %v2332 = vsel %vm1967, %v1824, 0
        %v2335 = vsel %vm1967, %v1825, 0
        %v2338 = vsel %vm1967, %v1826, 0
        %v2341 = vsel %vm1967, %v1827, 0
        %v2344 = vsel %vm1967, %v1828, 0
        %v2347 = vsel %vm1967, %v1829, 0
        %v2350 = vsel %vm1967, %v1830, 0
        %v2353 = vsel %vm1967, %v1831, 0
        %v2356 = vsel %vm1967, %v1832, 0
        %v2359 = vsel %vm1967, %v1833, 0
        %v2362 = vsel %vm1967, %v1834, 0
        %v2365 = vsel %vm1967, %v1835, 0
        %v2368 = vsel %vm1967, %v1836, 0
        %v2371 = vsel %vm1967, %v1837, 0
        %v2374 = vsel %vm1967, %v1838, 0
        %v2377 = vsel %vm1967, %v1839, 0
        %v2380 = vsel %vm1967, %v1840, 0
        %v2383 = vsel %vm1967, %v1841, 0
        %v2386 = vsel %vm1967, %v1842, 0
        %v2389 = vsel %vm1967, %v1843, 0
        %v2392 = vsel %vm1967, %v1844, 0
        %v2395 = vsel %vm1967, %v1845, 0
        %v2398 = vsel %vm1967, %v1846, 0
        %v2401 = vsel %vm1967, %v1847, 0
        %v2404 = vsel %vm1967, %v1848, 0
        %v2407 = vsel %vm1967, %v1849, 0
        %v2410 = vsel %vm1967, %v1850, 0
        %v2413 = vsel %vm1967, %v1851, 0
        %v2416 = vsel %vm1967, %v1852, 0
        %v2419 = vsel %vm1967, %v1853, 0
        %v2422 = vsel %vm1967, %v1854, 0
        %v2425 = vsel %vm1967, %v1855, 0
        %v2428 = vsel %vm1967, %v1856, 0
        %v2431 = vsel %vm1967, %v1857, 0
        %v2434 = vsel %vm1967, %v1858, 0
        %v2437 = vsel %vm1967, %v1859, 0
        %v2440 = vsel %vm1967, %v1860, 0
        %v2443 = vsel %vm1967, %v1861, 0
        %v2446 = vsel %vm1967, %v1862, 0
        %v2449 = vsel %vm1967, %v1863, 0
        %v2452 = vsel %vm1967, %v1864, 0
        %v2455 = vsel %vm1967, %v1865, 0
        %v2458 = vsel %vm1967, %v1866, 0
        %v2461 = vsel %vm1967, %v1867, 0
        %v2464 = vsel %vm1967, %v1868, 0
        %v2467 = vsel %vm1967, %v1869, 0
        %v2470 = vsel %vm1967, %v1870, 0
        %v2473 = vsel %vm1967, %v1871, 0
        %v2476 = vsel %vm1967, %v1872, 0
        %v2479 = vsel %vm1967, %v1873, 0
        %v2482 = vsel %vm1967, %v1874, 0
        %v2485 = vsel %vm1967, %v1875, 0
        %v2488 = vsel %vm1967, %v1876, 0
        %v2491 = vsel %vm1967, %v1877, 0
        %v2494 = vsel %vm1967, %v1878, 0
        %v2497 = vsel %vm1967, %v1879, 0
        %v2500 = vsel %vm1967, %v1880, 0
        %v2503 = vsel %vm1967, %v1881, 0
        %v2506 = vsel %vm1967, %v1882, 0
        %v2509 = vsel %vm1967, %v1883, 0
        %v2512 = vsel %vm1967, %v1884, 0
        %v2515 = vsel %vm1967, %v1885, 0
        %v2518 = vsel %vm1967, %v1886, 0
        %v2521 = vsel %vm1967, %v1887, 0
        %v2524 = vsel %vm1967, %v1888, 0
        %v2527 = vsel %vm1967, %v1889, 0
        %v2530 = vsel %vm1967, %v1890, 0
        %v2533 = vsel %vm1967, %v1891, 0
        %v2536 = vsel %vm1967, %v1892, 0
        %v2539 = vsel %vm1967, %v1893, 0
        %v2542 = vsel %vm1967, %v1894, 0
        %v2545 = vsel %vm1967, %v1895, 0
        %v2548 = vsel %vm1967, %v1896, 0
        %v2551 = vsel %vm1967, %v1897, 0
        %v2554 = vsel %vm1967, %v1898, 0
        %v2557 = vsel %vm1967, %v1899, 0
        %v2560 = vsel %vm1967, %v1900, 0
        %v2563 = vsel %vm1967, %v1901, 0
        %v2566 = vsel %vm1967, %v1902, 0
        %v2569 = vsel %vm1967, %v1903, 0
        %v2572 = vsel %vm1967, %v1904, 0
        %v2575 = vsel %vm1967, %v1905, 0
        %v2578 = vsel %vm1967, %v1906, 0
        %v2581 = vsel %vm1967, %v1907, 0
        %v2584 = vsel %vm1967, %v1908, 0
        %v2587 = vsel %vm1967, %v1909, 0
        %v2590 = vsel %vm1967, %v1910, 0
        %v2593 = vsel %vm1967, %v1911, 0
        %v2596 = vsel %vm1967, %v1912, 0
        %v2599 = vsel %vm1967, %v1913, 0
        %v2602 = vsel %vm1967, %v1914, 0
        %v2605 = vsel %vm1967, %v1915, 0
        %v2608 = vsel %vm1967, %v1916, 0
        %v2611 = vsel %vm1967, %v1917, 0
        %v2614 = vsel %vm1967, %v1918, 0
        %v2617 = vsel %vm1967, %v1919, 0
        %v2620 = vsel %vm1967, %v1920, 0
        %v2623 = vsel %vm1967, %v1921, 0
        %v2626 = vsel %vm1967, %v1922, 0
        %v2629 = vsel %vm1967, %v1923, 0
        %v2632 = vsel %vm1967, %v1924, 0
        %v2635 = vsel %vm1967, %v1925, 0
        %v2638 = vsel %vm1967, %v1926, 0
        %v2641 = vsel %vm1967, %v1927, 0
        %v2644 = vsel %vm1967, %v1928, 0
        %v2647 = vsel %vm1967, %v1929, 0
        %v2650 = vsel %vm1967, %v1930, 0
        %v2653 = vsel %vm1967, %v1931, 0
        %v2656 = vsel %vm1967, %v1932, 0
        %v2659 = vsel %vm1967, %v1933, 0
        %v2662 = vsel %vm1967, %v1934, 0
        %v2665 = vsel %vm1967, %v1935, 0
        %v2668 = vsel %vm1967, %v1936, 0
        %v2671 = vsel %vm1967, %v1937, 0
        %v2674 = vsel %vm1967, %v1938, 0
        %v2677 = vsel %vm1967, %v1939, 0
        %v2680 = vsel %vm1967, %v1940, 0
        %v2683 = vsel %vm1967, %v1941, 0
        %v2686 = vsel %vm1967, %v1942, 0
        %v2689 = vsel %vm1967, %v1943, 0
        %v2692 = vsel %vm1967, %v1944, 0
        %v2695 = vsel %vm1967, %v1945, 0
        %v2698 = vsel %vm1967, %v1946, 0
        %v2701 = vsel %vm1967, %v1947, 0
        %v2704 = vsel %vm1967, %v1948, 0
        %v2707 = vsel %vm1967, %v1949, 0
        %v2710 = vsel %vm1967, %v1950, 0
        %v2713 = vsel %vm1967, %v1951, 0
        %v2716 = vsel %vm1967, %v1952, 0
        %v2719 = vsel %vm1967, %v1953, 0
        %v2722 = vsel %vm1967, %v1954, 0
        %v2725 = vsel %vm1967, %v1955, 0
        %v2728 = vsel %vm1967, %v1956, 0
        %v2731 = vsel %vm1967, %v1957, 0
        %v2734 = vsel %vm1967, %v1958, 0
        %vm2736 = vcmask 1041408
        %v2738 = vsel %vm2736, %v1963, 0
        %v2741 = vsel %vm2736, %v1964, 0
        %v2744 = vsel %vm2736, %v1965, 0
        %v2747 = vsel %vm2736, %v1966, 0
        %2749 = vmatprep.subr.mxu0 0.0
        %2750 = vmatpush1.msra.mxu0 0.0
        %2751 = vmatprep.subr.mxu0 0.0
        %2752 = vmatpush1.msra.mxu0 0.0
        %2753 = vmatprep.subr.mxu0 0.0
        %2754 = vmatpush1.msra.mxu0 0.0
        %2755 = vmatprep.subr.mxu0 0.0
        %2756 = vmatpush1.msra.mxu0 0.0
        %2757 = vmatprep.subr.mxu0 0.0
        %2758 = vmatpush1.msra.mxu0 0.0
        %2759 = vmatprep.subr.mxu0 0.0
        %2760 = vmatpush1.msra.mxu0 0.0
        %2761 = vmatprep.subr.mxu0 0.0
        %2762 = vmatpush1.msra.mxu0 0.0
        %2763 = vmatprep.subr.mxu0 0.0
        %2764 = vmatpush1.msra.mxu0 0.0
        %2765 = vmatprep.subr.mxu0 0.0
        %2766 = vmatpush1.msra.mxu0 0.0
        %2767 = vmatprep.subr.mxu0 0.0
        %2768 = vmatpush1.msra.mxu0 0.0
        %2769 = vmatprep.subr.mxu0 0.0
        %2770 = vmatpush1.msra.mxu0 0.0
        %2771 = vmatprep.subr.mxu0 0.0
        %2772 = vmatpush1.msra.mxu0 0.0
        %2773 = vmatprep.subr.mxu0 0.0
        %2774 = vmatpush1.msra.mxu0 0.0
        %2775 = vmatprep.subr.mxu0 0.0
        %2776 = vmatpush1.msra.mxu0 0.0
        %2777 = vmatprep.subr.mxu0 %v2741
        %2778 = vmatpush1.msra.mxu0 %v2738
        %2779 = vmatprep.subr.mxu0 %v1960
        %2780 = vmatpush1.msra.mxu0 %v1959
        %2781 = vmatprep.subr.mxu0 0.0
        %2782 = vmatpush2.msra.mxu0 0.0
        %2783 = vmatprep.subr.mxu0 0.0
        %2784 = vmatpush2.msra.mxu0 0.0
        %2785 = vmatprep.subr.mxu0 0.0
        %2786 = vmatpush2.msra.mxu0 0.0
        %2787 = vmatprep.subr.mxu0 0.0
        %2788 = vmatpush2.msra.mxu0 0.0
        %2789 = vmatprep.subr.mxu0 0.0
        %2790 = vmatpush2.msra.mxu0 0.0
        %2791 = vmatprep.subr.mxu0 0.0
        %2792 = vmatpush2.msra.mxu0 0.0
        %2793 = vmatprep.subr.mxu0 0.0
        %2794 = vmatpush2.msra.mxu0 0.0
        %2795 = vmatprep.subr.mxu0 0.0
        %2796 = vmatpush2.msra.mxu0 0.0
        %2797 = vmatprep.subr.mxu0 0.0
        %2798 = vmatpush2.msra.mxu0 0.0
        %2799 = vmatprep.subr.mxu0 0.0
        %2800 = vmatpush2.msra.mxu0 0.0
        %2801 = vmatprep.subr.mxu0 0.0
        %2802 = vmatpush2.msra.mxu0 0.0
        %2803 = vmatprep.subr.mxu0 0.0
        %2804 = vmatpush2.msra.mxu0 0.0
        %2805 = vmatprep.subr.mxu0 0.0
        %2806 = vmatpush2.msra.mxu0 0.0
        %2807 = vmatprep.subr.mxu0 0.0
        %2808 = vmatpush2.msra.mxu0 0.0
        %2809 = vmatprep.subr.mxu0 0.0
        %2810 = vmatpush2.msra.mxu0 0.0
        %2811 = vmatprep.subr.mxu0 0.0
        %2812 = vmatpush2.msra.mxu0 0.0
        %2813 = vmatprep.mubr.f32.mxu0 0.0
        %2814 = vmatmul.mubr.f32.gmra.mxu0 %v1969
        %v2815 = vpop.f32.mrf.mxu0
        %v2816 = vadd.f32 0.0, %v2815
        %v2817 = vpop.f32.mrf.mxu0
        %v2818 = vadd.f32 0.0, %v2817
        %2819 = vmatprep.mubr.f32.mxu0 0.0
        %2820 = vmatmul.mubr.f32.gmra.mxu0 %v1972
        %v2821 = vpop.f32.mrf.mxu0
        %v2822 = vadd.f32 0.0, %v2821
        %v2823 = vpop.f32.mrf.mxu0
        %v2824 = vadd.f32 0.0, %v2823
        %2825 = vmatprep.mubr.f32.mxu0 0.0
        %2826 = vmatmul.mubr.f32.gmra.mxu0 %v1975
        %v2827 = vpop.f32.mrf.mxu0
        %v2828 = vadd.f32 0.0, %v2827
        %v2829 = vpop.f32.mrf.mxu0
        %v2830 = vadd.f32 0.0, %v2829
        %2831 = vmatprep.mubr.f32.mxu0 0.0
        %2832 = vmatmul.mubr.f32.gmra.mxu0 %v1978
        %v2833 = vpop.f32.mrf.mxu0
        %v2834 = vadd.f32 0.0, %v2833
        %v2835 = vpop.f32.mrf.mxu0
        %v2836 = vadd.f32 0.0, %v2835
        %2837 = vmatprep.mubr.f32.mxu0 0.0
        %2838 = vmatmul.mubr.f32.gmra.mxu0 %v1981
        %v2839 = vpop.f32.mrf.mxu0
        %v2840 = vadd.f32 0.0, %v2839
        %v2841 = vpop.f32.mrf.mxu0
        %v2842 = vadd.f32 0.0, %v2841
        %2843 = vmatprep.mubr.f32.mxu0 0.0
        %2844 = vmatmul.mubr.f32.gmra.mxu0 %v1984
        %v2845 = vpop.f32.mrf.mxu0
        %v2846 = vadd.f32 0.0, %v2845
        %v2847 = vpop.f32.mrf.mxu0
        %v2848 = vadd.f32 0.0, %v2847
        %2849 = vmatprep.mubr.f32.mxu0 0.0
        %2850 = vmatmul.mubr.f32.gmra.mxu0 %v1987
        %v2851 = vpop.f32.mrf.mxu0
        %v2852 = vadd.f32 0.0, %v2851
        %v2853 = vpop.f32.mrf.mxu0
        %v2854 = vadd.f32 0.0, %v2853
        %2855 = vmatprep.mubr.f32.mxu0 0.0
        %2856 = vmatmul.mubr.f32.gmra.mxu0 %v1990
        %v2857 = vpop.f32.mrf.mxu0
        %v2858 = vadd.f32 0.0, %v2857
        %v2859 = vpop.f32.mrf.mxu0
        %v2860 = vadd.f32 0.0, %v2859
        %2861 = vmatprep.mubr.f32.mxu0 0.0
        %2862 = vmatmul.mubr.f32.gmra.mxu0 %v1993
        %v2863 = vpop.f32.mrf.mxu0
        %v2864 = vadd.f32 0.0, %v2863
        %v2865 = vpop.f32.mrf.mxu0
        %v2866 = vadd.f32 0.0, %v2865
        %2867 = vmatprep.mubr.f32.mxu0 0.0
        %2868 = vmatmul.mubr.f32.gmra.mxu0 %v1996
        %v2869 = vpop.f32.mrf.mxu0
        %v2870 = vadd.f32 0.0, %v2869
        %v2871 = vpop.f32.mrf.mxu0
        %v2872 = vadd.f32 0.0, %v2871
        %2873 = vmatprep.mubr.f32.mxu0 0.0
        %2874 = vmatmul.mubr.f32.gmra.mxu0 %v1999
        %v2875 = vpop.f32.mrf.mxu0
        %v2876 = vadd.f32 0.0, %v2875
        %v2877 = vpop.f32.mrf.mxu0
        %v2878 = vadd.f32 0.0, %v2877
        %2879 = vmatprep.mubr.f32.mxu0 0.0
        %2880 = vmatmul.mubr.f32.gmra.mxu0 %v2002
        %v2881 = vpop.f32.mrf.mxu0
        %v2882 = vadd.f32 0.0, %v2881
        %v2883 = vpop.f32.mrf.mxu0
        %v2884 = vadd.f32 0.0, %v2883
        %2885 = vmatprep.mubr.f32.mxu0 0.0
        %2886 = vmatmul.mubr.f32.gmra.mxu0 %v2005
        %v2887 = vpop.f32.mrf.mxu0
        %v2888 = vadd.f32 0.0, %v2887
        %v2889 = vpop.f32.mrf.mxu0
        %v2890 = vadd.f32 0.0, %v2889
        %2891 = vmatprep.mubr.f32.mxu0 0.0
        %2892 = vmatmul.mubr.f32.gmra.mxu0 %v2008
        %v2893 = vpop.f32.mrf.mxu0
        %v2894 = vadd.f32 0.0, %v2893
        %v2895 = vpop.f32.mrf.mxu0
        %v2896 = vadd.f32 0.0, %v2895
        %2897 = vmatprep.mubr.f32.mxu0 0.0
        %2898 = vmatmul.mubr.f32.gmra.mxu0 %v2011
        %v2899 = vpop.f32.mrf.mxu0
        %v2900 = vadd.f32 0.0, %v2899
        %v2901 = vpop.f32.mrf.mxu0
        %v2902 = vadd.f32 0.0, %v2901
        %2903 = vmatprep.mubr.f32.mxu0 0.0
        %2904 = vmatmul.mubr.f32.gmra.mxu0 %v2014
        %v2905 = vpop.f32.mrf.mxu0
        %v2906 = vadd.f32 0.0, %v2905
        %v2907 = vpop.f32.mrf.mxu0
        %v2908 = vadd.f32 0.0, %v2907
        %2909 = vmatprep.mubr.f32.mxu0 0.0
        %2910 = vmatmul.mubr.f32.gmra.mxu0 %v2017
        %v2911 = vpop.f32.mrf.mxu0
        %v2912 = vadd.f32 0.0, %v2911
        %v2913 = vpop.f32.mrf.mxu0
        %v2914 = vadd.f32 0.0, %v2913
        %2915 = vmatprep.mubr.f32.mxu0 0.0
        %2916 = vmatmul.mubr.f32.gmra.mxu0 %v2020
        %v2917 = vpop.f32.mrf.mxu0
        %v2918 = vadd.f32 0.0, %v2917
        %v2919 = vpop.f32.mrf.mxu0
        %v2920 = vadd.f32 0.0, %v2919
        %2921 = vmatprep.mubr.f32.mxu0 0.0
        %2922 = vmatmul.mubr.f32.gmra.mxu0 %v2023
        %v2923 = vpop.f32.mrf.mxu0
        %v2924 = vadd.f32 0.0, %v2923
        %v2925 = vpop.f32.mrf.mxu0
        %v2926 = vadd.f32 0.0, %v2925
        %2927 = vmatprep.mubr.f32.mxu0 0.0
        %2928 = vmatmul.mubr.f32.gmra.mxu0 %v2026
        %v2929 = vpop.f32.mrf.mxu0
        %v2930 = vadd.f32 0.0, %v2929
        %v2931 = vpop.f32.mrf.mxu0
        %v2932 = vadd.f32 0.0, %v2931
        %2933 = vmatprep.mubr.f32.mxu0 0.0
        %2934 = vmatmul.mubr.f32.gmra.mxu0 %v2029
        %v2935 = vpop.f32.mrf.mxu0
        %v2936 = vadd.f32 0.0, %v2935
        %v2937 = vpop.f32.mrf.mxu0
        %v2938 = vadd.f32 0.0, %v2937
        %2939 = vmatprep.mubr.f32.mxu0 0.0
        %2940 = vmatmul.mubr.f32.gmra.mxu0 %v2032
        %v2941 = vpop.f32.mrf.mxu0
        %v2942 = vadd.f32 0.0, %v2941
        %v2943 = vpop.f32.mrf.mxu0
        %v2944 = vadd.f32 0.0, %v2943
        %2945 = vmatprep.mubr.f32.mxu0 0.0
        %2946 = vmatmul.mubr.f32.gmra.mxu0 %v2035
        %v2947 = vpop.f32.mrf.mxu0
        %v2948 = vadd.f32 0.0, %v2947
        %v2949 = vpop.f32.mrf.mxu0
        %v2950 = vadd.f32 0.0, %v2949
        %2951 = vmatprep.mubr.f32.mxu0 0.0
        %2952 = vmatmul.mubr.f32.gmra.mxu0 %v2038
        %v2953 = vpop.f32.mrf.mxu0
        %v2954 = vadd.f32 0.0, %v2953
        %v2955 = vpop.f32.mrf.mxu0
        %v2956 = vadd.f32 0.0, %v2955
        %2957 = vmatprep.mubr.f32.mxu0 0.0
        %2958 = vmatmul.mubr.f32.gmra.mxu0 %v2041
        %v2959 = vpop.f32.mrf.mxu0
        %v2960 = vadd.f32 0.0, %v2959
        %v2961 = vpop.f32.mrf.mxu0
        %v2962 = vadd.f32 0.0, %v2961
        %2963 = vmatprep.mubr.f32.mxu0 0.0
        %2964 = vmatmul.mubr.f32.gmra.mxu0 %v2044
        %v2965 = vpop.f32.mrf.mxu0
        %v2966 = vadd.f32 0.0, %v2965
        %v2967 = vpop.f32.mrf.mxu0
        %v2968 = vadd.f32 0.0, %v2967
        %2969 = vmatprep.mubr.f32.mxu0 0.0
        %2970 = vmatmul.mubr.f32.gmra.mxu0 %v2047
        %v2971 = vpop.f32.mrf.mxu0
        %v2972 = vadd.f32 0.0, %v2971
        %v2973 = vpop.f32.mrf.mxu0
        %v2974 = vadd.f32 0.0, %v2973
        %2975 = vmatprep.mubr.f32.mxu0 0.0
        %2976 = vmatmul.mubr.f32.gmra.mxu0 %v2050
        %v2977 = vpop.f32.mrf.mxu0
        %v2978 = vadd.f32 0.0, %v2977
        %v2979 = vpop.f32.mrf.mxu0
        %v2980 = vadd.f32 0.0, %v2979
        %2981 = vmatprep.mubr.f32.mxu0 0.0
        %2982 = vmatmul.mubr.f32.gmra.mxu0 %v2053
        %v2983 = vpop.f32.mrf.mxu0
        %v2984 = vadd.f32 0.0, %v2983
        %v2985 = vpop.f32.mrf.mxu0
        %v2986 = vadd.f32 0.0, %v2985
        %2987 = vmatprep.mubr.f32.mxu0 0.0
        %2988 = vmatmul.mubr.f32.gmra.mxu0 %v2056
        %v2989 = vpop.f32.mrf.mxu0
        %v2990 = vadd.f32 0.0, %v2989
        %v2991 = vpop.f32.mrf.mxu0
        %v2992 = vadd.f32 0.0, %v2991
        %2993 = vmatprep.mubr.f32.mxu0 0.0
        %2994 = vmatmul.mubr.f32.gmra.mxu0 %v2059
        %v2995 = vpop.f32.mrf.mxu0
        %v2996 = vadd.f32 0.0, %v2995
        %v2997 = vpop.f32.mrf.mxu0
        %v2998 = vadd.f32 0.0, %v2997
        %2999 = vmatprep.mubr.f32.mxu0 0.0
        %3000 = vmatmul.mubr.f32.gmra.mxu0 %v2062
        %v3001 = vpop.f32.mrf.mxu0
        %v3002 = vadd.f32 0.0, %v3001
        %v3003 = vpop.f32.mrf.mxu0
        %v3004 = vadd.f32 0.0, %v3003
        %3005 = vmatprep.mubr.f32.mxu0 0.0
        %3006 = vmatmul.mubr.f32.gmra.mxu0 %v2065
        %v3007 = vpop.f32.mrf.mxu0
        %v3008 = vadd.f32 0.0, %v3007
        %v3009 = vpop.f32.mrf.mxu0
        %v3010 = vadd.f32 0.0, %v3009
        %3011 = vmatprep.mubr.f32.mxu0 0.0
        %3012 = vmatmul.mubr.f32.gmra.mxu0 %v2068
        %v3013 = vpop.f32.mrf.mxu0
        %v3014 = vadd.f32 0.0, %v3013
        %v3015 = vpop.f32.mrf.mxu0
        %v3016 = vadd.f32 0.0, %v3015
        %3017 = vmatprep.mubr.f32.mxu0 0.0
        %3018 = vmatmul.mubr.f32.gmra.mxu0 %v2071
        %v3019 = vpop.f32.mrf.mxu0
        %v3020 = vadd.f32 0.0, %v3019
        %v3021 = vpop.f32.mrf.mxu0
        %v3022 = vadd.f32 0.0, %v3021
        %3023 = vmatprep.mubr.f32.mxu0 0.0
        %3024 = vmatmul.mubr.f32.gmra.mxu0 %v2074
        %v3025 = vpop.f32.mrf.mxu0
        %v3026 = vadd.f32 0.0, %v3025
        %v3027 = vpop.f32.mrf.mxu0
        %v3028 = vadd.f32 0.0, %v3027
        %3029 = vmatprep.mubr.f32.mxu0 0.0
        %3030 = vmatmul.mubr.f32.gmra.mxu0 %v2077
        %v3031 = vpop.f32.mrf.mxu0
        %v3032 = vadd.f32 0.0, %v3031
        %v3033 = vpop.f32.mrf.mxu0
        %v3034 = vadd.f32 0.0, %v3033
        %3035 = vmatprep.mubr.f32.mxu0 0.0
        %3036 = vmatmul.mubr.f32.gmra.mxu0 %v2080
        %v3037 = vpop.f32.mrf.mxu0
        %v3038 = vadd.f32 0.0, %v3037
        %v3039 = vpop.f32.mrf.mxu0
        %v3040 = vadd.f32 0.0, %v3039
        %3041 = vmatprep.mubr.f32.mxu0 0.0
        %3042 = vmatmul.mubr.f32.gmra.mxu0 %v2083
        %v3043 = vpop.f32.mrf.mxu0
        %v3044 = vadd.f32 0.0, %v3043
        %v3045 = vpop.f32.mrf.mxu0
        %v3046 = vadd.f32 0.0, %v3045
        %3047 = vmatprep.mubr.f32.mxu0 0.0
        %3048 = vmatmul.mubr.f32.gmra.mxu0 %v2086
        %v3049 = vpop.f32.mrf.mxu0
        %v3050 = vadd.f32 0.0, %v3049
        %v3051 = vpop.f32.mrf.mxu0
        %v3052 = vadd.f32 0.0, %v3051
        %3053 = vmatprep.mubr.f32.mxu0 0.0
        %3054 = vmatmul.mubr.f32.gmra.mxu0 %v2089
        %v3055 = vpop.f32.mrf.mxu0
        %v3056 = vadd.f32 0.0, %v3055
        %v3057 = vpop.f32.mrf.mxu0
        %v3058 = vadd.f32 0.0, %v3057
        %3059 = vmatprep.mubr.f32.mxu0 0.0
        %3060 = vmatmul.mubr.f32.gmra.mxu0 %v2092
        %v3061 = vpop.f32.mrf.mxu0
        %v3062 = vadd.f32 0.0, %v3061
        %v3063 = vpop.f32.mrf.mxu0
        %v3064 = vadd.f32 0.0, %v3063
        %3065 = vmatprep.mubr.f32.mxu0 0.0
        %3066 = vmatmul.mubr.f32.gmra.mxu0 %v2095
        %v3067 = vpop.f32.mrf.mxu0
        %v3068 = vadd.f32 0.0, %v3067
        %v3069 = vpop.f32.mrf.mxu0
        %v3070 = vadd.f32 0.0, %v3069
        %3071 = vmatprep.mubr.f32.mxu0 0.0
        %3072 = vmatmul.mubr.f32.gmra.mxu0 %v2098
        %v3073 = vpop.f32.mrf.mxu0
        %v3074 = vadd.f32 0.0, %v3073
        %v3075 = vpop.f32.mrf.mxu0
        %v3076 = vadd.f32 0.0, %v3075
        %3077 = vmatprep.mubr.f32.mxu0 0.0
        %3078 = vmatmul.mubr.f32.gmra.mxu0 %v2101
        %v3079 = vpop.f32.mrf.mxu0
        %v3080 = vadd.f32 0.0, %v3079
        %v3081 = vpop.f32.mrf.mxu0
        %v3082 = vadd.f32 0.0, %v3081
        %3083 = vmatprep.mubr.f32.mxu0 0.0
        %3084 = vmatmul.mubr.f32.gmra.mxu0 %v2104
        %v3085 = vpop.f32.mrf.mxu0
        %v3086 = vadd.f32 0.0, %v3085
        %v3087 = vpop.f32.mrf.mxu0
        %v3088 = vadd.f32 0.0, %v3087
        %3089 = vmatprep.mubr.f32.mxu0 0.0
        %3090 = vmatmul.mubr.f32.gmra.mxu0 %v2107
        %v3091 = vpop.f32.mrf.mxu0
        %v3092 = vadd.f32 0.0, %v3091
        %v3093 = vpop.f32.mrf.mxu0
        %v3094 = vadd.f32 0.0, %v3093
        %3095 = vmatprep.mubr.f32.mxu0 0.0
        %3096 = vmatmul.mubr.f32.gmra.mxu0 %v2110
        %v3097 = vpop.f32.mrf.mxu0
        %v3098 = vadd.f32 0.0, %v3097
        %v3099 = vpop.f32.mrf.mxu0
        %v3100 = vadd.f32 0.0, %v3099
        %3101 = vmatprep.mubr.f32.mxu0 0.0
        %3102 = vmatmul.mubr.f32.gmra.mxu0 %v2113
        %v3103 = vpop.f32.mrf.mxu0
        %v3104 = vadd.f32 0.0, %v3103
        %v3105 = vpop.f32.mrf.mxu0
        %v3106 = vadd.f32 0.0, %v3105
        %3107 = vmatprep.mubr.f32.mxu0 0.0
        %3108 = vmatmul.mubr.f32.gmra.mxu0 %v2116
        %v3109 = vpop.f32.mrf.mxu0
        %v3110 = vadd.f32 0.0, %v3109
        %v3111 = vpop.f32.mrf.mxu0
        %v3112 = vadd.f32 0.0, %v3111
        %3113 = vmatprep.mubr.f32.mxu0 0.0
        %3114 = vmatmul.mubr.f32.gmra.mxu0 %v2119
        %v3115 = vpop.f32.mrf.mxu0
        %v3116 = vadd.f32 0.0, %v3115
        %v3117 = vpop.f32.mrf.mxu0
        %v3118 = vadd.f32 0.0, %v3117
        %3119 = vmatprep.mubr.f32.mxu0 0.0
        %3120 = vmatmul.mubr.f32.gmra.mxu0 %v2122
        %v3121 = vpop.f32.mrf.mxu0
        %v3122 = vadd.f32 0.0, %v3121
        %v3123 = vpop.f32.mrf.mxu0
        %v3124 = vadd.f32 0.0, %v3123
        %3125 = vmatprep.mubr.f32.mxu0 0.0
        %3126 = vmatmul.mubr.f32.gmra.mxu0 %v2125
        %v3127 = vpop.f32.mrf.mxu0
        %v3128 = vadd.f32 0.0, %v3127
        %v3129 = vpop.f32.mrf.mxu0
        %v3130 = vadd.f32 0.0, %v3129
        %3131 = vmatprep.mubr.f32.mxu0 0.0
        %3132 = vmatmul.mubr.f32.gmra.mxu0 %v2128
        %v3133 = vpop.f32.mrf.mxu0
        %v3134 = vadd.f32 0.0, %v3133
        %v3135 = vpop.f32.mrf.mxu0
        %v3136 = vadd.f32 0.0, %v3135
        %3137 = vmatprep.mubr.f32.mxu0 0.0
        %3138 = vmatmul.mubr.f32.gmra.mxu0 %v2131
        %v3139 = vpop.f32.mrf.mxu0
        %v3140 = vadd.f32 0.0, %v3139
        %v3141 = vpop.f32.mrf.mxu0
        %v3142 = vadd.f32 0.0, %v3141
        %3143 = vmatprep.mubr.f32.mxu0 0.0
        %3144 = vmatmul.mubr.f32.gmra.mxu0 %v2134
        %v3145 = vpop.f32.mrf.mxu0
        %v3146 = vadd.f32 0.0, %v3145
        %v3147 = vpop.f32.mrf.mxu0
        %v3148 = vadd.f32 0.0, %v3147
        %3149 = vmatprep.mubr.f32.mxu0 0.0
        %3150 = vmatmul.mubr.f32.gmra.mxu0 %v2137
        %v3151 = vpop.f32.mrf.mxu0
        %v3152 = vadd.f32 0.0, %v3151
        %v3153 = vpop.f32.mrf.mxu0
        %v3154 = vadd.f32 0.0, %v3153
        %3155 = vmatprep.mubr.f32.mxu0 0.0
        %3156 = vmatmul.mubr.f32.gmra.mxu0 %v2140
        %v3157 = vpop.f32.mrf.mxu0
        %v3158 = vadd.f32 0.0, %v3157
        %v3159 = vpop.f32.mrf.mxu0
        %v3160 = vadd.f32 0.0, %v3159
        %3161 = vmatprep.mubr.f32.mxu0 0.0
        %3162 = vmatmul.mubr.f32.gmra.mxu0 %v2143
        %v3163 = vpop.f32.mrf.mxu0
        %v3164 = vadd.f32 0.0, %v3163
        %v3165 = vpop.f32.mrf.mxu0
        %v3166 = vadd.f32 0.0, %v3165
        %3167 = vmatprep.mubr.f32.mxu0 0.0
        %3168 = vmatmul.mubr.f32.gmra.mxu0 %v2146
        %v3169 = vpop.f32.mrf.mxu0
        %v3170 = vadd.f32 0.0, %v3169
        %v3171 = vpop.f32.mrf.mxu0
        %v3172 = vadd.f32 0.0, %v3171
        %3173 = vmatprep.mubr.f32.mxu0 0.0
        %3174 = vmatmul.mubr.f32.gmra.mxu0 %v2149
        %v3175 = vpop.f32.mrf.mxu0
        %v3176 = vadd.f32 0.0, %v3175
        %v3177 = vpop.f32.mrf.mxu0
        %v3178 = vadd.f32 0.0, %v3177
        %3179 = vmatprep.mubr.f32.mxu0 0.0
        %3180 = vmatmul.mubr.f32.gmra.mxu0 %v2152
        %v3181 = vpop.f32.mrf.mxu0
        %v3182 = vadd.f32 0.0, %v3181
        %v3183 = vpop.f32.mrf.mxu0
        %v3184 = vadd.f32 0.0, %v3183
        %3185 = vmatprep.mubr.f32.mxu0 0.0
        %3186 = vmatmul.mubr.f32.gmra.mxu0 %v2155
        %v3187 = vpop.f32.mrf.mxu0
        %v3188 = vadd.f32 0.0, %v3187
        %v3189 = vpop.f32.mrf.mxu0
        %v3190 = vadd.f32 0.0, %v3189
        %3191 = vmatprep.mubr.f32.mxu0 0.0
        %3192 = vmatmul.mubr.f32.gmra.mxu0 %v2158
        %v3193 = vpop.f32.mrf.mxu0
        %v3194 = vadd.f32 0.0, %v3193
        %v3195 = vpop.f32.mrf.mxu0
        %v3196 = vadd.f32 0.0, %v3195
        %3197 = vmatprep.mubr.f32.mxu0 0.0
        %3198 = vmatmul.mubr.f32.gmra.mxu0 %v2161
        %v3199 = vpop.f32.mrf.mxu0
        %v3200 = vadd.f32 0.0, %v3199
        %v3201 = vpop.f32.mrf.mxu0
        %v3202 = vadd.f32 0.0, %v3201
        %3203 = vmatprep.mubr.f32.mxu0 0.0
        %3204 = vmatmul.mubr.f32.gmra.mxu0 %v2164
        %v3205 = vpop.f32.mrf.mxu0
        %v3206 = vadd.f32 0.0, %v3205
        %v3207 = vpop.f32.mrf.mxu0
        %v3208 = vadd.f32 0.0, %v3207
        %3209 = vmatprep.mubr.f32.mxu0 0.0
        %3210 = vmatmul.mubr.f32.gmra.mxu0 %v2167
        %v3211 = vpop.f32.mrf.mxu0
        %v3212 = vadd.f32 0.0, %v3211
        %v3213 = vpop.f32.mrf.mxu0
        %v3214 = vadd.f32 0.0, %v3213
        %3215 = vmatprep.mubr.f32.mxu0 0.0
        %3216 = vmatmul.mubr.f32.gmra.mxu0 %v2170
        %v3217 = vpop.f32.mrf.mxu0
        %v3218 = vadd.f32 0.0, %v3217
        %v3219 = vpop.f32.mrf.mxu0
        %v3220 = vadd.f32 0.0, %v3219
        %3221 = vmatprep.mubr.f32.mxu0 0.0
        %3222 = vmatmul.mubr.f32.gmra.mxu0 %v2173
        %v3223 = vpop.f32.mrf.mxu0
        %v3224 = vadd.f32 0.0, %v3223
        %v3225 = vpop.f32.mrf.mxu0
        %v3226 = vadd.f32 0.0, %v3225
        %3227 = vmatprep.mubr.f32.mxu0 0.0
        %3228 = vmatmul.mubr.f32.gmra.mxu0 %v2176
        %v3229 = vpop.f32.mrf.mxu0
        %v3230 = vadd.f32 0.0, %v3229
        %v3231 = vpop.f32.mrf.mxu0
        %v3232 = vadd.f32 0.0, %v3231
        %3233 = vmatprep.mubr.f32.mxu0 0.0
        %3234 = vmatmul.mubr.f32.gmra.mxu0 %v2179
        %v3235 = vpop.f32.mrf.mxu0
        %v3236 = vadd.f32 0.0, %v3235
        %v3237 = vpop.f32.mrf.mxu0
        %v3238 = vadd.f32 0.0, %v3237
        %3239 = vmatprep.mubr.f32.mxu0 0.0
        %3240 = vmatmul.mubr.f32.gmra.mxu0 %v2182
        %v3241 = vpop.f32.mrf.mxu0
        %v3242 = vadd.f32 0.0, %v3241
        %v3243 = vpop.f32.mrf.mxu0
        %v3244 = vadd.f32 0.0, %v3243
        %3245 = vmatprep.mubr.f32.mxu0 0.0
        %3246 = vmatmul.mubr.f32.gmra.mxu0 %v2185
        %v3247 = vpop.f32.mrf.mxu0
        %v3248 = vadd.f32 0.0, %v3247
        %v3249 = vpop.f32.mrf.mxu0
        %v3250 = vadd.f32 0.0, %v3249
        %3251 = vmatprep.mubr.f32.mxu0 0.0
        %3252 = vmatmul.mubr.f32.gmra.mxu0 %v2188
        %v3253 = vpop.f32.mrf.mxu0
        %v3254 = vadd.f32 0.0, %v3253
        %v3255 = vpop.f32.mrf.mxu0
        %v3256 = vadd.f32 0.0, %v3255
        %3257 = vmatprep.mubr.f32.mxu0 0.0
        %3258 = vmatmul.mubr.f32.gmra.mxu0 %v2191
        %v3259 = vpop.f32.mrf.mxu0
        %v3260 = vadd.f32 0.0, %v3259
        %v3261 = vpop.f32.mrf.mxu0
        %v3262 = vadd.f32 0.0, %v3261
        %3263 = vmatprep.mubr.f32.mxu0 0.0
        %3264 = vmatmul.mubr.f32.gmra.mxu0 %v2194
        %v3265 = vpop.f32.mrf.mxu0
        %v3266 = vadd.f32 0.0, %v3265
        %v3267 = vpop.f32.mrf.mxu0
        %v3268 = vadd.f32 0.0, %v3267
        %3269 = vmatprep.mubr.f32.mxu0 0.0
        %3270 = vmatmul.mubr.f32.gmra.mxu0 %v2197
        %v3271 = vpop.f32.mrf.mxu0
        %v3272 = vadd.f32 0.0, %v3271
        %v3273 = vpop.f32.mrf.mxu0
        %v3274 = vadd.f32 0.0, %v3273
        %3275 = vmatprep.mubr.f32.mxu0 0.0
        %3276 = vmatmul.mubr.f32.gmra.mxu0 %v2200
        %v3277 = vpop.f32.mrf.mxu0
        %v3278 = vadd.f32 0.0, %v3277
        %v3279 = vpop.f32.mrf.mxu0
        %v3280 = vadd.f32 0.0, %v3279
        %3281 = vmatprep.mubr.f32.mxu0 0.0
        %3282 = vmatmul.mubr.f32.gmra.mxu0 %v2203
        %v3283 = vpop.f32.mrf.mxu0
        %v3284 = vadd.f32 0.0, %v3283
        %v3285 = vpop.f32.mrf.mxu0
        %v3286 = vadd.f32 0.0, %v3285
        %3287 = vmatprep.mubr.f32.mxu0 0.0
        %3288 = vmatmul.mubr.f32.gmra.mxu0 %v2206
        %v3289 = vpop.f32.mrf.mxu0
        %v3290 = vadd.f32 0.0, %v3289
        %v3291 = vpop.f32.mrf.mxu0
        %v3292 = vadd.f32 0.0, %v3291
        %3293 = vmatprep.mubr.f32.mxu0 0.0
        %3294 = vmatmul.mubr.f32.gmra.mxu0 %v2209
        %v3295 = vpop.f32.mrf.mxu0
        %v3296 = vadd.f32 0.0, %v3295
        %v3297 = vpop.f32.mrf.mxu0
        %v3298 = vadd.f32 0.0, %v3297
        %3299 = vmatprep.mubr.f32.mxu0 0.0
        %3300 = vmatmul.mubr.f32.gmra.mxu0 %v2212
        %v3301 = vpop.f32.mrf.mxu0
        %v3302 = vadd.f32 0.0, %v3301
        %v3303 = vpop.f32.mrf.mxu0
        %v3304 = vadd.f32 0.0, %v3303
        %3305 = vmatprep.mubr.f32.mxu0 0.0
        %3306 = vmatmul.mubr.f32.gmra.mxu0 %v2215
        %v3307 = vpop.f32.mrf.mxu0
        %v3308 = vadd.f32 0.0, %v3307
        %v3309 = vpop.f32.mrf.mxu0
        %v3310 = vadd.f32 0.0, %v3309
        %3311 = vmatprep.mubr.f32.mxu0 0.0
        %3312 = vmatmul.mubr.f32.gmra.mxu0 %v2218
        %v3313 = vpop.f32.mrf.mxu0
        %v3314 = vadd.f32 0.0, %v3313
        %v3315 = vpop.f32.mrf.mxu0
        %v3316 = vadd.f32 0.0, %v3315
        %3317 = vmatprep.mubr.f32.mxu0 0.0
        %3318 = vmatmul.mubr.f32.gmra.mxu0 %v2221
        %v3319 = vpop.f32.mrf.mxu0
        %v3320 = vadd.f32 0.0, %v3319
        %v3321 = vpop.f32.mrf.mxu0
        %v3322 = vadd.f32 0.0, %v3321
        %3323 = vmatprep.mubr.f32.mxu0 0.0
        %3324 = vmatmul.mubr.f32.gmra.mxu0 %v2224
        %v3325 = vpop.f32.mrf.mxu0
        %v3326 = vadd.f32 0.0, %v3325
        %v3327 = vpop.f32.mrf.mxu0
        %v3328 = vadd.f32 0.0, %v3327
        %3329 = vmatprep.mubr.f32.mxu0 0.0
        %3330 = vmatmul.mubr.f32.gmra.mxu0 %v2227
        %v3331 = vpop.f32.mrf.mxu0
        %v3332 = vadd.f32 0.0, %v3331
        %v3333 = vpop.f32.mrf.mxu0
        %v3334 = vadd.f32 0.0, %v3333
        %3335 = vmatprep.mubr.f32.mxu0 0.0
        %3336 = vmatmul.mubr.f32.gmra.mxu0 %v2230
        %v3337 = vpop.f32.mrf.mxu0
        %v3338 = vadd.f32 0.0, %v3337
        %v3339 = vpop.f32.mrf.mxu0
        %v3340 = vadd.f32 0.0, %v3339
        %3341 = vmatprep.mubr.f32.mxu0 0.0
        %3342 = vmatmul.mubr.f32.gmra.mxu0 %v2233
        %v3343 = vpop.f32.mrf.mxu0
        %v3344 = vadd.f32 0.0, %v3343
        %v3345 = vpop.f32.mrf.mxu0
        %v3346 = vadd.f32 0.0, %v3345
        %3347 = vmatprep.mubr.f32.mxu0 0.0
        %3348 = vmatmul.mubr.f32.gmra.mxu0 %v2236
        %v3349 = vpop.f32.mrf.mxu0
        %v3350 = vadd.f32 0.0, %v3349
        %v3351 = vpop.f32.mrf.mxu0
        %v3352 = vadd.f32 0.0, %v3351
        %3353 = vmatprep.mubr.f32.mxu0 0.0
        %3354 = vmatmul.mubr.f32.gmra.mxu0 %v2239
        %v3355 = vpop.f32.mrf.mxu0
        %v3356 = vadd.f32 0.0, %v3355
        %v3357 = vpop.f32.mrf.mxu0
        %v3358 = vadd.f32 0.0, %v3357
        %3359 = vmatprep.mubr.f32.mxu0 0.0
        %3360 = vmatmul.mubr.f32.gmra.mxu0 %v2242
        %v3361 = vpop.f32.mrf.mxu0
        %v3362 = vadd.f32 0.0, %v3361
        %v3363 = vpop.f32.mrf.mxu0
        %v3364 = vadd.f32 0.0, %v3363
        %3365 = vmatprep.mubr.f32.mxu0 0.0
        %3366 = vmatmul.mubr.f32.gmra.mxu0 %v2245
        %v3367 = vpop.f32.mrf.mxu0
        %v3368 = vadd.f32 0.0, %v3367
        %v3369 = vpop.f32.mrf.mxu0
        %v3370 = vadd.f32 0.0, %v3369
        %3371 = vmatprep.mubr.f32.mxu0 0.0
        %3372 = vmatmul.mubr.f32.gmra.mxu0 %v2248
        %v3373 = vpop.f32.mrf.mxu0
        %v3374 = vadd.f32 0.0, %v3373
        %v3375 = vpop.f32.mrf.mxu0
        %v3376 = vadd.f32 0.0, %v3375
        %3377 = vmatprep.mubr.f32.mxu0 0.0
        %3378 = vmatmul.mubr.f32.gmra.mxu0 %v2251
        %v3379 = vpop.f32.mrf.mxu0
        %v3380 = vadd.f32 0.0, %v3379
        %v3381 = vpop.f32.mrf.mxu0
        %v3382 = vadd.f32 0.0, %v3381
        %3383 = vmatprep.mubr.f32.mxu0 0.0
        %3384 = vmatmul.mubr.f32.gmra.mxu0 %v2254
        %v3385 = vpop.f32.mrf.mxu0
        %v3386 = vadd.f32 0.0, %v3385
        %v3387 = vpop.f32.mrf.mxu0
        %v3388 = vadd.f32 0.0, %v3387
        %3389 = vmatprep.mubr.f32.mxu0 0.0
        %3390 = vmatmul.mubr.f32.gmra.mxu0 %v2257
        %v3391 = vpop.f32.mrf.mxu0
        %v3392 = vadd.f32 0.0, %v3391
        %v3393 = vpop.f32.mrf.mxu0
        %v3394 = vadd.f32 0.0, %v3393
        %3395 = vmatprep.mubr.f32.mxu0 0.0
        %3396 = vmatmul.mubr.f32.gmra.mxu0 %v2260
        %v3397 = vpop.f32.mrf.mxu0
        %v3398 = vadd.f32 0.0, %v3397
        %v3399 = vpop.f32.mrf.mxu0
        %v3400 = vadd.f32 0.0, %v3399
        %3401 = vmatprep.mubr.f32.mxu0 0.0
        %3402 = vmatmul.mubr.f32.gmra.mxu0 %v2263
        %v3403 = vpop.f32.mrf.mxu0
        %v3404 = vadd.f32 0.0, %v3403
        %v3405 = vpop.f32.mrf.mxu0
        %v3406 = vadd.f32 0.0, %v3405
        %3407 = vmatprep.mubr.f32.mxu0 0.0
        %3408 = vmatmul.mubr.f32.gmra.mxu0 %v2266
        %v3409 = vpop.f32.mrf.mxu0
        %v3410 = vadd.f32 0.0, %v3409
        %v3411 = vpop.f32.mrf.mxu0
        %v3412 = vadd.f32 0.0, %v3411
        %3413 = vmatprep.mubr.f32.mxu0 0.0
        %3414 = vmatmul.mubr.f32.gmra.mxu0 %v2269
        %v3415 = vpop.f32.mrf.mxu0
        %v3416 = vadd.f32 0.0, %v3415
        %v3417 = vpop.f32.mrf.mxu0
        %v3418 = vadd.f32 0.0, %v3417
        %3419 = vmatprep.mubr.f32.mxu0 0.0
        %3420 = vmatmul.mubr.f32.gmra.mxu0 %v2272
        %v3421 = vpop.f32.mrf.mxu0
        %v3422 = vadd.f32 0.0, %v3421
        %v3423 = vpop.f32.mrf.mxu0
        %v3424 = vadd.f32 0.0, %v3423
        %3425 = vmatprep.mubr.f32.mxu0 0.0
        %3426 = vmatmul.mubr.f32.gmra.mxu0 %v2275
        %v3427 = vpop.f32.mrf.mxu0
        %v3428 = vadd.f32 0.0, %v3427
        %v3429 = vpop.f32.mrf.mxu0
        %v3430 = vadd.f32 0.0, %v3429
        %3431 = vmatprep.mubr.f32.mxu0 0.0
        %3432 = vmatmul.mubr.f32.gmra.mxu0 %v2278
        %v3433 = vpop.f32.mrf.mxu0
        %v3434 = vadd.f32 0.0, %v3433
        %v3435 = vpop.f32.mrf.mxu0
        %v3436 = vadd.f32 0.0, %v3435
        %3437 = vmatprep.mubr.f32.mxu0 0.0
        %3438 = vmatmul.mubr.f32.gmra.mxu0 %v2281
        %v3439 = vpop.f32.mrf.mxu0
        %v3440 = vadd.f32 0.0, %v3439
        %v3441 = vpop.f32.mrf.mxu0
        %v3442 = vadd.f32 0.0, %v3441
        %3443 = vmatprep.mubr.f32.mxu0 0.0
        %3444 = vmatmul.mubr.f32.gmra.mxu0 %v2284
        %v3445 = vpop.f32.mrf.mxu0
        %v3446 = vadd.f32 0.0, %v3445
        %v3447 = vpop.f32.mrf.mxu0
        %v3448 = vadd.f32 0.0, %v3447
        %3449 = vmatprep.mubr.f32.mxu0 0.0
        %3450 = vmatmul.mubr.f32.gmra.mxu0 %v2287
        %v3451 = vpop.f32.mrf.mxu0
        %v3452 = vadd.f32 0.0, %v3451
        %v3453 = vpop.f32.mrf.mxu0
        %v3454 = vadd.f32 0.0, %v3453
        %3455 = vmatprep.mubr.f32.mxu0 0.0
        %3456 = vmatmul.mubr.f32.gmra.mxu0 %v2290
        %v3457 = vpop.f32.mrf.mxu0
        %v3458 = vadd.f32 0.0, %v3457
        %v3459 = vpop.f32.mrf.mxu0
        %v3460 = vadd.f32 0.0, %v3459
        %3461 = vmatprep.mubr.f32.mxu0 0.0
        %3462 = vmatmul.mubr.f32.gmra.mxu0 %v2293
        %v3463 = vpop.f32.mrf.mxu0
        %v3464 = vadd.f32 0.0, %v3463
        %v3465 = vpop.f32.mrf.mxu0
        %v3466 = vadd.f32 0.0, %v3465
        %3467 = vmatprep.mubr.f32.mxu0 0.0
        %3468 = vmatmul.mubr.f32.gmra.mxu0 %v2296
        %v3469 = vpop.f32.mrf.mxu0
        %v3470 = vadd.f32 0.0, %v3469
        %v3471 = vpop.f32.mrf.mxu0
        %v3472 = vadd.f32 0.0, %v3471
        %3473 = vmatprep.mubr.f32.mxu0 0.0
        %3474 = vmatmul.mubr.f32.gmra.mxu0 %v2299
        %v3475 = vpop.f32.mrf.mxu0
        %v3476 = vadd.f32 0.0, %v3475
        %v3477 = vpop.f32.mrf.mxu0
        %v3478 = vadd.f32 0.0, %v3477
        %3479 = vmatprep.mubr.f32.mxu0 0.0
        %3480 = vmatmul.mubr.f32.gmra.mxu0 %v2302
        %v3481 = vpop.f32.mrf.mxu0
        %v3482 = vadd.f32 0.0, %v3481
        %v3483 = vpop.f32.mrf.mxu0
        %v3484 = vadd.f32 0.0, %v3483
        %3485 = vmatprep.mubr.f32.mxu0 0.0
        %3486 = vmatmul.mubr.f32.gmra.mxu0 %v2305
        %v3487 = vpop.f32.mrf.mxu0
        %v3488 = vadd.f32 0.0, %v3487
        %v3489 = vpop.f32.mrf.mxu0
        %v3490 = vadd.f32 0.0, %v3489
        %3491 = vmatprep.mubr.f32.mxu0 0.0
        %3492 = vmatmul.mubr.f32.gmra.mxu0 %v2308
        %v3493 = vpop.f32.mrf.mxu0
        %v3494 = vadd.f32 0.0, %v3493
        %v3495 = vpop.f32.mrf.mxu0
        %v3496 = vadd.f32 0.0, %v3495
        %3497 = vmatprep.mubr.f32.mxu0 0.0
        %3498 = vmatmul.mubr.f32.gmra.mxu0 %v2311
        %v3499 = vpop.f32.mrf.mxu0
        %v3500 = vadd.f32 0.0, %v3499
        %v3501 = vpop.f32.mrf.mxu0
        %v3502 = vadd.f32 0.0, %v3501
        %3503 = vmatprep.mubr.f32.mxu0 0.0
        %3504 = vmatmul.mubr.f32.gmra.mxu0 %v2314
        %v3505 = vpop.f32.mrf.mxu0
        %v3506 = vadd.f32 0.0, %v3505
        %v3507 = vpop.f32.mrf.mxu0
        %v3508 = vadd.f32 0.0, %v3507
        %3509 = vmatprep.mubr.f32.mxu0 0.0
        %3510 = vmatmul.mubr.f32.gmra.mxu0 %v2317
        %v3511 = vpop.f32.mrf.mxu0
        %v3512 = vadd.f32 0.0, %v3511
        %v3513 = vpop.f32.mrf.mxu0
        %v3514 = vadd.f32 0.0, %v3513
        %3515 = vmatprep.mubr.f32.mxu0 0.0
        %3516 = vmatmul.mubr.f32.gmra.mxu0 %v2320
        %v3517 = vpop.f32.mrf.mxu0
        %v3518 = vadd.f32 0.0, %v3517
        %v3519 = vpop.f32.mrf.mxu0
        %v3520 = vadd.f32 0.0, %v3519
        %3521 = vmatprep.mubr.f32.mxu0 0.0
        %3522 = vmatmul.mubr.f32.gmra.mxu0 %v2323
        %v3523 = vpop.f32.mrf.mxu0
        %v3524 = vadd.f32 0.0, %v3523
        %v3525 = vpop.f32.mrf.mxu0
        %v3526 = vadd.f32 0.0, %v3525
        %3527 = vmatprep.mubr.f32.mxu0 0.0
        %3528 = vmatmul.mubr.f32.gmra.mxu0 %v2326
        %v3529 = vpop.f32.mrf.mxu0
        %v3530 = vadd.f32 0.0, %v3529
        %v3531 = vpop.f32.mrf.mxu0
        %v3532 = vadd.f32 0.0, %v3531
        %3533 = vmatprep.mubr.f32.mxu0 0.0
        %3534 = vmatmul.mubr.f32.gmra.mxu0 %v2329
        %v3535 = vpop.f32.mrf.mxu0
        %v3536 = vadd.f32 0.0, %v3535
        %v3537 = vpop.f32.mrf.mxu0
        %v3538 = vadd.f32 0.0, %v3537
        %3539 = vmatprep.mubr.f32.mxu0 0.0
        %3540 = vmatmul.mubr.f32.gmra.mxu0 %v2332
        %v3541 = vpop.f32.mrf.mxu0
        %v3542 = vadd.f32 0.0, %v3541
        %v3543 = vpop.f32.mrf.mxu0
        %v3544 = vadd.f32 0.0, %v3543
        %3545 = vmatprep.mubr.f32.mxu0 0.0
        %3546 = vmatmul.mubr.f32.gmra.mxu0 %v2335
        %v3547 = vpop.f32.mrf.mxu0
        %v3548 = vadd.f32 0.0, %v3547
        %v3549 = vpop.f32.mrf.mxu0
        %v3550 = vadd.f32 0.0, %v3549
        %3551 = vmatprep.mubr.f32.mxu0 0.0
        %3552 = vmatmul.mubr.f32.gmra.mxu0 %v2338
        %v3553 = vpop.f32.mrf.mxu0
        %v3554 = vadd.f32 0.0, %v3553
        %v3555 = vpop.f32.mrf.mxu0
        %v3556 = vadd.f32 0.0, %v3555
        %3557 = vmatprep.mubr.f32.mxu0 0.0
        %3558 = vmatmul.mubr.f32.gmra.mxu0 %v2341
        %v3559 = vpop.f32.mrf.mxu0
        %v3560 = vadd.f32 0.0, %v3559
        %v3561 = vpop.f32.mrf.mxu0
        %v3562 = vadd.f32 0.0, %v3561
        %3563 = vmatprep.mubr.f32.mxu0 0.0
        %3564 = vmatmul.mubr.f32.gmra.mxu0 %v2344
        %v3565 = vpop.f32.mrf.mxu0
        %v3566 = vadd.f32 0.0, %v3565
        %v3567 = vpop.f32.mrf.mxu0
        %v3568 = vadd.f32 0.0, %v3567
        %3569 = vmatprep.mubr.f32.mxu0 0.0
        %3570 = vmatmul.mubr.f32.gmra.mxu0 %v2347
        %v3571 = vpop.f32.mrf.mxu0
        %v3572 = vadd.f32 0.0, %v3571
        %v3573 = vpop.f32.mrf.mxu0
        %v3574 = vadd.f32 0.0, %v3573
        %3575 = vmatprep.mubr.f32.mxu0 0.0
        %3576 = vmatmul.mubr.f32.gmra.mxu0 %v2350
        %v3577 = vpop.f32.mrf.mxu0
        %v3578 = vadd.f32 0.0, %v3577
        %v3579 = vpop.f32.mrf.mxu0
        %v3580 = vadd.f32 0.0, %v3579
        %3581 = vmatprep.mubr.f32.mxu0 0.0
        %3582 = vmatmul.mubr.f32.gmra.mxu0 %v2353
        %v3583 = vpop.f32.mrf.mxu0
        %v3584 = vadd.f32 0.0, %v3583
        %v3585 = vpop.f32.mrf.mxu0
        %v3586 = vadd.f32 0.0, %v3585
        %3587 = vmatprep.mubr.f32.mxu0 0.0
        %3588 = vmatmul.mubr.f32.gmra.mxu0 %v2356
        %v3589 = vpop.f32.mrf.mxu0
        %v3590 = vadd.f32 0.0, %v3589
        %v3591 = vpop.f32.mrf.mxu0
        %v3592 = vadd.f32 0.0, %v3591
        %3593 = vmatprep.mubr.f32.mxu0 0.0
        %3594 = vmatmul.mubr.f32.gmra.mxu0 %v2359
        %v3595 = vpop.f32.mrf.mxu0
        %v3596 = vadd.f32 0.0, %v3595
        %v3597 = vpop.f32.mrf.mxu0
        %v3598 = vadd.f32 0.0, %v3597
        %3599 = vmatprep.mubr.f32.mxu0 0.0
        %3600 = vmatmul.mubr.f32.gmra.mxu0 %v2362
        %v3601 = vpop.f32.mrf.mxu0
        %v3602 = vadd.f32 0.0, %v3601
        %v3603 = vpop.f32.mrf.mxu0
        %v3604 = vadd.f32 0.0, %v3603
        %3605 = vmatprep.mubr.f32.mxu0 0.0
        %3606 = vmatmul.mubr.f32.gmra.mxu0 %v2365
        %v3607 = vpop.f32.mrf.mxu0
        %v3608 = vadd.f32 0.0, %v3607
        %v3609 = vpop.f32.mrf.mxu0
        %v3610 = vadd.f32 0.0, %v3609
        %3611 = vmatprep.mubr.f32.mxu0 0.0
        %3612 = vmatmul.mubr.f32.gmra.mxu0 %v2368
        %v3613 = vpop.f32.mrf.mxu0
        %v3614 = vadd.f32 0.0, %v3613
        %v3615 = vpop.f32.mrf.mxu0
        %v3616 = vadd.f32 0.0, %v3615
        %3617 = vmatprep.mubr.f32.mxu0 0.0
        %3618 = vmatmul.mubr.f32.gmra.mxu0 %v2371
        %v3619 = vpop.f32.mrf.mxu0
        %v3620 = vadd.f32 0.0, %v3619
        %v3621 = vpop.f32.mrf.mxu0
        %v3622 = vadd.f32 0.0, %v3621
        %3623 = vmatprep.mubr.f32.mxu0 0.0
        %3624 = vmatmul.mubr.f32.gmra.mxu0 %v2374
        %v3625 = vpop.f32.mrf.mxu0
        %v3626 = vadd.f32 0.0, %v3625
        %v3627 = vpop.f32.mrf.mxu0
        %v3628 = vadd.f32 0.0, %v3627
        %3629 = vmatprep.mubr.f32.mxu0 0.0
        %3630 = vmatmul.mubr.f32.gmra.mxu0 %v2377
        %v3631 = vpop.f32.mrf.mxu0
        %v3632 = vadd.f32 0.0, %v3631
        %v3633 = vpop.f32.mrf.mxu0
        %v3634 = vadd.f32 0.0, %v3633
        %3635 = vmatprep.mubr.f32.mxu0 0.0
        %3636 = vmatmul.mubr.f32.gmra.mxu0 %v2380
        %v3637 = vpop.f32.mrf.mxu0
        %v3638 = vadd.f32 0.0, %v3637
        %v3639 = vpop.f32.mrf.mxu0
        %v3640 = vadd.f32 0.0, %v3639
        %3641 = vmatprep.mubr.f32.mxu0 0.0
        %3642 = vmatmul.mubr.f32.gmra.mxu0 %v2383
        %v3643 = vpop.f32.mrf.mxu0
        %v3644 = vadd.f32 0.0, %v3643
        %v3645 = vpop.f32.mrf.mxu0
        %v3646 = vadd.f32 0.0, %v3645
        %3647 = vmatprep.mubr.f32.mxu0 0.0
        %3648 = vmatmul.mubr.f32.gmra.mxu0 %v2386
        %v3649 = vpop.f32.mrf.mxu0
        %v3650 = vadd.f32 0.0, %v3649
        %v3651 = vpop.f32.mrf.mxu0
        %v3652 = vadd.f32 0.0, %v3651
        %3653 = vmatprep.mubr.f32.mxu0 0.0
        %3654 = vmatmul.mubr.f32.gmra.mxu0 %v2389
        %v3655 = vpop.f32.mrf.mxu0
        %v3656 = vadd.f32 0.0, %v3655
        %v3657 = vpop.f32.mrf.mxu0
        %v3658 = vadd.f32 0.0, %v3657
        %3659 = vmatprep.mubr.f32.mxu0 0.0
        %3660 = vmatmul.mubr.f32.gmra.mxu0 %v2392
        %v3661 = vpop.f32.mrf.mxu0
        %v3662 = vadd.f32 0.0, %v3661
        %v3663 = vpop.f32.mrf.mxu0
        %v3664 = vadd.f32 0.0, %v3663
        %3665 = vmatprep.mubr.f32.mxu0 0.0
        %3666 = vmatmul.mubr.f32.gmra.mxu0 %v2395
        %v3667 = vpop.f32.mrf.mxu0
        %v3668 = vadd.f32 0.0, %v3667
        %v3669 = vpop.f32.mrf.mxu0
        %v3670 = vadd.f32 0.0, %v3669
        %3671 = vmatprep.mubr.f32.mxu0 0.0
        %3672 = vmatmul.mubr.f32.gmra.mxu0 %v2398
        %v3673 = vpop.f32.mrf.mxu0
        %v3674 = vadd.f32 0.0, %v3673
        %v3675 = vpop.f32.mrf.mxu0
        %v3676 = vadd.f32 0.0, %v3675
        %3677 = vmatprep.mubr.f32.mxu0 0.0
        %3678 = vmatmul.mubr.f32.gmra.mxu0 %v2401
        %v3679 = vpop.f32.mrf.mxu0
        %v3680 = vadd.f32 0.0, %v3679
        %v3681 = vpop.f32.mrf.mxu0
        %v3682 = vadd.f32 0.0, %v3681
        %3683 = vmatprep.mubr.f32.mxu0 0.0
        %3684 = vmatmul.mubr.f32.gmra.mxu0 %v2404
        %v3685 = vpop.f32.mrf.mxu0
        %v3686 = vadd.f32 0.0, %v3685
        %v3687 = vpop.f32.mrf.mxu0
        %v3688 = vadd.f32 0.0, %v3687
        %3689 = vmatprep.mubr.f32.mxu0 0.0
        %3690 = vmatmul.mubr.f32.gmra.mxu0 %v2407
        %v3691 = vpop.f32.mrf.mxu0
        %v3692 = vadd.f32 0.0, %v3691
        %v3693 = vpop.f32.mrf.mxu0
        %v3694 = vadd.f32 0.0, %v3693
        %3695 = vmatprep.mubr.f32.mxu0 0.0
        %3696 = vmatmul.mubr.f32.gmra.mxu0 %v2410
        %v3697 = vpop.f32.mrf.mxu0
        %v3698 = vadd.f32 0.0, %v3697
        %v3699 = vpop.f32.mrf.mxu0
        %v3700 = vadd.f32 0.0, %v3699
        %3701 = vmatprep.mubr.f32.mxu0 0.0
        %3702 = vmatmul.mubr.f32.gmra.mxu0 %v2413
        %v3703 = vpop.f32.mrf.mxu0
        %v3704 = vadd.f32 0.0, %v3703
        %v3705 = vpop.f32.mrf.mxu0
        %v3706 = vadd.f32 0.0, %v3705
        %3707 = vmatprep.mubr.f32.mxu0 0.0
        %3708 = vmatmul.mubr.f32.gmra.mxu0 %v2416
        %v3709 = vpop.f32.mrf.mxu0
        %v3710 = vadd.f32 0.0, %v3709
        %v3711 = vpop.f32.mrf.mxu0
        %v3712 = vadd.f32 0.0, %v3711
        %3713 = vmatprep.mubr.f32.mxu0 0.0
        %3714 = vmatmul.mubr.f32.gmra.mxu0 %v2419
        %v3715 = vpop.f32.mrf.mxu0
        %v3716 = vadd.f32 0.0, %v3715
        %v3717 = vpop.f32.mrf.mxu0
        %v3718 = vadd.f32 0.0, %v3717
        %3719 = vmatprep.mubr.f32.mxu0 0.0
        %3720 = vmatmul.mubr.f32.gmra.mxu0 %v2422
        %v3721 = vpop.f32.mrf.mxu0
        %v3722 = vadd.f32 0.0, %v3721
        %v3723 = vpop.f32.mrf.mxu0
        %v3724 = vadd.f32 0.0, %v3723
        %3725 = vmatprep.mubr.f32.mxu0 0.0
        %3726 = vmatmul.mubr.f32.gmra.mxu0 %v2425
        %v3727 = vpop.f32.mrf.mxu0
        %v3728 = vadd.f32 0.0, %v3727
        %v3729 = vpop.f32.mrf.mxu0
        %v3730 = vadd.f32 0.0, %v3729
        %3731 = vmatprep.mubr.f32.mxu0 0.0
        %3732 = vmatmul.mubr.f32.gmra.mxu0 %v2428
        %v3733 = vpop.f32.mrf.mxu0
        %v3734 = vadd.f32 0.0, %v3733
        %v3735 = vpop.f32.mrf.mxu0
        %v3736 = vadd.f32 0.0, %v3735
        %3737 = vmatprep.mubr.f32.mxu0 0.0
        %3738 = vmatmul.mubr.f32.gmra.mxu0 %v2431
        %v3739 = vpop.f32.mrf.mxu0
        %v3740 = vadd.f32 0.0, %v3739
        %v3741 = vpop.f32.mrf.mxu0
        %v3742 = vadd.f32 0.0, %v3741
        %3743 = vmatprep.mubr.f32.mxu0 0.0
        %3744 = vmatmul.mubr.f32.gmra.mxu0 %v2434
        %v3745 = vpop.f32.mrf.mxu0
        %v3746 = vadd.f32 0.0, %v3745
        %v3747 = vpop.f32.mrf.mxu0
        %v3748 = vadd.f32 0.0, %v3747
        %3749 = vmatprep.mubr.f32.mxu0 0.0
        %3750 = vmatmul.mubr.f32.gmra.mxu0 %v2437
        %v3751 = vpop.f32.mrf.mxu0
        %v3752 = vadd.f32 0.0, %v3751
        %v3753 = vpop.f32.mrf.mxu0
        %v3754 = vadd.f32 0.0, %v3753
        %3755 = vmatprep.mubr.f32.mxu0 0.0
        %3756 = vmatmul.mubr.f32.gmra.mxu0 %v2440
        %v3757 = vpop.f32.mrf.mxu0
        %v3758 = vadd.f32 0.0, %v3757
        %v3759 = vpop.f32.mrf.mxu0
        %v3760 = vadd.f32 0.0, %v3759
        %3761 = vmatprep.mubr.f32.mxu0 0.0
        %3762 = vmatmul.mubr.f32.gmra.mxu0 %v2443
        %v3763 = vpop.f32.mrf.mxu0
        %v3764 = vadd.f32 0.0, %v3763
        %v3765 = vpop.f32.mrf.mxu0
        %v3766 = vadd.f32 0.0, %v3765
        %3767 = vmatprep.mubr.f32.mxu0 0.0
        %3768 = vmatmul.mubr.f32.gmra.mxu0 %v2446
        %v3769 = vpop.f32.mrf.mxu0
        %v3770 = vadd.f32 0.0, %v3769
        %v3771 = vpop.f32.mrf.mxu0
        %v3772 = vadd.f32 0.0, %v3771
        %3773 = vmatprep.mubr.f32.mxu0 0.0
        %3774 = vmatmul.mubr.f32.gmra.mxu0 %v2449
        %v3775 = vpop.f32.mrf.mxu0
        %v3776 = vadd.f32 0.0, %v3775
        %v3777 = vpop.f32.mrf.mxu0
        %v3778 = vadd.f32 0.0, %v3777
        %3779 = vmatprep.mubr.f32.mxu0 0.0
        %3780 = vmatmul.mubr.f32.gmra.mxu0 %v2452
        %v3781 = vpop.f32.mrf.mxu0
        %v3782 = vadd.f32 0.0, %v3781
        %v3783 = vpop.f32.mrf.mxu0
        %v3784 = vadd.f32 0.0, %v3783
        %3785 = vmatprep.mubr.f32.mxu0 0.0
        %3786 = vmatmul.mubr.f32.gmra.mxu0 %v2455
        %v3787 = vpop.f32.mrf.mxu0
        %v3788 = vadd.f32 0.0, %v3787
        %v3789 = vpop.f32.mrf.mxu0
        %v3790 = vadd.f32 0.0, %v3789
        %3791 = vmatprep.mubr.f32.mxu0 0.0
        %3792 = vmatmul.mubr.f32.gmra.mxu0 %v2458
        %v3793 = vpop.f32.mrf.mxu0
        %v3794 = vadd.f32 0.0, %v3793
        %v3795 = vpop.f32.mrf.mxu0
        %v3796 = vadd.f32 0.0, %v3795
        %3797 = vmatprep.mubr.f32.mxu0 0.0
        %3798 = vmatmul.mubr.f32.gmra.mxu0 %v2461
        %v3799 = vpop.f32.mrf.mxu0
        %v3800 = vadd.f32 0.0, %v3799
        %v3801 = vpop.f32.mrf.mxu0
        %v3802 = vadd.f32 0.0, %v3801
        %3803 = vmatprep.mubr.f32.mxu0 0.0
        %3804 = vmatmul.mubr.f32.gmra.mxu0 %v2464
        %v3805 = vpop.f32.mrf.mxu0
        %v3806 = vadd.f32 0.0, %v3805
        %v3807 = vpop.f32.mrf.mxu0
        %v3808 = vadd.f32 0.0, %v3807
        %3809 = vmatprep.mubr.f32.mxu0 0.0
        %3810 = vmatmul.mubr.f32.gmra.mxu0 %v2467
        %v3811 = vpop.f32.mrf.mxu0
        %v3812 = vadd.f32 0.0, %v3811
        %v3813 = vpop.f32.mrf.mxu0
        %v3814 = vadd.f32 0.0, %v3813
        %3815 = vmatprep.mubr.f32.mxu0 0.0
        %3816 = vmatmul.mubr.f32.gmra.mxu0 %v2470
        %v3817 = vpop.f32.mrf.mxu0
        %v3818 = vadd.f32 0.0, %v3817
        %v3819 = vpop.f32.mrf.mxu0
        %v3820 = vadd.f32 0.0, %v3819
        %3821 = vmatprep.mubr.f32.mxu0 0.0
        %3822 = vmatmul.mubr.f32.gmra.mxu0 %v2473
        %v3823 = vpop.f32.mrf.mxu0
        %v3824 = vadd.f32 0.0, %v3823
        %v3825 = vpop.f32.mrf.mxu0
        %v3826 = vadd.f32 0.0, %v3825
        %3827 = vmatprep.mubr.f32.mxu0 0.0
        %3828 = vmatmul.mubr.f32.gmra.mxu0 %v2476
        %v3829 = vpop.f32.mrf.mxu0
        %v3830 = vadd.f32 0.0, %v3829
        %v3831 = vpop.f32.mrf.mxu0
        %v3832 = vadd.f32 0.0, %v3831
        %3833 = vmatprep.mubr.f32.mxu0 0.0
        %3834 = vmatmul.mubr.f32.gmra.mxu0 %v2479
        %v3835 = vpop.f32.mrf.mxu0
        %v3836 = vadd.f32 0.0, %v3835
        %v3837 = vpop.f32.mrf.mxu0
        %v3838 = vadd.f32 0.0, %v3837
        %3839 = vmatprep.mubr.f32.mxu0 0.0
        %3840 = vmatmul.mubr.f32.gmra.mxu0 %v2482
        %v3841 = vpop.f32.mrf.mxu0
        %v3842 = vadd.f32 0.0, %v3841
        %v3843 = vpop.f32.mrf.mxu0
        %v3844 = vadd.f32 0.0, %v3843
        %3845 = vmatprep.mubr.f32.mxu0 0.0
        %3846 = vmatmul.mubr.f32.gmra.mxu0 %v2485
        %v3847 = vpop.f32.mrf.mxu0
        %v3848 = vadd.f32 0.0, %v3847
        %v3849 = vpop.f32.mrf.mxu0
        %v3850 = vadd.f32 0.0, %v3849
        %3851 = vmatprep.mubr.f32.mxu0 0.0
        %3852 = vmatmul.mubr.f32.gmra.mxu0 %v2488
        %v3853 = vpop.f32.mrf.mxu0
        %v3854 = vadd.f32 0.0, %v3853
        %v3855 = vpop.f32.mrf.mxu0
        %v3856 = vadd.f32 0.0, %v3855
        %3857 = vmatprep.mubr.f32.mxu0 0.0
        %3858 = vmatmul.mubr.f32.gmra.mxu0 %v2491
        %v3859 = vpop.f32.mrf.mxu0
        %v3860 = vadd.f32 0.0, %v3859
        %v3861 = vpop.f32.mrf.mxu0
        %v3862 = vadd.f32 0.0, %v3861
        %3863 = vmatprep.mubr.f32.mxu0 0.0
        %3864 = vmatmul.mubr.f32.gmra.mxu0 %v2494
        %v3865 = vpop.f32.mrf.mxu0
        %v3866 = vadd.f32 0.0, %v3865
        %v3867 = vpop.f32.mrf.mxu0
        %v3868 = vadd.f32 0.0, %v3867
        %3869 = vmatprep.mubr.f32.mxu0 0.0
        %3870 = vmatmul.mubr.f32.gmra.mxu0 %v2497
        %v3871 = vpop.f32.mrf.mxu0
        %v3872 = vadd.f32 0.0, %v3871
        %v3873 = vpop.f32.mrf.mxu0
        %v3874 = vadd.f32 0.0, %v3873
        %3875 = vmatprep.mubr.f32.mxu0 0.0
        %3876 = vmatmul.mubr.f32.gmra.mxu0 %v2500
        %v3877 = vpop.f32.mrf.mxu0
        %v3878 = vadd.f32 0.0, %v3877
        %v3879 = vpop.f32.mrf.mxu0
        %v3880 = vadd.f32 0.0, %v3879
        %3881 = vmatprep.mubr.f32.mxu0 0.0
        %3882 = vmatmul.mubr.f32.gmra.mxu0 %v2503
        %v3883 = vpop.f32.mrf.mxu0
        %v3884 = vadd.f32 0.0, %v3883
        %v3885 = vpop.f32.mrf.mxu0
        %v3886 = vadd.f32 0.0, %v3885
        %3887 = vmatprep.mubr.f32.mxu0 0.0
        %3888 = vmatmul.mubr.f32.gmra.mxu0 %v2506
        %v3889 = vpop.f32.mrf.mxu0
        %v3890 = vadd.f32 0.0, %v3889
        %v3891 = vpop.f32.mrf.mxu0
        %v3892 = vadd.f32 0.0, %v3891
        %3893 = vmatprep.mubr.f32.mxu0 0.0
        %3894 = vmatmul.mubr.f32.gmra.mxu0 %v2509
        %v3895 = vpop.f32.mrf.mxu0
        %v3896 = vadd.f32 0.0, %v3895
        %v3897 = vpop.f32.mrf.mxu0
        %v3898 = vadd.f32 0.0, %v3897
        %3899 = vmatprep.mubr.f32.mxu0 0.0
        %3900 = vmatmul.mubr.f32.gmra.mxu0 %v2512
        %v3901 = vpop.f32.mrf.mxu0
        %v3902 = vadd.f32 0.0, %v3901
        %v3903 = vpop.f32.mrf.mxu0
        %v3904 = vadd.f32 0.0, %v3903
        %3905 = vmatprep.mubr.f32.mxu0 0.0
        %3906 = vmatmul.mubr.f32.gmra.mxu0 %v2515
        %v3907 = vpop.f32.mrf.mxu0
        %v3908 = vadd.f32 0.0, %v3907
        %v3909 = vpop.f32.mrf.mxu0
        %v3910 = vadd.f32 0.0, %v3909
        %3911 = vmatprep.mubr.f32.mxu0 0.0
        %3912 = vmatmul.mubr.f32.gmra.mxu0 %v2518
        %v3913 = vpop.f32.mrf.mxu0
        %v3914 = vadd.f32 0.0, %v3913
        %v3915 = vpop.f32.mrf.mxu0
        %v3916 = vadd.f32 0.0, %v3915
        %3917 = vmatprep.mubr.f32.mxu0 0.0
        %3918 = vmatmul.mubr.f32.gmra.mxu0 %v2521
        %v3919 = vpop.f32.mrf.mxu0
        %v3920 = vadd.f32 0.0, %v3919
        %v3921 = vpop.f32.mrf.mxu0
        %v3922 = vadd.f32 0.0, %v3921
        %3923 = vmatprep.mubr.f32.mxu0 0.0
        %3924 = vmatmul.mubr.f32.gmra.mxu0 %v2524
        %v3925 = vpop.f32.mrf.mxu0
        %v3926 = vadd.f32 0.0, %v3925
        %v3927 = vpop.f32.mrf.mxu0
        %v3928 = vadd.f32 0.0, %v3927
        %3929 = vmatprep.mubr.f32.mxu0 0.0
        %3930 = vmatmul.mubr.f32.gmra.mxu0 %v2527
        %v3931 = vpop.f32.mrf.mxu0
        %v3932 = vadd.f32 0.0, %v3931
        %v3933 = vpop.f32.mrf.mxu0
        %v3934 = vadd.f32 0.0, %v3933
        %3935 = vmatprep.mubr.f32.mxu0 0.0
        %3936 = vmatmul.mubr.f32.gmra.mxu0 %v2530
        %v3937 = vpop.f32.mrf.mxu0
        %v3938 = vadd.f32 0.0, %v3937
        %v3939 = vpop.f32.mrf.mxu0
        %v3940 = vadd.f32 0.0, %v3939
        %3941 = vmatprep.mubr.f32.mxu0 0.0
        %3942 = vmatmul.mubr.f32.gmra.mxu0 %v2533
        %v3943 = vpop.f32.mrf.mxu0
        %v3944 = vadd.f32 0.0, %v3943
        %v3945 = vpop.f32.mrf.mxu0
        %v3946 = vadd.f32 0.0, %v3945
        %3947 = vmatprep.mubr.f32.mxu0 0.0
        %3948 = vmatmul.mubr.f32.gmra.mxu0 %v2536
        %v3949 = vpop.f32.mrf.mxu0
        %v3950 = vadd.f32 0.0, %v3949
        %v3951 = vpop.f32.mrf.mxu0
        %v3952 = vadd.f32 0.0, %v3951
        %3953 = vmatprep.mubr.f32.mxu0 0.0
        %3954 = vmatmul.mubr.f32.gmra.mxu0 %v2539
        %v3955 = vpop.f32.mrf.mxu0
        %v3956 = vadd.f32 0.0, %v3955
        %v3957 = vpop.f32.mrf.mxu0
        %v3958 = vadd.f32 0.0, %v3957
        %3959 = vmatprep.mubr.f32.mxu0 0.0
        %3960 = vmatmul.mubr.f32.gmra.mxu0 %v2542
        %v3961 = vpop.f32.mrf.mxu0
        %v3962 = vadd.f32 0.0, %v3961
        %v3963 = vpop.f32.mrf.mxu0
        %v3964 = vadd.f32 0.0, %v3963
        %3965 = vmatprep.mubr.f32.mxu0 0.0
        %3966 = vmatmul.mubr.f32.gmra.mxu0 %v2545
        %v3967 = vpop.f32.mrf.mxu0
        %v3968 = vadd.f32 0.0, %v3967
        %v3969 = vpop.f32.mrf.mxu0
        %v3970 = vadd.f32 0.0, %v3969
        %3971 = vmatprep.mubr.f32.mxu0 0.0
        %3972 = vmatmul.mubr.f32.gmra.mxu0 %v2548
        %v3973 = vpop.f32.mrf.mxu0
        %v3974 = vadd.f32 0.0, %v3973
        %v3975 = vpop.f32.mrf.mxu0
        %v3976 = vadd.f32 0.0, %v3975
        %3977 = vmatprep.mubr.f32.mxu0 0.0
        %3978 = vmatmul.mubr.f32.gmra.mxu0 %v2551
        %v3979 = vpop.f32.mrf.mxu0
        %v3980 = vadd.f32 0.0, %v3979
        %v3981 = vpop.f32.mrf.mxu0
        %v3982 = vadd.f32 0.0, %v3981
        %3983 = vmatprep.mubr.f32.mxu0 0.0
        %3984 = vmatmul.mubr.f32.gmra.mxu0 %v2554
        %v3985 = vpop.f32.mrf.mxu0
        %v3986 = vadd.f32 0.0, %v3985
        %v3987 = vpop.f32.mrf.mxu0
        %v3988 = vadd.f32 0.0, %v3987
        %3989 = vmatprep.mubr.f32.mxu0 0.0
        %3990 = vmatmul.mubr.f32.gmra.mxu0 %v2557
        %v3991 = vpop.f32.mrf.mxu0
        %v3992 = vadd.f32 0.0, %v3991
        %v3993 = vpop.f32.mrf.mxu0
        %v3994 = vadd.f32 0.0, %v3993
        %3995 = vmatprep.mubr.f32.mxu0 0.0
        %3996 = vmatmul.mubr.f32.gmra.mxu0 %v2560
        %v3997 = vpop.f32.mrf.mxu0
        %v3998 = vadd.f32 0.0, %v3997
        %v3999 = vpop.f32.mrf.mxu0
        %v4000 = vadd.f32 0.0, %v3999
        %4001 = vmatprep.mubr.f32.mxu0 0.0
        %4002 = vmatmul.mubr.f32.gmra.mxu0 %v2563
        %v4003 = vpop.f32.mrf.mxu0
        %v4004 = vadd.f32 0.0, %v4003
        %v4005 = vpop.f32.mrf.mxu0
        %v4006 = vadd.f32 0.0, %v4005
        %4007 = vmatprep.mubr.f32.mxu0 0.0
        %4008 = vmatmul.mubr.f32.gmra.mxu0 %v2566
        %v4009 = vpop.f32.mrf.mxu0
        %v4010 = vadd.f32 0.0, %v4009
        %v4011 = vpop.f32.mrf.mxu0
        %v4012 = vadd.f32 0.0, %v4011
        %4013 = vmatprep.mubr.f32.mxu0 0.0
        %4014 = vmatmul.mubr.f32.gmra.mxu0 %v2569
        %v4015 = vpop.f32.mrf.mxu0
        %v4016 = vadd.f32 0.0, %v4015
        %v4017 = vpop.f32.mrf.mxu0
        %v4018 = vadd.f32 0.0, %v4017
        %4019 = vmatprep.mubr.f32.mxu0 0.0
        %4020 = vmatmul.mubr.f32.gmra.mxu0 %v2572
        %v4021 = vpop.f32.mrf.mxu0
        %v4022 = vadd.f32 0.0, %v4021
        %v4023 = vpop.f32.mrf.mxu0
        %v4024 = vadd.f32 0.0, %v4023
        %4025 = vmatprep.mubr.f32.mxu0 0.0
        %4026 = vmatmul.mubr.f32.gmra.mxu0 %v2575
        %v4027 = vpop.f32.mrf.mxu0
        %v4028 = vadd.f32 0.0, %v4027
        %v4029 = vpop.f32.mrf.mxu0
        %v4030 = vadd.f32 0.0, %v4029
        %4031 = vmatprep.mubr.f32.mxu0 0.0
        %4032 = vmatmul.mubr.f32.gmra.mxu0 %v2578
        %v4033 = vpop.f32.mrf.mxu0
        %v4034 = vadd.f32 0.0, %v4033
        %v4035 = vpop.f32.mrf.mxu0
        %v4036 = vadd.f32 0.0, %v4035
        %4037 = vmatprep.mubr.f32.mxu0 0.0
        %4038 = vmatmul.mubr.f32.gmra.mxu0 %v2581
        %v4039 = vpop.f32.mrf.mxu0
        %v4040 = vadd.f32 0.0, %v4039
        %v4041 = vpop.f32.mrf.mxu0
        %v4042 = vadd.f32 0.0, %v4041
        %4043 = vmatprep.mubr.f32.mxu0 0.0
        %4044 = vmatmul.mubr.f32.gmra.mxu0 %v2584
        %v4045 = vpop.f32.mrf.mxu0
        %v4046 = vadd.f32 0.0, %v4045
        %v4047 = vpop.f32.mrf.mxu0
        %v4048 = vadd.f32 0.0, %v4047
        %4049 = vmatprep.mubr.f32.mxu0 0.0
        %4050 = vmatmul.mubr.f32.gmra.mxu0 %v2587
        %v4051 = vpop.f32.mrf.mxu0
        %v4052 = vadd.f32 0.0, %v4051
        %v4053 = vpop.f32.mrf.mxu0
        %v4054 = vadd.f32 0.0, %v4053
        %4055 = vmatprep.mubr.f32.mxu0 0.0
        %4056 = vmatmul.mubr.f32.gmra.mxu0 %v2590
        %v4057 = vpop.f32.mrf.mxu0
        %v4058 = vadd.f32 0.0, %v4057
        %v4059 = vpop.f32.mrf.mxu0
        %v4060 = vadd.f32 0.0, %v4059
        %4061 = vmatprep.mubr.f32.mxu0 0.0
        %4062 = vmatmul.mubr.f32.gmra.mxu0 %v2593
        %v4063 = vpop.f32.mrf.mxu0
        %v4064 = vadd.f32 0.0, %v4063
        %v4065 = vpop.f32.mrf.mxu0
        %v4066 = vadd.f32 0.0, %v4065
        %4067 = vmatprep.mubr.f32.mxu0 0.0
        %4068 = vmatmul.mubr.f32.gmra.mxu0 %v2596
        %v4069 = vpop.f32.mrf.mxu0
        %v4070 = vadd.f32 0.0, %v4069
        %v4071 = vpop.f32.mrf.mxu0
        %v4072 = vadd.f32 0.0, %v4071
        %4073 = vmatprep.mubr.f32.mxu0 0.0
        %4074 = vmatmul.mubr.f32.gmra.mxu0 %v2599
        %v4075 = vpop.f32.mrf.mxu0
        %v4076 = vadd.f32 0.0, %v4075
        %v4077 = vpop.f32.mrf.mxu0
        %v4078 = vadd.f32 0.0, %v4077
        %4079 = vmatprep.mubr.f32.mxu0 0.0
        %4080 = vmatmul.mubr.f32.gmra.mxu0 %v2602
        %v4081 = vpop.f32.mrf.mxu0
        %v4082 = vadd.f32 0.0, %v4081
        %v4083 = vpop.f32.mrf.mxu0
        %v4084 = vadd.f32 0.0, %v4083
        %4085 = vmatprep.mubr.f32.mxu0 0.0
        %4086 = vmatmul.mubr.f32.gmra.mxu0 %v2605
        %v4087 = vpop.f32.mrf.mxu0
        %v4088 = vadd.f32 0.0, %v4087
        %v4089 = vpop.f32.mrf.mxu0
        %v4090 = vadd.f32 0.0, %v4089
        %4091 = vmatprep.mubr.f32.mxu0 0.0
        %4092 = vmatmul.mubr.f32.gmra.mxu0 %v2608
        %v4093 = vpop.f32.mrf.mxu0
        %v4094 = vadd.f32 0.0, %v4093
        %v4095 = vpop.f32.mrf.mxu0
        %v4096 = vadd.f32 0.0, %v4095
        %4097 = vmatprep.mubr.f32.mxu0 0.0
        %4098 = vmatmul.mubr.f32.gmra.mxu0 %v2611
        %v4099 = vpop.f32.mrf.mxu0
        %v4100 = vadd.f32 0.0, %v4099
        %v4101 = vpop.f32.mrf.mxu0
        %v4102 = vadd.f32 0.0, %v4101
        %4103 = vmatprep.mubr.f32.mxu0 0.0
        %4104 = vmatmul.mubr.f32.gmra.mxu0 %v2614
        %v4105 = vpop.f32.mrf.mxu0
        %v4106 = vadd.f32 0.0, %v4105
        %v4107 = vpop.f32.mrf.mxu0
        %v4108 = vadd.f32 0.0, %v4107
        %4109 = vmatprep.mubr.f32.mxu0 0.0
        %4110 = vmatmul.mubr.f32.gmra.mxu0 %v2617
        %v4111 = vpop.f32.mrf.mxu0
        %v4112 = vadd.f32 0.0, %v4111
        %v4113 = vpop.f32.mrf.mxu0
        %v4114 = vadd.f32 0.0, %v4113
        %4115 = vmatprep.mubr.f32.mxu0 0.0
        %4116 = vmatmul.mubr.f32.gmra.mxu0 %v2620
        %v4117 = vpop.f32.mrf.mxu0
        %v4118 = vadd.f32 0.0, %v4117
        %v4119 = vpop.f32.mrf.mxu0
        %v4120 = vadd.f32 0.0, %v4119
        %4121 = vmatprep.mubr.f32.mxu0 0.0
        %4122 = vmatmul.mubr.f32.gmra.mxu0 %v2623
        %v4123 = vpop.f32.mrf.mxu0
        %v4124 = vadd.f32 0.0, %v4123
        %v4125 = vpop.f32.mrf.mxu0
        %v4126 = vadd.f32 0.0, %v4125
        %4127 = vmatprep.mubr.f32.mxu0 0.0
        %4128 = vmatmul.mubr.f32.gmra.mxu0 %v2626
        %v4129 = vpop.f32.mrf.mxu0
        %v4130 = vadd.f32 0.0, %v4129
        %v4131 = vpop.f32.mrf.mxu0
        %v4132 = vadd.f32 0.0, %v4131
        %4133 = vmatprep.mubr.f32.mxu0 0.0
        %4134 = vmatmul.mubr.f32.gmra.mxu0 %v2629
        %v4135 = vpop.f32.mrf.mxu0
        %v4136 = vadd.f32 0.0, %v4135
        %v4137 = vpop.f32.mrf.mxu0
        %v4138 = vadd.f32 0.0, %v4137
        %4139 = vmatprep.mubr.f32.mxu0 0.0
        %4140 = vmatmul.mubr.f32.gmra.mxu0 %v2632
        %v4141 = vpop.f32.mrf.mxu0
        %v4142 = vadd.f32 0.0, %v4141
        %v4143 = vpop.f32.mrf.mxu0
        %v4144 = vadd.f32 0.0, %v4143
        %4145 = vmatprep.mubr.f32.mxu0 0.0
        %4146 = vmatmul.mubr.f32.gmra.mxu0 %v2635
        %v4147 = vpop.f32.mrf.mxu0
        %v4148 = vadd.f32 0.0, %v4147
        %v4149 = vpop.f32.mrf.mxu0
        %v4150 = vadd.f32 0.0, %v4149
        %4151 = vmatprep.mubr.f32.mxu0 0.0
        %4152 = vmatmul.mubr.f32.gmra.mxu0 %v2638
        %v4153 = vpop.f32.mrf.mxu0
        %v4154 = vadd.f32 0.0, %v4153
        %v4155 = vpop.f32.mrf.mxu0
        %v4156 = vadd.f32 0.0, %v4155
        %4157 = vmatprep.mubr.f32.mxu0 0.0
        %4158 = vmatmul.mubr.f32.gmra.mxu0 %v2641
        %v4159 = vpop.f32.mrf.mxu0
        %v4160 = vadd.f32 0.0, %v4159
        %v4161 = vpop.f32.mrf.mxu0
        %v4162 = vadd.f32 0.0, %v4161
        %4163 = vmatprep.mubr.f32.mxu0 0.0
        %4164 = vmatmul.mubr.f32.gmra.mxu0 %v2644
        %v4165 = vpop.f32.mrf.mxu0
        %v4166 = vadd.f32 0.0, %v4165
        %v4167 = vpop.f32.mrf.mxu0
        %v4168 = vadd.f32 0.0, %v4167
        %4169 = vmatprep.mubr.f32.mxu0 0.0
        %4170 = vmatmul.mubr.f32.gmra.mxu0 %v2647
        %v4171 = vpop.f32.mrf.mxu0
        %v4172 = vadd.f32 0.0, %v4171
        %v4173 = vpop.f32.mrf.mxu0
        %v4174 = vadd.f32 0.0, %v4173
        %4175 = vmatprep.mubr.f32.mxu0 0.0
        %4176 = vmatmul.mubr.f32.gmra.mxu0 %v2650
        %v4177 = vpop.f32.mrf.mxu0
        %v4178 = vadd.f32 0.0, %v4177
        %v4179 = vpop.f32.mrf.mxu0
        %v4180 = vadd.f32 0.0, %v4179
        %4181 = vmatprep.mubr.f32.mxu0 0.0
        %4182 = vmatmul.mubr.f32.gmra.mxu0 %v2653
        %v4183 = vpop.f32.mrf.mxu0
        %v4184 = vadd.f32 0.0, %v4183
        %v4185 = vpop.f32.mrf.mxu0
        %v4186 = vadd.f32 0.0, %v4185
        %4187 = vmatprep.mubr.f32.mxu0 0.0
        %4188 = vmatmul.mubr.f32.gmra.mxu0 %v2656
        %v4189 = vpop.f32.mrf.mxu0
        %v4190 = vadd.f32 0.0, %v4189
        %v4191 = vpop.f32.mrf.mxu0
        %v4192 = vadd.f32 0.0, %v4191
        %4193 = vmatprep.mubr.f32.mxu0 0.0
        %4194 = vmatmul.mubr.f32.gmra.mxu0 %v2659
        %v4195 = vpop.f32.mrf.mxu0
        %v4196 = vadd.f32 0.0, %v4195
        %v4197 = vpop.f32.mrf.mxu0
        %v4198 = vadd.f32 0.0, %v4197
        %4199 = vmatprep.mubr.f32.mxu0 0.0
        %4200 = vmatmul.mubr.f32.gmra.mxu0 %v2662
        %v4201 = vpop.f32.mrf.mxu0
        %v4202 = vadd.f32 0.0, %v4201
        %v4203 = vpop.f32.mrf.mxu0
        %v4204 = vadd.f32 0.0, %v4203
        %4205 = vmatprep.mubr.f32.mxu0 0.0
        %4206 = vmatmul.mubr.f32.gmra.mxu0 %v2665
        %v4207 = vpop.f32.mrf.mxu0
        %v4208 = vadd.f32 0.0, %v4207
        %v4209 = vpop.f32.mrf.mxu0
        %v4210 = vadd.f32 0.0, %v4209
        %4211 = vmatprep.mubr.f32.mxu0 0.0
        %4212 = vmatmul.mubr.f32.gmra.mxu0 %v2668
        %v4213 = vpop.f32.mrf.mxu0
        %v4214 = vadd.f32 0.0, %v4213
        %v4215 = vpop.f32.mrf.mxu0
        %v4216 = vadd.f32 0.0, %v4215
        %4217 = vmatprep.mubr.f32.mxu0 0.0
        %4218 = vmatmul.mubr.f32.gmra.mxu0 %v2671
        %v4219 = vpop.f32.mrf.mxu0
        %v4220 = vadd.f32 0.0, %v4219
        %v4221 = vpop.f32.mrf.mxu0
        %v4222 = vadd.f32 0.0, %v4221
        %4223 = vmatprep.mubr.f32.mxu0 0.0
        %4224 = vmatmul.mubr.f32.gmra.mxu0 %v2674
        %v4225 = vpop.f32.mrf.mxu0
        %v4226 = vadd.f32 0.0, %v4225
        %v4227 = vpop.f32.mrf.mxu0
        %v4228 = vadd.f32 0.0, %v4227
        %4229 = vmatprep.mubr.f32.mxu0 0.0
        %4230 = vmatmul.mubr.f32.gmra.mxu0 %v2677
        %v4231 = vpop.f32.mrf.mxu0
        %v4232 = vadd.f32 0.0, %v4231
        %v4233 = vpop.f32.mrf.mxu0
        %v4234 = vadd.f32 0.0, %v4233
        %4235 = vmatprep.mubr.f32.mxu0 0.0
        %4236 = vmatmul.mubr.f32.gmra.mxu0 %v2680
        %v4237 = vpop.f32.mrf.mxu0
        %v4238 = vadd.f32 0.0, %v4237
        %v4239 = vpop.f32.mrf.mxu0
        %v4240 = vadd.f32 0.0, %v4239
        %4241 = vmatprep.mubr.f32.mxu0 0.0
        %4242 = vmatmul.mubr.f32.gmra.mxu0 %v2683
        %v4243 = vpop.f32.mrf.mxu0
        %v4244 = vadd.f32 0.0, %v4243
        %v4245 = vpop.f32.mrf.mxu0
        %v4246 = vadd.f32 0.0, %v4245
        %4247 = vmatprep.mubr.f32.mxu0 0.0
        %4248 = vmatmul.mubr.f32.gmra.mxu0 %v2686
        %v4249 = vpop.f32.mrf.mxu0
        %v4250 = vadd.f32 0.0, %v4249
        %v4251 = vpop.f32.mrf.mxu0
        %v4252 = vadd.f32 0.0, %v4251
        %4253 = vmatprep.mubr.f32.mxu0 0.0
        %4254 = vmatmul.mubr.f32.gmra.mxu0 %v2689
        %v4255 = vpop.f32.mrf.mxu0
        %v4256 = vadd.f32 0.0, %v4255
        %v4257 = vpop.f32.mrf.mxu0
        %v4258 = vadd.f32 0.0, %v4257
        %4259 = vmatprep.mubr.f32.mxu0 0.0
        %4260 = vmatmul.mubr.f32.gmra.mxu0 %v2692
        %v4261 = vpop.f32.mrf.mxu0
        %v4262 = vadd.f32 0.0, %v4261
        %v4263 = vpop.f32.mrf.mxu0
        %v4264 = vadd.f32 0.0, %v4263
        %4265 = vmatprep.mubr.f32.mxu0 0.0
        %4266 = vmatmul.mubr.f32.gmra.mxu0 %v2695
        %v4267 = vpop.f32.mrf.mxu0
        %v4268 = vadd.f32 0.0, %v4267
        %v4269 = vpop.f32.mrf.mxu0
        %v4270 = vadd.f32 0.0, %v4269
        %4271 = vmatprep.mubr.f32.mxu0 0.0
        %4272 = vmatmul.mubr.f32.gmra.mxu0 %v2698
        %v4273 = vpop.f32.mrf.mxu0
        %v4274 = vadd.f32 0.0, %v4273
        %v4275 = vpop.f32.mrf.mxu0
        %v4276 = vadd.f32 0.0, %v4275
        %4277 = vmatprep.mubr.f32.mxu0 0.0
        %4278 = vmatmul.mubr.f32.gmra.mxu0 %v2701
        %v4279 = vpop.f32.mrf.mxu0
        %v4280 = vadd.f32 0.0, %v4279
        %v4281 = vpop.f32.mrf.mxu0
        %v4282 = vadd.f32 0.0, %v4281
        %4283 = vmatprep.mubr.f32.mxu0 0.0
        %4284 = vmatmul.mubr.f32.gmra.mxu0 %v2704
        %v4285 = vpop.f32.mrf.mxu0
        %v4286 = vadd.f32 0.0, %v4285
        %v4287 = vpop.f32.mrf.mxu0
        %v4288 = vadd.f32 0.0, %v4287
        %4289 = vmatprep.mubr.f32.mxu0 0.0
        %4290 = vmatmul.mubr.f32.gmra.mxu0 %v2707
        %v4291 = vpop.f32.mrf.mxu0
        %v4292 = vadd.f32 0.0, %v4291
        %v4293 = vpop.f32.mrf.mxu0
        %v4294 = vadd.f32 0.0, %v4293
        %4295 = vmatprep.mubr.f32.mxu0 0.0
        %4296 = vmatmul.mubr.f32.gmra.mxu0 %v2710
        %v4297 = vpop.f32.mrf.mxu0
        %v4298 = vadd.f32 0.0, %v4297
        %v4299 = vpop.f32.mrf.mxu0
        %v4300 = vadd.f32 0.0, %v4299
        %4301 = vmatprep.mubr.f32.mxu0 0.0
        %4302 = vmatmul.mubr.f32.gmra.mxu0 %v2713
        %v4303 = vpop.f32.mrf.mxu0
        %v4304 = vadd.f32 0.0, %v4303
        %v4305 = vpop.f32.mrf.mxu0
        %v4306 = vadd.f32 0.0, %v4305
        %4307 = vmatprep.mubr.f32.mxu0 0.0
        %4308 = vmatmul.mubr.f32.gmra.mxu0 %v2716
        %v4309 = vpop.f32.mrf.mxu0
        %v4310 = vadd.f32 0.0, %v4309
        %v4311 = vpop.f32.mrf.mxu0
        %v4312 = vadd.f32 0.0, %v4311
        %4313 = vmatprep.mubr.f32.mxu0 0.0
        %4314 = vmatmul.mubr.f32.gmra.mxu0 %v2719
        %v4315 = vpop.f32.mrf.mxu0
        %v4316 = vadd.f32 0.0, %v4315
        %v4317 = vpop.f32.mrf.mxu0
        %v4318 = vadd.f32 0.0, %v4317
        %4319 = vmatprep.mubr.f32.mxu0 0.0
        %4320 = vmatmul.mubr.f32.gmra.mxu0 %v2722
        %v4321 = vpop.f32.mrf.mxu0
        %v4322 = vadd.f32 0.0, %v4321
        %v4323 = vpop.f32.mrf.mxu0
        %v4324 = vadd.f32 0.0, %v4323
        %4325 = vmatprep.mubr.f32.mxu0 0.0
        %4326 = vmatmul.mubr.f32.gmra.mxu0 %v2725
        %v4327 = vpop.f32.mrf.mxu0
        %v4328 = vadd.f32 0.0, %v4327
        %v4329 = vpop.f32.mrf.mxu0
        %v4330 = vadd.f32 0.0, %v4329
        %4331 = vmatprep.mubr.f32.mxu0 0.0
        %4332 = vmatmul.mubr.f32.gmra.mxu0 %v2728
        %v4333 = vpop.f32.mrf.mxu0
        %v4334 = vadd.f32 0.0, %v4333
        %v4335 = vpop.f32.mrf.mxu0
        %v4336 = vadd.f32 0.0, %v4335
        %4337 = vmatprep.mubr.f32.mxu0 0.0
        %4338 = vmatmul.mubr.f32.gmra.mxu0 %v2731
        %v4339 = vpop.f32.mrf.mxu0
        %v4340 = vadd.f32 0.0, %v4339
        %v4341 = vpop.f32.mrf.mxu0
        %v4342 = vadd.f32 0.0, %v4341
        %4343 = vmatprep.mubr.f32.mxu0 0.0
        %4344 = vmatmul.mubr.f32.gmra.mxu0 %v2734
        %v4345 = vpop.f32.mrf.mxu0
        %v4346 = vadd.f32 0.0, %v4345
        %v4347 = vpop.f32.mrf.mxu0
        %v4348 = vadd.f32 0.0, %v4347
        %4349 = vdwg.mxu0
        %4350 = vmatprep.subr.mxu0 0.0
        %4351 = vmatpush1.msra.mxu0 0.0
        %4352 = vmatprep.subr.mxu0 0.0
        %4353 = vmatpush1.msra.mxu0 0.0
        %4354 = vmatprep.subr.mxu0 0.0
        %4355 = vmatpush1.msra.mxu0 0.0
        %4356 = vmatprep.subr.mxu0 0.0
        %4357 = vmatpush1.msra.mxu0 0.0
        %4358 = vmatprep.subr.mxu0 0.0
        %4359 = vmatpush1.msra.mxu0 0.0
        %4360 = vmatprep.subr.mxu0 0.0
        %4361 = vmatpush1.msra.mxu0 0.0
        %4362 = vmatprep.subr.mxu0 0.0
        %4363 = vmatpush1.msra.mxu0 0.0
        %4364 = vmatprep.subr.mxu0 0.0
        %4365 = vmatpush1.msra.mxu0 0.0
        %4366 = vmatprep.subr.mxu0 0.0
        %4367 = vmatpush1.msra.mxu0 0.0
        %4368 = vmatprep.subr.mxu0 0.0
        %4369 = vmatpush1.msra.mxu0 0.0
        %4370 = vmatprep.subr.mxu0 0.0
        %4371 = vmatpush1.msra.mxu0 0.0
        %4372 = vmatprep.subr.mxu0 0.0
        %4373 = vmatpush1.msra.mxu0 0.0
        %4374 = vmatprep.subr.mxu0 0.0
        %4375 = vmatpush1.msra.mxu0 0.0
        %4376 = vmatprep.subr.mxu0 0.0
        %4377 = vmatpush1.msra.mxu0 0.0
        %4378 = vmatprep.subr.mxu0 %v2747
        %4379 = vmatpush1.msra.mxu0 %v2744
        %4380 = vmatprep.subr.mxu0 %v1962
        %4381 = vmatpush1.msra.mxu0 %v1961
        %4382 = vmatprep.subr.mxu0 0.0
        %4383 = vmatpush2.msra.mxu0 0.0
        %4384 = vmatprep.subr.mxu0 0.0
        %4385 = vmatpush2.msra.mxu0 0.0
        %4386 = vmatprep.subr.mxu0 0.0
        %4387 = vmatpush2.msra.mxu0 0.0
        %4388 = vmatprep.subr.mxu0 0.0
        %4389 = vmatpush2.msra.mxu0 0.0
        %4390 = vmatprep.subr.mxu0 0.0
        %4391 = vmatpush2.msra.mxu0 0.0
        %4392 = vmatprep.subr.mxu0 0.0
        %4393 = vmatpush2.msra.mxu0 0.0
        %4394 = vmatprep.subr.mxu0 0.0
        %4395 = vmatpush2.msra.mxu0 0.0
        %4396 = vmatprep.subr.mxu0 0.0
        %4397 = vmatpush2.msra.mxu0 0.0
        %4398 = vmatprep.subr.mxu0 0.0
        %4399 = vmatpush2.msra.mxu0 0.0
        %4400 = vmatprep.subr.mxu0 0.0
        %4401 = vmatpush2.msra.mxu0 0.0
        %4402 = vmatprep.subr.mxu0 0.0
        %4403 = vmatpush2.msra.mxu0 0.0
        %4404 = vmatprep.subr.mxu0 0.0
        %4405 = vmatpush2.msra.mxu0 0.0
        %4406 = vmatprep.subr.mxu0 0.0
        %4407 = vmatpush2.msra.mxu0 0.0
        %4408 = vmatprep.subr.mxu0 0.0
        %4409 = vmatpush2.msra.mxu0 0.0
        %4410 = vmatprep.subr.mxu0 0.0
        %4411 = vmatpush2.msra.mxu0 0.0
        %4412 = vmatprep.subr.mxu0 0.0
        %4413 = vmatpush2.msra.mxu0 0.0
        %4414 = vmatprep.mubr.f32.mxu0 0.0
        %4415 = vmatmul.mubr.f32.gmra.mxu0 %v1969
        %v4416 = vpop.f32.mrf.mxu0
        %v4417 = vadd.f32 0.0, %v4416
        %v4418 = vpop.f32.mrf.mxu0
        %v4419 = vadd.f32 0.0, %v4418
        %4420 = vmatprep.mubr.f32.mxu0 0.0
        %4421 = vmatmul.mubr.f32.gmra.mxu0 %v1972
        %v4422 = vpop.f32.mrf.mxu0
        %v4423 = vadd.f32 0.0, %v4422
        %v4424 = vpop.f32.mrf.mxu0
        %v4425 = vadd.f32 0.0, %v4424
        %4426 = vmatprep.mubr.f32.mxu0 0.0
        %4427 = vmatmul.mubr.f32.gmra.mxu0 %v1975
        %v4428 = vpop.f32.mrf.mxu0
        %v4429 = vadd.f32 0.0, %v4428
        %v4430 = vpop.f32.mrf.mxu0
        %v4431 = vadd.f32 0.0, %v4430
        %4432 = vmatprep.mubr.f32.mxu0 0.0
        %4433 = vmatmul.mubr.f32.gmra.mxu0 %v1978
        %v4434 = vpop.f32.mrf.mxu0
        %v4435 = vadd.f32 0.0, %v4434
        %v4436 = vpop.f32.mrf.mxu0
        %v4437 = vadd.f32 0.0, %v4436
        %4438 = vmatprep.mubr.f32.mxu0 0.0
        %4439 = vmatmul.mubr.f32.gmra.mxu0 %v1981
        %v4440 = vpop.f32.mrf.mxu0
        %v4441 = vadd.f32 0.0, %v4440
        %v4442 = vpop.f32.mrf.mxu0
        %v4443 = vadd.f32 0.0, %v4442
        %4444 = vmatprep.mubr.f32.mxu0 0.0
        %4445 = vmatmul.mubr.f32.gmra.mxu0 %v1984
        %v4446 = vpop.f32.mrf.mxu0
        %v4447 = vadd.f32 0.0, %v4446
        %v4448 = vpop.f32.mrf.mxu0
        %v4449 = vadd.f32 0.0, %v4448
        %4450 = vmatprep.mubr.f32.mxu0 0.0
        %4451 = vmatmul.mubr.f32.gmra.mxu0 %v1987
        %v4452 = vpop.f32.mrf.mxu0
        %v4453 = vadd.f32 0.0, %v4452
        %v4454 = vpop.f32.mrf.mxu0
        %v4455 = vadd.f32 0.0, %v4454
        %4456 = vmatprep.mubr.f32.mxu0 0.0
        %4457 = vmatmul.mubr.f32.gmra.mxu0 %v1990
        %v4458 = vpop.f32.mrf.mxu0
        %v4459 = vadd.f32 0.0, %v4458
        %v4460 = vpop.f32.mrf.mxu0
        %v4461 = vadd.f32 0.0, %v4460
        %4462 = vmatprep.mubr.f32.mxu0 0.0
        %4463 = vmatmul.mubr.f32.gmra.mxu0 %v1993
        %v4464 = vpop.f32.mrf.mxu0
        %v4465 = vadd.f32 0.0, %v4464
        %v4466 = vpop.f32.mrf.mxu0
        %v4467 = vadd.f32 0.0, %v4466
        %4468 = vmatprep.mubr.f32.mxu0 0.0
        %4469 = vmatmul.mubr.f32.gmra.mxu0 %v1996
        %v4470 = vpop.f32.mrf.mxu0
        %v4471 = vadd.f32 0.0, %v4470
        %v4472 = vpop.f32.mrf.mxu0
        %v4473 = vadd.f32 0.0, %v4472
        %4474 = vmatprep.mubr.f32.mxu0 0.0
        %4475 = vmatmul.mubr.f32.gmra.mxu0 %v1999
        %v4476 = vpop.f32.mrf.mxu0
        %v4477 = vadd.f32 0.0, %v4476
        %v4478 = vpop.f32.mrf.mxu0
        %v4479 = vadd.f32 0.0, %v4478
        %4480 = vmatprep.mubr.f32.mxu0 0.0
        %4481 = vmatmul.mubr.f32.gmra.mxu0 %v2002
        %v4482 = vpop.f32.mrf.mxu0
        %v4483 = vadd.f32 0.0, %v4482
        %v4484 = vpop.f32.mrf.mxu0
        %v4485 = vadd.f32 0.0, %v4484
        %4486 = vmatprep.mubr.f32.mxu0 0.0
        %4487 = vmatmul.mubr.f32.gmra.mxu0 %v2005
        %v4488 = vpop.f32.mrf.mxu0
        %v4489 = vadd.f32 0.0, %v4488
        %v4490 = vpop.f32.mrf.mxu0
        %v4491 = vadd.f32 0.0, %v4490
        %4492 = vmatprep.mubr.f32.mxu0 0.0
        %4493 = vmatmul.mubr.f32.gmra.mxu0 %v2008
        %v4494 = vpop.f32.mrf.mxu0
        %v4495 = vadd.f32 0.0, %v4494
        %v4496 = vpop.f32.mrf.mxu0
        %v4497 = vadd.f32 0.0, %v4496
        %4498 = vmatprep.mubr.f32.mxu0 0.0
        %4499 = vmatmul.mubr.f32.gmra.mxu0 %v2011
        %v4500 = vpop.f32.mrf.mxu0
        %v4501 = vadd.f32 0.0, %v4500
        %v4502 = vpop.f32.mrf.mxu0
        %v4503 = vadd.f32 0.0, %v4502
        %4504 = vmatprep.mubr.f32.mxu0 0.0
        %4505 = vmatmul.mubr.f32.gmra.mxu0 %v2014
        %v4506 = vpop.f32.mrf.mxu0
        %v4507 = vadd.f32 0.0, %v4506
        %v4508 = vpop.f32.mrf.mxu0
        %v4509 = vadd.f32 0.0, %v4508
        %4510 = vmatprep.mubr.f32.mxu0 0.0
        %4511 = vmatmul.mubr.f32.gmra.mxu0 %v2017
        %v4512 = vpop.f32.mrf.mxu0
        %v4513 = vadd.f32 0.0, %v4512
        %v4514 = vpop.f32.mrf.mxu0
        %v4515 = vadd.f32 0.0, %v4514
        %4516 = vmatprep.mubr.f32.mxu0 0.0
        %4517 = vmatmul.mubr.f32.gmra.mxu0 %v2020
        %v4518 = vpop.f32.mrf.mxu0
        %v4519 = vadd.f32 0.0, %v4518
        %v4520 = vpop.f32.mrf.mxu0
        %v4521 = vadd.f32 0.0, %v4520
        %4522 = vmatprep.mubr.f32.mxu0 0.0
        %4523 = vmatmul.mubr.f32.gmra.mxu0 %v2023
        %v4524 = vpop.f32.mrf.mxu0
        %v4525 = vadd.f32 0.0, %v4524
        %v4526 = vpop.f32.mrf.mxu0
        %v4527 = vadd.f32 0.0, %v4526
        %4528 = vmatprep.mubr.f32.mxu0 0.0
        %4529 = vmatmul.mubr.f32.gmra.mxu0 %v2026
        %v4530 = vpop.f32.mrf.mxu0
        %v4531 = vadd.f32 0.0, %v4530
        %v4532 = vpop.f32.mrf.mxu0
        %v4533 = vadd.f32 0.0, %v4532
        %4534 = vmatprep.mubr.f32.mxu0 0.0
        %4535 = vmatmul.mubr.f32.gmra.mxu0 %v2029
        %v4536 = vpop.f32.mrf.mxu0
        %v4537 = vadd.f32 0.0, %v4536
        %v4538 = vpop.f32.mrf.mxu0
        %v4539 = vadd.f32 0.0, %v4538
        %4540 = vmatprep.mubr.f32.mxu0 0.0
        %4541 = vmatmul.mubr.f32.gmra.mxu0 %v2032
        %v4542 = vpop.f32.mrf.mxu0
        %v4543 = vadd.f32 0.0, %v4542
        %v4544 = vpop.f32.mrf.mxu0
        %v4545 = vadd.f32 0.0, %v4544
        %4546 = vmatprep.mubr.f32.mxu0 0.0
        %4547 = vmatmul.mubr.f32.gmra.mxu0 %v2035
        %v4548 = vpop.f32.mrf.mxu0
        %v4549 = vadd.f32 0.0, %v4548
        %v4550 = vpop.f32.mrf.mxu0
        %v4551 = vadd.f32 0.0, %v4550
        %4552 = vmatprep.mubr.f32.mxu0 0.0
        %4553 = vmatmul.mubr.f32.gmra.mxu0 %v2038
        %v4554 = vpop.f32.mrf.mxu0
        %v4555 = vadd.f32 0.0, %v4554
        %v4556 = vpop.f32.mrf.mxu0
        %v4557 = vadd.f32 0.0, %v4556
        %4558 = vmatprep.mubr.f32.mxu0 0.0
        %4559 = vmatmul.mubr.f32.gmra.mxu0 %v2041
        %v4560 = vpop.f32.mrf.mxu0
        %v4561 = vadd.f32 0.0, %v4560
        %v4562 = vpop.f32.mrf.mxu0
        %v4563 = vadd.f32 0.0, %v4562
        %4564 = vmatprep.mubr.f32.mxu0 0.0
        %4565 = vmatmul.mubr.f32.gmra.mxu0 %v2044
        %v4566 = vpop.f32.mrf.mxu0
        %v4567 = vadd.f32 0.0, %v4566
        %v4568 = vpop.f32.mrf.mxu0
        %v4569 = vadd.f32 0.0, %v4568
        %4570 = vmatprep.mubr.f32.mxu0 0.0
        %4571 = vmatmul.mubr.f32.gmra.mxu0 %v2047
        %v4572 = vpop.f32.mrf.mxu0
        %v4573 = vadd.f32 0.0, %v4572
        %v4574 = vpop.f32.mrf.mxu0
        %v4575 = vadd.f32 0.0, %v4574
        %4576 = vmatprep.mubr.f32.mxu0 0.0
        %4577 = vmatmul.mubr.f32.gmra.mxu0 %v2050
        %v4578 = vpop.f32.mrf.mxu0
        %v4579 = vadd.f32 0.0, %v4578
        %v4580 = vpop.f32.mrf.mxu0
        %v4581 = vadd.f32 0.0, %v4580
        %4582 = vmatprep.mubr.f32.mxu0 0.0
        %4583 = vmatmul.mubr.f32.gmra.mxu0 %v2053
        %v4584 = vpop.f32.mrf.mxu0
        %v4585 = vadd.f32 0.0, %v4584
        %v4586 = vpop.f32.mrf.mxu0
        %v4587 = vadd.f32 0.0, %v4586
        %4588 = vmatprep.mubr.f32.mxu0 0.0
        %4589 = vmatmul.mubr.f32.gmra.mxu0 %v2056
        %v4590 = vpop.f32.mrf.mxu0
        %v4591 = vadd.f32 0.0, %v4590
        %v4592 = vpop.f32.mrf.mxu0
        %v4593 = vadd.f32 0.0, %v4592
        %4594 = vmatprep.mubr.f32.mxu0 0.0
        %4595 = vmatmul.mubr.f32.gmra.mxu0 %v2059
        %v4596 = vpop.f32.mrf.mxu0
        %v4597 = vadd.f32 0.0, %v4596
        %v4598 = vpop.f32.mrf.mxu0
        %v4599 = vadd.f32 0.0, %v4598
        %4600 = vmatprep.mubr.f32.mxu0 0.0
        %4601 = vmatmul.mubr.f32.gmra.mxu0 %v2062
        %v4602 = vpop.f32.mrf.mxu0
        %v4603 = vadd.f32 0.0, %v4602
        %v4604 = vpop.f32.mrf.mxu0
        %v4605 = vadd.f32 0.0, %v4604
        %4606 = vmatprep.mubr.f32.mxu0 0.0
        %4607 = vmatmul.mubr.f32.gmra.mxu0 %v2065
        %v4608 = vpop.f32.mrf.mxu0
        %v4609 = vadd.f32 0.0, %v4608
        %v4610 = vpop.f32.mrf.mxu0
        %v4611 = vadd.f32 0.0, %v4610
        %4612 = vmatprep.mubr.f32.mxu0 0.0
        %4613 = vmatmul.mubr.f32.gmra.mxu0 %v2068
        %v4614 = vpop.f32.mrf.mxu0
        %v4615 = vadd.f32 0.0, %v4614
        %v4616 = vpop.f32.mrf.mxu0
        %v4617 = vadd.f32 0.0, %v4616
        %4618 = vmatprep.mubr.f32.mxu0 0.0
        %4619 = vmatmul.mubr.f32.gmra.mxu0 %v2071
        %v4620 = vpop.f32.mrf.mxu0
        %v4621 = vadd.f32 0.0, %v4620
        %v4622 = vpop.f32.mrf.mxu0
        %v4623 = vadd.f32 0.0, %v4622
        %4624 = vmatprep.mubr.f32.mxu0 0.0
        %4625 = vmatmul.mubr.f32.gmra.mxu0 %v2074
        %v4626 = vpop.f32.mrf.mxu0
        %v4627 = vadd.f32 0.0, %v4626
        %v4628 = vpop.f32.mrf.mxu0
        %v4629 = vadd.f32 0.0, %v4628
        %4630 = vmatprep.mubr.f32.mxu0 0.0
        %4631 = vmatmul.mubr.f32.gmra.mxu0 %v2077
        %v4632 = vpop.f32.mrf.mxu0
        %v4633 = vadd.f32 0.0, %v4632
        %v4634 = vpop.f32.mrf.mxu0
        %v4635 = vadd.f32 0.0, %v4634
        %4636 = vmatprep.mubr.f32.mxu0 0.0
        %4637 = vmatmul.mubr.f32.gmra.mxu0 %v2080
        %v4638 = vpop.f32.mrf.mxu0
        %v4639 = vadd.f32 0.0, %v4638
        %v4640 = vpop.f32.mrf.mxu0
        %v4641 = vadd.f32 0.0, %v4640
        %4642 = vmatprep.mubr.f32.mxu0 0.0
        %4643 = vmatmul.mubr.f32.gmra.mxu0 %v2083
        %v4644 = vpop.f32.mrf.mxu0
        %v4645 = vadd.f32 0.0, %v4644
        %v4646 = vpop.f32.mrf.mxu0
        %v4647 = vadd.f32 0.0, %v4646
        %4648 = vmatprep.mubr.f32.mxu0 0.0
        %4649 = vmatmul.mubr.f32.gmra.mxu0 %v2086
        %v4650 = vpop.f32.mrf.mxu0
        %v4651 = vadd.f32 0.0, %v4650
        %v4652 = vpop.f32.mrf.mxu0
        %v4653 = vadd.f32 0.0, %v4652
        %4654 = vmatprep.mubr.f32.mxu0 0.0
        %4655 = vmatmul.mubr.f32.gmra.mxu0 %v2089
        %v4656 = vpop.f32.mrf.mxu0
        %v4657 = vadd.f32 0.0, %v4656
        %v4658 = vpop.f32.mrf.mxu0
        %v4659 = vadd.f32 0.0, %v4658
        %4660 = vmatprep.mubr.f32.mxu0 0.0
        %4661 = vmatmul.mubr.f32.gmra.mxu0 %v2092
        %v4662 = vpop.f32.mrf.mxu0
        %v4663 = vadd.f32 0.0, %v4662
        %v4664 = vpop.f32.mrf.mxu0
        %v4665 = vadd.f32 0.0, %v4664
        %4666 = vmatprep.mubr.f32.mxu0 0.0
        %4667 = vmatmul.mubr.f32.gmra.mxu0 %v2095
        %v4668 = vpop.f32.mrf.mxu0
        %v4669 = vadd.f32 0.0, %v4668
        %v4670 = vpop.f32.mrf.mxu0
        %v4671 = vadd.f32 0.0, %v4670
        %4672 = vmatprep.mubr.f32.mxu0 0.0
        %4673 = vmatmul.mubr.f32.gmra.mxu0 %v2098
        %v4674 = vpop.f32.mrf.mxu0
        %v4675 = vadd.f32 0.0, %v4674
        %v4676 = vpop.f32.mrf.mxu0
        %v4677 = vadd.f32 0.0, %v4676
        %4678 = vmatprep.mubr.f32.mxu0 0.0
        %4679 = vmatmul.mubr.f32.gmra.mxu0 %v2101
        %v4680 = vpop.f32.mrf.mxu0
        %v4681 = vadd.f32 0.0, %v4680
        %v4682 = vpop.f32.mrf.mxu0
        %v4683 = vadd.f32 0.0, %v4682
        %4684 = vmatprep.mubr.f32.mxu0 0.0
        %4685 = vmatmul.mubr.f32.gmra.mxu0 %v2104
        %v4686 = vpop.f32.mrf.mxu0
        %v4687 = vadd.f32 0.0, %v4686
        %v4688 = vpop.f32.mrf.mxu0
        %v4689 = vadd.f32 0.0, %v4688
        %4690 = vmatprep.mubr.f32.mxu0 0.0
        %4691 = vmatmul.mubr.f32.gmra.mxu0 %v2107
        %v4692 = vpop.f32.mrf.mxu0
        %v4693 = vadd.f32 0.0, %v4692
        %v4694 = vpop.f32.mrf.mxu0
        %v4695 = vadd.f32 0.0, %v4694
        %4696 = vmatprep.mubr.f32.mxu0 0.0
        %4697 = vmatmul.mubr.f32.gmra.mxu0 %v2110
        %v4698 = vpop.f32.mrf.mxu0
        %v4699 = vadd.f32 0.0, %v4698
        %v4700 = vpop.f32.mrf.mxu0
        %v4701 = vadd.f32 0.0, %v4700
        %4702 = vmatprep.mubr.f32.mxu0 0.0
        %4703 = vmatmul.mubr.f32.gmra.mxu0 %v2113
        %v4704 = vpop.f32.mrf.mxu0
        %v4705 = vadd.f32 0.0, %v4704
        %v4706 = vpop.f32.mrf.mxu0
        %v4707 = vadd.f32 0.0, %v4706
        %4708 = vmatprep.mubr.f32.mxu0 0.0
        %4709 = vmatmul.mubr.f32.gmra.mxu0 %v2116
        %v4710 = vpop.f32.mrf.mxu0
        %v4711 = vadd.f32 0.0, %v4710
        %v4712 = vpop.f32.mrf.mxu0
        %v4713 = vadd.f32 0.0, %v4712
        %4714 = vmatprep.mubr.f32.mxu0 0.0
        %4715 = vmatmul.mubr.f32.gmra.mxu0 %v2119
        %v4716 = vpop.f32.mrf.mxu0
        %v4717 = vadd.f32 0.0, %v4716
        %v4718 = vpop.f32.mrf.mxu0
        %v4719 = vadd.f32 0.0, %v4718
        %4720 = vmatprep.mubr.f32.mxu0 0.0
        %4721 = vmatmul.mubr.f32.gmra.mxu0 %v2122
        %v4722 = vpop.f32.mrf.mxu0
        %v4723 = vadd.f32 0.0, %v4722
        %v4724 = vpop.f32.mrf.mxu0
        %v4725 = vadd.f32 0.0, %v4724
        %4726 = vmatprep.mubr.f32.mxu0 0.0
        %4727 = vmatmul.mubr.f32.gmra.mxu0 %v2125
        %v4728 = vpop.f32.mrf.mxu0
        %v4729 = vadd.f32 0.0, %v4728
        %v4730 = vpop.f32.mrf.mxu0
        %v4731 = vadd.f32 0.0, %v4730
        %4732 = vmatprep.mubr.f32.mxu0 0.0
        %4733 = vmatmul.mubr.f32.gmra.mxu0 %v2128
        %v4734 = vpop.f32.mrf.mxu0
        %v4735 = vadd.f32 0.0, %v4734
        %v4736 = vpop.f32.mrf.mxu0
        %v4737 = vadd.f32 0.0, %v4736
        %4738 = vmatprep.mubr.f32.mxu0 0.0
        %4739 = vmatmul.mubr.f32.gmra.mxu0 %v2131
        %v4740 = vpop.f32.mrf.mxu0
        %v4741 = vadd.f32 0.0, %v4740
        %v4742 = vpop.f32.mrf.mxu0
        %v4743 = vadd.f32 0.0, %v4742
        %4744 = vmatprep.mubr.f32.mxu0 0.0
        %4745 = vmatmul.mubr.f32.gmra.mxu0 %v2134
        %v4746 = vpop.f32.mrf.mxu0
        %v4747 = vadd.f32 0.0, %v4746
        %v4748 = vpop.f32.mrf.mxu0
        %v4749 = vadd.f32 0.0, %v4748
        %4750 = vmatprep.mubr.f32.mxu0 0.0
        %4751 = vmatmul.mubr.f32.gmra.mxu0 %v2137
        %v4752 = vpop.f32.mrf.mxu0
        %v4753 = vadd.f32 0.0, %v4752
        %v4754 = vpop.f32.mrf.mxu0
        %v4755 = vadd.f32 0.0, %v4754
        %4756 = vmatprep.mubr.f32.mxu0 0.0
        %4757 = vmatmul.mubr.f32.gmra.mxu0 %v2140
        %v4758 = vpop.f32.mrf.mxu0
        %v4759 = vadd.f32 0.0, %v4758
        %v4760 = vpop.f32.mrf.mxu0
        %v4761 = vadd.f32 0.0, %v4760
        %4762 = vmatprep.mubr.f32.mxu0 0.0
        %4763 = vmatmul.mubr.f32.gmra.mxu0 %v2143
        %v4764 = vpop.f32.mrf.mxu0
        %v4765 = vadd.f32 0.0, %v4764
        %v4766 = vpop.f32.mrf.mxu0
        %v4767 = vadd.f32 0.0, %v4766
        %4768 = vmatprep.mubr.f32.mxu0 0.0
        %4769 = vmatmul.mubr.f32.gmra.mxu0 %v2146
        %v4770 = vpop.f32.mrf.mxu0
        %v4771 = vadd.f32 0.0, %v4770
        %v4772 = vpop.f32.mrf.mxu0
        %v4773 = vadd.f32 0.0, %v4772
        %4774 = vmatprep.mubr.f32.mxu0 0.0
        %4775 = vmatmul.mubr.f32.gmra.mxu0 %v2149
        %v4776 = vpop.f32.mrf.mxu0
        %v4777 = vadd.f32 0.0, %v4776
        %v4778 = vpop.f32.mrf.mxu0
        %v4779 = vadd.f32 0.0, %v4778
        %4780 = vmatprep.mubr.f32.mxu0 0.0
        %4781 = vmatmul.mubr.f32.gmra.mxu0 %v2152
        %v4782 = vpop.f32.mrf.mxu0
        %v4783 = vadd.f32 0.0, %v4782
        %v4784 = vpop.f32.mrf.mxu0
        %v4785 = vadd.f32 0.0, %v4784
        %4786 = vmatprep.mubr.f32.mxu0 0.0
        %4787 = vmatmul.mubr.f32.gmra.mxu0 %v2155
        %v4788 = vpop.f32.mrf.mxu0
        %v4789 = vadd.f32 0.0, %v4788
        %v4790 = vpop.f32.mrf.mxu0
        %v4791 = vadd.f32 0.0, %v4790
        %4792 = vmatprep.mubr.f32.mxu0 0.0
        %4793 = vmatmul.mubr.f32.gmra.mxu0 %v2158
        %v4794 = vpop.f32.mrf.mxu0
        %v4795 = vadd.f32 0.0, %v4794
        %v4796 = vpop.f32.mrf.mxu0
        %v4797 = vadd.f32 0.0, %v4796
        %4798 = vmatprep.mubr.f32.mxu0 0.0
        %4799 = vmatmul.mubr.f32.gmra.mxu0 %v2161
        %v4800 = vpop.f32.mrf.mxu0
        %v4801 = vadd.f32 0.0, %v4800
        %v4802 = vpop.f32.mrf.mxu0
        %v4803 = vadd.f32 0.0, %v4802
        %4804 = vmatprep.mubr.f32.mxu0 0.0
        %4805 = vmatmul.mubr.f32.gmra.mxu0 %v2164
        %v4806 = vpop.f32.mrf.mxu0
        %v4807 = vadd.f32 0.0, %v4806
        %v4808 = vpop.f32.mrf.mxu0
        %v4809 = vadd.f32 0.0, %v4808
        %4810 = vmatprep.mubr.f32.mxu0 0.0
        %4811 = vmatmul.mubr.f32.gmra.mxu0 %v2167
        %v4812 = vpop.f32.mrf.mxu0
        %v4813 = vadd.f32 0.0, %v4812
        %v4814 = vpop.f32.mrf.mxu0
        %v4815 = vadd.f32 0.0, %v4814
        %4816 = vmatprep.mubr.f32.mxu0 0.0
        %4817 = vmatmul.mubr.f32.gmra.mxu0 %v2170
        %v4818 = vpop.f32.mrf.mxu0
        %v4819 = vadd.f32 0.0, %v4818
        %v4820 = vpop.f32.mrf.mxu0
        %v4821 = vadd.f32 0.0, %v4820
        %4822 = vmatprep.mubr.f32.mxu0 0.0
        %4823 = vmatmul.mubr.f32.gmra.mxu0 %v2173
        %v4824 = vpop.f32.mrf.mxu0
        %v4825 = vadd.f32 0.0, %v4824
        %v4826 = vpop.f32.mrf.mxu0
        %v4827 = vadd.f32 0.0, %v4826
        %4828 = vmatprep.mubr.f32.mxu0 0.0
        %4829 = vmatmul.mubr.f32.gmra.mxu0 %v2176
        %v4830 = vpop.f32.mrf.mxu0
        %v4831 = vadd.f32 0.0, %v4830
        %v4832 = vpop.f32.mrf.mxu0
        %v4833 = vadd.f32 0.0, %v4832
        %4834 = vmatprep.mubr.f32.mxu0 0.0
        %4835 = vmatmul.mubr.f32.gmra.mxu0 %v2179
        %v4836 = vpop.f32.mrf.mxu0
        %v4837 = vadd.f32 0.0, %v4836
        %v4838 = vpop.f32.mrf.mxu0
        %v4839 = vadd.f32 0.0, %v4838
        %4840 = vmatprep.mubr.f32.mxu0 0.0
        %4841 = vmatmul.mubr.f32.gmra.mxu0 %v2182
        %v4842 = vpop.f32.mrf.mxu0
        %v4843 = vadd.f32 0.0, %v4842
        %v4844 = vpop.f32.mrf.mxu0
        %v4845 = vadd.f32 0.0, %v4844
        %4846 = vmatprep.mubr.f32.mxu0 0.0
        %4847 = vmatmul.mubr.f32.gmra.mxu0 %v2185
        %v4848 = vpop.f32.mrf.mxu0
        %v4849 = vadd.f32 0.0, %v4848
        %v4850 = vpop.f32.mrf.mxu0
        %v4851 = vadd.f32 0.0, %v4850
        %4852 = vmatprep.mubr.f32.mxu0 0.0
        %4853 = vmatmul.mubr.f32.gmra.mxu0 %v2188
        %v4854 = vpop.f32.mrf.mxu0
        %v4855 = vadd.f32 0.0, %v4854
        %v4856 = vpop.f32.mrf.mxu0
        %v4857 = vadd.f32 0.0, %v4856
        %4858 = vmatprep.mubr.f32.mxu0 0.0
        %4859 = vmatmul.mubr.f32.gmra.mxu0 %v2191
        %v4860 = vpop.f32.mrf.mxu0
        %v4861 = vadd.f32 0.0, %v4860
        %v4862 = vpop.f32.mrf.mxu0
        %v4863 = vadd.f32 0.0, %v4862
        %4864 = vmatprep.mubr.f32.mxu0 0.0
        %4865 = vmatmul.mubr.f32.gmra.mxu0 %v2194
        %v4866 = vpop.f32.mrf.mxu0
        %v4867 = vadd.f32 0.0, %v4866
        %v4868 = vpop.f32.mrf.mxu0
        %v4869 = vadd.f32 0.0, %v4868
        %4870 = vmatprep.mubr.f32.mxu0 0.0
        %4871 = vmatmul.mubr.f32.gmra.mxu0 %v2197
        %v4872 = vpop.f32.mrf.mxu0
        %v4873 = vadd.f32 0.0, %v4872
        %v4874 = vpop.f32.mrf.mxu0
        %v4875 = vadd.f32 0.0, %v4874
        %4876 = vmatprep.mubr.f32.mxu0 0.0
        %4877 = vmatmul.mubr.f32.gmra.mxu0 %v2200
        %v4878 = vpop.f32.mrf.mxu0
        %v4879 = vadd.f32 0.0, %v4878
        %v4880 = vpop.f32.mrf.mxu0
        %v4881 = vadd.f32 0.0, %v4880
        %4882 = vmatprep.mubr.f32.mxu0 0.0
        %4883 = vmatmul.mubr.f32.gmra.mxu0 %v2203
        %v4884 = vpop.f32.mrf.mxu0
        %v4885 = vadd.f32 0.0, %v4884
        %v4886 = vpop.f32.mrf.mxu0
        %v4887 = vadd.f32 0.0, %v4886
        %4888 = vmatprep.mubr.f32.mxu0 0.0
        %4889 = vmatmul.mubr.f32.gmra.mxu0 %v2206
        %v4890 = vpop.f32.mrf.mxu0
        %v4891 = vadd.f32 0.0, %v4890
        %v4892 = vpop.f32.mrf.mxu0
        %v4893 = vadd.f32 0.0, %v4892
        %4894 = vmatprep.mubr.f32.mxu0 0.0
        %4895 = vmatmul.mubr.f32.gmra.mxu0 %v2209
        %v4896 = vpop.f32.mrf.mxu0
        %v4897 = vadd.f32 0.0, %v4896
        %v4898 = vpop.f32.mrf.mxu0
        %v4899 = vadd.f32 0.0, %v4898
        %4900 = vmatprep.mubr.f32.mxu0 0.0
        %4901 = vmatmul.mubr.f32.gmra.mxu0 %v2212
        %v4902 = vpop.f32.mrf.mxu0
        %v4903 = vadd.f32 0.0, %v4902
        %v4904 = vpop.f32.mrf.mxu0
        %v4905 = vadd.f32 0.0, %v4904
        %4906 = vmatprep.mubr.f32.mxu0 0.0
        %4907 = vmatmul.mubr.f32.gmra.mxu0 %v2215
        %v4908 = vpop.f32.mrf.mxu0
        %v4909 = vadd.f32 0.0, %v4908
        %v4910 = vpop.f32.mrf.mxu0
        %v4911 = vadd.f32 0.0, %v4910
        %4912 = vmatprep.mubr.f32.mxu0 0.0
        %4913 = vmatmul.mubr.f32.gmra.mxu0 %v2218
        %v4914 = vpop.f32.mrf.mxu0
        %v4915 = vadd.f32 0.0, %v4914
        %v4916 = vpop.f32.mrf.mxu0
        %v4917 = vadd.f32 0.0, %v4916
        %4918 = vmatprep.mubr.f32.mxu0 0.0
        %4919 = vmatmul.mubr.f32.gmra.mxu0 %v2221
        %v4920 = vpop.f32.mrf.mxu0
        %v4921 = vadd.f32 0.0, %v4920
        %v4922 = vpop.f32.mrf.mxu0
        %v4923 = vadd.f32 0.0, %v4922
        %4924 = vmatprep.mubr.f32.mxu0 0.0
        %4925 = vmatmul.mubr.f32.gmra.mxu0 %v2224
        %v4926 = vpop.f32.mrf.mxu0
        %v4927 = vadd.f32 0.0, %v4926
        %v4928 = vpop.f32.mrf.mxu0
        %v4929 = vadd.f32 0.0, %v4928
        %4930 = vmatprep.mubr.f32.mxu0 0.0
        %4931 = vmatmul.mubr.f32.gmra.mxu0 %v2227
        %v4932 = vpop.f32.mrf.mxu0
        %v4933 = vadd.f32 0.0, %v4932
        %v4934 = vpop.f32.mrf.mxu0
        %v4935 = vadd.f32 0.0, %v4934
        %4936 = vmatprep.mubr.f32.mxu0 0.0
        %4937 = vmatmul.mubr.f32.gmra.mxu0 %v2230
        %v4938 = vpop.f32.mrf.mxu0
        %v4939 = vadd.f32 0.0, %v4938
        %v4940 = vpop.f32.mrf.mxu0
        %v4941 = vadd.f32 0.0, %v4940
        %4942 = vmatprep.mubr.f32.mxu0 0.0
        %4943 = vmatmul.mubr.f32.gmra.mxu0 %v2233
        %v4944 = vpop.f32.mrf.mxu0
        %v4945 = vadd.f32 0.0, %v4944
        %v4946 = vpop.f32.mrf.mxu0
        %v4947 = vadd.f32 0.0, %v4946
        %4948 = vmatprep.mubr.f32.mxu0 0.0
        %4949 = vmatmul.mubr.f32.gmra.mxu0 %v2236
        %v4950 = vpop.f32.mrf.mxu0
        %v4951 = vadd.f32 0.0, %v4950
        %v4952 = vpop.f32.mrf.mxu0
        %v4953 = vadd.f32 0.0, %v4952
        %4954 = vmatprep.mubr.f32.mxu0 0.0
        %4955 = vmatmul.mubr.f32.gmra.mxu0 %v2239
        %v4956 = vpop.f32.mrf.mxu0
        %v4957 = vadd.f32 0.0, %v4956
        %v4958 = vpop.f32.mrf.mxu0
        %v4959 = vadd.f32 0.0, %v4958
        %4960 = vmatprep.mubr.f32.mxu0 0.0
        %4961 = vmatmul.mubr.f32.gmra.mxu0 %v2242
        %v4962 = vpop.f32.mrf.mxu0
        %v4963 = vadd.f32 0.0, %v4962
        %v4964 = vpop.f32.mrf.mxu0
        %v4965 = vadd.f32 0.0, %v4964
        %4966 = vmatprep.mubr.f32.mxu0 0.0
        %4967 = vmatmul.mubr.f32.gmra.mxu0 %v2245
        %v4968 = vpop.f32.mrf.mxu0
        %v4969 = vadd.f32 0.0, %v4968
        %v4970 = vpop.f32.mrf.mxu0
        %v4971 = vadd.f32 0.0, %v4970
        %4972 = vmatprep.mubr.f32.mxu0 0.0
        %4973 = vmatmul.mubr.f32.gmra.mxu0 %v2248
        %v4974 = vpop.f32.mrf.mxu0
        %v4975 = vadd.f32 0.0, %v4974
        %v4976 = vpop.f32.mrf.mxu0
        %v4977 = vadd.f32 0.0, %v4976
        %4978 = vmatprep.mubr.f32.mxu0 0.0
        %4979 = vmatmul.mubr.f32.gmra.mxu0 %v2251
        %v4980 = vpop.f32.mrf.mxu0
        %v4981 = vadd.f32 0.0, %v4980
        %v4982 = vpop.f32.mrf.mxu0
        %v4983 = vadd.f32 0.0, %v4982
        %4984 = vmatprep.mubr.f32.mxu0 0.0
        %4985 = vmatmul.mubr.f32.gmra.mxu0 %v2254
        %v4986 = vpop.f32.mrf.mxu0
        %v4987 = vadd.f32 0.0, %v4986
        %v4988 = vpop.f32.mrf.mxu0
        %v4989 = vadd.f32 0.0, %v4988
        %4990 = vmatprep.mubr.f32.mxu0 0.0
        %4991 = vmatmul.mubr.f32.gmra.mxu0 %v2257
        %v4992 = vpop.f32.mrf.mxu0
        %v4993 = vadd.f32 0.0, %v4992
        %v4994 = vpop.f32.mrf.mxu0
        %v4995 = vadd.f32 0.0, %v4994
        %4996 = vmatprep.mubr.f32.mxu0 0.0
        %4997 = vmatmul.mubr.f32.gmra.mxu0 %v2260
        %v4998 = vpop.f32.mrf.mxu0
        %v4999 = vadd.f32 0.0, %v4998
        %v5000 = vpop.f32.mrf.mxu0
        %v5001 = vadd.f32 0.0, %v5000
        %5002 = vmatprep.mubr.f32.mxu0 0.0
        %5003 = vmatmul.mubr.f32.gmra.mxu0 %v2263
        %v5004 = vpop.f32.mrf.mxu0
        %v5005 = vadd.f32 0.0, %v5004
        %v5006 = vpop.f32.mrf.mxu0
        %v5007 = vadd.f32 0.0, %v5006
        %5008 = vmatprep.mubr.f32.mxu0 0.0
        %5009 = vmatmul.mubr.f32.gmra.mxu0 %v2266
        %v5010 = vpop.f32.mrf.mxu0
        %v5011 = vadd.f32 0.0, %v5010
        %v5012 = vpop.f32.mrf.mxu0
        %v5013 = vadd.f32 0.0, %v5012
        %5014 = vmatprep.mubr.f32.mxu0 0.0
        %5015 = vmatmul.mubr.f32.gmra.mxu0 %v2269
        %v5016 = vpop.f32.mrf.mxu0
        %v5017 = vadd.f32 0.0, %v5016
        %v5018 = vpop.f32.mrf.mxu0
        %v5019 = vadd.f32 0.0, %v5018
        %5020 = vmatprep.mubr.f32.mxu0 0.0
        %5021 = vmatmul.mubr.f32.gmra.mxu0 %v2272
        %v5022 = vpop.f32.mrf.mxu0
        %v5023 = vadd.f32 0.0, %v5022
        %v5024 = vpop.f32.mrf.mxu0
        %v5025 = vadd.f32 0.0, %v5024
        %5026 = vmatprep.mubr.f32.mxu0 0.0
        %5027 = vmatmul.mubr.f32.gmra.mxu0 %v2275
        %v5028 = vpop.f32.mrf.mxu0
        %v5029 = vadd.f32 0.0, %v5028
        %v5030 = vpop.f32.mrf.mxu0
        %v5031 = vadd.f32 0.0, %v5030
        %5032 = vmatprep.mubr.f32.mxu0 0.0
        %5033 = vmatmul.mubr.f32.gmra.mxu0 %v2278
        %v5034 = vpop.f32.mrf.mxu0
        %v5035 = vadd.f32 0.0, %v5034
        %v5036 = vpop.f32.mrf.mxu0
        %v5037 = vadd.f32 0.0, %v5036
        %5038 = vmatprep.mubr.f32.mxu0 0.0
        %5039 = vmatmul.mubr.f32.gmra.mxu0 %v2281
        %v5040 = vpop.f32.mrf.mxu0
        %v5041 = vadd.f32 0.0, %v5040
        %v5042 = vpop.f32.mrf.mxu0
        %v5043 = vadd.f32 0.0, %v5042
        %5044 = vmatprep.mubr.f32.mxu0 0.0
        %5045 = vmatmul.mubr.f32.gmra.mxu0 %v2284
        %v5046 = vpop.f32.mrf.mxu0
        %v5047 = vadd.f32 0.0, %v5046
        %v5048 = vpop.f32.mrf.mxu0
        %v5049 = vadd.f32 0.0, %v5048
        %5050 = vmatprep.mubr.f32.mxu0 0.0
        %5051 = vmatmul.mubr.f32.gmra.mxu0 %v2287
        %v5052 = vpop.f32.mrf.mxu0
        %v5053 = vadd.f32 0.0, %v5052
        %v5054 = vpop.f32.mrf.mxu0
        %v5055 = vadd.f32 0.0, %v5054
        %5056 = vmatprep.mubr.f32.mxu0 0.0
        %5057 = vmatmul.mubr.f32.gmra.mxu0 %v2290
        %v5058 = vpop.f32.mrf.mxu0
        %v5059 = vadd.f32 0.0, %v5058
        %v5060 = vpop.f32.mrf.mxu0
        %v5061 = vadd.f32 0.0, %v5060
        %5062 = vmatprep.mubr.f32.mxu0 0.0
        %5063 = vmatmul.mubr.f32.gmra.mxu0 %v2293
        %v5064 = vpop.f32.mrf.mxu0
        %v5065 = vadd.f32 0.0, %v5064
        %v5066 = vpop.f32.mrf.mxu0
        %v5067 = vadd.f32 0.0, %v5066
        %5068 = vmatprep.mubr.f32.mxu0 0.0
        %5069 = vmatmul.mubr.f32.gmra.mxu0 %v2296
        %v5070 = vpop.f32.mrf.mxu0
        %v5071 = vadd.f32 0.0, %v5070
        %v5072 = vpop.f32.mrf.mxu0
        %v5073 = vadd.f32 0.0, %v5072
        %5074 = vmatprep.mubr.f32.mxu0 0.0
        %5075 = vmatmul.mubr.f32.gmra.mxu0 %v2299
        %v5076 = vpop.f32.mrf.mxu0
        %v5077 = vadd.f32 0.0, %v5076
        %v5078 = vpop.f32.mrf.mxu0
        %v5079 = vadd.f32 0.0, %v5078
        %5080 = vmatprep.mubr.f32.mxu0 0.0
        %5081 = vmatmul.mubr.f32.gmra.mxu0 %v2302
        %v5082 = vpop.f32.mrf.mxu0
        %v5083 = vadd.f32 0.0, %v5082
        %v5084 = vpop.f32.mrf.mxu0
        %v5085 = vadd.f32 0.0, %v5084
        %5086 = vmatprep.mubr.f32.mxu0 0.0
        %5087 = vmatmul.mubr.f32.gmra.mxu0 %v2305
        %v5088 = vpop.f32.mrf.mxu0
        %v5089 = vadd.f32 0.0, %v5088
        %v5090 = vpop.f32.mrf.mxu0
        %v5091 = vadd.f32 0.0, %v5090
        %5092 = vmatprep.mubr.f32.mxu0 0.0
        %5093 = vmatmul.mubr.f32.gmra.mxu0 %v2308
        %v5094 = vpop.f32.mrf.mxu0
        %v5095 = vadd.f32 0.0, %v5094
        %v5096 = vpop.f32.mrf.mxu0
        %v5097 = vadd.f32 0.0, %v5096
        %5098 = vmatprep.mubr.f32.mxu0 0.0
        %5099 = vmatmul.mubr.f32.gmra.mxu0 %v2311
        %v5100 = vpop.f32.mrf.mxu0
        %v5101 = vadd.f32 0.0, %v5100
        %v5102 = vpop.f32.mrf.mxu0
        %v5103 = vadd.f32 0.0, %v5102
        %5104 = vmatprep.mubr.f32.mxu0 0.0
        %5105 = vmatmul.mubr.f32.gmra.mxu0 %v2314
        %v5106 = vpop.f32.mrf.mxu0
        %v5107 = vadd.f32 0.0, %v5106
        %v5108 = vpop.f32.mrf.mxu0
        %v5109 = vadd.f32 0.0, %v5108
        %5110 = vmatprep.mubr.f32.mxu0 0.0
        %5111 = vmatmul.mubr.f32.gmra.mxu0 %v2317
        %v5112 = vpop.f32.mrf.mxu0
        %v5113 = vadd.f32 0.0, %v5112
        %v5114 = vpop.f32.mrf.mxu0
        %v5115 = vadd.f32 0.0, %v5114
        %5116 = vmatprep.mubr.f32.mxu0 0.0
        %5117 = vmatmul.mubr.f32.gmra.mxu0 %v2320
        %v5118 = vpop.f32.mrf.mxu0
        %v5119 = vadd.f32 0.0, %v5118
        %v5120 = vpop.f32.mrf.mxu0
        %v5121 = vadd.f32 0.0, %v5120
        %5122 = vmatprep.mubr.f32.mxu0 0.0
        %5123 = vmatmul.mubr.f32.gmra.mxu0 %v2323
        %v5124 = vpop.f32.mrf.mxu0
        %v5125 = vadd.f32 0.0, %v5124
        %v5126 = vpop.f32.mrf.mxu0
        %v5127 = vadd.f32 0.0, %v5126
        %5128 = vmatprep.mubr.f32.mxu0 0.0
        %5129 = vmatmul.mubr.f32.gmra.mxu0 %v2326
        %v5130 = vpop.f32.mrf.mxu0
        %v5131 = vadd.f32 0.0, %v5130
        %v5132 = vpop.f32.mrf.mxu0
        %v5133 = vadd.f32 0.0, %v5132
        %5134 = vmatprep.mubr.f32.mxu0 0.0
        %5135 = vmatmul.mubr.f32.gmra.mxu0 %v2329
        %v5136 = vpop.f32.mrf.mxu0
        %v5137 = vadd.f32 0.0, %v5136
        %v5138 = vpop.f32.mrf.mxu0
        %v5139 = vadd.f32 0.0, %v5138
        %5140 = vmatprep.mubr.f32.mxu0 0.0
        %5141 = vmatmul.mubr.f32.gmra.mxu0 %v2332
        %v5142 = vpop.f32.mrf.mxu0
        %v5143 = vadd.f32 0.0, %v5142
        %v5144 = vpop.f32.mrf.mxu0
        %v5145 = vadd.f32 0.0, %v5144
        %5146 = vmatprep.mubr.f32.mxu0 0.0
        %5147 = vmatmul.mubr.f32.gmra.mxu0 %v2335
        %v5148 = vpop.f32.mrf.mxu0
        %v5149 = vadd.f32 0.0, %v5148
        %v5150 = vpop.f32.mrf.mxu0
        %v5151 = vadd.f32 0.0, %v5150
        %5152 = vmatprep.mubr.f32.mxu0 0.0
        %5153 = vmatmul.mubr.f32.gmra.mxu0 %v2338
        %v5154 = vpop.f32.mrf.mxu0
        %v5155 = vadd.f32 0.0, %v5154
        %v5156 = vpop.f32.mrf.mxu0
        %v5157 = vadd.f32 0.0, %v5156
        %5158 = vmatprep.mubr.f32.mxu0 0.0
        %5159 = vmatmul.mubr.f32.gmra.mxu0 %v2341
        %v5160 = vpop.f32.mrf.mxu0
        %v5161 = vadd.f32 0.0, %v5160
        %v5162 = vpop.f32.mrf.mxu0
        %v5163 = vadd.f32 0.0, %v5162
        %5164 = vmatprep.mubr.f32.mxu0 0.0
        %5165 = vmatmul.mubr.f32.gmra.mxu0 %v2344
        %v5166 = vpop.f32.mrf.mxu0
        %v5167 = vadd.f32 0.0, %v5166
        %v5168 = vpop.f32.mrf.mxu0
        %v5169 = vadd.f32 0.0, %v5168
        %5170 = vmatprep.mubr.f32.mxu0 0.0
        %5171 = vmatmul.mubr.f32.gmra.mxu0 %v2347
        %v5172 = vpop.f32.mrf.mxu0
        %v5173 = vadd.f32 0.0, %v5172
        %v5174 = vpop.f32.mrf.mxu0
        %v5175 = vadd.f32 0.0, %v5174
        %5176 = vmatprep.mubr.f32.mxu0 0.0
        %5177 = vmatmul.mubr.f32.gmra.mxu0 %v2350
        %v5178 = vpop.f32.mrf.mxu0
        %v5179 = vadd.f32 0.0, %v5178
        %v5180 = vpop.f32.mrf.mxu0
        %v5181 = vadd.f32 0.0, %v5180
        %5182 = vmatprep.mubr.f32.mxu0 0.0
        %5183 = vmatmul.mubr.f32.gmra.mxu0 %v2353
        %v5184 = vpop.f32.mrf.mxu0
        %v5185 = vadd.f32 0.0, %v5184
        %v5186 = vpop.f32.mrf.mxu0
        %v5187 = vadd.f32 0.0, %v5186
        %5188 = vmatprep.mubr.f32.mxu0 0.0
        %5189 = vmatmul.mubr.f32.gmra.mxu0 %v2356
        %v5190 = vpop.f32.mrf.mxu0
        %v5191 = vadd.f32 0.0, %v5190
        %v5192 = vpop.f32.mrf.mxu0
        %v5193 = vadd.f32 0.0, %v5192
        %5194 = vmatprep.mubr.f32.mxu0 0.0
        %5195 = vmatmul.mubr.f32.gmra.mxu0 %v2359
        %v5196 = vpop.f32.mrf.mxu0
        %v5197 = vadd.f32 0.0, %v5196
        %v5198 = vpop.f32.mrf.mxu0
        %v5199 = vadd.f32 0.0, %v5198
        %5200 = vmatprep.mubr.f32.mxu0 0.0
        %5201 = vmatmul.mubr.f32.gmra.mxu0 %v2362
        %v5202 = vpop.f32.mrf.mxu0
        %v5203 = vadd.f32 0.0, %v5202
        %v5204 = vpop.f32.mrf.mxu0
        %v5205 = vadd.f32 0.0, %v5204
        %5206 = vmatprep.mubr.f32.mxu0 0.0
        %5207 = vmatmul.mubr.f32.gmra.mxu0 %v2365
        %v5208 = vpop.f32.mrf.mxu0
        %v5209 = vadd.f32 0.0, %v5208
        %v5210 = vpop.f32.mrf.mxu0
        %v5211 = vadd.f32 0.0, %v5210
        %5212 = vmatprep.mubr.f32.mxu0 0.0
        %5213 = vmatmul.mubr.f32.gmra.mxu0 %v2368
        %v5214 = vpop.f32.mrf.mxu0
        %v5215 = vadd.f32 0.0, %v5214
        %v5216 = vpop.f32.mrf.mxu0
        %v5217 = vadd.f32 0.0, %v5216
        %5218 = vmatprep.mubr.f32.mxu0 0.0
        %5219 = vmatmul.mubr.f32.gmra.mxu0 %v2371
        %v5220 = vpop.f32.mrf.mxu0
        %v5221 = vadd.f32 0.0, %v5220
        %v5222 = vpop.f32.mrf.mxu0
        %v5223 = vadd.f32 0.0, %v5222
        %5224 = vmatprep.mubr.f32.mxu0 0.0
        %5225 = vmatmul.mubr.f32.gmra.mxu0 %v2374
        %v5226 = vpop.f32.mrf.mxu0
        %v5227 = vadd.f32 0.0, %v5226
        %v5228 = vpop.f32.mrf.mxu0
        %v5229 = vadd.f32 0.0, %v5228
        %5230 = vmatprep.mubr.f32.mxu0 0.0
        %5231 = vmatmul.mubr.f32.gmra.mxu0 %v2377
        %v5232 = vpop.f32.mrf.mxu0
        %v5233 = vadd.f32 0.0, %v5232
        %v5234 = vpop.f32.mrf.mxu0
        %v5235 = vadd.f32 0.0, %v5234
        %5236 = vmatprep.mubr.f32.mxu0 0.0
        %5237 = vmatmul.mubr.f32.gmra.mxu0 %v2380
        %v5238 = vpop.f32.mrf.mxu0
        %v5239 = vadd.f32 0.0, %v5238
        %v5240 = vpop.f32.mrf.mxu0
        %v5241 = vadd.f32 0.0, %v5240
        %5242 = vmatprep.mubr.f32.mxu0 0.0
        %5243 = vmatmul.mubr.f32.gmra.mxu0 %v2383
        %v5244 = vpop.f32.mrf.mxu0
        %v5245 = vadd.f32 0.0, %v5244
        %v5246 = vpop.f32.mrf.mxu0
        %v5247 = vadd.f32 0.0, %v5246
        %5248 = vmatprep.mubr.f32.mxu0 0.0
        %5249 = vmatmul.mubr.f32.gmra.mxu0 %v2386
        %v5250 = vpop.f32.mrf.mxu0
        %v5251 = vadd.f32 0.0, %v5250
        %v5252 = vpop.f32.mrf.mxu0
        %v5253 = vadd.f32 0.0, %v5252
        %5254 = vmatprep.mubr.f32.mxu0 0.0
        %5255 = vmatmul.mubr.f32.gmra.mxu0 %v2389
        %v5256 = vpop.f32.mrf.mxu0
        %v5257 = vadd.f32 0.0, %v5256
        %v5258 = vpop.f32.mrf.mxu0
        %v5259 = vadd.f32 0.0, %v5258
        %5260 = vmatprep.mubr.f32.mxu0 0.0
        %5261 = vmatmul.mubr.f32.gmra.mxu0 %v2392
        %v5262 = vpop.f32.mrf.mxu0
        %v5263 = vadd.f32 0.0, %v5262
        %v5264 = vpop.f32.mrf.mxu0
        %v5265 = vadd.f32 0.0, %v5264
        %5266 = vmatprep.mubr.f32.mxu0 0.0
        %5267 = vmatmul.mubr.f32.gmra.mxu0 %v2395
        %v5268 = vpop.f32.mrf.mxu0
        %v5269 = vadd.f32 0.0, %v5268
        %v5270 = vpop.f32.mrf.mxu0
        %v5271 = vadd.f32 0.0, %v5270
        %5272 = vmatprep.mubr.f32.mxu0 0.0
        %5273 = vmatmul.mubr.f32.gmra.mxu0 %v2398
        %v5274 = vpop.f32.mrf.mxu0
        %v5275 = vadd.f32 0.0, %v5274
        %v5276 = vpop.f32.mrf.mxu0
        %v5277 = vadd.f32 0.0, %v5276
        %5278 = vmatprep.mubr.f32.mxu0 0.0
        %5279 = vmatmul.mubr.f32.gmra.mxu0 %v2401
        %v5280 = vpop.f32.mrf.mxu0
        %v5281 = vadd.f32 0.0, %v5280
        %v5282 = vpop.f32.mrf.mxu0
        %v5283 = vadd.f32 0.0, %v5282
        %5284 = vmatprep.mubr.f32.mxu0 0.0
        %5285 = vmatmul.mubr.f32.gmra.mxu0 %v2404
        %v5286 = vpop.f32.mrf.mxu0
        %v5287 = vadd.f32 0.0, %v5286
        %v5288 = vpop.f32.mrf.mxu0
        %v5289 = vadd.f32 0.0, %v5288
        %5290 = vmatprep.mubr.f32.mxu0 0.0
        %5291 = vmatmul.mubr.f32.gmra.mxu0 %v2407
        %v5292 = vpop.f32.mrf.mxu0
        %v5293 = vadd.f32 0.0, %v5292
        %v5294 = vpop.f32.mrf.mxu0
        %v5295 = vadd.f32 0.0, %v5294
        %5296 = vmatprep.mubr.f32.mxu0 0.0
        %5297 = vmatmul.mubr.f32.gmra.mxu0 %v2410
        %v5298 = vpop.f32.mrf.mxu0
        %v5299 = vadd.f32 0.0, %v5298
        %v5300 = vpop.f32.mrf.mxu0
        %v5301 = vadd.f32 0.0, %v5300
        %5302 = vmatprep.mubr.f32.mxu0 0.0
        %5303 = vmatmul.mubr.f32.gmra.mxu0 %v2413
        %v5304 = vpop.f32.mrf.mxu0
        %v5305 = vadd.f32 0.0, %v5304
        %v5306 = vpop.f32.mrf.mxu0
        %v5307 = vadd.f32 0.0, %v5306
        %5308 = vmatprep.mubr.f32.mxu0 0.0
        %5309 = vmatmul.mubr.f32.gmra.mxu0 %v2416
        %v5310 = vpop.f32.mrf.mxu0
        %v5311 = vadd.f32 0.0, %v5310
        %v5312 = vpop.f32.mrf.mxu0
        %v5313 = vadd.f32 0.0, %v5312
        %5314 = vmatprep.mubr.f32.mxu0 0.0
        %5315 = vmatmul.mubr.f32.gmra.mxu0 %v2419
        %v5316 = vpop.f32.mrf.mxu0
        %v5317 = vadd.f32 0.0, %v5316
        %v5318 = vpop.f32.mrf.mxu0
        %v5319 = vadd.f32 0.0, %v5318
        %5320 = vmatprep.mubr.f32.mxu0 0.0
        %5321 = vmatmul.mubr.f32.gmra.mxu0 %v2422
        %v5322 = vpop.f32.mrf.mxu0
        %v5323 = vadd.f32 0.0, %v5322
        %v5324 = vpop.f32.mrf.mxu0
        %v5325 = vadd.f32 0.0, %v5324
        %5326 = vmatprep.mubr.f32.mxu0 0.0
        %5327 = vmatmul.mubr.f32.gmra.mxu0 %v2425
        %v5328 = vpop.f32.mrf.mxu0
        %v5329 = vadd.f32 0.0, %v5328
        %v5330 = vpop.f32.mrf.mxu0
        %v5331 = vadd.f32 0.0, %v5330
        %5332 = vmatprep.mubr.f32.mxu0 0.0
        %5333 = vmatmul.mubr.f32.gmra.mxu0 %v2428
        %v5334 = vpop.f32.mrf.mxu0
        %v5335 = vadd.f32 0.0, %v5334
        %v5336 = vpop.f32.mrf.mxu0
        %v5337 = vadd.f32 0.0, %v5336
        %5338 = vmatprep.mubr.f32.mxu0 0.0
        %5339 = vmatmul.mubr.f32.gmra.mxu0 %v2431
        %v5340 = vpop.f32.mrf.mxu0
        %v5341 = vadd.f32 0.0, %v5340
        %v5342 = vpop.f32.mrf.mxu0
        %v5343 = vadd.f32 0.0, %v5342
        %5344 = vmatprep.mubr.f32.mxu0 0.0
        %5345 = vmatmul.mubr.f32.gmra.mxu0 %v2434
        %v5346 = vpop.f32.mrf.mxu0
        %v5347 = vadd.f32 0.0, %v5346
        %v5348 = vpop.f32.mrf.mxu0
        %v5349 = vadd.f32 0.0, %v5348
        %5350 = vmatprep.mubr.f32.mxu0 0.0
        %5351 = vmatmul.mubr.f32.gmra.mxu0 %v2437
        %v5352 = vpop.f32.mrf.mxu0
        %v5353 = vadd.f32 0.0, %v5352
        %v5354 = vpop.f32.mrf.mxu0
        %v5355 = vadd.f32 0.0, %v5354
        %5356 = vmatprep.mubr.f32.mxu0 0.0
        %5357 = vmatmul.mubr.f32.gmra.mxu0 %v2440
        %v5358 = vpop.f32.mrf.mxu0
        %v5359 = vadd.f32 0.0, %v5358
        %v5360 = vpop.f32.mrf.mxu0
        %v5361 = vadd.f32 0.0, %v5360
        %5362 = vmatprep.mubr.f32.mxu0 0.0
        %5363 = vmatmul.mubr.f32.gmra.mxu0 %v2443
        %v5364 = vpop.f32.mrf.mxu0
        %v5365 = vadd.f32 0.0, %v5364
        %v5366 = vpop.f32.mrf.mxu0
        %v5367 = vadd.f32 0.0, %v5366
        %5368 = vmatprep.mubr.f32.mxu0 0.0
        %5369 = vmatmul.mubr.f32.gmra.mxu0 %v2446
        %v5370 = vpop.f32.mrf.mxu0
        %v5371 = vadd.f32 0.0, %v5370
        %v5372 = vpop.f32.mrf.mxu0
        %v5373 = vadd.f32 0.0, %v5372
        %5374 = vmatprep.mubr.f32.mxu0 0.0
        %5375 = vmatmul.mubr.f32.gmra.mxu0 %v2449
        %v5376 = vpop.f32.mrf.mxu0
        %v5377 = vadd.f32 0.0, %v5376
        %v5378 = vpop.f32.mrf.mxu0
        %v5379 = vadd.f32 0.0, %v5378
        %5380 = vmatprep.mubr.f32.mxu0 0.0
        %5381 = vmatmul.mubr.f32.gmra.mxu0 %v2452
        %v5382 = vpop.f32.mrf.mxu0
        %v5383 = vadd.f32 0.0, %v5382
        %v5384 = vpop.f32.mrf.mxu0
        %v5385 = vadd.f32 0.0, %v5384
        %5386 = vmatprep.mubr.f32.mxu0 0.0
        %5387 = vmatmul.mubr.f32.gmra.mxu0 %v2455
        %v5388 = vpop.f32.mrf.mxu0
        %v5389 = vadd.f32 0.0, %v5388
        %v5390 = vpop.f32.mrf.mxu0
        %v5391 = vadd.f32 0.0, %v5390
        %5392 = vmatprep.mubr.f32.mxu0 0.0
        %5393 = vmatmul.mubr.f32.gmra.mxu0 %v2458
        %v5394 = vpop.f32.mrf.mxu0
        %v5395 = vadd.f32 0.0, %v5394
        %v5396 = vpop.f32.mrf.mxu0
        %v5397 = vadd.f32 0.0, %v5396
        %5398 = vmatprep.mubr.f32.mxu0 0.0
        %5399 = vmatmul.mubr.f32.gmra.mxu0 %v2461
        %v5400 = vpop.f32.mrf.mxu0
        %v5401 = vadd.f32 0.0, %v5400
        %v5402 = vpop.f32.mrf.mxu0
        %v5403 = vadd.f32 0.0, %v5402
        %5404 = vmatprep.mubr.f32.mxu0 0.0
        %5405 = vmatmul.mubr.f32.gmra.mxu0 %v2464
        %v5406 = vpop.f32.mrf.mxu0
        %v5407 = vadd.f32 0.0, %v5406
        %v5408 = vpop.f32.mrf.mxu0
        %v5409 = vadd.f32 0.0, %v5408
        %5410 = vmatprep.mubr.f32.mxu0 0.0
        %5411 = vmatmul.mubr.f32.gmra.mxu0 %v2467
        %v5412 = vpop.f32.mrf.mxu0
        %v5413 = vadd.f32 0.0, %v5412
        %v5414 = vpop.f32.mrf.mxu0
        %v5415 = vadd.f32 0.0, %v5414
        %5416 = vmatprep.mubr.f32.mxu0 0.0
        %5417 = vmatmul.mubr.f32.gmra.mxu0 %v2470
        %v5418 = vpop.f32.mrf.mxu0
        %v5419 = vadd.f32 0.0, %v5418
        %v5420 = vpop.f32.mrf.mxu0
        %v5421 = vadd.f32 0.0, %v5420
        %5422 = vmatprep.mubr.f32.mxu0 0.0
        %5423 = vmatmul.mubr.f32.gmra.mxu0 %v2473
        %v5424 = vpop.f32.mrf.mxu0
        %v5425 = vadd.f32 0.0, %v5424
        %v5426 = vpop.f32.mrf.mxu0
        %v5427 = vadd.f32 0.0, %v5426
        %5428 = vmatprep.mubr.f32.mxu0 0.0
        %5429 = vmatmul.mubr.f32.gmra.mxu0 %v2476
        %v5430 = vpop.f32.mrf.mxu0
        %v5431 = vadd.f32 0.0, %v5430
        %v5432 = vpop.f32.mrf.mxu0
        %v5433 = vadd.f32 0.0, %v5432
        %5434 = vmatprep.mubr.f32.mxu0 0.0
        %5435 = vmatmul.mubr.f32.gmra.mxu0 %v2479
        %v5436 = vpop.f32.mrf.mxu0
        %v5437 = vadd.f32 0.0, %v5436
        %v5438 = vpop.f32.mrf.mxu0
        %v5439 = vadd.f32 0.0, %v5438
        %5440 = vmatprep.mubr.f32.mxu0 0.0
        %5441 = vmatmul.mubr.f32.gmra.mxu0 %v2482
        %v5442 = vpop.f32.mrf.mxu0
        %v5443 = vadd.f32 0.0, %v5442
        %v5444 = vpop.f32.mrf.mxu0
        %v5445 = vadd.f32 0.0, %v5444
        %5446 = vmatprep.mubr.f32.mxu0 0.0
        %5447 = vmatmul.mubr.f32.gmra.mxu0 %v2485
        %v5448 = vpop.f32.mrf.mxu0
        %v5449 = vadd.f32 0.0, %v5448
        %v5450 = vpop.f32.mrf.mxu0
        %v5451 = vadd.f32 0.0, %v5450
        %5452 = vmatprep.mubr.f32.mxu0 0.0
        %5453 = vmatmul.mubr.f32.gmra.mxu0 %v2488
        %v5454 = vpop.f32.mrf.mxu0
        %v5455 = vadd.f32 0.0, %v5454
        %v5456 = vpop.f32.mrf.mxu0
        %v5457 = vadd.f32 0.0, %v5456
        %5458 = vmatprep.mubr.f32.mxu0 0.0
        %5459 = vmatmul.mubr.f32.gmra.mxu0 %v2491
        %v5460 = vpop.f32.mrf.mxu0
        %v5461 = vadd.f32 0.0, %v5460
        %v5462 = vpop.f32.mrf.mxu0
        %v5463 = vadd.f32 0.0, %v5462
        %5464 = vmatprep.mubr.f32.mxu0 0.0
        %5465 = vmatmul.mubr.f32.gmra.mxu0 %v2494
        %v5466 = vpop.f32.mrf.mxu0
        %v5467 = vadd.f32 0.0, %v5466
        %v5468 = vpop.f32.mrf.mxu0
        %v5469 = vadd.f32 0.0, %v5468
        %5470 = vmatprep.mubr.f32.mxu0 0.0
        %5471 = vmatmul.mubr.f32.gmra.mxu0 %v2497
        %v5472 = vpop.f32.mrf.mxu0
        %v5473 = vadd.f32 0.0, %v5472
        %v5474 = vpop.f32.mrf.mxu0
        %v5475 = vadd.f32 0.0, %v5474
        %5476 = vmatprep.mubr.f32.mxu0 0.0
        %5477 = vmatmul.mubr.f32.gmra.mxu0 %v2500
        %v5478 = vpop.f32.mrf.mxu0
        %v5479 = vadd.f32 0.0, %v5478
        %v5480 = vpop.f32.mrf.mxu0
        %v5481 = vadd.f32 0.0, %v5480
        %5482 = vmatprep.mubr.f32.mxu0 0.0
        %5483 = vmatmul.mubr.f32.gmra.mxu0 %v2503
        %v5484 = vpop.f32.mrf.mxu0
        %v5485 = vadd.f32 0.0, %v5484
        %v5486 = vpop.f32.mrf.mxu0
        %v5487 = vadd.f32 0.0, %v5486
        %5488 = vmatprep.mubr.f32.mxu0 0.0
        %5489 = vmatmul.mubr.f32.gmra.mxu0 %v2506
        %v5490 = vpop.f32.mrf.mxu0
        %v5491 = vadd.f32 0.0, %v5490
        %v5492 = vpop.f32.mrf.mxu0
        %v5493 = vadd.f32 0.0, %v5492
        %5494 = vmatprep.mubr.f32.mxu0 0.0
        %5495 = vmatmul.mubr.f32.gmra.mxu0 %v2509
        %v5496 = vpop.f32.mrf.mxu0
        %v5497 = vadd.f32 0.0, %v5496
        %v5498 = vpop.f32.mrf.mxu0
        %v5499 = vadd.f32 0.0, %v5498
        %5500 = vmatprep.mubr.f32.mxu0 0.0
        %5501 = vmatmul.mubr.f32.gmra.mxu0 %v2512
        %v5502 = vpop.f32.mrf.mxu0
        %v5503 = vadd.f32 0.0, %v5502
        %v5504 = vpop.f32.mrf.mxu0
        %v5505 = vadd.f32 0.0, %v5504
        %5506 = vmatprep.mubr.f32.mxu0 0.0
        %5507 = vmatmul.mubr.f32.gmra.mxu0 %v2515
        %v5508 = vpop.f32.mrf.mxu0
        %v5509 = vadd.f32 0.0, %v5508
        %v5510 = vpop.f32.mrf.mxu0
        %v5511 = vadd.f32 0.0, %v5510
        %5512 = vmatprep.mubr.f32.mxu0 0.0
        %5513 = vmatmul.mubr.f32.gmra.mxu0 %v2518
        %v5514 = vpop.f32.mrf.mxu0
        %v5515 = vadd.f32 0.0, %v5514
        %v5516 = vpop.f32.mrf.mxu0
        %v5517 = vadd.f32 0.0, %v5516
        %5518 = vmatprep.mubr.f32.mxu0 0.0
        %5519 = vmatmul.mubr.f32.gmra.mxu0 %v2521
        %v5520 = vpop.f32.mrf.mxu0
        %v5521 = vadd.f32 0.0, %v5520
        %v5522 = vpop.f32.mrf.mxu0
        %v5523 = vadd.f32 0.0, %v5522
        %5524 = vmatprep.mubr.f32.mxu0 0.0
        %5525 = vmatmul.mubr.f32.gmra.mxu0 %v2524
        %v5526 = vpop.f32.mrf.mxu0
        %v5527 = vadd.f32 0.0, %v5526
        %v5528 = vpop.f32.mrf.mxu0
        %v5529 = vadd.f32 0.0, %v5528
        %5530 = vmatprep.mubr.f32.mxu0 0.0
        %5531 = vmatmul.mubr.f32.gmra.mxu0 %v2527
        %v5532 = vpop.f32.mrf.mxu0
        %v5533 = vadd.f32 0.0, %v5532
        %v5534 = vpop.f32.mrf.mxu0
        %v5535 = vadd.f32 0.0, %v5534
        %5536 = vmatprep.mubr.f32.mxu0 0.0
        %5537 = vmatmul.mubr.f32.gmra.mxu0 %v2530
        %v5538 = vpop.f32.mrf.mxu0
        %v5539 = vadd.f32 0.0, %v5538
        %v5540 = vpop.f32.mrf.mxu0
        %v5541 = vadd.f32 0.0, %v5540
        %5542 = vmatprep.mubr.f32.mxu0 0.0
        %5543 = vmatmul.mubr.f32.gmra.mxu0 %v2533
        %v5544 = vpop.f32.mrf.mxu0
        %v5545 = vadd.f32 0.0, %v5544
        %v5546 = vpop.f32.mrf.mxu0
        %v5547 = vadd.f32 0.0, %v5546
        %5548 = vmatprep.mubr.f32.mxu0 0.0
        %5549 = vmatmul.mubr.f32.gmra.mxu0 %v2536
        %v5550 = vpop.f32.mrf.mxu0
        %v5551 = vadd.f32 0.0, %v5550
        %v5552 = vpop.f32.mrf.mxu0
        %v5553 = vadd.f32 0.0, %v5552
        %5554 = vmatprep.mubr.f32.mxu0 0.0
        %5555 = vmatmul.mubr.f32.gmra.mxu0 %v2539
        %v5556 = vpop.f32.mrf.mxu0
        %v5557 = vadd.f32 0.0, %v5556
        %v5558 = vpop.f32.mrf.mxu0
        %v5559 = vadd.f32 0.0, %v5558
        %5560 = vmatprep.mubr.f32.mxu0 0.0
        %5561 = vmatmul.mubr.f32.gmra.mxu0 %v2542
        %v5562 = vpop.f32.mrf.mxu0
        %v5563 = vadd.f32 0.0, %v5562
        %v5564 = vpop.f32.mrf.mxu0
        %v5565 = vadd.f32 0.0, %v5564
        %5566 = vmatprep.mubr.f32.mxu0 0.0
        %5567 = vmatmul.mubr.f32.gmra.mxu0 %v2545
        %v5568 = vpop.f32.mrf.mxu0
        %v5569 = vadd.f32 0.0, %v5568
        %v5570 = vpop.f32.mrf.mxu0
        %v5571 = vadd.f32 0.0, %v5570
        %5572 = vmatprep.mubr.f32.mxu0 0.0
        %5573 = vmatmul.mubr.f32.gmra.mxu0 %v2548
        %v5574 = vpop.f32.mrf.mxu0
        %v5575 = vadd.f32 0.0, %v5574
        %v5576 = vpop.f32.mrf.mxu0
        %v5577 = vadd.f32 0.0, %v5576
        %5578 = vmatprep.mubr.f32.mxu0 0.0
        %5579 = vmatmul.mubr.f32.gmra.mxu0 %v2551
        %v5580 = vpop.f32.mrf.mxu0
        %v5581 = vadd.f32 0.0, %v5580
        %v5582 = vpop.f32.mrf.mxu0
        %v5583 = vadd.f32 0.0, %v5582
        %5584 = vmatprep.mubr.f32.mxu0 0.0
        %5585 = vmatmul.mubr.f32.gmra.mxu0 %v2554
        %v5586 = vpop.f32.mrf.mxu0
        %v5587 = vadd.f32 0.0, %v5586
        %v5588 = vpop.f32.mrf.mxu0
        %v5589 = vadd.f32 0.0, %v5588
        %5590 = vmatprep.mubr.f32.mxu0 0.0
        %5591 = vmatmul.mubr.f32.gmra.mxu0 %v2557
        %v5592 = vpop.f32.mrf.mxu0
        %v5593 = vadd.f32 0.0, %v5592
        %v5594 = vpop.f32.mrf.mxu0
        %v5595 = vadd.f32 0.0, %v5594
        %5596 = vmatprep.mubr.f32.mxu0 0.0
        %5597 = vmatmul.mubr.f32.gmra.mxu0 %v2560
        %v5598 = vpop.f32.mrf.mxu0
        %v5599 = vadd.f32 0.0, %v5598
        %v5600 = vpop.f32.mrf.mxu0
        %v5601 = vadd.f32 0.0, %v5600
        %5602 = vmatprep.mubr.f32.mxu0 0.0
        %5603 = vmatmul.mubr.f32.gmra.mxu0 %v2563
        %v5604 = vpop.f32.mrf.mxu0
        %v5605 = vadd.f32 0.0, %v5604
        %v5606 = vpop.f32.mrf.mxu0
        %v5607 = vadd.f32 0.0, %v5606
        %5608 = vmatprep.mubr.f32.mxu0 0.0
        %5609 = vmatmul.mubr.f32.gmra.mxu0 %v2566
        %v5610 = vpop.f32.mrf.mxu0
        %v5611 = vadd.f32 0.0, %v5610
        %v5612 = vpop.f32.mrf.mxu0
        %v5613 = vadd.f32 0.0, %v5612
        %5614 = vmatprep.mubr.f32.mxu0 0.0
        %5615 = vmatmul.mubr.f32.gmra.mxu0 %v2569
        %v5616 = vpop.f32.mrf.mxu0
        %v5617 = vadd.f32 0.0, %v5616
        %v5618 = vpop.f32.mrf.mxu0
        %v5619 = vadd.f32 0.0, %v5618
        %5620 = vmatprep.mubr.f32.mxu0 0.0
        %5621 = vmatmul.mubr.f32.gmra.mxu0 %v2572
        %v5622 = vpop.f32.mrf.mxu0
        %v5623 = vadd.f32 0.0, %v5622
        %v5624 = vpop.f32.mrf.mxu0
        %v5625 = vadd.f32 0.0, %v5624
        %5626 = vmatprep.mubr.f32.mxu0 0.0
        %5627 = vmatmul.mubr.f32.gmra.mxu0 %v2575
        %v5628 = vpop.f32.mrf.mxu0
        %v5629 = vadd.f32 0.0, %v5628
        %v5630 = vpop.f32.mrf.mxu0
        %v5631 = vadd.f32 0.0, %v5630
        %5632 = vmatprep.mubr.f32.mxu0 0.0
        %5633 = vmatmul.mubr.f32.gmra.mxu0 %v2578
        %v5634 = vpop.f32.mrf.mxu0
        %v5635 = vadd.f32 0.0, %v5634
        %v5636 = vpop.f32.mrf.mxu0
        %v5637 = vadd.f32 0.0, %v5636
        %5638 = vmatprep.mubr.f32.mxu0 0.0
        %5639 = vmatmul.mubr.f32.gmra.mxu0 %v2581
        %v5640 = vpop.f32.mrf.mxu0
        %v5641 = vadd.f32 0.0, %v5640
        %v5642 = vpop.f32.mrf.mxu0
        %v5643 = vadd.f32 0.0, %v5642
        %5644 = vmatprep.mubr.f32.mxu0 0.0
        %5645 = vmatmul.mubr.f32.gmra.mxu0 %v2584
        %v5646 = vpop.f32.mrf.mxu0
        %v5647 = vadd.f32 0.0, %v5646
        %v5648 = vpop.f32.mrf.mxu0
        %v5649 = vadd.f32 0.0, %v5648
        %5650 = vmatprep.mubr.f32.mxu0 0.0
        %5651 = vmatmul.mubr.f32.gmra.mxu0 %v2587
        %v5652 = vpop.f32.mrf.mxu0
        %v5653 = vadd.f32 0.0, %v5652
        %v5654 = vpop.f32.mrf.mxu0
        %v5655 = vadd.f32 0.0, %v5654
        %5656 = vmatprep.mubr.f32.mxu0 0.0
        %5657 = vmatmul.mubr.f32.gmra.mxu0 %v2590
        %v5658 = vpop.f32.mrf.mxu0
        %v5659 = vadd.f32 0.0, %v5658
        %v5660 = vpop.f32.mrf.mxu0
        %v5661 = vadd.f32 0.0, %v5660
        %5662 = vmatprep.mubr.f32.mxu0 0.0
        %5663 = vmatmul.mubr.f32.gmra.mxu0 %v2593
        %v5664 = vpop.f32.mrf.mxu0
        %v5665 = vadd.f32 0.0, %v5664
        %v5666 = vpop.f32.mrf.mxu0
        %v5667 = vadd.f32 0.0, %v5666
        %5668 = vmatprep.mubr.f32.mxu0 0.0
        %5669 = vmatmul.mubr.f32.gmra.mxu0 %v2596
        %v5670 = vpop.f32.mrf.mxu0
        %v5671 = vadd.f32 0.0, %v5670
        %v5672 = vpop.f32.mrf.mxu0
        %v5673 = vadd.f32 0.0, %v5672
        %5674 = vmatprep.mubr.f32.mxu0 0.0
        %5675 = vmatmul.mubr.f32.gmra.mxu0 %v2599
        %v5676 = vpop.f32.mrf.mxu0
        %v5677 = vadd.f32 0.0, %v5676
        %v5678 = vpop.f32.mrf.mxu0
        %v5679 = vadd.f32 0.0, %v5678
        %5680 = vmatprep.mubr.f32.mxu0 0.0
        %5681 = vmatmul.mubr.f32.gmra.mxu0 %v2602
        %v5682 = vpop.f32.mrf.mxu0
        %v5683 = vadd.f32 0.0, %v5682
        %v5684 = vpop.f32.mrf.mxu0
        %v5685 = vadd.f32 0.0, %v5684
        %5686 = vmatprep.mubr.f32.mxu0 0.0
        %5687 = vmatmul.mubr.f32.gmra.mxu0 %v2605
        %v5688 = vpop.f32.mrf.mxu0
        %v5689 = vadd.f32 0.0, %v5688
        %v5690 = vpop.f32.mrf.mxu0
        %v5691 = vadd.f32 0.0, %v5690
        %5692 = vmatprep.mubr.f32.mxu0 0.0
        %5693 = vmatmul.mubr.f32.gmra.mxu0 %v2608
        %v5694 = vpop.f32.mrf.mxu0
        %v5695 = vadd.f32 0.0, %v5694
        %v5696 = vpop.f32.mrf.mxu0
        %v5697 = vadd.f32 0.0, %v5696
        %5698 = vmatprep.mubr.f32.mxu0 0.0
        %5699 = vmatmul.mubr.f32.gmra.mxu0 %v2611
        %v5700 = vpop.f32.mrf.mxu0
        %v5701 = vadd.f32 0.0, %v5700
        %v5702 = vpop.f32.mrf.mxu0
        %v5703 = vadd.f32 0.0, %v5702
        %5704 = vmatprep.mubr.f32.mxu0 0.0
        %5705 = vmatmul.mubr.f32.gmra.mxu0 %v2614
        %v5706 = vpop.f32.mrf.mxu0
        %v5707 = vadd.f32 0.0, %v5706
        %v5708 = vpop.f32.mrf.mxu0
        %v5709 = vadd.f32 0.0, %v5708
        %5710 = vmatprep.mubr.f32.mxu0 0.0
        %5711 = vmatmul.mubr.f32.gmra.mxu0 %v2617
        %v5712 = vpop.f32.mrf.mxu0
        %v5713 = vadd.f32 0.0, %v5712
        %v5714 = vpop.f32.mrf.mxu0
        %v5715 = vadd.f32 0.0, %v5714
        %5716 = vmatprep.mubr.f32.mxu0 0.0
        %5717 = vmatmul.mubr.f32.gmra.mxu0 %v2620
        %v5718 = vpop.f32.mrf.mxu0
        %v5719 = vadd.f32 0.0, %v5718
        %v5720 = vpop.f32.mrf.mxu0
        %v5721 = vadd.f32 0.0, %v5720
        %5722 = vmatprep.mubr.f32.mxu0 0.0
        %5723 = vmatmul.mubr.f32.gmra.mxu0 %v2623
        %v5724 = vpop.f32.mrf.mxu0
        %v5725 = vadd.f32 0.0, %v5724
        %v5726 = vpop.f32.mrf.mxu0
        %v5727 = vadd.f32 0.0, %v5726
        %5728 = vmatprep.mubr.f32.mxu0 0.0
        %5729 = vmatmul.mubr.f32.gmra.mxu0 %v2626
        %v5730 = vpop.f32.mrf.mxu0
        %v5731 = vadd.f32 0.0, %v5730
        %v5732 = vpop.f32.mrf.mxu0
        %v5733 = vadd.f32 0.0, %v5732
        %5734 = vmatprep.mubr.f32.mxu0 0.0
        %5735 = vmatmul.mubr.f32.gmra.mxu0 %v2629
        %v5736 = vpop.f32.mrf.mxu0
        %v5737 = vadd.f32 0.0, %v5736
        %v5738 = vpop.f32.mrf.mxu0
        %v5739 = vadd.f32 0.0, %v5738
        %5740 = vmatprep.mubr.f32.mxu0 0.0
        %5741 = vmatmul.mubr.f32.gmra.mxu0 %v2632
        %v5742 = vpop.f32.mrf.mxu0
        %v5743 = vadd.f32 0.0, %v5742
        %v5744 = vpop.f32.mrf.mxu0
        %v5745 = vadd.f32 0.0, %v5744
        %5746 = vmatprep.mubr.f32.mxu0 0.0
        %5747 = vmatmul.mubr.f32.gmra.mxu0 %v2635
        %v5748 = vpop.f32.mrf.mxu0
        %v5749 = vadd.f32 0.0, %v5748
        %v5750 = vpop.f32.mrf.mxu0
        %v5751 = vadd.f32 0.0, %v5750
        %5752 = vmatprep.mubr.f32.mxu0 0.0
        %5753 = vmatmul.mubr.f32.gmra.mxu0 %v2638
        %v5754 = vpop.f32.mrf.mxu0
        %v5755 = vadd.f32 0.0, %v5754
        %v5756 = vpop.f32.mrf.mxu0
        %v5757 = vadd.f32 0.0, %v5756
        %5758 = vmatprep.mubr.f32.mxu0 0.0
        %5759 = vmatmul.mubr.f32.gmra.mxu0 %v2641
        %v5760 = vpop.f32.mrf.mxu0
        %v5761 = vadd.f32 0.0, %v5760
        %v5762 = vpop.f32.mrf.mxu0
        %v5763 = vadd.f32 0.0, %v5762
        %5764 = vmatprep.mubr.f32.mxu0 0.0
        %5765 = vmatmul.mubr.f32.gmra.mxu0 %v2644
        %v5766 = vpop.f32.mrf.mxu0
        %v5767 = vadd.f32 0.0, %v5766
        %v5768 = vpop.f32.mrf.mxu0
        %v5769 = vadd.f32 0.0, %v5768
        %5770 = vmatprep.mubr.f32.mxu0 0.0
        %5771 = vmatmul.mubr.f32.gmra.mxu0 %v2647
        %v5772 = vpop.f32.mrf.mxu0
        %v5773 = vadd.f32 0.0, %v5772
        %v5774 = vpop.f32.mrf.mxu0
        %v5775 = vadd.f32 0.0, %v5774
        %5776 = vmatprep.mubr.f32.mxu0 0.0
        %5777 = vmatmul.mubr.f32.gmra.mxu0 %v2650
        %v5778 = vpop.f32.mrf.mxu0
        %v5779 = vadd.f32 0.0, %v5778
        %v5780 = vpop.f32.mrf.mxu0
        %v5781 = vadd.f32 0.0, %v5780
        %5782 = vmatprep.mubr.f32.mxu0 0.0
        %5783 = vmatmul.mubr.f32.gmra.mxu0 %v2653
        %v5784 = vpop.f32.mrf.mxu0
        %v5785 = vadd.f32 0.0, %v5784
        %v5786 = vpop.f32.mrf.mxu0
        %v5787 = vadd.f32 0.0, %v5786
        %5788 = vmatprep.mubr.f32.mxu0 0.0
        %5789 = vmatmul.mubr.f32.gmra.mxu0 %v2656
        %v5790 = vpop.f32.mrf.mxu0
        %v5791 = vadd.f32 0.0, %v5790
        %v5792 = vpop.f32.mrf.mxu0
        %v5793 = vadd.f32 0.0, %v5792
        %5794 = vmatprep.mubr.f32.mxu0 0.0
        %5795 = vmatmul.mubr.f32.gmra.mxu0 %v2659
        %v5796 = vpop.f32.mrf.mxu0
        %v5797 = vadd.f32 0.0, %v5796
        %v5798 = vpop.f32.mrf.mxu0
        %v5799 = vadd.f32 0.0, %v5798
        %5800 = vmatprep.mubr.f32.mxu0 0.0
        %5801 = vmatmul.mubr.f32.gmra.mxu0 %v2662
        %v5802 = vpop.f32.mrf.mxu0
        %v5803 = vadd.f32 0.0, %v5802
        %v5804 = vpop.f32.mrf.mxu0
        %v5805 = vadd.f32 0.0, %v5804
        %5806 = vmatprep.mubr.f32.mxu0 0.0
        %5807 = vmatmul.mubr.f32.gmra.mxu0 %v2665
        %v5808 = vpop.f32.mrf.mxu0
        %v5809 = vadd.f32 0.0, %v5808
        %v5810 = vpop.f32.mrf.mxu0
        %v5811 = vadd.f32 0.0, %v5810
        %5812 = vmatprep.mubr.f32.mxu0 0.0
        %5813 = vmatmul.mubr.f32.gmra.mxu0 %v2668
        %v5814 = vpop.f32.mrf.mxu0
        %v5815 = vadd.f32 0.0, %v5814
        %v5816 = vpop.f32.mrf.mxu0
        %v5817 = vadd.f32 0.0, %v5816
        %5818 = vmatprep.mubr.f32.mxu0 0.0
        %5819 = vmatmul.mubr.f32.gmra.mxu0 %v2671
        %v5820 = vpop.f32.mrf.mxu0
        %v5821 = vadd.f32 0.0, %v5820
        %v5822 = vpop.f32.mrf.mxu0
        %v5823 = vadd.f32 0.0, %v5822
        %5824 = vmatprep.mubr.f32.mxu0 0.0
        %5825 = vmatmul.mubr.f32.gmra.mxu0 %v2674
        %v5826 = vpop.f32.mrf.mxu0
        %v5827 = vadd.f32 0.0, %v5826
        %v5828 = vpop.f32.mrf.mxu0
        %v5829 = vadd.f32 0.0, %v5828
        %5830 = vmatprep.mubr.f32.mxu0 0.0
        %5831 = vmatmul.mubr.f32.gmra.mxu0 %v2677
        %v5832 = vpop.f32.mrf.mxu0
        %v5833 = vadd.f32 0.0, %v5832
        %v5834 = vpop.f32.mrf.mxu0
        %v5835 = vadd.f32 0.0, %v5834
        %5836 = vmatprep.mubr.f32.mxu0 0.0
        %5837 = vmatmul.mubr.f32.gmra.mxu0 %v2680
        %v5838 = vpop.f32.mrf.mxu0
        %v5839 = vadd.f32 0.0, %v5838
        %v5840 = vpop.f32.mrf.mxu0
        %v5841 = vadd.f32 0.0, %v5840
        %5842 = vmatprep.mubr.f32.mxu0 0.0
        %5843 = vmatmul.mubr.f32.gmra.mxu0 %v2683
        %v5844 = vpop.f32.mrf.mxu0
        %v5845 = vadd.f32 0.0, %v5844
        %v5846 = vpop.f32.mrf.mxu0
        %v5847 = vadd.f32 0.0, %v5846
        %5848 = vmatprep.mubr.f32.mxu0 0.0
        %5849 = vmatmul.mubr.f32.gmra.mxu0 %v2686
        %v5850 = vpop.f32.mrf.mxu0
        %v5851 = vadd.f32 0.0, %v5850
        %v5852 = vpop.f32.mrf.mxu0
        %v5853 = vadd.f32 0.0, %v5852
        %5854 = vmatprep.mubr.f32.mxu0 0.0
        %5855 = vmatmul.mubr.f32.gmra.mxu0 %v2689
        %v5856 = vpop.f32.mrf.mxu0
        %v5857 = vadd.f32 0.0, %v5856
        %v5858 = vpop.f32.mrf.mxu0
        %v5859 = vadd.f32 0.0, %v5858
        %5860 = vmatprep.mubr.f32.mxu0 0.0
        %5861 = vmatmul.mubr.f32.gmra.mxu0 %v2692
        %v5862 = vpop.f32.mrf.mxu0
        %v5863 = vadd.f32 0.0, %v5862
        %v5864 = vpop.f32.mrf.mxu0
        %v5865 = vadd.f32 0.0, %v5864
        %5866 = vmatprep.mubr.f32.mxu0 0.0
        %5867 = vmatmul.mubr.f32.gmra.mxu0 %v2695
        %v5868 = vpop.f32.mrf.mxu0
        %v5869 = vadd.f32 0.0, %v5868
        %v5870 = vpop.f32.mrf.mxu0
        %v5871 = vadd.f32 0.0, %v5870
        %5872 = vmatprep.mubr.f32.mxu0 0.0
        %5873 = vmatmul.mubr.f32.gmra.mxu0 %v2698
        %v5874 = vpop.f32.mrf.mxu0
        %v5875 = vadd.f32 0.0, %v5874
        %v5876 = vpop.f32.mrf.mxu0
        %v5877 = vadd.f32 0.0, %v5876
        %5878 = vmatprep.mubr.f32.mxu0 0.0
        %5879 = vmatmul.mubr.f32.gmra.mxu0 %v2701
        %v5880 = vpop.f32.mrf.mxu0
        %v5881 = vadd.f32 0.0, %v5880
        %v5882 = vpop.f32.mrf.mxu0
        %v5883 = vadd.f32 0.0, %v5882
        %5884 = vmatprep.mubr.f32.mxu0 0.0
        %5885 = vmatmul.mubr.f32.gmra.mxu0 %v2704
        %v5886 = vpop.f32.mrf.mxu0
        %v5887 = vadd.f32 0.0, %v5886
        %v5888 = vpop.f32.mrf.mxu0
        %v5889 = vadd.f32 0.0, %v5888
        %5890 = vmatprep.mubr.f32.mxu0 0.0
        %5891 = vmatmul.mubr.f32.gmra.mxu0 %v2707
        %v5892 = vpop.f32.mrf.mxu0
        %v5893 = vadd.f32 0.0, %v5892
        %v5894 = vpop.f32.mrf.mxu0
        %v5895 = vadd.f32 0.0, %v5894
        %5896 = vmatprep.mubr.f32.mxu0 0.0
        %5897 = vmatmul.mubr.f32.gmra.mxu0 %v2710
        %v5898 = vpop.f32.mrf.mxu0
        %v5899 = vadd.f32 0.0, %v5898
        %v5900 = vpop.f32.mrf.mxu0
        %v5901 = vadd.f32 0.0, %v5900
        %5902 = vmatprep.mubr.f32.mxu0 0.0
        %5903 = vmatmul.mubr.f32.gmra.mxu0 %v2713
        %v5904 = vpop.f32.mrf.mxu0
        %v5905 = vadd.f32 0.0, %v5904
        %v5906 = vpop.f32.mrf.mxu0
        %v5907 = vadd.f32 0.0, %v5906
        %5908 = vmatprep.mubr.f32.mxu0 0.0
        %5909 = vmatmul.mubr.f32.gmra.mxu0 %v2716
        %v5910 = vpop.f32.mrf.mxu0
        %v5911 = vadd.f32 0.0, %v5910
        %v5912 = vpop.f32.mrf.mxu0
        %v5913 = vadd.f32 0.0, %v5912
        %5914 = vmatprep.mubr.f32.mxu0 0.0
        %5915 = vmatmul.mubr.f32.gmra.mxu0 %v2719
        %v5916 = vpop.f32.mrf.mxu0
        %v5917 = vadd.f32 0.0, %v5916
        %v5918 = vpop.f32.mrf.mxu0
        %v5919 = vadd.f32 0.0, %v5918
        %5920 = vmatprep.mubr.f32.mxu0 0.0
        %5921 = vmatmul.mubr.f32.gmra.mxu0 %v2722
        %v5922 = vpop.f32.mrf.mxu0
        %v5923 = vadd.f32 0.0, %v5922
        %v5924 = vpop.f32.mrf.mxu0
        %v5925 = vadd.f32 0.0, %v5924
        %5926 = vmatprep.mubr.f32.mxu0 0.0
        %5927 = vmatmul.mubr.f32.gmra.mxu0 %v2725
        %v5928 = vpop.f32.mrf.mxu0
        %v5929 = vadd.f32 0.0, %v5928
        %v5930 = vpop.f32.mrf.mxu0
        %v5931 = vadd.f32 0.0, %v5930
        %5932 = vmatprep.mubr.f32.mxu0 0.0
        %5933 = vmatmul.mubr.f32.gmra.mxu0 %v2728
        %v5934 = vpop.f32.mrf.mxu0
        %v5935 = vadd.f32 0.0, %v5934
        %v5936 = vpop.f32.mrf.mxu0
        %v5937 = vadd.f32 0.0, %v5936
        %5938 = vmatprep.mubr.f32.mxu0 0.0
        %5939 = vmatmul.mubr.f32.gmra.mxu0 %v2731
        %v5940 = vpop.f32.mrf.mxu0
        %v5941 = vadd.f32 0.0, %v5940
        %v5942 = vpop.f32.mrf.mxu0
        %v5943 = vadd.f32 0.0, %v5942
        %5944 = vmatprep.mubr.f32.mxu0 0.0
        %5945 = vmatmul.mubr.f32.gmra.mxu0 %v2734
        %v5946 = vpop.f32.mrf.mxu0
        %v5947 = vadd.f32 0.0, %v5946
        %v5948 = vpop.f32.mrf.mxu0
        %v5949 = vadd.f32 0.0, %v5948
        %5950 = vdwg.mxu0
        %5951 = vst [vmem:[%s152] sm:$0xff] %v2816
        %5952 = vst [vmem:[%s152 + $0x8] sm:$0xff] %v2818
        %5953 = vst [vmem:[%s152 + $0x10] sm:$0xff] %v4417
        %5954 = vst [vmem:[%s152 + $0x18] sm:$0xff] %v4419
        %5955 = vst [vmem:[%s152 + $0x20] sm:$0xff] %v2822
        %5956 = vst [vmem:[%s152 + $0x28] sm:$0xff] %v2824
        %5957 = vst [vmem:[%s152 + $0x30] sm:$0xff] %v4423
        %5958 = vst [vmem:[%s152 + $0x38] sm:$0xff] %v4425
        %5959 = vst [vmem:[%s152 + $0x40] sm:$0xff] %v2828
        %5960 = vst [vmem:[%s152 + $0x48] sm:$0xff] %v2830
        %5961 = vst [vmem:[%s152 + $0x50] sm:$0xff] %v4429
        %5962 = vst [vmem:[%s152 + $0x58] sm:$0xff] %v4431
        %5963 = vst [vmem:[%s152 + $0x60] sm:$0xff] %v2834
        %5964 = vst [vmem:[%s152 + $0x68] sm:$0xff] %v2836
        %5965 = vst [vmem:[%s152 + $0x70] sm:$0xff] %v4435
        %5966 = vst [vmem:[%s152 + $0x78] sm:$0xff] %v4437
        %5967 = vst [vmem:[%s152 + $0x80] sm:$0xff] %v2840
        %5968 = vst [vmem:[%s152 + $0x88] sm:$0xff] %v2842
        %5969 = vst [vmem:[%s152 + $0x90] sm:$0xff] %v4441
        %5970 = vst [vmem:[%s152 + $0x98] sm:$0xff] %v4443
        %5971 = vst [vmem:[%s152 + $0xa0] sm:$0xff] %v2846
        %5972 = vst [vmem:[%s152 + $0xa8] sm:$0xff] %v2848
        %5973 = vst [vmem:[%s152 + $0xb0] sm:$0xff] %v4447
        %5974 = vst [vmem:[%s152 + $0xb8] sm:$0xff] %v4449
        %5975 = vst [vmem:[%s152 + $0xc0] sm:$0xff] %v2852
        %5976 = vst [vmem:[%s152 + $0xc8] sm:$0xff] %v2854
        %5977 = vst [vmem:[%s152 + $0xd0] sm:$0xff] %v4453
        %5978 = vst [vmem:[%s152 + $0xd8] sm:$0xff] %v4455
        %5979 = vst [vmem:[%s152 + $0xe0] sm:$0xff] %v2858
        %5980 = vst [vmem:[%s152 + $0xe8] sm:$0xff] %v2860
        %5981 = vst [vmem:[%s152 + $0xf0] sm:$0xff] %v4459
        %5982 = vst [vmem:[%s152 + $0xf8] sm:$0xff] %v4461
        %5983 = vst [vmem:[%s152 + $0x100] sm:$0xff] %v2864
        %5984 = vst [vmem:[%s152 + $0x108] sm:$0xff] %v2866
        %5985 = vst [vmem:[%s152 + $0x110] sm:$0xff] %v4465
        %5986 = vst [vmem:[%s152 + $0x118] sm:$0xff] %v4467
        %5987 = vst [vmem:[%s152 + $0x120] sm:$0xff] %v2870
        %5988 = vst [vmem:[%s152 + $0x128] sm:$0xff] %v2872
        %5989 = vst [vmem:[%s152 + $0x130] sm:$0xff] %v4471
        %5990 = vst [vmem:[%s152 + $0x138] sm:$0xff] %v4473
        %5991 = vst [vmem:[%s152 + $0x140] sm:$0xff] %v2876
        %5992 = vst [vmem:[%s152 + $0x148] sm:$0xff] %v2878
        %5993 = vst [vmem:[%s152 + $0x150] sm:$0xff] %v4477
        %5994 = vst [vmem:[%s152 + $0x158] sm:$0xff] %v4479
        %5995 = vst [vmem:[%s152 + $0x160] sm:$0xff] %v2882
        %5996 = vst [vmem:[%s152 + $0x168] sm:$0xff] %v2884
        %5997 = vst [vmem:[%s152 + $0x170] sm:$0xff] %v4483
        %5998 = vst [vmem:[%s152 + $0x178] sm:$0xff] %v4485
        %5999 = vst [vmem:[%s152 + $0x180] sm:$0xff] %v2888
        %6000 = vst [vmem:[%s152 + $0x188] sm:$0xff] %v2890
        %6001 = vst [vmem:[%s152 + $0x190] sm:$0xff] %v4489
        %6002 = vst [vmem:[%s152 + $0x198] sm:$0xff] %v4491
        %6003 = vst [vmem:[%s152 + $0x1a0] sm:$0xff] %v2894
        %6004 = vst [vmem:[%s152 + $0x1a8] sm:$0xff] %v2896
        %6005 = vst [vmem:[%s152 + $0x1b0] sm:$0xff] %v4495
        %6006 = vst [vmem:[%s152 + $0x1b8] sm:$0xff] %v4497
        %6007 = vst [vmem:[%s152 + $0x1c0] sm:$0xff] %v2900
        %6008 = vst [vmem:[%s152 + $0x1c8] sm:$0xff] %v2902
        %6009 = vst [vmem:[%s152 + $0x1d0] sm:$0xff] %v4501
        %6010 = vst [vmem:[%s152 + $0x1d8] sm:$0xff] %v4503
        %6011 = vst [vmem:[%s152 + $0x1e0] sm:$0xff] %v2906
        %6012 = vst [vmem:[%s152 + $0x1e8] sm:$0xff] %v2908
        %6013 = vst [vmem:[%s152 + $0x1f0] sm:$0xff] %v4507
        %6014 = vst [vmem:[%s152 + $0x1f8] sm:$0xff] %v4509
        %6015 = vst [vmem:[%s152 + $0x200] sm:$0xff] %v2912
        %6016 = vst [vmem:[%s152 + $0x208] sm:$0xff] %v2914
        %6017 = vst [vmem:[%s152 + $0x210] sm:$0xff] %v4513
        %6018 = vst [vmem:[%s152 + $0x218] sm:$0xff] %v4515
        %6019 = vst [vmem:[%s152 + $0x220] sm:$0xff] %v2918
        %6020 = vst [vmem:[%s152 + $0x228] sm:$0xff] %v2920
        %6021 = vst [vmem:[%s152 + $0x230] sm:$0xff] %v4519
        %6022 = vst [vmem:[%s152 + $0x238] sm:$0xff] %v4521
        %6023 = vst [vmem:[%s152 + $0x240] sm:$0xff] %v2924
        %6024 = vst [vmem:[%s152 + $0x248] sm:$0xff] %v2926
        %6025 = vst [vmem:[%s152 + $0x250] sm:$0xff] %v4525
        %6026 = vst [vmem:[%s152 + $0x258] sm:$0xff] %v4527
        %6027 = vst [vmem:[%s152 + $0x260] sm:$0xff] %v2930
        %6028 = vst [vmem:[%s152 + $0x268] sm:$0xff] %v2932
        %6029 = vst [vmem:[%s152 + $0x270] sm:$0xff] %v4531
        %6030 = vst [vmem:[%s152 + $0x278] sm:$0xff] %v4533
        %6031 = vst [vmem:[%s152 + $0x280] sm:$0xff] %v2936
        %6032 = vst [vmem:[%s152 + $0x288] sm:$0xff] %v2938
        %6033 = vst [vmem:[%s152 + $0x290] sm:$0xff] %v4537
        %6034 = vst [vmem:[%s152 + $0x298] sm:$0xff] %v4539
        %6035 = vst [vmem:[%s152 + $0x2a0] sm:$0xff] %v2942
        %6036 = vst [vmem:[%s152 + $0x2a8] sm:$0xff] %v2944
        %6037 = vst [vmem:[%s152 + $0x2b0] sm:$0xff] %v4543
        %6038 = vst [vmem:[%s152 + $0x2b8] sm:$0xff] %v4545
        %6039 = vst [vmem:[%s152 + $0x2c0] sm:$0xff] %v2948
        %6040 = vst [vmem:[%s152 + $0x2c8] sm:$0xff] %v2950
        %6041 = vst [vmem:[%s152 + $0x2d0] sm:$0xff] %v4549
        %6042 = vst [vmem:[%s152 + $0x2d8] sm:$0xff] %v4551
        %6043 = vst [vmem:[%s152 + $0x2e0] sm:$0xff] %v2954
        %6044 = vst [vmem:[%s152 + $0x2e8] sm:$0xff] %v2956
        %6045 = vst [vmem:[%s152 + $0x2f0] sm:$0xff] %v4555
        %6046 = vst [vmem:[%s152 + $0x2f8] sm:$0xff] %v4557
        %6047 = vst [vmem:[%s152 + $0x300] sm:$0xff] %v2960
        %6048 = vst [vmem:[%s152 + $0x308] sm:$0xff] %v2962
        %6049 = vst [vmem:[%s152 + $0x310] sm:$0xff] %v4561
        %6050 = vst [vmem:[%s152 + $0x318] sm:$0xff] %v4563
        %6051 = vst [vmem:[%s152 + $0x320] sm:$0xff] %v2966
        %6052 = vst [vmem:[%s152 + $0x328] sm:$0xff] %v2968
        %6053 = vst [vmem:[%s152 + $0x330] sm:$0xff] %v4567
        %6054 = vst [vmem:[%s152 + $0x338] sm:$0xff] %v4569
        %6055 = vst [vmem:[%s152 + $0x340] sm:$0xff] %v2972
        %6056 = vst [vmem:[%s152 + $0x348] sm:$0xff] %v2974
        %6057 = vst [vmem:[%s152 + $0x350] sm:$0xff] %v4573
        %6058 = vst [vmem:[%s152 + $0x358] sm:$0xff] %v4575
        %6059 = vst [vmem:[%s152 + $0x360] sm:$0xff] %v2978
        %6060 = vst [vmem:[%s152 + $0x368] sm:$0xff] %v2980
        %6061 = vst [vmem:[%s152 + $0x370] sm:$0xff] %v4579
        %6062 = vst [vmem:[%s152 + $0x378] sm:$0xff] %v4581
        %6063 = vst [vmem:[%s152 + $0x380] sm:$0xff] %v2984
        %6064 = vst [vmem:[%s152 + $0x388] sm:$0xff] %v2986
        %6065 = vst [vmem:[%s152 + $0x390] sm:$0xff] %v4585
        %6066 = vst [vmem:[%s152 + $0x398] sm:$0xff] %v4587
        %6067 = vst [vmem:[%s152 + $0x3a0] sm:$0xff] %v2990
        %6068 = vst [vmem:[%s152 + $0x3a8] sm:$0xff] %v2992
        %6069 = vst [vmem:[%s152 + $0x3b0] sm:$0xff] %v4591
        %6070 = vst [vmem:[%s152 + $0x3b8] sm:$0xff] %v4593
        %6071 = vst [vmem:[%s152 + $0x3c0] sm:$0xff] %v2996
        %6072 = vst [vmem:[%s152 + $0x3c8] sm:$0xff] %v2998
        %6073 = vst [vmem:[%s152 + $0x3d0] sm:$0xff] %v4597
        %6074 = vst [vmem:[%s152 + $0x3d8] sm:$0xff] %v4599
        %6075 = vst [vmem:[%s152 + $0x3e0] sm:$0xff] %v3002
        %6076 = vst [vmem:[%s152 + $0x3e8] sm:$0xff] %v3004
        %6077 = vst [vmem:[%s152 + $0x3f0] sm:$0xff] %v4603
        %6078 = vst [vmem:[%s152 + $0x3f8] sm:$0xff] %v4605
        %6079 = vst [vmem:[%s152 + $0x400] sm:$0xff] %v3008
        %6080 = vst [vmem:[%s152 + $0x408] sm:$0xff] %v3010
        %6081 = vst [vmem:[%s152 + $0x410] sm:$0xff] %v4609
        %6082 = vst [vmem:[%s152 + $0x418] sm:$0xff] %v4611
        %6083 = vst [vmem:[%s152 + $0x420] sm:$0xff] %v3014
        %6084 = vst [vmem:[%s152 + $0x428] sm:$0xff] %v3016
        %6085 = vst [vmem:[%s152 + $0x430] sm:$0xff] %v4615
        %6086 = vst [vmem:[%s152 + $0x438] sm:$0xff] %v4617
        %6087 = vst [vmem:[%s152 + $0x440] sm:$0xff] %v3020
        %6088 = vst [vmem:[%s152 + $0x448] sm:$0xff] %v3022
        %6089 = vst [vmem:[%s152 + $0x450] sm:$0xff] %v4621
        %6090 = vst [vmem:[%s152 + $0x458] sm:$0xff] %v4623
        %6091 = vst [vmem:[%s152 + $0x460] sm:$0xff] %v3026
        %6092 = vst [vmem:[%s152 + $0x468] sm:$0xff] %v3028
        %6093 = vst [vmem:[%s152 + $0x470] sm:$0xff] %v4627
        %6094 = vst [vmem:[%s152 + $0x478] sm:$0xff] %v4629
        %6095 = vst [vmem:[%s152 + $0x480] sm:$0xff] %v3032
        %6096 = vst [vmem:[%s152 + $0x488] sm:$0xff] %v3034
        %6097 = vst [vmem:[%s152 + $0x490] sm:$0xff] %v4633
        %6098 = vst [vmem:[%s152 + $0x498] sm:$0xff] %v4635
        %6099 = vst [vmem:[%s152 + $0x4a0] sm:$0xff] %v3038
        %6100 = vst [vmem:[%s152 + $0x4a8] sm:$0xff] %v3040
        %6101 = vst [vmem:[%s152 + $0x4b0] sm:$0xff] %v4639
        %6102 = vst [vmem:[%s152 + $0x4b8] sm:$0xff] %v4641
        %6103 = vst [vmem:[%s152 + $0x4c0] sm:$0xff] %v3044
        %6104 = vst [vmem:[%s152 + $0x4c8] sm:$0xff] %v3046
        %6105 = vst [vmem:[%s152 + $0x4d0] sm:$0xff] %v4645
        %6106 = vst [vmem:[%s152 + $0x4d8] sm:$0xff] %v4647
        %6107 = vst [vmem:[%s152 + $0x4e0] sm:$0xff] %v3050
        %6108 = vst [vmem:[%s152 + $0x4e8] sm:$0xff] %v3052
        %6109 = vst [vmem:[%s152 + $0x4f0] sm:$0xff] %v4651
        %6110 = vst [vmem:[%s152 + $0x4f8] sm:$0xff] %v4653
        %6111 = vst [vmem:[%s152 + $0x500] sm:$0xff] %v3056
        %6112 = vst [vmem:[%s152 + $0x508] sm:$0xff] %v3058
        %6113 = vst [vmem:[%s152 + $0x510] sm:$0xff] %v4657
        %6114 = vst [vmem:[%s152 + $0x518] sm:$0xff] %v4659
        %6115 = vst [vmem:[%s152 + $0x520] sm:$0xff] %v3062
        %6116 = vst [vmem:[%s152 + $0x528] sm:$0xff] %v3064
        %6117 = vst [vmem:[%s152 + $0x530] sm:$0xff] %v4663
        %6118 = vst [vmem:[%s152 + $0x538] sm:$0xff] %v4665
        %6119 = vst [vmem:[%s152 + $0x540] sm:$0xff] %v3068
        %6120 = vst [vmem:[%s152 + $0x548] sm:$0xff] %v3070
        %6121 = vst [vmem:[%s152 + $0x550] sm:$0xff] %v4669
        %6122 = vst [vmem:[%s152 + $0x558] sm:$0xff] %v4671
        %6123 = vst [vmem:[%s152 + $0x560] sm:$0xff] %v3074
        %6124 = vst [vmem:[%s152 + $0x568] sm:$0xff] %v3076
        %6125 = vst [vmem:[%s152 + $0x570] sm:$0xff] %v4675
        %6126 = vst [vmem:[%s152 + $0x578] sm:$0xff] %v4677
        %6127 = vst [vmem:[%s152 + $0x580] sm:$0xff] %v3080
        %6128 = vst [vmem:[%s152 + $0x588] sm:$0xff] %v3082
        %6129 = vst [vmem:[%s152 + $0x590] sm:$0xff] %v4681
        %6130 = vst [vmem:[%s152 + $0x598] sm:$0xff] %v4683
        %6131 = vst [vmem:[%s152 + $0x5a0] sm:$0xff] %v3086
        %6132 = vst [vmem:[%s152 + $0x5a8] sm:$0xff] %v3088
        %6133 = vst [vmem:[%s152 + $0x5b0] sm:$0xff] %v4687
        %6134 = vst [vmem:[%s152 + $0x5b8] sm:$0xff] %v4689
        %6135 = vst [vmem:[%s152 + $0x5c0] sm:$0xff] %v3092
        %6136 = vst [vmem:[%s152 + $0x5c8] sm:$0xff] %v3094
        %6137 = vst [vmem:[%s152 + $0x5d0] sm:$0xff] %v4693
        %6138 = vst [vmem:[%s152 + $0x5d8] sm:$0xff] %v4695
        %6139 = vst [vmem:[%s152 + $0x5e0] sm:$0xff] %v3098
        %6140 = vst [vmem:[%s152 + $0x5e8] sm:$0xff] %v3100
        %6141 = vst [vmem:[%s152 + $0x5f0] sm:$0xff] %v4699
        %6142 = vst [vmem:[%s152 + $0x5f8] sm:$0xff] %v4701
        %6143 = vst [vmem:[%s152 + $0x600] sm:$0xff] %v3104
        %6144 = vst [vmem:[%s152 + $0x608] sm:$0xff] %v3106
        %6145 = vst [vmem:[%s152 + $0x610] sm:$0xff] %v4705
        %6146 = vst [vmem:[%s152 + $0x618] sm:$0xff] %v4707
        %6147 = vst [vmem:[%s152 + $0x620] sm:$0xff] %v3110
        %6148 = vst [vmem:[%s152 + $0x628] sm:$0xff] %v3112
        %6149 = vst [vmem:[%s152 + $0x630] sm:$0xff] %v4711
        %6150 = vst [vmem:[%s152 + $0x638] sm:$0xff] %v4713
        %6151 = vst [vmem:[%s152 + $0x640] sm:$0xff] %v3116
        %6152 = vst [vmem:[%s152 + $0x648] sm:$0xff] %v3118
        %6153 = vst [vmem:[%s152 + $0x650] sm:$0xff] %v4717
        %6154 = vst [vmem:[%s152 + $0x658] sm:$0xff] %v4719
        %6155 = vst [vmem:[%s152 + $0x660] sm:$0xff] %v3122
        %6156 = vst [vmem:[%s152 + $0x668] sm:$0xff] %v3124
        %6157 = vst [vmem:[%s152 + $0x670] sm:$0xff] %v4723
        %6158 = vst [vmem:[%s152 + $0x678] sm:$0xff] %v4725
        %6159 = vst [vmem:[%s152 + $0x680] sm:$0xff] %v3128
        %6160 = vst [vmem:[%s152 + $0x688] sm:$0xff] %v3130
        %6161 = vst [vmem:[%s152 + $0x690] sm:$0xff] %v4729
        %6162 = vst [vmem:[%s152 + $0x698] sm:$0xff] %v4731
        %6163 = vst [vmem:[%s152 + $0x6a0] sm:$0xff] %v3134
        %6164 = vst [vmem:[%s152 + $0x6a8] sm:$0xff] %v3136
        %6165 = vst [vmem:[%s152 + $0x6b0] sm:$0xff] %v4735
        %6166 = vst [vmem:[%s152 + $0x6b8] sm:$0xff] %v4737
        %6167 = vst [vmem:[%s152 + $0x6c0] sm:$0xff] %v3140
        %6168 = vst [vmem:[%s152 + $0x6c8] sm:$0xff] %v3142
        %6169 = vst [vmem:[%s152 + $0x6d0] sm:$0xff] %v4741
        %6170 = vst [vmem:[%s152 + $0x6d8] sm:$0xff] %v4743
        %6171 = vst [vmem:[%s152 + $0x6e0] sm:$0xff] %v3146
        %6172 = vst [vmem:[%s152 + $0x6e8] sm:$0xff] %v3148
        %6173 = vst [vmem:[%s152 + $0x6f0] sm:$0xff] %v4747
        %6174 = vst [vmem:[%s152 + $0x6f8] sm:$0xff] %v4749
        %6175 = vst [vmem:[%s152 + $0x700] sm:$0xff] %v3152
        %6176 = vst [vmem:[%s152 + $0x708] sm:$0xff] %v3154
        %6177 = vst [vmem:[%s152 + $0x710] sm:$0xff] %v4753
        %6178 = vst [vmem:[%s152 + $0x718] sm:$0xff] %v4755
        %6179 = vst [vmem:[%s152 + $0x720] sm:$0xff] %v3158
        %6180 = vst [vmem:[%s152 + $0x728] sm:$0xff] %v3160
        %6181 = vst [vmem:[%s152 + $0x730] sm:$0xff] %v4759
        %6182 = vst [vmem:[%s152 + $0x738] sm:$0xff] %v4761
        %6183 = vst [vmem:[%s152 + $0x740] sm:$0xff] %v3164
        %6184 = vst [vmem:[%s152 + $0x748] sm:$0xff] %v3166
        %6185 = vst [vmem:[%s152 + $0x750] sm:$0xff] %v4765
        %6186 = vst [vmem:[%s152 + $0x758] sm:$0xff] %v4767
        %6187 = vst [vmem:[%s152 + $0x760] sm:$0xff] %v3170
        %6188 = vst [vmem:[%s152 + $0x768] sm:$0xff] %v3172
        %6189 = vst [vmem:[%s152 + $0x770] sm:$0xff] %v4771
        %6190 = vst [vmem:[%s152 + $0x778] sm:$0xff] %v4773
        %6191 = vst [vmem:[%s152 + $0x780] sm:$0xff] %v3176
        %6192 = vst [vmem:[%s152 + $0x788] sm:$0xff] %v3178
        %6193 = vst [vmem:[%s152 + $0x790] sm:$0xff] %v4777
        %6194 = vst [vmem:[%s152 + $0x798] sm:$0xff] %v4779
        %6195 = vst [vmem:[%s152 + $0x7a0] sm:$0xff] %v3182
        %6196 = vst [vmem:[%s152 + $0x7a8] sm:$0xff] %v3184
        %6197 = vst [vmem:[%s152 + $0x7b0] sm:$0xff] %v4783
        %6198 = vst [vmem:[%s152 + $0x7b8] sm:$0xff] %v4785
        %6199 = vst [vmem:[%s152 + $0x7c0] sm:$0xff] %v3188
        %6200 = vst [vmem:[%s152 + $0x7c8] sm:$0xff] %v3190
        %6201 = vst [vmem:[%s152 + $0x7d0] sm:$0xff] %v4789
        %6202 = vst [vmem:[%s152 + $0x7d8] sm:$0xff] %v4791
        %6203 = vst [vmem:[%s152 + $0x7e0] sm:$0xff] %v3194
        %6204 = vst [vmem:[%s152 + $0x7e8] sm:$0xff] %v3196
        %6205 = vst [vmem:[%s152 + $0x7f0] sm:$0xff] %v4795
        %6206 = vst [vmem:[%s152 + $0x7f8] sm:$0xff] %v4797
        %6207 = vst [vmem:[%s152 + $0x800] sm:$0xff] %v3200
        %6208 = vst [vmem:[%s152 + $0x808] sm:$0xff] %v3202
        %6209 = vst [vmem:[%s152 + $0x810] sm:$0xff] %v4801
        %6210 = vst [vmem:[%s152 + $0x818] sm:$0xff] %v4803
        %6211 = vst [vmem:[%s152 + $0x820] sm:$0xff] %v3206
        %6212 = vst [vmem:[%s152 + $0x828] sm:$0xff] %v3208
        %6213 = vst [vmem:[%s152 + $0x830] sm:$0xff] %v4807
        %6214 = vst [vmem:[%s152 + $0x838] sm:$0xff] %v4809
        %6215 = vst [vmem:[%s152 + $0x840] sm:$0xff] %v3212
        %6216 = vst [vmem:[%s152 + $0x848] sm:$0xff] %v3214
        %6217 = vst [vmem:[%s152 + $0x850] sm:$0xff] %v4813
        %6218 = vst [vmem:[%s152 + $0x858] sm:$0xff] %v4815
        %6219 = vst [vmem:[%s152 + $0x860] sm:$0xff] %v3218
        %6220 = vst [vmem:[%s152 + $0x868] sm:$0xff] %v3220
        %6221 = vst [vmem:[%s152 + $0x870] sm:$0xff] %v4819
        %6222 = vst [vmem:[%s152 + $0x878] sm:$0xff] %v4821
        %6223 = vst [vmem:[%s152 + $0x880] sm:$0xff] %v3224
        %6224 = vst [vmem:[%s152 + $0x888] sm:$0xff] %v3226
        %6225 = vst [vmem:[%s152 + $0x890] sm:$0xff] %v4825
        %6226 = vst [vmem:[%s152 + $0x898] sm:$0xff] %v4827
        %6227 = vst [vmem:[%s152 + $0x8a0] sm:$0xff] %v3230
        %6228 = vst [vmem:[%s152 + $0x8a8] sm:$0xff] %v3232
        %6229 = vst [vmem:[%s152 + $0x8b0] sm:$0xff] %v4831
        %6230 = vst [vmem:[%s152 + $0x8b8] sm:$0xff] %v4833
        %6231 = vst [vmem:[%s152 + $0x8c0] sm:$0xff] %v3236
        %6232 = vst [vmem:[%s152 + $0x8c8] sm:$0xff] %v3238
        %6233 = vst [vmem:[%s152 + $0x8d0] sm:$0xff] %v4837
        %6234 = vst [vmem:[%s152 + $0x8d8] sm:$0xff] %v4839
        %6235 = vst [vmem:[%s152 + $0x8e0] sm:$0xff] %v3242
        %6236 = vst [vmem:[%s152 + $0x8e8] sm:$0xff] %v3244
        %6237 = vst [vmem:[%s152 + $0x8f0] sm:$0xff] %v4843
        %6238 = vst [vmem:[%s152 + $0x8f8] sm:$0xff] %v4845
        %6239 = vst [vmem:[%s152 + $0x900] sm:$0xff] %v3248
        %6240 = vst [vmem:[%s152 + $0x908] sm:$0xff] %v3250
        %6241 = vst [vmem:[%s152 + $0x910] sm:$0xff] %v4849
        %6242 = vst [vmem:[%s152 + $0x918] sm:$0xff] %v4851
        %6243 = vst [vmem:[%s152 + $0x920] sm:$0xff] %v3254
        %6244 = vst [vmem:[%s152 + $0x928] sm:$0xff] %v3256
        %6245 = vst [vmem:[%s152 + $0x930] sm:$0xff] %v4855
        %6246 = vst [vmem:[%s152 + $0x938] sm:$0xff] %v4857
        %6247 = vst [vmem:[%s152 + $0x940] sm:$0xff] %v3260
        %6248 = vst [vmem:[%s152 + $0x948] sm:$0xff] %v3262
        %6249 = vst [vmem:[%s152 + $0x950] sm:$0xff] %v4861
        %6250 = vst [vmem:[%s152 + $0x958] sm:$0xff] %v4863
        %6251 = vst [vmem:[%s152 + $0x960] sm:$0xff] %v3266
        %6252 = vst [vmem:[%s152 + $0x968] sm:$0xff] %v3268
        %6253 = vst [vmem:[%s152 + $0x970] sm:$0xff] %v4867
        %6254 = vst [vmem:[%s152 + $0x978] sm:$0xff] %v4869
        %6255 = vst [vmem:[%s152 + $0x980] sm:$0xff] %v3272
        %6256 = vst [vmem:[%s152 + $0x988] sm:$0xff] %v3274
        %6257 = vst [vmem:[%s152 + $0x990] sm:$0xff] %v4873
        %6258 = vst [vmem:[%s152 + $0x998] sm:$0xff] %v4875
        %6259 = vst [vmem:[%s152 + $0x9a0] sm:$0xff] %v3278
        %6260 = vst [vmem:[%s152 + $0x9a8] sm:$0xff] %v3280
        %6261 = vst [vmem:[%s152 + $0x9b0] sm:$0xff] %v4879
        %6262 = vst [vmem:[%s152 + $0x9b8] sm:$0xff] %v4881
        %6263 = vst [vmem:[%s152 + $0x9c0] sm:$0xff] %v3284
        %6264 = vst [vmem:[%s152 + $0x9c8] sm:$0xff] %v3286
        %6265 = vst [vmem:[%s152 + $0x9d0] sm:$0xff] %v4885
        %6266 = vst [vmem:[%s152 + $0x9d8] sm:$0xff] %v4887
        %6267 = vst [vmem:[%s152 + $0x9e0] sm:$0xff] %v3290
        %6268 = vst [vmem:[%s152 + $0x9e8] sm:$0xff] %v3292
        %6269 = vst [vmem:[%s152 + $0x9f0] sm:$0xff] %v4891
        %6270 = vst [vmem:[%s152 + $0x9f8] sm:$0xff] %v4893
        %6271 = vst [vmem:[%s152 + $0xa00] sm:$0xff] %v3296
        %6272 = vst [vmem:[%s152 + $0xa08] sm:$0xff] %v3298
        %6273 = vst [vmem:[%s152 + $0xa10] sm:$0xff] %v4897
        %6274 = vst [vmem:[%s152 + $0xa18] sm:$0xff] %v4899
        %6275 = vst [vmem:[%s152 + $0xa20] sm:$0xff] %v3302
        %6276 = vst [vmem:[%s152 + $0xa28] sm:$0xff] %v3304
        %6277 = vst [vmem:[%s152 + $0xa30] sm:$0xff] %v4903
        %6278 = vst [vmem:[%s152 + $0xa38] sm:$0xff] %v4905
        %6279 = vst [vmem:[%s152 + $0xa40] sm:$0xff] %v3308
        %6280 = vst [vmem:[%s152 + $0xa48] sm:$0xff] %v3310
        %6281 = vst [vmem:[%s152 + $0xa50] sm:$0xff] %v4909
        %6282 = vst [vmem:[%s152 + $0xa58] sm:$0xff] %v4911
        %6283 = vst [vmem:[%s152 + $0xa60] sm:$0xff] %v3314
        %6284 = vst [vmem:[%s152 + $0xa68] sm:$0xff] %v3316
        %6285 = vst [vmem:[%s152 + $0xa70] sm:$0xff] %v4915
        %6286 = vst [vmem:[%s152 + $0xa78] sm:$0xff] %v4917
        %6287 = vst [vmem:[%s152 + $0xa80] sm:$0xff] %v3320
        %6288 = vst [vmem:[%s152 + $0xa88] sm:$0xff] %v3322
        %6289 = vst [vmem:[%s152 + $0xa90] sm:$0xff] %v4921
        %6290 = vst [vmem:[%s152 + $0xa98] sm:$0xff] %v4923
        %6291 = vst [vmem:[%s152 + $0xaa0] sm:$0xff] %v3326
        %6292 = vst [vmem:[%s152 + $0xaa8] sm:$0xff] %v3328
        %6293 = vst [vmem:[%s152 + $0xab0] sm:$0xff] %v4927
        %6294 = vst [vmem:[%s152 + $0xab8] sm:$0xff] %v4929
        %6295 = vst [vmem:[%s152 + $0xac0] sm:$0xff] %v3332
        %6296 = vst [vmem:[%s152 + $0xac8] sm:$0xff] %v3334
        %6297 = vst [vmem:[%s152 + $0xad0] sm:$0xff] %v4933
        %6298 = vst [vmem:[%s152 + $0xad8] sm:$0xff] %v4935
        %6299 = vst [vmem:[%s152 + $0xae0] sm:$0xff] %v3338
        %6300 = vst [vmem:[%s152 + $0xae8] sm:$0xff] %v3340
        %6301 = vst [vmem:[%s152 + $0xaf0] sm:$0xff] %v4939
        %6302 = vst [vmem:[%s152 + $0xaf8] sm:$0xff] %v4941
        %6303 = vst [vmem:[%s152 + $0xb00] sm:$0xff] %v3344
        %6304 = vst [vmem:[%s152 + $0xb08] sm:$0xff] %v3346
        %6305 = vst [vmem:[%s152 + $0xb10] sm:$0xff] %v4945
        %6306 = vst [vmem:[%s152 + $0xb18] sm:$0xff] %v4947
        %6307 = vst [vmem:[%s152 + $0xb20] sm:$0xff] %v3350
        %6308 = vst [vmem:[%s152 + $0xb28] sm:$0xff] %v3352
        %6309 = vst [vmem:[%s152 + $0xb30] sm:$0xff] %v4951
        %6310 = vst [vmem:[%s152 + $0xb38] sm:$0xff] %v4953
        %6311 = vst [vmem:[%s152 + $0xb40] sm:$0xff] %v3356
        %6312 = vst [vmem:[%s152 + $0xb48] sm:$0xff] %v3358
        %6313 = vst [vmem:[%s152 + $0xb50] sm:$0xff] %v4957
        %6314 = vst [vmem:[%s152 + $0xb58] sm:$0xff] %v4959
        %6315 = vst [vmem:[%s152 + $0xb60] sm:$0xff] %v3362
        %6316 = vst [vmem:[%s152 + $0xb68] sm:$0xff] %v3364
        %6317 = vst [vmem:[%s152 + $0xb70] sm:$0xff] %v4963
        %6318 = vst [vmem:[%s152 + $0xb78] sm:$0xff] %v4965
        %6319 = vst [vmem:[%s152 + $0xb80] sm:$0xff] %v3368
        %6320 = vst [vmem:[%s152 + $0xb88] sm:$0xff] %v3370
        %6321 = vst [vmem:[%s152 + $0xb90] sm:$0xff] %v4969
        %6322 = vst [vmem:[%s152 + $0xb98] sm:$0xff] %v4971
        %6323 = vst [vmem:[%s152 + $0xba0] sm:$0xff] %v3374
        %6324 = vst [vmem:[%s152 + $0xba8] sm:$0xff] %v3376
        %6325 = vst [vmem:[%s152 + $0xbb0] sm:$0xff] %v4975
        %6326 = vst [vmem:[%s152 + $0xbb8] sm:$0xff] %v4977
        %6327 = vst [vmem:[%s152 + $0xbc0] sm:$0xff] %v3380
        %6328 = vst [vmem:[%s152 + $0xbc8] sm:$0xff] %v3382
        %6329 = vst [vmem:[%s152 + $0xbd0] sm:$0xff] %v4981
        %6330 = vst [vmem:[%s152 + $0xbd8] sm:$0xff] %v4983
        %6331 = vst [vmem:[%s152 + $0xbe0] sm:$0xff] %v3386
        %6332 = vst [vmem:[%s152 + $0xbe8] sm:$0xff] %v3388
        %6333 = vst [vmem:[%s152 + $0xbf0] sm:$0xff] %v4987
        %6334 = vst [vmem:[%s152 + $0xbf8] sm:$0xff] %v4989
        %6335 = vst [vmem:[%s152 + $0xc00] sm:$0xff] %v3392
        %6336 = vst [vmem:[%s152 + $0xc08] sm:$0xff] %v3394
        %6337 = vst [vmem:[%s152 + $0xc10] sm:$0xff] %v4993
        %6338 = vst [vmem:[%s152 + $0xc18] sm:$0xff] %v4995
        %6339 = vst [vmem:[%s152 + $0xc20] sm:$0xff] %v3398
        %6340 = vst [vmem:[%s152 + $0xc28] sm:$0xff] %v3400
        %6341 = vst [vmem:[%s152 + $0xc30] sm:$0xff] %v4999
        %6342 = vst [vmem:[%s152 + $0xc38] sm:$0xff] %v5001
        %6343 = vst [vmem:[%s152 + $0xc40] sm:$0xff] %v3404
        %6344 = vst [vmem:[%s152 + $0xc48] sm:$0xff] %v3406
        %6345 = vst [vmem:[%s152 + $0xc50] sm:$0xff] %v5005
        %6346 = vst [vmem:[%s152 + $0xc58] sm:$0xff] %v5007
        %6347 = vst [vmem:[%s152 + $0xc60] sm:$0xff] %v3410
        %6348 = vst [vmem:[%s152 + $0xc68] sm:$0xff] %v3412
        %6349 = vst [vmem:[%s152 + $0xc70] sm:$0xff] %v5011
        %6350 = vst [vmem:[%s152 + $0xc78] sm:$0xff] %v5013
        %6351 = vst [vmem:[%s152 + $0xc80] sm:$0xff] %v3416
        %6352 = vst [vmem:[%s152 + $0xc88] sm:$0xff] %v3418
        %6353 = vst [vmem:[%s152 + $0xc90] sm:$0xff] %v5017
        %6354 = vst [vmem:[%s152 + $0xc98] sm:$0xff] %v5019
        %6355 = vst [vmem:[%s152 + $0xca0] sm:$0xff] %v3422
        %6356 = vst [vmem:[%s152 + $0xca8] sm:$0xff] %v3424
        %6357 = vst [vmem:[%s152 + $0xcb0] sm:$0xff] %v5023
        %6358 = vst [vmem:[%s152 + $0xcb8] sm:$0xff] %v5025
        %6359 = vst [vmem:[%s152 + $0xcc0] sm:$0xff] %v3428
        %6360 = vst [vmem:[%s152 + $0xcc8] sm:$0xff] %v3430
        %6361 = vst [vmem:[%s152 + $0xcd0] sm:$0xff] %v5029
        %6362 = vst [vmem:[%s152 + $0xcd8] sm:$0xff] %v5031
        %6363 = vst [vmem:[%s152 + $0xce0] sm:$0xff] %v3434
        %6364 = vst [vmem:[%s152 + $0xce8] sm:$0xff] %v3436
        %6365 = vst [vmem:[%s152 + $0xcf0] sm:$0xff] %v5035
        %6366 = vst [vmem:[%s152 + $0xcf8] sm:$0xff] %v5037
        %6367 = vst [vmem:[%s152 + $0xd00] sm:$0xff] %v3440
        %6368 = vst [vmem:[%s152 + $0xd08] sm:$0xff] %v3442
        %6369 = vst [vmem:[%s152 + $0xd10] sm:$0xff] %v5041
        %6370 = vst [vmem:[%s152 + $0xd18] sm:$0xff] %v5043
        %6371 = vst [vmem:[%s152 + $0xd20] sm:$0xff] %v3446
        %6372 = vst [vmem:[%s152 + $0xd28] sm:$0xff] %v3448
        %6373 = vst [vmem:[%s152 + $0xd30] sm:$0xff] %v5047
        %6374 = vst [vmem:[%s152 + $0xd38] sm:$0xff] %v5049
        %6375 = vst [vmem:[%s152 + $0xd40] sm:$0xff] %v3452
        %6376 = vst [vmem:[%s152 + $0xd48] sm:$0xff] %v3454
        %6377 = vst [vmem:[%s152 + $0xd50] sm:$0xff] %v5053
        %6378 = vst [vmem:[%s152 + $0xd58] sm:$0xff] %v5055
        %6379 = vst [vmem:[%s152 + $0xd60] sm:$0xff] %v3458
        %6380 = vst [vmem:[%s152 + $0xd68] sm:$0xff] %v3460
        %6381 = vst [vmem:[%s152 + $0xd70] sm:$0xff] %v5059
        %6382 = vst [vmem:[%s152 + $0xd78] sm:$0xff] %v5061
        %6383 = vst [vmem:[%s152 + $0xd80] sm:$0xff] %v3464
        %6384 = vst [vmem:[%s152 + $0xd88] sm:$0xff] %v3466
        %6385 = vst [vmem:[%s152 + $0xd90] sm:$0xff] %v5065
        %6386 = vst [vmem:[%s152 + $0xd98] sm:$0xff] %v5067
        %6387 = vst [vmem:[%s152 + $0xda0] sm:$0xff] %v3470
        %6388 = vst [vmem:[%s152 + $0xda8] sm:$0xff] %v3472
        %6389 = vst [vmem:[%s152 + $0xdb0] sm:$0xff] %v5071
        %6390 = vst [vmem:[%s152 + $0xdb8] sm:$0xff] %v5073
        %6391 = vst [vmem:[%s152 + $0xdc0] sm:$0xff] %v3476
        %6392 = vst [vmem:[%s152 + $0xdc8] sm:$0xff] %v3478
        %6393 = vst [vmem:[%s152 + $0xdd0] sm:$0xff] %v5077
        %6394 = vst [vmem:[%s152 + $0xdd8] sm:$0xff] %v5079
        %6395 = vst [vmem:[%s152 + $0xde0] sm:$0xff] %v3482
        %6396 = vst [vmem:[%s152 + $0xde8] sm:$0xff] %v3484
        %6397 = vst [vmem:[%s152 + $0xdf0] sm:$0xff] %v5083
        %6398 = vst [vmem:[%s152 + $0xdf8] sm:$0xff] %v5085
        %6399 = vst [vmem:[%s152 + $0xe00] sm:$0xff] %v3488
        %6400 = vst [vmem:[%s152 + $0xe08] sm:$0xff] %v3490
        %6401 = vst [vmem:[%s152 + $0xe10] sm:$0xff] %v5089
        %6402 = vst [vmem:[%s152 + $0xe18] sm:$0xff] %v5091
        %6403 = vst [vmem:[%s152 + $0xe20] sm:$0xff] %v3494
        %6404 = vst [vmem:[%s152 + $0xe28] sm:$0xff] %v3496
        %6405 = vst [vmem:[%s152 + $0xe30] sm:$0xff] %v5095
        %6406 = vst [vmem:[%s152 + $0xe38] sm:$0xff] %v5097
        %6407 = vst [vmem:[%s152 + $0xe40] sm:$0xff] %v3500
        %6408 = vst [vmem:[%s152 + $0xe48] sm:$0xff] %v3502
        %6409 = vst [vmem:[%s152 + $0xe50] sm:$0xff] %v5101
        %6410 = vst [vmem:[%s152 + $0xe58] sm:$0xff] %v5103
        %6411 = vst [vmem:[%s152 + $0xe60] sm:$0xff] %v3506
        %6412 = vst [vmem:[%s152 + $0xe68] sm:$0xff] %v3508
        %6413 = vst [vmem:[%s152 + $0xe70] sm:$0xff] %v5107
        %6414 = vst [vmem:[%s152 + $0xe78] sm:$0xff] %v5109
        %6415 = vst [vmem:[%s152 + $0xe80] sm:$0xff] %v3512
        %6416 = vst [vmem:[%s152 + $0xe88] sm:$0xff] %v3514
        %6417 = vst [vmem:[%s152 + $0xe90] sm:$0xff] %v5113
        %6418 = vst [vmem:[%s152 + $0xe98] sm:$0xff] %v5115
        %6419 = vst [vmem:[%s152 + $0xea0] sm:$0xff] %v3518
        %6420 = vst [vmem:[%s152 + $0xea8] sm:$0xff] %v3520
        %6421 = vst [vmem:[%s152 + $0xeb0] sm:$0xff] %v5119
        %6422 = vst [vmem:[%s152 + $0xeb8] sm:$0xff] %v5121
        %6423 = vst [vmem:[%s152 + $0xec0] sm:$0xff] %v3524
        %6424 = vst [vmem:[%s152 + $0xec8] sm:$0xff] %v3526
        %6425 = vst [vmem:[%s152 + $0xed0] sm:$0xff] %v5125
        %6426 = vst [vmem:[%s152 + $0xed8] sm:$0xff] %v5127
        %6427 = vst [vmem:[%s152 + $0xee0] sm:$0xff] %v3530
        %6428 = vst [vmem:[%s152 + $0xee8] sm:$0xff] %v3532
        %6429 = vst [vmem:[%s152 + $0xef0] sm:$0xff] %v5131
        %6430 = vst [vmem:[%s152 + $0xef8] sm:$0xff] %v5133
        %6431 = vst [vmem:[%s152 + $0xf00] sm:$0xff] %v3536
        %6432 = vst [vmem:[%s152 + $0xf08] sm:$0xff] %v3538
        %6433 = vst [vmem:[%s152 + $0xf10] sm:$0xff] %v5137
        %6434 = vst [vmem:[%s152 + $0xf18] sm:$0xff] %v5139
        %6435 = vst [vmem:[%s152 + $0xf20] sm:$0xff] %v3542
        %6436 = vst [vmem:[%s152 + $0xf28] sm:$0xff] %v3544
        %6437 = vst [vmem:[%s152 + $0xf30] sm:$0xff] %v5143
        %6438 = vst [vmem:[%s152 + $0xf38] sm:$0xff] %v5145
        %6439 = vst [vmem:[%s152 + $0xf40] sm:$0xff] %v3548
        %6440 = vst [vmem:[%s152 + $0xf48] sm:$0xff] %v3550
        %6441 = vst [vmem:[%s152 + $0xf50] sm:$0xff] %v5149
        %6442 = vst [vmem:[%s152 + $0xf58] sm:$0xff] %v5151
        %6443 = vst [vmem:[%s152 + $0xf60] sm:$0xff] %v3554
        %6444 = vst [vmem:[%s152 + $0xf68] sm:$0xff] %v3556
        %6445 = vst [vmem:[%s152 + $0xf70] sm:$0xff] %v5155
        %6446 = vst [vmem:[%s152 + $0xf78] sm:$0xff] %v5157
        %6447 = vst [vmem:[%s152 + $0xf80] sm:$0xff] %v3560
        %6448 = vst [vmem:[%s152 + $0xf88] sm:$0xff] %v3562
        %6449 = vst [vmem:[%s152 + $0xf90] sm:$0xff] %v5161
        %6450 = vst [vmem:[%s152 + $0xf98] sm:$0xff] %v5163
        %6451 = vst [vmem:[%s152 + $0xfa0] sm:$0xff] %v3566
        %6452 = vst [vmem:[%s152 + $0xfa8] sm:$0xff] %v3568
        %6453 = vst [vmem:[%s152 + $0xfb0] sm:$0xff] %v5167
        %6454 = vst [vmem:[%s152 + $0xfb8] sm:$0xff] %v5169
        %6455 = vst [vmem:[%s152 + $0xfc0] sm:$0xff] %v3572
        %6456 = vst [vmem:[%s152 + $0xfc8] sm:$0xff] %v3574
        %6457 = vst [vmem:[%s152 + $0xfd0] sm:$0xff] %v5173
        %6458 = vst [vmem:[%s152 + $0xfd8] sm:$0xff] %v5175
        %6459 = vst [vmem:[%s152 + $0xfe0] sm:$0xff] %v3578
        %6460 = vst [vmem:[%s152 + $0xfe8] sm:$0xff] %v3580
        %6461 = vst [vmem:[%s152 + $0xff0] sm:$0xff] %v5179
        %6462 = vst [vmem:[%s152 + $0xff8] sm:$0xff] %v5181
        %6463 = vst [vmem:[%s152 + $0x1000] sm:$0xff] %v3584
        %6464 = vst [vmem:[%s152 + $0x1008] sm:$0xff] %v3586
        %6465 = vst [vmem:[%s152 + $0x1010] sm:$0xff] %v5185
        %6466 = vst [vmem:[%s152 + $0x1018] sm:$0xff] %v5187
        %6467 = vst [vmem:[%s152 + $0x1020] sm:$0xff] %v3590
        %6468 = vst [vmem:[%s152 + $0x1028] sm:$0xff] %v3592
        %6469 = vst [vmem:[%s152 + $0x1030] sm:$0xff] %v5191
        %6470 = vst [vmem:[%s152 + $0x1038] sm:$0xff] %v5193
        %6471 = vst [vmem:[%s152 + $0x1040] sm:$0xff] %v3596
        %6472 = vst [vmem:[%s152 + $0x1048] sm:$0xff] %v3598
        %6473 = vst [vmem:[%s152 + $0x1050] sm:$0xff] %v5197
        %6474 = vst [vmem:[%s152 + $0x1058] sm:$0xff] %v5199
        %6475 = vst [vmem:[%s152 + $0x1060] sm:$0xff] %v3602
        %6476 = vst [vmem:[%s152 + $0x1068] sm:$0xff] %v3604
        %6477 = vst [vmem:[%s152 + $0x1070] sm:$0xff] %v5203
        %6478 = vst [vmem:[%s152 + $0x1078] sm:$0xff] %v5205
        %6479 = vst [vmem:[%s152 + $0x1080] sm:$0xff] %v3608
        %6480 = vst [vmem:[%s152 + $0x1088] sm:$0xff] %v3610
        %6481 = vst [vmem:[%s152 + $0x1090] sm:$0xff] %v5209
        %6482 = vst [vmem:[%s152 + $0x1098] sm:$0xff] %v5211
        %6483 = vst [vmem:[%s152 + $0x10a0] sm:$0xff] %v3614
        %6484 = vst [vmem:[%s152 + $0x10a8] sm:$0xff] %v3616
        %6485 = vst [vmem:[%s152 + $0x10b0] sm:$0xff] %v5215
        %6486 = vst [vmem:[%s152 + $0x10b8] sm:$0xff] %v5217
        %6487 = vst [vmem:[%s152 + $0x10c0] sm:$0xff] %v3620
        %6488 = vst [vmem:[%s152 + $0x10c8] sm:$0xff] %v3622
        %6489 = vst [vmem:[%s152 + $0x10d0] sm:$0xff] %v5221
        %6490 = vst [vmem:[%s152 + $0x10d8] sm:$0xff] %v5223
        %6491 = vst [vmem:[%s152 + $0x10e0] sm:$0xff] %v3626
        %6492 = vst [vmem:[%s152 + $0x10e8] sm:$0xff] %v3628
        %6493 = vst [vmem:[%s152 + $0x10f0] sm:$0xff] %v5227
        %6494 = vst [vmem:[%s152 + $0x10f8] sm:$0xff] %v5229
        %6495 = vst [vmem:[%s152 + $0x1100] sm:$0xff] %v3632
        %6496 = vst [vmem:[%s152 + $0x1108] sm:$0xff] %v3634
        %6497 = vst [vmem:[%s152 + $0x1110] sm:$0xff] %v5233
        %6498 = vst [vmem:[%s152 + $0x1118] sm:$0xff] %v5235
        %6499 = vst [vmem:[%s152 + $0x1120] sm:$0xff] %v3638
        %6500 = vst [vmem:[%s152 + $0x1128] sm:$0xff] %v3640
        %6501 = vst [vmem:[%s152 + $0x1130] sm:$0xff] %v5239
        %6502 = vst [vmem:[%s152 + $0x1138] sm:$0xff] %v5241
        %6503 = vst [vmem:[%s152 + $0x1140] sm:$0xff] %v3644
        %6504 = vst [vmem:[%s152 + $0x1148] sm:$0xff] %v3646
        %6505 = vst [vmem:[%s152 + $0x1150] sm:$0xff] %v5245
        %6506 = vst [vmem:[%s152 + $0x1158] sm:$0xff] %v5247
        %6507 = vst [vmem:[%s152 + $0x1160] sm:$0xff] %v3650
        %6508 = vst [vmem:[%s152 + $0x1168] sm:$0xff] %v3652
        %6509 = vst [vmem:[%s152 + $0x1170] sm:$0xff] %v5251
        %6510 = vst [vmem:[%s152 + $0x1178] sm:$0xff] %v5253
        %6511 = vst [vmem:[%s152 + $0x1180] sm:$0xff] %v3656
        %6512 = vst [vmem:[%s152 + $0x1188] sm:$0xff] %v3658
        %6513 = vst [vmem:[%s152 + $0x1190] sm:$0xff] %v5257
        %6514 = vst [vmem:[%s152 + $0x1198] sm:$0xff] %v5259
        %6515 = vst [vmem:[%s152 + $0x11a0] sm:$0xff] %v3662
        %6516 = vst [vmem:[%s152 + $0x11a8] sm:$0xff] %v3664
        %6517 = vst [vmem:[%s152 + $0x11b0] sm:$0xff] %v5263
        %6518 = vst [vmem:[%s152 + $0x11b8] sm:$0xff] %v5265
        %6519 = vst [vmem:[%s152 + $0x11c0] sm:$0xff] %v3668
        %6520 = vst [vmem:[%s152 + $0x11c8] sm:$0xff] %v3670
        %6521 = vst [vmem:[%s152 + $0x11d0] sm:$0xff] %v5269
        %6522 = vst [vmem:[%s152 + $0x11d8] sm:$0xff] %v5271
        %6523 = vst [vmem:[%s152 + $0x11e0] sm:$0xff] %v3674
        %6524 = vst [vmem:[%s152 + $0x11e8] sm:$0xff] %v3676
        %6525 = vst [vmem:[%s152 + $0x11f0] sm:$0xff] %v5275
        %6526 = vst [vmem:[%s152 + $0x11f8] sm:$0xff] %v5277
        %6527 = vst [vmem:[%s152 + $0x1200] sm:$0xff] %v3680
        %6528 = vst [vmem:[%s152 + $0x1208] sm:$0xff] %v3682
        %6529 = vst [vmem:[%s152 + $0x1210] sm:$0xff] %v5281
        %6530 = vst [vmem:[%s152 + $0x1218] sm:$0xff] %v5283
        %6531 = vst [vmem:[%s152 + $0x1220] sm:$0xff] %v3686
        %6532 = vst [vmem:[%s152 + $0x1228] sm:$0xff] %v3688
        %6533 = vst [vmem:[%s152 + $0x1230] sm:$0xff] %v5287
        %6534 = vst [vmem:[%s152 + $0x1238] sm:$0xff] %v5289
        %6535 = vst [vmem:[%s152 + $0x1240] sm:$0xff] %v3692
        %6536 = vst [vmem:[%s152 + $0x1248] sm:$0xff] %v3694
        %6537 = vst [vmem:[%s152 + $0x1250] sm:$0xff] %v5293
        %6538 = vst [vmem:[%s152 + $0x1258] sm:$0xff] %v5295
        %6539 = vst [vmem:[%s152 + $0x1260] sm:$0xff] %v3698
        %6540 = vst [vmem:[%s152 + $0x1268] sm:$0xff] %v3700
        %6541 = vst [vmem:[%s152 + $0x1270] sm:$0xff] %v5299
        %6542 = vst [vmem:[%s152 + $0x1278] sm:$0xff] %v5301
        %6543 = vst [vmem:[%s152 + $0x1280] sm:$0xff] %v3704
        %6544 = vst [vmem:[%s152 + $0x1288] sm:$0xff] %v3706
        %6545 = vst [vmem:[%s152 + $0x1290] sm:$0xff] %v5305
        %6546 = vst [vmem:[%s152 + $0x1298] sm:$0xff] %v5307
        %6547 = vst [vmem:[%s152 + $0x12a0] sm:$0xff] %v3710
        %6548 = vst [vmem:[%s152 + $0x12a8] sm:$0xff] %v3712
        %6549 = vst [vmem:[%s152 + $0x12b0] sm:$0xff] %v5311
        %6550 = vst [vmem:[%s152 + $0x12b8] sm:$0xff] %v5313
        %6551 = vst [vmem:[%s152 + $0x12c0] sm:$0xff] %v3716
        %6552 = vst [vmem:[%s152 + $0x12c8] sm:$0xff] %v3718
        %6553 = vst [vmem:[%s152 + $0x12d0] sm:$0xff] %v5317
        %6554 = vst [vmem:[%s152 + $0x12d8] sm:$0xff] %v5319
        %6555 = vst [vmem:[%s152 + $0x12e0] sm:$0xff] %v3722
        %6556 = vst [vmem:[%s152 + $0x12e8] sm:$0xff] %v3724
        %6557 = vst [vmem:[%s152 + $0x12f0] sm:$0xff] %v5323
        %6558 = vst [vmem:[%s152 + $0x12f8] sm:$0xff] %v5325
        %6559 = vst [vmem:[%s152 + $0x1300] sm:$0xff] %v3728
        %6560 = vst [vmem:[%s152 + $0x1308] sm:$0xff] %v3730
        %6561 = vst [vmem:[%s152 + $0x1310] sm:$0xff] %v5329
        %6562 = vst [vmem:[%s152 + $0x1318] sm:$0xff] %v5331
        %6563 = vst [vmem:[%s152 + $0x1320] sm:$0xff] %v3734
        %6564 = vst [vmem:[%s152 + $0x1328] sm:$0xff] %v3736
        %6565 = vst [vmem:[%s152 + $0x1330] sm:$0xff] %v5335
        %6566 = vst [vmem:[%s152 + $0x1338] sm:$0xff] %v5337
        %6567 = vst [vmem:[%s152 + $0x1340] sm:$0xff] %v3740
        %6568 = vst [vmem:[%s152 + $0x1348] sm:$0xff] %v3742
        %6569 = vst [vmem:[%s152 + $0x1350] sm:$0xff] %v5341
        %6570 = vst [vmem:[%s152 + $0x1358] sm:$0xff] %v5343
        %6571 = vst [vmem:[%s152 + $0x1360] sm:$0xff] %v3746
        %6572 = vst [vmem:[%s152 + $0x1368] sm:$0xff] %v3748
        %6573 = vst [vmem:[%s152 + $0x1370] sm:$0xff] %v5347
        %6574 = vst [vmem:[%s152 + $0x1378] sm:$0xff] %v5349
        %6575 = vst [vmem:[%s152 + $0x1380] sm:$0xff] %v3752
        %6576 = vst [vmem:[%s152 + $0x1388] sm:$0xff] %v3754
        %6577 = vst [vmem:[%s152 + $0x1390] sm:$0xff] %v5353
        %6578 = vst [vmem:[%s152 + $0x1398] sm:$0xff] %v5355
        %6579 = vst [vmem:[%s152 + $0x13a0] sm:$0xff] %v3758
        %6580 = vst [vmem:[%s152 + $0x13a8] sm:$0xff] %v3760
        %6581 = vst [vmem:[%s152 + $0x13b0] sm:$0xff] %v5359
        %6582 = vst [vmem:[%s152 + $0x13b8] sm:$0xff] %v5361
        %6583 = vst [vmem:[%s152 + $0x13c0] sm:$0xff] %v3764
        %6584 = vst [vmem:[%s152 + $0x13c8] sm:$0xff] %v3766
        %6585 = vst [vmem:[%s152 + $0x13d0] sm:$0xff] %v5365
        %6586 = vst [vmem:[%s152 + $0x13d8] sm:$0xff] %v5367
        %6587 = vst [vmem:[%s152 + $0x13e0] sm:$0xff] %v3770
        %6588 = vst [vmem:[%s152 + $0x13e8] sm:$0xff] %v3772
        %6589 = vst [vmem:[%s152 + $0x13f0] sm:$0xff] %v5371
        %6590 = vst [vmem:[%s152 + $0x13f8] sm:$0xff] %v5373
        %6591 = vst [vmem:[%s152 + $0x1400] sm:$0xff] %v3776
        %6592 = vst [vmem:[%s152 + $0x1408] sm:$0xff] %v3778
        %6593 = vst [vmem:[%s152 + $0x1410] sm:$0xff] %v5377
        %6594 = vst [vmem:[%s152 + $0x1418] sm:$0xff] %v5379
        %6595 = vst [vmem:[%s152 + $0x1420] sm:$0xff] %v3782
        %6596 = vst [vmem:[%s152 + $0x1428] sm:$0xff] %v3784
        %6597 = vst [vmem:[%s152 + $0x1430] sm:$0xff] %v5383
        %6598 = vst [vmem:[%s152 + $0x1438] sm:$0xff] %v5385
        %6599 = vst [vmem:[%s152 + $0x1440] sm:$0xff] %v3788
        %6600 = vst [vmem:[%s152 + $0x1448] sm:$0xff] %v3790
        %6601 = vst [vmem:[%s152 + $0x1450] sm:$0xff] %v5389
        %6602 = vst [vmem:[%s152 + $0x1458] sm:$0xff] %v5391
        %6603 = vst [vmem:[%s152 + $0x1460] sm:$0xff] %v3794
        %6604 = vst [vmem:[%s152 + $0x1468] sm:$0xff] %v3796
        %6605 = vst [vmem:[%s152 + $0x1470] sm:$0xff] %v5395
        %6606 = vst [vmem:[%s152 + $0x1478] sm:$0xff] %v5397
        %6607 = vst [vmem:[%s152 + $0x1480] sm:$0xff] %v3800
        %6608 = vst [vmem:[%s152 + $0x1488] sm:$0xff] %v3802
        %6609 = vst [vmem:[%s152 + $0x1490] sm:$0xff] %v5401
        %6610 = vst [vmem:[%s152 + $0x1498] sm:$0xff] %v5403
        %6611 = vst [vmem:[%s152 + $0x14a0] sm:$0xff] %v3806
        %6612 = vst [vmem:[%s152 + $0x14a8] sm:$0xff] %v3808
        %6613 = vst [vmem:[%s152 + $0x14b0] sm:$0xff] %v5407
        %6614 = vst [vmem:[%s152 + $0x14b8] sm:$0xff] %v5409
        %6615 = vst [vmem:[%s152 + $0x14c0] sm:$0xff] %v3812
        %6616 = vst [vmem:[%s152 + $0x14c8] sm:$0xff] %v3814
        %6617 = vst [vmem:[%s152 + $0x14d0] sm:$0xff] %v5413
        %6618 = vst [vmem:[%s152 + $0x14d8] sm:$0xff] %v5415
        %6619 = vst [vmem:[%s152 + $0x14e0] sm:$0xff] %v3818
        %6620 = vst [vmem:[%s152 + $0x14e8] sm:$0xff] %v3820
        %6621 = vst [vmem:[%s152 + $0x14f0] sm:$0xff] %v5419
        %6622 = vst [vmem:[%s152 + $0x14f8] sm:$0xff] %v5421
        %6623 = vst [vmem:[%s152 + $0x1500] sm:$0xff] %v3824
        %6624 = vst [vmem:[%s152 + $0x1508] sm:$0xff] %v3826
        %6625 = vst [vmem:[%s152 + $0x1510] sm:$0xff] %v5425
        %6626 = vst [vmem:[%s152 + $0x1518] sm:$0xff] %v5427
        %6627 = vst [vmem:[%s152 + $0x1520] sm:$0xff] %v3830
        %6628 = vst [vmem:[%s152 + $0x1528] sm:$0xff] %v3832
        %6629 = vst [vmem:[%s152 + $0x1530] sm:$0xff] %v5431
        %6630 = vst [vmem:[%s152 + $0x1538] sm:$0xff] %v5433
        %6631 = vst [vmem:[%s152 + $0x1540] sm:$0xff] %v3836
        %6632 = vst [vmem:[%s152 + $0x1548] sm:$0xff] %v3838
        %6633 = vst [vmem:[%s152 + $0x1550] sm:$0xff] %v5437
        %6634 = vst [vmem:[%s152 + $0x1558] sm:$0xff] %v5439
        %6635 = vst [vmem:[%s152 + $0x1560] sm:$0xff] %v3842
        %6636 = vst [vmem:[%s152 + $0x1568] sm:$0xff] %v3844
        %6637 = vst [vmem:[%s152 + $0x1570] sm:$0xff] %v5443
        %6638 = vst [vmem:[%s152 + $0x1578] sm:$0xff] %v5445
        %6639 = vst [vmem:[%s152 + $0x1580] sm:$0xff] %v3848
        %6640 = vst [vmem:[%s152 + $0x1588] sm:$0xff] %v3850
        %6641 = vst [vmem:[%s152 + $0x1590] sm:$0xff] %v5449
        %6642 = vst [vmem:[%s152 + $0x1598] sm:$0xff] %v5451
        %6643 = vst [vmem:[%s152 + $0x15a0] sm:$0xff] %v3854
        %6644 = vst [vmem:[%s152 + $0x15a8] sm:$0xff] %v3856
        %6645 = vst [vmem:[%s152 + $0x15b0] sm:$0xff] %v5455
        %6646 = vst [vmem:[%s152 + $0x15b8] sm:$0xff] %v5457
        %6647 = vst [vmem:[%s152 + $0x15c0] sm:$0xff] %v3860
        %6648 = vst [vmem:[%s152 + $0x15c8] sm:$0xff] %v3862
        %6649 = vst [vmem:[%s152 + $0x15d0] sm:$0xff] %v5461
        %6650 = vst [vmem:[%s152 + $0x15d8] sm:$0xff] %v5463
        %6651 = vst [vmem:[%s152 + $0x15e0] sm:$0xff] %v3866
        %6652 = vst [vmem:[%s152 + $0x15e8] sm:$0xff] %v3868
        %6653 = vst [vmem:[%s152 + $0x15f0] sm:$0xff] %v5467
        %6654 = vst [vmem:[%s152 + $0x15f8] sm:$0xff] %v5469
        %6655 = vst [vmem:[%s152 + $0x1600] sm:$0xff] %v3872
        %6656 = vst [vmem:[%s152 + $0x1608] sm:$0xff] %v3874
        %6657 = vst [vmem:[%s152 + $0x1610] sm:$0xff] %v5473
        %6658 = vst [vmem:[%s152 + $0x1618] sm:$0xff] %v5475
        %6659 = vst [vmem:[%s152 + $0x1620] sm:$0xff] %v3878
        %6660 = vst [vmem:[%s152 + $0x1628] sm:$0xff] %v3880
        %6661 = vst [vmem:[%s152 + $0x1630] sm:$0xff] %v5479
        %6662 = vst [vmem:[%s152 + $0x1638] sm:$0xff] %v5481
        %6663 = vst [vmem:[%s152 + $0x1640] sm:$0xff] %v3884
        %6664 = vst [vmem:[%s152 + $0x1648] sm:$0xff] %v3886
        %6665 = vst [vmem:[%s152 + $0x1650] sm:$0xff] %v5485
        %6666 = vst [vmem:[%s152 + $0x1658] sm:$0xff] %v5487
        %6667 = vst [vmem:[%s152 + $0x1660] sm:$0xff] %v3890
        %6668 = vst [vmem:[%s152 + $0x1668] sm:$0xff] %v3892
        %6669 = vst [vmem:[%s152 + $0x1670] sm:$0xff] %v5491
        %6670 = vst [vmem:[%s152 + $0x1678] sm:$0xff] %v5493
        %6671 = vst [vmem:[%s152 + $0x1680] sm:$0xff] %v3896
        %6672 = vst [vmem:[%s152 + $0x1688] sm:$0xff] %v3898
        %6673 = vst [vmem:[%s152 + $0x1690] sm:$0xff] %v5497
        %6674 = vst [vmem:[%s152 + $0x1698] sm:$0xff] %v5499
        %6675 = vst [vmem:[%s152 + $0x16a0] sm:$0xff] %v3902
        %6676 = vst [vmem:[%s152 + $0x16a8] sm:$0xff] %v3904
        %6677 = vst [vmem:[%s152 + $0x16b0] sm:$0xff] %v5503
        %6678 = vst [vmem:[%s152 + $0x16b8] sm:$0xff] %v5505
        %6679 = vst [vmem:[%s152 + $0x16c0] sm:$0xff] %v3908
        %6680 = vst [vmem:[%s152 + $0x16c8] sm:$0xff] %v3910
        %6681 = vst [vmem:[%s152 + $0x16d0] sm:$0xff] %v5509
        %6682 = vst [vmem:[%s152 + $0x16d8] sm:$0xff] %v5511
        %6683 = vst [vmem:[%s152 + $0x16e0] sm:$0xff] %v3914
        %6684 = vst [vmem:[%s152 + $0x16e8] sm:$0xff] %v3916
        %6685 = vst [vmem:[%s152 + $0x16f0] sm:$0xff] %v5515
        %6686 = vst [vmem:[%s152 + $0x16f8] sm:$0xff] %v5517
        %6687 = vst [vmem:[%s152 + $0x1700] sm:$0xff] %v3920
        %6688 = vst [vmem:[%s152 + $0x1708] sm:$0xff] %v3922
        %6689 = vst [vmem:[%s152 + $0x1710] sm:$0xff] %v5521
        %6690 = vst [vmem:[%s152 + $0x1718] sm:$0xff] %v5523
        %6691 = vst [vmem:[%s152 + $0x1720] sm:$0xff] %v3926
        %6692 = vst [vmem:[%s152 + $0x1728] sm:$0xff] %v3928
        %6693 = vst [vmem:[%s152 + $0x1730] sm:$0xff] %v5527
        %6694 = vst [vmem:[%s152 + $0x1738] sm:$0xff] %v5529
        %6695 = vst [vmem:[%s152 + $0x1740] sm:$0xff] %v3932
        %6696 = vst [vmem:[%s152 + $0x1748] sm:$0xff] %v3934
        %6697 = vst [vmem:[%s152 + $0x1750] sm:$0xff] %v5533
        %6698 = vst [vmem:[%s152 + $0x1758] sm:$0xff] %v5535
        %6699 = vst [vmem:[%s152 + $0x1760] sm:$0xff] %v3938
        %6700 = vst [vmem:[%s152 + $0x1768] sm:$0xff] %v3940
        %6701 = vst [vmem:[%s152 + $0x1770] sm:$0xff] %v5539
        %6702 = vst [vmem:[%s152 + $0x1778] sm:$0xff] %v5541
        %6703 = vst [vmem:[%s152 + $0x1780] sm:$0xff] %v3944
        %6704 = vst [vmem:[%s152 + $0x1788] sm:$0xff] %v3946
        %6705 = vst [vmem:[%s152 + $0x1790] sm:$0xff] %v5545
        %6706 = vst [vmem:[%s152 + $0x1798] sm:$0xff] %v5547
        %6707 = vst [vmem:[%s152 + $0x17a0] sm:$0xff] %v3950
        %6708 = vst [vmem:[%s152 + $0x17a8] sm:$0xff] %v3952
        %6709 = vst [vmem:[%s152 + $0x17b0] sm:$0xff] %v5551
        %6710 = vst [vmem:[%s152 + $0x17b8] sm:$0xff] %v5553
        %6711 = vst [vmem:[%s152 + $0x17c0] sm:$0xff] %v3956
        %6712 = vst [vmem:[%s152 + $0x17c8] sm:$0xff] %v3958
        %6713 = vst [vmem:[%s152 + $0x17d0] sm:$0xff] %v5557
        %6714 = vst [vmem:[%s152 + $0x17d8] sm:$0xff] %v5559
        %6715 = vst [vmem:[%s152 + $0x17e0] sm:$0xff] %v3962
        %6716 = vst [vmem:[%s152 + $0x17e8] sm:$0xff] %v3964
        %6717 = vst [vmem:[%s152 + $0x17f0] sm:$0xff] %v5563
        %6718 = vst [vmem:[%s152 + $0x17f8] sm:$0xff] %v5565
        %6719 = vst [vmem:[%s152 + $0x1800] sm:$0xff] %v3968
        %6720 = vst [vmem:[%s152 + $0x1808] sm:$0xff] %v3970
        %6721 = vst [vmem:[%s152 + $0x1810] sm:$0xff] %v5569
        %6722 = vst [vmem:[%s152 + $0x1818] sm:$0xff] %v5571
        %6723 = vst [vmem:[%s152 + $0x1820] sm:$0xff] %v3974
        %6724 = vst [vmem:[%s152 + $0x1828] sm:$0xff] %v3976
        %6725 = vst [vmem:[%s152 + $0x1830] sm:$0xff] %v5575
        %6726 = vst [vmem:[%s152 + $0x1838] sm:$0xff] %v5577
        %6727 = vst [vmem:[%s152 + $0x1840] sm:$0xff] %v3980
        %6728 = vst [vmem:[%s152 + $0x1848] sm:$0xff] %v3982
        %6729 = vst [vmem:[%s152 + $0x1850] sm:$0xff] %v5581
        %6730 = vst [vmem:[%s152 + $0x1858] sm:$0xff] %v5583
        %6731 = vst [vmem:[%s152 + $0x1860] sm:$0xff] %v3986
        %6732 = vst [vmem:[%s152 + $0x1868] sm:$0xff] %v3988
        %6733 = vst [vmem:[%s152 + $0x1870] sm:$0xff] %v5587
        %6734 = vst [vmem:[%s152 + $0x1878] sm:$0xff] %v5589
        %6735 = vst [vmem:[%s152 + $0x1880] sm:$0xff] %v3992
        %6736 = vst [vmem:[%s152 + $0x1888] sm:$0xff] %v3994
        %6737 = vst [vmem:[%s152 + $0x1890] sm:$0xff] %v5593
        %6738 = vst [vmem:[%s152 + $0x1898] sm:$0xff] %v5595
        %6739 = vst [vmem:[%s152 + $0x18a0] sm:$0xff] %v3998
        %6740 = vst [vmem:[%s152 + $0x18a8] sm:$0xff] %v4000
        %6741 = vst [vmem:[%s152 + $0x18b0] sm:$0xff] %v5599
        %6742 = vst [vmem:[%s152 + $0x18b8] sm:$0xff] %v5601
        %6743 = vst [vmem:[%s152 + $0x18c0] sm:$0xff] %v4004
        %6744 = vst [vmem:[%s152 + $0x18c8] sm:$0xff] %v4006
        %6745 = vst [vmem:[%s152 + $0x18d0] sm:$0xff] %v5605
        %6746 = vst [vmem:[%s152 + $0x18d8] sm:$0xff] %v5607
        %6747 = vst [vmem:[%s152 + $0x18e0] sm:$0xff] %v4010
        %6748 = vst [vmem:[%s152 + $0x18e8] sm:$0xff] %v4012
        %6749 = vst [vmem:[%s152 + $0x18f0] sm:$0xff] %v5611
        %6750 = vst [vmem:[%s152 + $0x18f8] sm:$0xff] %v5613
        %6751 = vst [vmem:[%s152 + $0x1900] sm:$0xff] %v4016
        %6752 = vst [vmem:[%s152 + $0x1908] sm:$0xff] %v4018
        %6753 = vst [vmem:[%s152 + $0x1910] sm:$0xff] %v5617
        %6754 = vst [vmem:[%s152 + $0x1918] sm:$0xff] %v5619
        %6755 = vst [vmem:[%s152 + $0x1920] sm:$0xff] %v4022
        %6756 = vst [vmem:[%s152 + $0x1928] sm:$0xff] %v4024
        %6757 = vst [vmem:[%s152 + $0x1930] sm:$0xff] %v5623
        %6758 = vst [vmem:[%s152 + $0x1938] sm:$0xff] %v5625
        %6759 = vst [vmem:[%s152 + $0x1940] sm:$0xff] %v4028
        %6760 = vst [vmem:[%s152 + $0x1948] sm:$0xff] %v4030
        %6761 = vst [vmem:[%s152 + $0x1950] sm:$0xff] %v5629
        %6762 = vst [vmem:[%s152 + $0x1958] sm:$0xff] %v5631
        %6763 = vst [vmem:[%s152 + $0x1960] sm:$0xff] %v4034
        %6764 = vst [vmem:[%s152 + $0x1968] sm:$0xff] %v4036
        %6765 = vst [vmem:[%s152 + $0x1970] sm:$0xff] %v5635
        %6766 = vst [vmem:[%s152 + $0x1978] sm:$0xff] %v5637
        %6767 = vst [vmem:[%s152 + $0x1980] sm:$0xff] %v4040
        %6768 = vst [vmem:[%s152 + $0x1988] sm:$0xff] %v4042
        %6769 = vst [vmem:[%s152 + $0x1990] sm:$0xff] %v5641
        %6770 = vst [vmem:[%s152 + $0x1998] sm:$0xff] %v5643
        %6771 = vst [vmem:[%s152 + $0x19a0] sm:$0xff] %v4046
        %6772 = vst [vmem:[%s152 + $0x19a8] sm:$0xff] %v4048
        %6773 = vst [vmem:[%s152 + $0x19b0] sm:$0xff] %v5647
        %6774 = vst [vmem:[%s152 + $0x19b8] sm:$0xff] %v5649
        %6775 = vst [vmem:[%s152 + $0x19c0] sm:$0xff] %v4052
        %6776 = vst [vmem:[%s152 + $0x19c8] sm:$0xff] %v4054
        %6777 = vst [vmem:[%s152 + $0x19d0] sm:$0xff] %v5653
        %6778 = vst [vmem:[%s152 + $0x19d8] sm:$0xff] %v5655
        %6779 = vst [vmem:[%s152 + $0x19e0] sm:$0xff] %v4058
        %6780 = vst [vmem:[%s152 + $0x19e8] sm:$0xff] %v4060
        %6781 = vst [vmem:[%s152 + $0x19f0] sm:$0xff] %v5659
        %6782 = vst [vmem:[%s152 + $0x19f8] sm:$0xff] %v5661
        %6783 = vst [vmem:[%s152 + $0x1a00] sm:$0xff] %v4064
        %6784 = vst [vmem:[%s152 + $0x1a08] sm:$0xff] %v4066
        %6785 = vst [vmem:[%s152 + $0x1a10] sm:$0xff] %v5665
        %6786 = vst [vmem:[%s152 + $0x1a18] sm:$0xff] %v5667
        %6787 = vst [vmem:[%s152 + $0x1a20] sm:$0xff] %v4070
        %6788 = vst [vmem:[%s152 + $0x1a28] sm:$0xff] %v4072
        %6789 = vst [vmem:[%s152 + $0x1a30] sm:$0xff] %v5671
        %6790 = vst [vmem:[%s152 + $0x1a38] sm:$0xff] %v5673
        %6791 = vst [vmem:[%s152 + $0x1a40] sm:$0xff] %v4076
        %6792 = vst [vmem:[%s152 + $0x1a48] sm:$0xff] %v4078
        %6793 = vst [vmem:[%s152 + $0x1a50] sm:$0xff] %v5677
        %6794 = vst [vmem:[%s152 + $0x1a58] sm:$0xff] %v5679
        %6795 = vst [vmem:[%s152 + $0x1a60] sm:$0xff] %v4082
        %6796 = vst [vmem:[%s152 + $0x1a68] sm:$0xff] %v4084
        %6797 = vst [vmem:[%s152 + $0x1a70] sm:$0xff] %v5683
        %6798 = vst [vmem:[%s152 + $0x1a78] sm:$0xff] %v5685
        %6799 = vst [vmem:[%s152 + $0x1a80] sm:$0xff] %v4088
        %6800 = vst [vmem:[%s152 + $0x1a88] sm:$0xff] %v4090
        %6801 = vst [vmem:[%s152 + $0x1a90] sm:$0xff] %v5689
        %6802 = vst [vmem:[%s152 + $0x1a98] sm:$0xff] %v5691
        %6803 = vst [vmem:[%s152 + $0x1aa0] sm:$0xff] %v4094
        %6804 = vst [vmem:[%s152 + $0x1aa8] sm:$0xff] %v4096
        %6805 = vst [vmem:[%s152 + $0x1ab0] sm:$0xff] %v5695
        %6806 = vst [vmem:[%s152 + $0x1ab8] sm:$0xff] %v5697
        %6807 = vst [vmem:[%s152 + $0x1ac0] sm:$0xff] %v4100
        %6808 = vst [vmem:[%s152 + $0x1ac8] sm:$0xff] %v4102
        %6809 = vst [vmem:[%s152 + $0x1ad0] sm:$0xff] %v5701
        %6810 = vst [vmem:[%s152 + $0x1ad8] sm:$0xff] %v5703
        %6811 = vst [vmem:[%s152 + $0x1ae0] sm:$0xff] %v4106
        %6812 = vst [vmem:[%s152 + $0x1ae8] sm:$0xff] %v4108
        %6813 = vst [vmem:[%s152 + $0x1af0] sm:$0xff] %v5707
        %6814 = vst [vmem:[%s152 + $0x1af8] sm:$0xff] %v5709
        %6815 = vst [vmem:[%s152 + $0x1b00] sm:$0xff] %v4112
        %6816 = vst [vmem:[%s152 + $0x1b08] sm:$0xff] %v4114
        %6817 = vst [vmem:[%s152 + $0x1b10] sm:$0xff] %v5713
        %6818 = vst [vmem:[%s152 + $0x1b18] sm:$0xff] %v5715
        %6819 = vst [vmem:[%s152 + $0x1b20] sm:$0xff] %v4118
        %6820 = vst [vmem:[%s152 + $0x1b28] sm:$0xff] %v4120
        %6821 = vst [vmem:[%s152 + $0x1b30] sm:$0xff] %v5719
        %6822 = vst [vmem:[%s152 + $0x1b38] sm:$0xff] %v5721
        %6823 = vst [vmem:[%s152 + $0x1b40] sm:$0xff] %v4124
        %6824 = vst [vmem:[%s152 + $0x1b48] sm:$0xff] %v4126
        %6825 = vst [vmem:[%s152 + $0x1b50] sm:$0xff] %v5725
        %6826 = vst [vmem:[%s152 + $0x1b58] sm:$0xff] %v5727
        %6827 = vst [vmem:[%s152 + $0x1b60] sm:$0xff] %v4130
        %6828 = vst [vmem:[%s152 + $0x1b68] sm:$0xff] %v4132
        %6829 = vst [vmem:[%s152 + $0x1b70] sm:$0xff] %v5731
        %6830 = vst [vmem:[%s152 + $0x1b78] sm:$0xff] %v5733
        %6831 = vst [vmem:[%s152 + $0x1b80] sm:$0xff] %v4136
        %6832 = vst [vmem:[%s152 + $0x1b88] sm:$0xff] %v4138
        %6833 = vst [vmem:[%s152 + $0x1b90] sm:$0xff] %v5737
        %6834 = vst [vmem:[%s152 + $0x1b98] sm:$0xff] %v5739
        %6835 = vst [vmem:[%s152 + $0x1ba0] sm:$0xff] %v4142
        %6836 = vst [vmem:[%s152 + $0x1ba8] sm:$0xff] %v4144
        %6837 = vst [vmem:[%s152 + $0x1bb0] sm:$0xff] %v5743
        %6838 = vst [vmem:[%s152 + $0x1bb8] sm:$0xff] %v5745
        %6839 = vst [vmem:[%s152 + $0x1bc0] sm:$0xff] %v4148
        %6840 = vst [vmem:[%s152 + $0x1bc8] sm:$0xff] %v4150
        %6841 = vst [vmem:[%s152 + $0x1bd0] sm:$0xff] %v5749
        %6842 = vst [vmem:[%s152 + $0x1bd8] sm:$0xff] %v5751
        %6843 = vst [vmem:[%s152 + $0x1be0] sm:$0xff] %v4154
        %6844 = vst [vmem:[%s152 + $0x1be8] sm:$0xff] %v4156
        %6845 = vst [vmem:[%s152 + $0x1bf0] sm:$0xff] %v5755
        %6846 = vst [vmem:[%s152 + $0x1bf8] sm:$0xff] %v5757
        %6847 = vst [vmem:[%s152 + $0x1c00] sm:$0xff] %v4160
        %6848 = vst [vmem:[%s152 + $0x1c08] sm:$0xff] %v4162
        %6849 = vst [vmem:[%s152 + $0x1c10] sm:$0xff] %v5761
        %6850 = vst [vmem:[%s152 + $0x1c18] sm:$0xff] %v5763
        %6851 = vst [vmem:[%s152 + $0x1c20] sm:$0xff] %v4166
        %6852 = vst [vmem:[%s152 + $0x1c28] sm:$0xff] %v4168
        %6853 = vst [vmem:[%s152 + $0x1c30] sm:$0xff] %v5767
        %6854 = vst [vmem:[%s152 + $0x1c38] sm:$0xff] %v5769
        %6855 = vst [vmem:[%s152 + $0x1c40] sm:$0xff] %v4172
        %6856 = vst [vmem:[%s152 + $0x1c48] sm:$0xff] %v4174
        %6857 = vst [vmem:[%s152 + $0x1c50] sm:$0xff] %v5773
        %6858 = vst [vmem:[%s152 + $0x1c58] sm:$0xff] %v5775
        %6859 = vst [vmem:[%s152 + $0x1c60] sm:$0xff] %v4178
        %6860 = vst [vmem:[%s152 + $0x1c68] sm:$0xff] %v4180
        %6861 = vst [vmem:[%s152 + $0x1c70] sm:$0xff] %v5779
        %6862 = vst [vmem:[%s152 + $0x1c78] sm:$0xff] %v5781
        %6863 = vst [vmem:[%s152 + $0x1c80] sm:$0xff] %v4184
        %6864 = vst [vmem:[%s152 + $0x1c88] sm:$0xff] %v4186
        %6865 = vst [vmem:[%s152 + $0x1c90] sm:$0xff] %v5785
        %6866 = vst [vmem:[%s152 + $0x1c98] sm:$0xff] %v5787
        %6867 = vst [vmem:[%s152 + $0x1ca0] sm:$0xff] %v4190
        %6868 = vst [vmem:[%s152 + $0x1ca8] sm:$0xff] %v4192
        %6869 = vst [vmem:[%s152 + $0x1cb0] sm:$0xff] %v5791
        %6870 = vst [vmem:[%s152 + $0x1cb8] sm:$0xff] %v5793
        %6871 = vst [vmem:[%s152 + $0x1cc0] sm:$0xff] %v4196
        %6872 = vst [vmem:[%s152 + $0x1cc8] sm:$0xff] %v4198
        %6873 = vst [vmem:[%s152 + $0x1cd0] sm:$0xff] %v5797
        %6874 = vst [vmem:[%s152 + $0x1cd8] sm:$0xff] %v5799
        %6875 = vst [vmem:[%s152 + $0x1ce0] sm:$0xff] %v4202
        %6876 = vst [vmem:[%s152 + $0x1ce8] sm:$0xff] %v4204
        %6877 = vst [vmem:[%s152 + $0x1cf0] sm:$0xff] %v5803
        %6878 = vst [vmem:[%s152 + $0x1cf8] sm:$0xff] %v5805
        %6879 = vst [vmem:[%s152 + $0x1d00] sm:$0xff] %v4208
        %6880 = vst [vmem:[%s152 + $0x1d08] sm:$0xff] %v4210
        %6881 = vst [vmem:[%s152 + $0x1d10] sm:$0xff] %v5809
        %6882 = vst [vmem:[%s152 + $0x1d18] sm:$0xff] %v5811
        %6883 = vst [vmem:[%s152 + $0x1d20] sm:$0xff] %v4214
        %6884 = vst [vmem:[%s152 + $0x1d28] sm:$0xff] %v4216
        %6885 = vst [vmem:[%s152 + $0x1d30] sm:$0xff] %v5815
        %6886 = vst [vmem:[%s152 + $0x1d38] sm:$0xff] %v5817
        %6887 = vst [vmem:[%s152 + $0x1d40] sm:$0xff] %v4220
        %6888 = vst [vmem:[%s152 + $0x1d48] sm:$0xff] %v4222
        %6889 = vst [vmem:[%s152 + $0x1d50] sm:$0xff] %v5821
        %6890 = vst [vmem:[%s152 + $0x1d58] sm:$0xff] %v5823
        %6891 = vst [vmem:[%s152 + $0x1d60] sm:$0xff] %v4226
        %6892 = vst [vmem:[%s152 + $0x1d68] sm:$0xff] %v4228
        %6893 = vst [vmem:[%s152 + $0x1d70] sm:$0xff] %v5827
        %6894 = vst [vmem:[%s152 + $0x1d78] sm:$0xff] %v5829
        %6895 = vst [vmem:[%s152 + $0x1d80] sm:$0xff] %v4232
        %6896 = vst [vmem:[%s152 + $0x1d88] sm:$0xff] %v4234
        %6897 = vst [vmem:[%s152 + $0x1d90] sm:$0xff] %v5833
        %6898 = vst [vmem:[%s152 + $0x1d98] sm:$0xff] %v5835
        %6899 = vst [vmem:[%s152 + $0x1da0] sm:$0xff] %v4238
        %6900 = vst [vmem:[%s152 + $0x1da8] sm:$0xff] %v4240
        %6901 = vst [vmem:[%s152 + $0x1db0] sm:$0xff] %v5839
        %6902 = vst [vmem:[%s152 + $0x1db8] sm:$0xff] %v5841
        %6903 = vst [vmem:[%s152 + $0x1dc0] sm:$0xff] %v4244
        %6904 = vst [vmem:[%s152 + $0x1dc8] sm:$0xff] %v4246
        %6905 = vst [vmem:[%s152 + $0x1dd0] sm:$0xff] %v5845
        %6906 = vst [vmem:[%s152 + $0x1dd8] sm:$0xff] %v5847
        %6907 = vst [vmem:[%s152 + $0x1de0] sm:$0xff] %v4250
        %6908 = vst [vmem:[%s152 + $0x1de8] sm:$0xff] %v4252
        %6909 = vst [vmem:[%s152 + $0x1df0] sm:$0xff] %v5851
        %6910 = vst [vmem:[%s152 + $0x1df8] sm:$0xff] %v5853
        %6911 = vst [vmem:[%s152 + $0x1e00] sm:$0xff] %v4256
        %6912 = vst [vmem:[%s152 + $0x1e08] sm:$0xff] %v4258
        %6913 = vst [vmem:[%s152 + $0x1e10] sm:$0xff] %v5857
        %6914 = vst [vmem:[%s152 + $0x1e18] sm:$0xff] %v5859
        %6915 = vst [vmem:[%s152 + $0x1e20] sm:$0xff] %v4262
        %6916 = vst [vmem:[%s152 + $0x1e28] sm:$0xff] %v4264
        %6917 = vst [vmem:[%s152 + $0x1e30] sm:$0xff] %v5863
        %6918 = vst [vmem:[%s152 + $0x1e38] sm:$0xff] %v5865
        %6919 = vst [vmem:[%s152 + $0x1e40] sm:$0xff] %v4268
        %6920 = vst [vmem:[%s152 + $0x1e48] sm:$0xff] %v4270
        %6921 = vst [vmem:[%s152 + $0x1e50] sm:$0xff] %v5869
        %6922 = vst [vmem:[%s152 + $0x1e58] sm:$0xff] %v5871
        %6923 = vst [vmem:[%s152 + $0x1e60] sm:$0xff] %v4274
        %6924 = vst [vmem:[%s152 + $0x1e68] sm:$0xff] %v4276
        %6925 = vst [vmem:[%s152 + $0x1e70] sm:$0xff] %v5875
        %6926 = vst [vmem:[%s152 + $0x1e78] sm:$0xff] %v5877
        %6927 = vst [vmem:[%s152 + $0x1e80] sm:$0xff] %v4280
        %6928 = vst [vmem:[%s152 + $0x1e88] sm:$0xff] %v4282
        %6929 = vst [vmem:[%s152 + $0x1e90] sm:$0xff] %v5881
        %6930 = vst [vmem:[%s152 + $0x1e98] sm:$0xff] %v5883
        %6931 = vst [vmem:[%s152 + $0x1ea0] sm:$0xff] %v4286
        %6932 = vst [vmem:[%s152 + $0x1ea8] sm:$0xff] %v4288
        %6933 = vst [vmem:[%s152 + $0x1eb0] sm:$0xff] %v5887
        %6934 = vst [vmem:[%s152 + $0x1eb8] sm:$0xff] %v5889
        %6935 = vst [vmem:[%s152 + $0x1ec0] sm:$0xff] %v4292
        %6936 = vst [vmem:[%s152 + $0x1ec8] sm:$0xff] %v4294
        %6937 = vst [vmem:[%s152 + $0x1ed0] sm:$0xff] %v5893
        %6938 = vst [vmem:[%s152 + $0x1ed8] sm:$0xff] %v5895
        %6939 = vst [vmem:[%s152 + $0x1ee0] sm:$0xff] %v4298
        %6940 = vst [vmem:[%s152 + $0x1ee8] sm:$0xff] %v4300
        %6941 = vst [vmem:[%s152 + $0x1ef0] sm:$0xff] %v5899
        %6942 = vst [vmem:[%s152 + $0x1ef8] sm:$0xff] %v5901
        %6943 = vst [vmem:[%s152 + $0x1f00] sm:$0xff] %v4304
        %6944 = vst [vmem:[%s152 + $0x1f08] sm:$0xff] %v4306
        %6945 = vst [vmem:[%s152 + $0x1f10] sm:$0xff] %v5905
        %6946 = vst [vmem:[%s152 + $0x1f18] sm:$0xff] %v5907
        %6947 = vst [vmem:[%s152 + $0x1f20] sm:$0xff] %v4310
        %6948 = vst [vmem:[%s152 + $0x1f28] sm:$0xff] %v4312
        %6949 = vst [vmem:[%s152 + $0x1f30] sm:$0xff] %v5911
        %6950 = vst [vmem:[%s152 + $0x1f38] sm:$0xff] %v5913
        %6951 = vst [vmem:[%s152 + $0x1f40] sm:$0xff] %v4316
        %6952 = vst [vmem:[%s152 + $0x1f48] sm:$0xff] %v4318
        %6953 = vst [vmem:[%s152 + $0x1f50] sm:$0xff] %v5917
        %6954 = vst [vmem:[%s152 + $0x1f58] sm:$0xff] %v5919
        %6955 = vst [vmem:[%s152 + $0x1f60] sm:$0xff] %v4322
        %6956 = vst [vmem:[%s152 + $0x1f68] sm:$0xff] %v4324
        %6957 = vst [vmem:[%s152 + $0x1f70] sm:$0xff] %v5923
        %6958 = vst [vmem:[%s152 + $0x1f78] sm:$0xff] %v5925
        %6959 = vst [vmem:[%s152 + $0x1f80] sm:$0xff] %v4328
        %6960 = vst [vmem:[%s152 + $0x1f88] sm:$0xff] %v4330
        %6961 = vst [vmem:[%s152 + $0x1f90] sm:$0xff] %v5929
        %6962 = vst [vmem:[%s152 + $0x1f98] sm:$0xff] %v5931
        %6963 = vst [vmem:[%s152 + $0x1fa0] sm:$0xff] %v4334
        %6964 = vst [vmem:[%s152 + $0x1fa8] sm:$0xff] %v4336
        %6965 = vst [vmem:[%s152 + $0x1fb0] sm:$0xff] %v5935
        %6966 = vst [vmem:[%s152 + $0x1fb8] sm:$0xff] %v5937
        %6967 = vst [vmem:[%s152 + $0x1fc0] sm:$0xff] %v4340
        %6968 = vst [vmem:[%s152 + $0x1fc8] sm:$0xff] %v4342
        %6969 = vst [vmem:[%s152 + $0x1fd0] sm:$0xff] %v5941
        %6970 = vst [vmem:[%s152 + $0x1fd8] sm:$0xff] %v5943
        %6971 = vst [vmem:[%s152 + $0x1fe0] sm:$0xff] %v4346
        %6972 = vst [vmem:[%s152 + $0x1fe8] sm:$0xff] %v4348
        %6973 = vst [vmem:[%s152 + $0x1ff0] sm:$0xff] %v5947
        %6974 = vst [vmem:[%s152 + $0x1ff8] sm:$0xff] %v5949
        %s6975 = sand.u32 %s72, 1
        %s6976 = scalar_lea.sflag [#allocation4], %s6975
        %s6977 = sand.u32 %s72, 1
        %s6978 = smul.addr %s6977, 8192
        %s6979 = scalar_lea.vmem [#allocation5], %s6978
        // Predicated region
        $region33: #{tpu_custom_call.1} parent=27 // pred_check
          %p6980 = pneg %p82
        $region34: #{tpu_custom_call.1} parent=27 // pred_check_branch
          %6982 = sbr.rel (%p6980) target = $region36
        $region35: #{tpu_custom_call.1} parent=27 // pred_region
          %s6983 = smul.u32 256, %s17
          %s6984 = ssub.s32 375, %s6983
          %p6985 = scmp.lt.s32.totalorder %s6984, 256
          %s6986 = scalar_select %p6985, %s6984, 256
          %s6987 = smul.u32 128, %s6986
          %s6988 = smul.u32 %s6987, 4
          %s6990 = ssub.s32 131072, %s6988
          %6991 = vsyncadd %s6976, %s6990
          %p6992 = scmp.ne.s32.totalorder 0, %s6988
          %s6993 = smul.addr %s6983, 4
          %s6994 = smul.addr %s6993, 128
          %s6995 = scalar_lea.hbm %s2, %s6994
          %s6996 = smul.u32 32, %s6986
          %s6997 = sshll.u32 %s6979, 4
          %s6998 = int_to_ptr.vmem [resolvable:$true] %s6997
          %s6999 = sshll.u32 %s6996, 4
          %7003 = dma.vmem_to_hbm [thread:$0]  (%p6992), %s6998, %s6999, %s6995, %s6976, 512, 512, 32
        $region36: #{tpu_custom_call.1} parent=27 // pred_fallthru
          _
      $region28: #{tpu_custom_call.1} parent=5 // pred_fallthru
        _
      %p7004 = scmp.le.s32.totalorder 2, %s12
      // Predicated region
      $region37: #{tpu_custom_call.1} parent=5 // pred_check
        %p7005 = pneg %p7004
      $region38: #{tpu_custom_call.1} parent=5 // pred_check_branch
        %7007 = sbr.rel (%p7005) target = $region40
      $region39: #{tpu_custom_call.1} parent=5 // pred_region
        %s7008 = ssub.s32 %s12, 2
        // Predicated region
        $region41: #{tpu_custom_call.1} parent=39 // pred_check
          %p7009 = pneg %p88
        $region42: #{tpu_custom_call.1} parent=39 // pred_check_branch
          %7011 = sbr.rel (%p7009) target = $region44
        $region43: #{tpu_custom_call.1} parent=39 // pred_region
          %s7012 = sand.u32 %s73, 1
          %s7013 = scalar_lea.sflag [#allocation4], %s7012
          %s7014 = sand.u32 %s73, 1
          %s7015 = smul.addr %s7014, 8192
          %s7016 = scalar_lea.vmem [#allocation5], %s7015
          %7017 = dma.done %s7013, 131072
        $region44: #{tpu_custom_call.1} parent=39 // pred_fallthru
          _
      $region40: #{tpu_custom_call.1} parent=5 // pred_fallthru
        _
    $region6: #{tpu_custom_call.1} parent=1 // loop_footer
      %s16 = sadd.s32 1, %s12
    $region7: #{tpu_custom_call.1} parent=1 // loop_footer_branch
      %11 = sbr.rel target = $region3
    $region8: #{tpu_custom_call.1} parent=1 // loop_exit
      _
    %7018 = vsyncpa [#allocation3], 1
    %s7019 = scalar_lea.sflag [#allocation3], 1
    %7020 = vsyncpa %s7019, 1
    %7021 = vsyncpa [#allocation4], 1
    %s7022 = scalar_lea.sflag [#allocation4], 1
    %7023 = vsyncpa %s7022, 1

</llo_original>
